<compile_context>
chip_gen: v6e
topology: v6e:2x2x1
jax: 0.10.0
libtpu: 0.0.40
codegen_flags: <defaults>
</compile_context>

<pallas_src>
import jax
import jax.numpy as jnp
from jax.experimental import pallas as pl
from jax.experimental.pallas import tpu as pltpu

_EPS = 1e-5
_SLOPE = 0.2
_VMEM = pl.BlockSpec(memory_space=pltpu.MemorySpace.VMEM)


# --------------------------------------------------------------------------
# In-kernel helpers
# --------------------------------------------------------------------------
def _lrelu(x):
    return jnp.where(x >= 0.0, x, _SLOPE * x)


def _lane_group_total(v, chan):
    """v: (1, L) with lanes ordered (w, c), channel width `chan`.

    Returns (1, L) where every lane holds the sum over all lanes sharing its
    channel (lane % chan) -- log2(L / chan) roll+add steps (XLU, free slot).
    """
    lanes = v.shape[-1]
    shift = lanes // 2
    while shift >= chan:
        v = v + pltpu.roll(v, shift, axis=1)
        shift //= 2
    return v


def _row_tile(rows):
    if rows <= 32:
        return rows
    for t in (32, 16, 8):
        if rows % t == 0:
            return t
    return rows


def _bn_convt_stage(src_ref, dst_ref, w_ref, *, gamma=None, beta=None,
                    groups=None, bias=None, final_act=None):
    """(optional BN2d + LeakyReLU) then ConvTranspose2d(k=2, s=2).

    src_ref: (rows, W*Cin), rows encode (h..., n), lanes ordered (w, c_in).
    w_ref:   (2, W*Cin, 2W*Cout) block-diagonal weights, stacked over ki.
    dst_ref: (2*rows, 2W*Cout); ki result goes to row block [ki*rows, ...),
             output lanes ordered (2w+kj, c_out).
    gamma/beta: (1, W*Cin) lane-tiled BN params of the *previous* conv.
    groups:  number of width positions W (per-channel count = rows * groups).
    """
    rows, lanes = src_ref.shape
    tile = _row_tile(rows)

    if gamma is not None:
        chan = lanes // groups
        cnt = float(rows * groups)
        csum = jnp.zeros((1, lanes), jnp.float32)
        csum2 = jnp.zeros((1, lanes), jnp.float32)
        for t0 in range(0, rows, tile):
            xt = src_ref[pl.ds(t0, tile), :]
            csum = csum + jnp.sum(xt, axis=0, keepdims=True)
            csum2 = csum2 + jnp.sum(xt * xt, axis=0, keepdims=True)
        tot = _lane_group_total(csum, chan)
        tot2 = _lane_group_total(csum2, chan)
        mean = tot / cnt
        var = jnp.maximum(tot2 / cnt - mean * mean, 0.0)
        scale = jax.lax.rsqrt(var + _EPS) * gamma
        shift = beta - mean * scale

    for t0 in range(0, rows, tile):
        xt = src_ref[pl.ds(t0, tile), :]
        if gamma is not None:
            xt = _lrelu(xt * scale + shift)
        for ki in range(2):
            y = jnp.dot(xt, w_ref[ki], preferred_element_type=jnp.float32)
            if bias is not None:
                y = y + bias
            if final_act is not None:
                y = final_act(y)
            dst_ref[pl.ds(ki * rows + t0, tile), :] = y


# --------------------------------------------------------------------------
# The single fused generator kernel
# --------------------------------------------------------------------------
def _generator_kernel(z_ref, wlin_ref, g0_ref, be0_ref,
                      w1_ref, g1_ref, be1_ref,
                      w2_ref, g2_ref, be2_ref,
                      w3_ref, b3_ref,
                      o_ref, s0_ref, s1_ref, s2_ref):
    n = z_ref.shape[0]
    l0 = s0_ref.shape[1]            # 4 * C0 lanes, ordered (w0, c0)

    # ---- preprocess: Linear + BatchNorm1d + LeakyReLU ---------------------
    # (linear bias omitted: a per-feature constant is cancelled by BN1d)
    pre = jnp.dot(z_ref[...], wlin_ref[...], preferred_element_type=jnp.float32)
    mean = jnp.mean(pre, axis=0, keepdims=True)
    var = jnp.maximum(jnp.mean(pre * pre, axis=0, keepdims=True) - mean * mean,
                      0.0)
    x = _lrelu((pre - mean) * jax.lax.rsqrt(var + _EPS) * g0_ref[...]
               + be0_ref[...])
    # Columns were pre-permuted to (h0, w0, c0); split the 4 h0 slabs into row
    # blocks so downstream activations are rows=(h..., n), lanes=(w, c).
    for h0 in range(4):
        s0_ref[pl.ds(h0 * n, n), :] = x[:, h0 * l0:(h0 + 1) * l0]

    # ---- block1 conv (its BN+LReLU is applied at the start of next stage) --
    _bn_convt_stage(s0_ref, s1_ref, w1_ref)
    # ---- BN2d+LReLU (block1 stats) then block2 conv -------------------------
    _bn_convt_stage(s1_ref, s2_ref, w2_ref,
                    gamma=g1_ref[...], beta=be1_ref[...], groups=8)
    # ---- BN2d+LReLU (block2 stats) then convT_out + bias + tanh ------------
    _bn_convt_stage(s2_ref, o_ref, w3_ref,
                    gamma=g2_ref[...], beta=be2_ref[...], groups=16,
                    bias=b3_ref[...], final_act=jnp.tanh)


# --------------------------------------------------------------------------
# One-time parameter layout preparation (PyTorch layout -> kernel layout)
# --------------------------------------------------------------------------
def _convt_block_diag(w, win, cout_pad=None):
    """ConvTranspose2d(k=2,s=2) weight (Cin, Cout, 2, 2) -> block-diagonal
    matrices stacked over the height-kernel position ki:
      out[ki, w0*Cin + ci, (2*w0 + kj)*Cp + co] = w[ci, co, ki, kj]
    so `act(rows, win*Cin) @ out[ki]` doubles the width in-lane."""
    cin, cout = w.shape[0], w.shape[1]
    cp = cout if cout_pad is None else cout_pad
    if cp != cout:
        w = jnp.pad(w, ((0, 0), (0, cp - cout), (0, 0), (0, 0)))
    eye = jnp.eye(win, dtype=w.dtype)
    mats = []
    for ki in range(2):
        wk = w[:, :, ki, :]                               # (Cin, Cp, 2)
        t = jnp.einsum("ab,ioj->aibjo", eye, wk)          # (win,Cin,win,2,Cp)
        mats.append(t.reshape(win * cin, win * 2 * cp))
    return jnp.stack(mats)


def prepare_params(params, base_dim):
    p = params
    c0 = 4 * base_dim
    f = 16 * c0
    zd = p["w_lin"].shape[0]

    # Linear output features: PyTorch's .view(-1, 4*bd, 4, 4) implies feature
    # order (c0, h0, w0); permute to (h0, w0, c0) so the kernel's h0-slab
    # split yields lanes ordered (w0, c0).
    w_lin = p["w_lin"].reshape(zd, c0, 4, 4).transpose(0, 2, 3, 1).reshape(zd, f)

    def vec_hwc(v):
        return v.reshape(c0, 4, 4).transpose(1, 2, 0).reshape(1, f)

    tile_row = lambda v, rep: jnp.tile(v, rep).reshape(1, -1)

    # NOTE: b_lin / bc1 / bc2 are intentionally not passed to the kernel --
    # a per-channel constant bias followed by training-mode BatchNorm is a
    # mathematical no-op.
    return {
        "w_lin": w_lin,
        "g0": vec_hwc(p["g0"]),
        "be0": vec_hwc(p["be0"]),
        "w1": _convt_block_diag(p["wc1"], win=4),
        "g1": tile_row(p["g1"], 8), "be1": tile_row(p["be1"], 8),
        "w2": _convt_block_diag(p["wc2"], win=8),
        "g2": tile_row(p["g2"], 16), "be2": tile_row(p["be2"], 16),
        "w3": _convt_block_diag(p["wc3"], win=16, cout_pad=4),
        "b3": tile_row(jnp.pad(p["bc3"], (0, 1)), 32),
    }


# --------------------------------------------------------------------------
# Full generator forward: ONE pallas_call + tiny XLA epilogue
# --------------------------------------------------------------------------
@jax.jit
def generator_forward(z, p):
    n = z.shape[0]                      # even batch keeps row blocks 8-aligned
    zd = z.shape[1]
    f = p["w_lin"].shape[1]
    l0 = p["w1"].shape[1]               # 4 * C0
    l1 = p["w1"].shape[2]               # 8 * C1
    l2 = p["w2"].shape[2]               # 16 * C2
    l3 = p["w3"].shape[2]               # 32 * 4 = 128

    mm = lambda m, k, nn: 2 * m * k * nn
    flops = (mm(n, zd, f)
             + 2 * mm(4 * n, l0, l1)
             + 2 * mm(8 * n, l1, l2)
             + 2 * mm(16 * n, l2, l3))
    bytes_accessed = 4 * (int(z.size) + sum(int(v.size) for v in p.values())
                          + 32 * n * l3)
    cost = pl.CostEstimate(flops=flops,
                           transcendentals=32 * n * l3 + 4 * f,
                           bytes_accessed=bytes_accessed)

    out = pl.pallas_call(
        _generator_kernel,
        out_shape=jax.ShapeDtypeStruct((32 * n, l3), jnp.float32),
        in_specs=[_VMEM] * 12,
        out_specs=_VMEM,
        scratch_shapes=[
            pltpu.VMEM((4 * n, l0), jnp.float32),    # 4x4 activations
            pltpu.VMEM((8 * n, l1), jnp.float32),    # block1 conv output
            pltpu.VMEM((16 * n, l2), jnp.float32),   # block2 conv output
        ],
        compiler_params=pltpu.CompilerParams(vmem_limit_bytes=32 * 1024 * 1024),
        cost_estimate=cost,
    )(z, p["w_lin"], p["g0"], p["be0"],
      p["w1"], p["g1"], p["be1"],
      p["w2"], p["g2"], p["be2"],
      p["w3"], p["b3"])

    # Epilogue (XLA, 64 KB at batch 4): rows are (ki3, ki2, ki1, h0, n), lanes
    # are (W, c_pad4); H = 8*h0 + 4*ki1 + 2*ki2 + ki3, W = lane // 4.
    y = out.reshape(2, 2, 2, 4, n, 32, 4)
    y = y.transpose(4, 6, 3, 2, 1, 0, 5)        # (n, c, h0, ki1, ki2, ki3, W)
    return y.reshape(n, 4, 32, 32)[:, :3]


# --------------------------------------------------------------------------
# Deterministic parameter initialization (shapes follow the PyTorch __init__)
# --------------------------------------------------------------------------
def init_params(key, base_dim, z_dim):
    ks = jax.random.split(key, 12)
    f = 4 * 4 * 4 * base_dim

    def nrm(k, shape, std, mean=0.0):
        return mean + std * jax.random.normal(k, shape, dtype=jnp.float32)

    return {
        "w_lin": nrm(ks[0], (z_dim, f), 0.02),
        "b_lin": nrm(ks[1], (f,), 0.02),
        "g0": nrm(ks[2], (f,), 0.02, mean=1.0),
        "be0": jnp.zeros((f,), jnp.float32),
        "wc1": nrm(ks[3], (4 * base_dim, 2 * base_dim, 2, 2), 0.02),
        "bc1": nrm(ks[4], (2 * base_dim,), 0.02),
        "g1": nrm(ks[5], (2 * base_dim,), 0.02, mean=1.0),
        "be1": jnp.zeros((2 * base_dim,), jnp.float32),
        "wc2": nrm(ks[6], (2 * base_dim, base_dim, 2, 2), 0.02),
        "bc2": nrm(ks[7], (base_dim,), 0.02),
        "g2": nrm(ks[8], (base_dim,), 0.02, mean=1.0),
        "be2": jnp.zeros((base_dim,), jnp.float32),
        "wc3": nrm(ks[9], (base_dim, 3, 2, 2), 0.02),
        "bc3": nrm(ks[10], (3,), 0.02),
    }


# --------------------------------------------------------------------------
# Pure-JAX NCHW reference (PyTorch semantics, incl. the pre-BN biases)
# --------------------------------------------------------------------------
def _reference_forward(z, params, base_dim):
    def lrelu(x):
        return jnp.where(x >= 0.0, x, _SLOPE * x)

    def bn1d(x, g, b):
        m = x.mean(axis=0, keepdims=True)
        v = ((x - m) ** 2).mean(axis=0, keepdims=True)
        return (x - m) / jnp.sqrt(v + _EPS) * g + b

    def bn2d(x, g, b):
        m = x.mean(axis=(0, 2, 3), keepdims=True)
        v = ((x - m) ** 2).mean(axis=(0, 2, 3), keepdims=True)
        xn = (x - m) / jnp.sqrt(v + _EPS)
        return xn * g.reshape(1, -1, 1, 1) + b.reshape(1, -1, 1, 1)

    def convt(x, w, b):   # x (N,Ci,H,W), w (Ci,Co,2,2): stride-2 kernel-2 deconv
        y = jnp.einsum("nchw,cokl->nohwkl", x, w)
        nn_, co, hh, ww = y.shape[:4]
        y = y.transpose(0, 1, 2, 4, 3, 5).reshape(nn_, co, 2 * hh, 2 * ww)
        return y + b.reshape(1, -1, 1, 1)

    p = params
    x = lrelu(bn1d(z @ p["w_lin"] + p["b_lin"], p["g0"], p["be0"]))
    x = x.reshape(-1, 4 * base_dim, 4, 4)
    x = lrelu(bn2d(convt(x, p["wc1"], p["bc1"]), p["g1"], p["be1"]))
    x = lrelu(bn2d(convt(x, p["wc2"], p["bc2"]), p["g2"], p["be2"]))
    return jnp.tanh(convt(x, p["wc3"], p["bc3"]))


if __name__ == "__main__":
    base_dim = 32
    z_dim = 32
    batch = 4  # > 1 so training-mode batchnorm is well defined

    key = jax.random.PRNGKey(0)
    k_params, k_z = jax.random.split(key)
    params = init_params(k_params, base_dim, z_dim)
    z = jax.random.normal(k_z, (batch, z_dim), dtype=jnp.float32)

    prepped = prepare_params(params, base_dim)
    out = generator_forward(z, prepped)
    jax.block_until_ready(out)

    assert out.shape == (batch, 3, 32, 32), out.shape
    assert bool(jnp.all(jnp.isfinite(out)))
    assert bool(jnp.all(jnp.abs(out) <= 1.0))  # tanh output range

    # Layout/index sanity check against a straightforward NCHW reference.
    # Loose tolerance: catches any pixel/channel scrambling while being immune
    # to MXU-vs-XLA f32 matmul precision differences.
    ref = _reference_forward(z, params, base_dim)
    max_diff = float(jnp.max(jnp.abs(out - ref)))
    assert max_diff < 5e-2, max_diff

    print("KERNEL_OK")
</pallas_src>

<mosaic_0001>
module attributes {stable_mosaic.version = 11 : i64} {
  func.func @_generator_kernel(%arg0: memref<4x32xf32, #tpu.memory_space<vmem>>, %arg1: memref<32x2048xf32, #tpu.memory_space<vmem>>, %arg2: memref<1x2048xf32, #tpu.memory_space<vmem>>, %arg3: memref<1x2048xf32, #tpu.memory_space<vmem>>, %arg4: memref<2x512x512xf32, #tpu.memory_space<vmem>>, %arg5: memref<1x512xf32, #tpu.memory_space<vmem>>, %arg6: memref<1x512xf32, #tpu.memory_space<vmem>>, %arg7: memref<2x512x512xf32, #tpu.memory_space<vmem>>, %arg8: memref<1x512xf32, #tpu.memory_space<vmem>>, %arg9: memref<1x512xf32, #tpu.memory_space<vmem>>, %arg10: memref<2x512x128xf32, #tpu.memory_space<vmem>>, %arg11: memref<1x128xf32, #tpu.memory_space<vmem>>, %arg12: memref<128x128xf32, #tpu.memory_space<vmem>>, %arg13: memref<16x512xf32, #tpu.memory_space<vmem>>, %arg14: memref<32x512xf32, #tpu.memory_space<vmem>>, %arg15: memref<64x512xf32, #tpu.memory_space<vmem>>) attributes {dimension_semantics = [], scalar_prefetch = 0 : i64, scratch_operands = 3 : i64, tpu.core_type = #tpu.core_type<tc>} {
    %c0 = arith.constant 0 : index
    %c0_0 = arith.constant 0 : index
    %0 = vector.load %arg0[%c0, %c0_0] : memref<4x32xf32, #tpu.memory_space<vmem>>, vector<4x32xf32>
    %c0_1 = arith.constant 0 : index
    %c0_2 = arith.constant 0 : index
    %1 = vector.load %arg1[%c0_1, %c0_2] : memref<32x2048xf32, #tpu.memory_space<vmem>>, vector<32x2048xf32>
    %cst = arith.constant dense<0.000000e+00> : vector<4x2048xf32>
    %2 = tpu.matmul %0, %1, %cst {dimension_numbers = #tpu.dot_dimension_numbers<[1], [0], [0], [1], [0, 0, 1, 1], [], []>} : vector<4x32xf32>, vector<32x2048xf32>, vector<4x2048xf32> -> vector<4x2048xf32>
    %cst_3 = arith.constant dense<0.000000e+00> : vector<2048xf32>
    %3 = vector.multi_reduction <add>, %2, %cst_3 [0] : vector<4x2048xf32> to vector<2048xf32>
    %4 = vector.shape_cast %3 : vector<2048xf32> to vector<1x2048xf32>
    %cst_4 = arith.constant 4.000000e+00 : f32
    %5 = vector.broadcast %cst_4 : f32 to vector<1x2048xf32>
    %6 = arith.divf %4, %5 : vector<1x2048xf32>
    %7 = arith.mulf %2, %2 : vector<4x2048xf32>
    %cst_5 = arith.constant dense<0.000000e+00> : vector<2048xf32>
    %8 = vector.multi_reduction <add>, %7, %cst_5 [0] : vector<4x2048xf32> to vector<2048xf32>
    %9 = vector.shape_cast %8 : vector<2048xf32> to vector<1x2048xf32>
    %cst_6 = arith.constant 4.000000e+00 : f32
    %10 = vector.broadcast %cst_6 : f32 to vector<1x2048xf32>
    %11 = arith.divf %9, %10 : vector<1x2048xf32>
    %12 = arith.mulf %6, %6 : vector<1x2048xf32>
    %13 = arith.subf %11, %12 : vector<1x2048xf32>
    %cst_7 = arith.constant 0.000000e+00 : f32
    %14 = vector.broadcast %cst_7 : f32 to vector<1x2048xf32>
    %15 = arith.maximumf %13, %14 : vector<1x2048xf32>
    %16 = vector.broadcast %6 : vector<1x2048xf32> to vector<4x2048xf32>
    %17 = arith.subf %2, %16 : vector<4x2048xf32>
    %cst_8 = arith.constant 9.99999974E-6 : f32
    %18 = vector.broadcast %cst_8 : f32 to vector<1x2048xf32>
    %19 = arith.addf %15, %18 : vector<1x2048xf32>
    %20 = math.rsqrt %19 : vector<1x2048xf32>
    %21 = vector.broadcast %20 : vector<1x2048xf32> to vector<4x2048xf32>
    %22 = arith.mulf %17, %21 : vector<4x2048xf32>
    %c0_9 = arith.constant 0 : index
    %c0_10 = arith.constant 0 : index
    %23 = vector.load %arg2[%c0_9, %c0_10] : memref<1x2048xf32, #tpu.memory_space<vmem>>, vector<1x2048xf32>
    %24 = vector.broadcast %23 : vector<1x2048xf32> to vector<4x2048xf32>
    %25 = arith.mulf %22, %24 : vector<4x2048xf32>
    %c0_11 = arith.constant 0 : index
    %c0_12 = arith.constant 0 : index
    %26 = vector.load %arg3[%c0_11, %c0_12] : memref<1x2048xf32, #tpu.memory_space<vmem>>, vector<1x2048xf32>
    %27 = vector.broadcast %26 : vector<1x2048xf32> to vector<4x2048xf32>
    %28 = arith.addf %25, %27 : vector<4x2048xf32>
    %cst_13 = arith.constant 0.000000e+00 : f32
    %29 = vector.broadcast %cst_13 : f32 to vector<4x2048xf32>
    %30 = arith.cmpf oge, %28, %29 : vector<4x2048xf32>
    %cst_14 = arith.constant 2.000000e-01 : f32
    %31 = vector.broadcast %cst_14 : f32 to vector<4x2048xf32>
    %32 = arith.mulf %31, %28 : vector<4x2048xf32>
    %33 = arith.select %30, %28, %32 : vector<4x2048xi1>, vector<4x2048xf32>
    %34 = vector.extract_strided_slice %33 {offsets = [0, 0], sizes = [4, 512], strides = [1, 1]} : vector<4x2048xf32> to vector<4x512xf32>
    %c0_15 = arith.constant 0 : index
    %c0_16 = arith.constant 0 : index
    %35 = vector.load %arg13[%c0_15, %c0_16] : memref<16x512xf32, #tpu.memory_space<vmem>>, vector<4x512xf32>
    tpu.vector_store %arg13[%c0_15, %c0_16], %34 {strides = array<i32>} : memref<16x512xf32, #tpu.memory_space<vmem>>, vector<4x512xf32>,
    %36 = vector.extract_strided_slice %33 {offsets = [0, 512], sizes = [4, 512], strides = [1, 1]} : vector<4x2048xf32> to vector<4x512xf32>
    %c4 = arith.constant 4 : index
    %c0_17 = arith.constant 0 : index
    %37 = vector.load %arg13[%c4, %c0_17] : memref<16x512xf32, #tpu.memory_space<vmem>>, vector<4x512xf32>
    tpu.vector_store %arg13[%c4, %c0_17], %36 {strides = array<i32>} : memref<16x512xf32, #tpu.memory_space<vmem>>, vector<4x512xf32>,
    %38 = vector.extract_strided_slice %33 {offsets = [0, 1024], sizes = [4, 512], strides = [1, 1]} : vector<4x2048xf32> to vector<4x512xf32>
    %c8 = arith.constant 8 : index
    %c0_18 = arith.constant 0 : index
    %39 = vector.load %arg13[%c8, %c0_18] : memref<16x512xf32, #tpu.memory_space<vmem>>, vector<4x512xf32>
    tpu.vector_store %arg13[%c8, %c0_18], %38 {strides = array<i32>} : memref<16x512xf32, #tpu.memory_space<vmem>>, vector<4x512xf32>,
    %40 = vector.extract_strided_slice %33 {offsets = [0, 1536], sizes = [4, 512], strides = [1, 1]} : vector<4x2048xf32> to vector<4x512xf32>
    %c12 = arith.constant 12 : index
    %c0_19 = arith.constant 0 : index
    %41 = vector.load %arg13[%c12, %c0_19] : memref<16x512xf32, #tpu.memory_space<vmem>>, vector<4x512xf32>
    tpu.vector_store %arg13[%c12, %c0_19], %40 {strides = array<i32>} : memref<16x512xf32, #tpu.memory_space<vmem>>, vector<4x512xf32>,
    %c0_20 = arith.constant 0 : index
    %c0_21 = arith.constant 0 : index
    %42 = vector.load %arg13[%c0_20, %c0_21] : memref<16x512xf32, #tpu.memory_space<vmem>>, vector<16x512xf32>
    %c0_22 = arith.constant 0 : index
    %c0_23 = arith.constant 0 : index
    %c0_24 = arith.constant 0 : index
    %43 = vector.load %arg4[%c0_22, %c0_23, %c0_24] : memref<2x512x512xf32, #tpu.memory_space<vmem>>, vector<1x512x512xf32>
    %44 = vector.shape_cast %43 : vector<1x512x512xf32> to vector<512x512xf32>
    %cst_25 = arith.constant dense<0.000000e+00> : vector<16x512xf32>
    %45 = tpu.matmul %42, %44, %cst_25 {dimension_numbers = #tpu.dot_dimension_numbers<[1], [0], [0], [1], [0, 0, 1, 1], [], []>} : vector<16x512xf32>, vector<512x512xf32>, vector<16x512xf32> -> vector<16x512xf32>
    %c0_26 = arith.constant 0 : index
    %c0_27 = arith.constant 0 : index
    %46 = vector.load %arg14[%c0_26, %c0_27] : memref<32x512xf32, #tpu.memory_space<vmem>>, vector<16x512xf32>
    tpu.vector_store %arg14[%c0_26, %c0_27], %45 {strides = array<i32>} : memref<32x512xf32, #tpu.memory_space<vmem>>, vector<16x512xf32>,
    %c1 = arith.constant 1 : index
    %c0_28 = arith.constant 0 : index
    %c0_29 = arith.constant 0 : index
    %47 = vector.load %arg4[%c1, %c0_28, %c0_29] : memref<2x512x512xf32, #tpu.memory_space<vmem>>, vector<1x512x512xf32>
    %48 = vector.shape_cast %47 : vector<1x512x512xf32> to vector<512x512xf32>
    %cst_30 = arith.constant dense<0.000000e+00> : vector<16x512xf32>
    %49 = tpu.matmul %42, %48, %cst_30 {dimension_numbers = #tpu.dot_dimension_numbers<[1], [0], [0], [1], [0, 0, 1, 1], [], []>} : vector<16x512xf32>, vector<512x512xf32>, vector<16x512xf32> -> vector<16x512xf32>
    %c16 = arith.constant 16 : index
    %c0_31 = arith.constant 0 : index
    %50 = vector.load %arg14[%c16, %c0_31] : memref<32x512xf32, #tpu.memory_space<vmem>>, vector<16x512xf32>
    tpu.vector_store %arg14[%c16, %c0_31], %49 {strides = array<i32>} : memref<32x512xf32, #tpu.memory_space<vmem>>, vector<16x512xf32>,
    %c0_32 = arith.constant 0 : index
    %c0_33 = arith.constant 0 : index
    %51 = vector.load %arg5[%c0_32, %c0_33] : memref<1x512xf32, #tpu.memory_space<vmem>>, vector<1x512xf32>
    %c0_34 = arith.constant 0 : index
    %c0_35 = arith.constant 0 : index
    %52 = vector.load %arg6[%c0_34, %c0_35] : memref<1x512xf32, #tpu.memory_space<vmem>>, vector<1x512xf32>
    %cst_36 = arith.constant 0.000000e+00 : f32
    %53 = vector.broadcast %cst_36 : f32 to vector<1x512xf32>
    %cst_37 = arith.constant 0.000000e+00 : f32
    %54 = vector.broadcast %cst_37 : f32 to vector<1x512xf32>
    %c0_38 = arith.constant 0 : index
    %c0_39 = arith.constant 0 : index
    %55 = vector.load %arg14[%c0_38, %c0_39] : memref<32x512xf32, #tpu.memory_space<vmem>>, vector<32x512xf32>
    %cst_40 = arith.constant dense<0.000000e+00> : vector<512xf32>
    %56 = vector.multi_reduction <add>, %55, %cst_40 [0] : vector<32x512xf32> to vector<512xf32>
    %57 = vector.shape_cast %56 : vector<512xf32> to vector<1x512xf32>
    %58 = arith.addf %53, %57 : vector<1x512xf32>
    %59 = arith.mulf %55, %55 : vector<32x512xf32>
    %cst_41 = arith.constant dense<0.000000e+00> : vector<512xf32>
    %60 = vector.multi_reduction <add>, %59, %cst_41 [0] : vector<32x512xf32> to vector<512xf32>
    %61 = vector.shape_cast %60 : vector<512xf32> to vector<1x512xf32>
    %62 = arith.addf %54, %61 : vector<1x512xf32>
    %c256_i32 = arith.constant 256 : i32
    %63 = tpu.dynamic_rotate %58 by %c256_i32 dim 1 : vector<1x512xf32>, i32 -> vector<1x512xf32>
    %64 = arith.addf %58, %63 : vector<1x512xf32>
    %c128_i32 = arith.constant 128 : i32
    %65 = tpu.dynamic_rotate %64 by %c128_i32 dim 1 : vector<1x512xf32>, i32 -> vector<1x512xf32>
    %66 = arith.addf %64, %65 : vector<1x512xf32>
    %c64_i32 = arith.constant 64 : i32
    %67 = tpu.dynamic_rotate %66 by %c64_i32 dim 1 : vector<1x512xf32>, i32 -> vector<1x512xf32>
    %68 = arith.addf %66, %67 : vector<1x512xf32>
    %c256_i32_42 = arith.constant 256 : i32
    %69 = tpu.dynamic_rotate %62 by %c256_i32_42 dim 1 : vector<1x512xf32>, i32 -> vector<1x512xf32>
    %70 = arith.addf %62, %69 : vector<1x512xf32>
    %c128_i32_43 = arith.constant 128 : i32
    %71 = tpu.dynamic_rotate %70 by %c128_i32_43 dim 1 : vector<1x512xf32>, i32 -> vector<1x512xf32>
    %72 = arith.addf %70, %71 : vector<1x512xf32>
    %c64_i32_44 = arith.constant 64 : i32
    %73 = tpu.dynamic_rotate %72 by %c64_i32_44 dim 1 : vector<1x512xf32>, i32 -> vector<1x512xf32>
    %74 = arith.addf %72, %73 : vector<1x512xf32>
    %cst_45 = arith.constant 2.560000e+02 : f32
    %75 = vector.broadcast %cst_45 : f32 to vector<1x512xf32>
    %76 = arith.divf %68, %75 : vector<1x512xf32>
    %cst_46 = arith.constant 2.560000e+02 : f32
    %77 = vector.broadcast %cst_46 : f32 to vector<1x512xf32>
    %78 = arith.divf %74, %77 : vector<1x512xf32>
    %79 = arith.mulf %76, %76 : vector<1x512xf32>
    %80 = arith.subf %78, %79 : vector<1x512xf32>
    %cst_47 = arith.constant 0.000000e+00 : f32
    %81 = vector.broadcast %cst_47 : f32 to vector<1x512xf32>
    %82 = arith.maximumf %80, %81 : vector<1x512xf32>
    %cst_48 = arith.constant 9.99999974E-6 : f32
    %83 = vector.broadcast %cst_48 : f32 to vector<1x512xf32>
    %84 = arith.addf %82, %83 : vector<1x512xf32>
    %85 = math.rsqrt %84 : vector<1x512xf32>
    %86 = arith.mulf %85, %51 : vector<1x512xf32>
    %87 = arith.mulf %76, %86 : vector<1x512xf32>
    %88 = arith.subf %52, %87 : vector<1x512xf32>
    %c0_49 = arith.constant 0 : index
    %c0_50 = arith.constant 0 : index
    %89 = vector.load %arg14[%c0_49, %c0_50] : memref<32x512xf32, #tpu.memory_space<vmem>>, vector<32x512xf32>
    %90 = vector.broadcast %86 : vector<1x512xf32> to vector<32x512xf32>
    %91 = arith.mulf %89, %90 : vector<32x512xf32>
    %92 = vector.broadcast %88 : vector<1x512xf32> to vector<32x512xf32>
    %93 = arith.addf %91, %92 : vector<32x512xf32>
    %cst_51 = arith.constant 0.000000e+00 : f32
    %94 = vector.broadcast %cst_51 : f32 to vector<32x512xf32>
    %95 = arith.cmpf oge, %93, %94 : vector<32x512xf32>
    %cst_52 = arith.constant 2.000000e-01 : f32
    %96 = vector.broadcast %cst_52 : f32 to vector<32x512xf32>
    %97 = arith.mulf %96, %93 : vector<32x512xf32>
    %98 = arith.select %95, %93, %97 : vector<32x512xi1>, vector<32x512xf32>
    %c0_53 = arith.constant 0 : index
    %c0_54 = arith.constant 0 : index
    %c0_55 = arith.constant 0 : index
    %99 = vector.load %arg7[%c0_53, %c0_54, %c0_55] : memref<2x512x512xf32, #tpu.memory_space<vmem>>, vector<1x512x512xf32>
    %100 = vector.shape_cast %99 : vector<1x512x512xf32> to vector<512x512xf32>
    %cst_56 = arith.constant dense<0.000000e+00> : vector<32x512xf32>
    %101 = tpu.matmul %98, %100, %cst_56 {dimension_numbers = #tpu.dot_dimension_numbers<[1], [0], [0], [1], [0, 0, 1, 1], [], []>} : vector<32x512xf32>, vector<512x512xf32>, vector<32x512xf32> -> vector<32x512xf32>
    %c0_57 = arith.constant 0 : index
    %c0_58 = arith.constant 0 : index
    %102 = vector.load %arg15[%c0_57, %c0_58] : memref<64x512xf32, #tpu.memory_space<vmem>>, vector<32x512xf32>
    tpu.vector_store %arg15[%c0_57, %c0_58], %101 {strides = array<i32>} : memref<64x512xf32, #tpu.memory_space<vmem>>, vector<32x512xf32>,
    %c1_59 = arith.constant 1 : index
    %c0_60 = arith.constant 0 : index
    %c0_61 = arith.constant 0 : index
    %103 = vector.load %arg7[%c1_59, %c0_60, %c0_61] : memref<2x512x512xf32, #tpu.memory_space<vmem>>, vector<1x512x512xf32>
    %104 = vector.shape_cast %103 : vector<1x512x512xf32> to vector<512x512xf32>
    %cst_62 = arith.constant dense<0.000000e+00> : vector<32x512xf32>
    %105 = tpu.matmul %98, %104, %cst_62 {dimension_numbers = #tpu.dot_dimension_numbers<[1], [0], [0], [1], [0, 0, 1, 1], [], []>} : vector<32x512xf32>, vector<512x512xf32>, vector<32x512xf32> -> vector<32x512xf32>
    %c32 = arith.constant 32 : index
    %c0_63 = arith.constant 0 : index
    %106 = vector.load %arg15[%c32, %c0_63] : memref<64x512xf32, #tpu.memory_space<vmem>>, vector<32x512xf32>
    tpu.vector_store %arg15[%c32, %c0_63], %105 {strides = array<i32>} : memref<64x512xf32, #tpu.memory_space<vmem>>, vector<32x512xf32>,
    %c0_64 = arith.constant 0 : index
    %c0_65 = arith.constant 0 : index
    %107 = vector.load %arg8[%c0_64, %c0_65] : memref<1x512xf32, #tpu.memory_space<vmem>>, vector<1x512xf32>
    %c0_66 = arith.constant 0 : index
    %c0_67 = arith.constant 0 : index
    %108 = vector.load %arg9[%c0_66, %c0_67] : memref<1x512xf32, #tpu.memory_space<vmem>>, vector<1x512xf32>
    %c0_68 = arith.constant 0 : index
    %c0_69 = arith.constant 0 : index
    %109 = vector.load %arg11[%c0_68, %c0_69] : memref<1x128xf32, #tpu.memory_space<vmem>>, vector<1x128xf32>
    %cst_70 = arith.constant 0.000000e+00 : f32
    %110 = vector.broadcast %cst_70 : f32 to vector<1x512xf32>
    %cst_71 = arith.constant 0.000000e+00 : f32
    %111 = vector.broadcast %cst_71 : f32 to vector<1x512xf32>
    %c0_72 = arith.constant 0 : index
    %c0_73 = arith.constant 0 : index
    %112 = vector.load %arg15[%c0_72, %c0_73] : memref<64x512xf32, #tpu.memory_space<vmem>>, vector<32x512xf32>
    %cst_74 = arith.constant dense<0.000000e+00> : vector<512xf32>
    %113 = vector.multi_reduction <add>, %112, %cst_74 [0] : vector<32x512xf32> to vector<512xf32>
    %114 = vector.shape_cast %113 : vector<512xf32> to vector<1x512xf32>
    %115 = arith.addf %110, %114 : vector<1x512xf32>
    %116 = arith.mulf %112, %112 : vector<32x512xf32>
    %cst_75 = arith.constant dense<0.000000e+00> : vector<512xf32>
    %117 = vector.multi_reduction <add>, %116, %cst_75 [0] : vector<32x512xf32> to vector<512xf32>
    %118 = vector.shape_cast %117 : vector<512xf32> to vector<1x512xf32>
    %119 = arith.addf %111, %118 : vector<1x512xf32>
    %c32_76 = arith.constant 32 : index
    %c0_77 = arith.constant 0 : index
    %120 = vector.load %arg15[%c32_76, %c0_77] : memref<64x512xf32, #tpu.memory_space<vmem>>, vector<32x512xf32>
    %cst_78 = arith.constant dense<0.000000e+00> : vector<512xf32>
    %121 = vector.multi_reduction <add>, %120, %cst_78 [0] : vector<32x512xf32> to vector<512xf32>
    %122 = vector.shape_cast %121 : vector<512xf32> to vector<1x512xf32>
    %123 = arith.addf %115, %122 : vector<1x512xf32>
    %124 = arith.mulf %120, %120 : vector<32x512xf32>
    %cst_79 = arith.constant dense<0.000000e+00> : vector<512xf32>
    %125 = vector.multi_reduction <add>, %124, %cst_79 [0] : vector<32x512xf32> to vector<512xf32>
    %126 = vector.shape_cast %125 : vector<512xf32> to vector<1x512xf32>
    %127 = arith.addf %119, %126 : vector<1x512xf32>
    %c256_i32_80 = arith.constant 256 : i32
    %128 = tpu.dynamic_rotate %123 by %c256_i32_80 dim 1 : vector<1x512xf32>, i32 -> vector<1x512xf32>
    %129 = arith.addf %123, %128 : vector<1x512xf32>
    %c128_i32_81 = arith.constant 128 : i32
    %130 = tpu.dynamic_rotate %129 by %c128_i32_81 dim 1 : vector<1x512xf32>, i32 -> vector<1x512xf32>
    %131 = arith.addf %129, %130 : vector<1x512xf32>
    %c64_i32_82 = arith.constant 64 : i32
    %132 = tpu.dynamic_rotate %131 by %c64_i32_82 dim 1 : vector<1x512xf32>, i32 -> vector<1x512xf32>
    %133 = arith.addf %131, %132 : vector<1x512xf32>
    %c32_i32 = arith.constant 32 : i32
    %134 = tpu.dynamic_rotate %133 by %c32_i32 dim 1 : vector<1x512xf32>, i32 -> vector<1x512xf32>
    %135 = arith.addf %133, %134 : vector<1x512xf32>
    %c256_i32_83 = arith.constant 256 : i32
    %136 = tpu.dynamic_rotate %127 by %c256_i32_83 dim 1 : vector<1x512xf32>, i32 -> vector<1x512xf32>
    %137 = arith.addf %127, %136 : vector<1x512xf32>
    %c128_i32_84 = arith.constant 128 : i32
    %138 = tpu.dynamic_rotate %137 by %c128_i32_84 dim 1 : vector<1x512xf32>, i32 -> vector<1x512xf32>
    %139 = arith.addf %137, %138 : vector<1x512xf32>
    %c64_i32_85 = arith.constant 64 : i32
    %140 = tpu.dynamic_rotate %139 by %c64_i32_85 dim 1 : vector<1x512xf32>, i32 -> vector<1x512xf32>
    %141 = arith.addf %139, %140 : vector<1x512xf32>
    %c32_i32_86 = arith.constant 32 : i32
    %142 = tpu.dynamic_rotate %141 by %c32_i32_86 dim 1 : vector<1x512xf32>, i32 -> vector<1x512xf32>
    %143 = arith.addf %141, %142 : vector<1x512xf32>
    %cst_87 = arith.constant 1.024000e+03 : f32
    %144 = vector.broadcast %cst_87 : f32 to vector<1x512xf32>
    %145 = arith.divf %135, %144 : vector<1x512xf32>
    %cst_88 = arith.constant 1.024000e+03 : f32
    %146 = vector.broadcast %cst_88 : f32 to vector<1x512xf32>
    %147 = arith.divf %143, %146 : vector<1x512xf32>
    %148 = arith.mulf %145, %145 : vector<1x512xf32>
    %149 = arith.subf %147, %148 : vector<1x512xf32>
    %cst_89 = arith.constant 0.000000e+00 : f32
    %150 = vector.broadcast %cst_89 : f32 to vector<1x512xf32>
    %151 = arith.maximumf %149, %150 : vector<1x512xf32>
    %cst_90 = arith.constant 9.99999974E-6 : f32
    %152 = vector.broadcast %cst_90 : f32 to vector<1x512xf32>
    %153 = arith.addf %151, %152 : vector<1x512xf32>
    %154 = math.rsqrt %153 : vector<1x512xf32>
    %155 = arith.mulf %154, %107 : vector<1x512xf32>
    %156 = arith.mulf %145, %155 : vector<1x512xf32>
    %157 = arith.subf %108, %156 : vector<1x512xf32>
    %c0_91 = arith.constant 0 : index
    %c0_92 = arith.constant 0 : index
    %158 = vector.load %arg15[%c0_91, %c0_92] : memref<64x512xf32, #tpu.memory_space<vmem>>, vector<32x512xf32>
    %159 = vector.broadcast %155 : vector<1x512xf32> to vector<32x512xf32>
    %160 = arith.mulf %158, %159 : vector<32x512xf32>
    %161 = vector.broadcast %157 : vector<1x512xf32> to vector<32x512xf32>
    %162 = arith.addf %160, %161 : vector<32x512xf32>
    %cst_93 = arith.constant 0.000000e+00 : f32
    %163 = vector.broadcast %cst_93 : f32 to vector<32x512xf32>
    %164 = arith.cmpf oge, %162, %163 : vector<32x512xf32>
    %cst_94 = arith.constant 2.000000e-01 : f32
    %165 = vector.broadcast %cst_94 : f32 to vector<32x512xf32>
    %166 = arith.mulf %165, %162 : vector<32x512xf32>
    %167 = arith.select %164, %162, %166 : vector<32x512xi1>, vector<32x512xf32>
    %c0_95 = arith.constant 0 : index
    %c0_96 = arith.constant 0 : index
    %c0_97 = arith.constant 0 : index
    %168 = vector.load %arg10[%c0_95, %c0_96, %c0_97] : memref<2x512x128xf32, #tpu.memory_space<vmem>>, vector<1x512x128xf32>
    %169 = vector.shape_cast %168 : vector<1x512x128xf32> to vector<512x128xf32>
    %cst_98 = arith.constant dense<0.000000e+00> : vector<32x128xf32>
    %170 = tpu.matmul %167, %169, %cst_98 {dimension_numbers = #tpu.dot_dimension_numbers<[1], [0], [0], [1], [0, 0, 1, 1], [], []>} : vector<32x512xf32>, vector<512x128xf32>, vector<32x128xf32> -> vector<32x128xf32>
    %171 = vector.broadcast %109 : vector<1x128xf32> to vector<32x128xf32>
    %172 = arith.addf %170, %171 : vector<32x128xf32>
    %173 = math.tanh %172 : vector<32x128xf32>
    %c0_99 = arith.constant 0 : index
    %c0_100 = arith.constant 0 : index
    %174 = vector.load %arg12[%c0_99, %c0_100] : memref<128x128xf32, #tpu.memory_space<vmem>>, vector<32x128xf32>
    tpu.vector_store %arg12[%c0_99, %c0_100], %173 {strides = array<i32>} : memref<128x128xf32, #tpu.memory_space<vmem>>, vector<32x128xf32>,
    %c1_101 = arith.constant 1 : index
    %c0_102 = arith.constant 0 : index
    %c0_103 = arith.constant 0 : index
    %175 = vector.load %arg10[%c1_101, %c0_102, %c0_103] : memref<2x512x128xf32, #tpu.memory_space<vmem>>, vector<1x512x128xf32>
    %176 = vector.shape_cast %175 : vector<1x512x128xf32> to vector<512x128xf32>
    %cst_104 = arith.constant dense<0.000000e+00> : vector<32x128xf32>
    %177 = tpu.matmul %167, %176, %cst_104 {dimension_numbers = #tpu.dot_dimension_numbers<[1], [0], [0], [1], [0, 0, 1, 1], [], []>} : vector<32x512xf32>, vector<512x128xf32>, vector<32x128xf32> -> vector<32x128xf32>
    %178 = vector.broadcast %109 : vector<1x128xf32> to vector<32x128xf32>
    %179 = arith.addf %177, %178 : vector<32x128xf32>
    %180 = math.tanh %179 : vector<32x128xf32>
    %c64 = arith.constant 64 : index
    %c0_105 = arith.constant 0 : index
    %181 = vector.load %arg12[%c64, %c0_105] : memref<128x128xf32, #tpu.memory_space<vmem>>, vector<32x128xf32>
    tpu.vector_store %arg12[%c64, %c0_105], %180 {strides = array<i32>} : memref<128x128xf32, #tpu.memory_space<vmem>>, vector<32x128xf32>,
    %c32_106 = arith.constant 32 : index
    %c0_107 = arith.constant 0 : index
    %182 = vector.load %arg15[%c32_106, %c0_107] : memref<64x512xf32, #tpu.memory_space<vmem>>, vector<32x512xf32>
    %183 = vector.broadcast %155 : vector<1x512xf32> to vector<32x512xf32>
    %184 = arith.mulf %182, %183 : vector<32x512xf32>
    %185 = vector.broadcast %157 : vector<1x512xf32> to vector<32x512xf32>
    %186 = arith.addf %184, %185 : vector<32x512xf32>
    %cst_108 = arith.constant 0.000000e+00 : f32
    %187 = vector.broadcast %cst_108 : f32 to vector<32x512xf32>
    %188 = arith.cmpf oge, %186, %187 : vector<32x512xf32>
    %cst_109 = arith.constant 2.000000e-01 : f32
    %189 = vector.broadcast %cst_109 : f32 to vector<32x512xf32>
    %190 = arith.mulf %189, %186 : vector<32x512xf32>
    %191 = arith.select %188, %186, %190 : vector<32x512xi1>, vector<32x512xf32>
    %c0_110 = arith.constant 0 : index
    %c0_111 = arith.constant 0 : index
    %c0_112 = arith.constant 0 : index
    %192 = vector.load %arg10[%c0_110, %c0_111, %c0_112] : memref<2x512x128xf32, #tpu.memory_space<vmem>>, vector<1x512x128xf32>
    %193 = vector.shape_cast %192 : vector<1x512x128xf32> to vector<512x128xf32>
    %cst_113 = arith.constant dense<0.000000e+00> : vector<32x128xf32>
    %194 = tpu.matmul %191, %193, %cst_113 {dimension_numbers = #tpu.dot_dimension_numbers<[1], [0], [0], [1], [0, 0, 1, 1], [], []>} : vector<32x512xf32>, vector<512x128xf32>, vector<32x128xf32> -> vector<32x128xf32>
    %195 = vector.broadcast %109 : vector<1x128xf32> to vector<32x128xf32>
    %196 = arith.addf %194, %195 : vector<32x128xf32>
    %197 = math.tanh %196 : vector<32x128xf32>
    %c32_114 = arith.constant 32 : index
    %c0_115 = arith.constant 0 : index
    %198 = vector.load %arg12[%c32_114, %c0_115] : memref<128x128xf32, #tpu.memory_space<vmem>>, vector<32x128xf32>
    tpu.vector_store %arg12[%c32_114, %c0_115], %197 {strides = array<i32>} : memref<128x128xf32, #tpu.memory_space<vmem>>, vector<32x128xf32>,
    %c1_116 = arith.constant 1 : index
    %c0_117 = arith.constant 0 : index
    %c0_118 = arith.constant 0 : index
    %199 = vector.load %arg10[%c1_116, %c0_117, %c0_118] : memref<2x512x128xf32, #tpu.memory_space<vmem>>, vector<1x512x128xf32>
    %200 = vector.shape_cast %199 : vector<1x512x128xf32> to vector<512x128xf32>
    %cst_119 = arith.constant dense<0.000000e+00> : vector<32x128xf32>
    %201 = tpu.matmul %191, %200, %cst_119 {dimension_numbers = #tpu.dot_dimension_numbers<[1], [0], [0], [1], [0, 0, 1, 1], [], []>} : vector<32x512xf32>, vector<512x128xf32>, vector<32x128xf32> -> vector<32x128xf32>
    %202 = vector.broadcast %109 : vector<1x128xf32> to vector<32x128xf32>
    %203 = arith.addf %201, %202 : vector<32x128xf32>
    %204 = math.tanh %203 : vector<32x128xf32>
    %c96 = arith.constant 96 : index
    %c0_120 = arith.constant 0 : index
    %205 = vector.load %arg12[%c96, %c0_120] : memref<128x128xf32, #tpu.memory_space<vmem>>, vector<32x128xf32>
    tpu.vector_store %arg12[%c96, %c0_120], %204 {strides = array<i32>} : memref<128x128xf32, #tpu.memory_space<vmem>>, vector<32x128xf32>,
    return
  }
}

</mosaic_0001>

<llo_original>
// kernel: generator_forward.1
$region0: #{generator_forward.1}
  #allocation0 [shape = 'u32[]', space=smem, size = 0x4, offset = 0x4, fixed_abs, tag = 'smem constant byte address 0x4 - core index']
  #allocation1 [shape = 'u32[144,128]{1,0:T(1,128)}', space=vmem, size = 0x12000, scoped, tag = 'internal scratch']
  #allocation2 [shape = 'f32[16,512]{1,0:T(8,128)}', space=vmem, size = 0x8000, scoped, tag = 'scratch operand']
  #allocation3 [shape = 'f32[32,512]{1,0:T(8,128)}', space=vmem, size = 0x10000, scoped, tag = 'scratch operand']
  #allocation4 [shape = 'f32[64,512]{1,0:T(8,128)}', space=vmem, size = 0x20000, scoped, tag = 'scratch operand']
  %s0 = inlined_call_operand.hbm [shape: f32[4,32], index: 0, kind: input, shape index: {}]
  %s1 = inlined_call_operand.hbm [shape: f32[32,2048], index: 1, kind: input, shape index: {}]
  %s2 = inlined_call_operand.hbm [shape: f32[1,2048], index: 2, kind: input, shape index: {}]
  %s3 = inlined_call_operand.hbm [shape: f32[1,2048], index: 3, kind: input, shape index: {}]
  %s4 = inlined_call_operand.hbm [shape: f32[2,512,512], index: 4, kind: input, shape index: {}]
  %s5 = inlined_call_operand.hbm [shape: f32[1,512], index: 5, kind: input, shape index: {}]
  %s6 = inlined_call_operand.hbm [shape: f32[1,512], index: 6, kind: input, shape index: {}]
  %s7 = inlined_call_operand.hbm [shape: f32[2,512,512], index: 7, kind: input, shape index: {}]
  %s8 = inlined_call_operand.hbm [shape: f32[1,512], index: 8, kind: input, shape index: {}]
  %s9 = inlined_call_operand.hbm [shape: f32[1,512], index: 9, kind: input, shape index: {}]
  %s10 = inlined_call_operand.hbm [shape: f32[2,512,128], index: 10, kind: input, shape index: {}]
  %s11 = inlined_call_operand.hbm [shape: f32[1,128], index: 11, kind: input, shape index: {}]
  %s12 = inlined_call_operand.vmem [shape: f32[128,128], index: 12, kind: output, shape index: {}]
  %s13 = sld [smem:[#allocation0]]
  $region106: #{generator_forward.1} parent=0
    _
  %s15 = ssub.s32 1, %s13
  %s16 = scalar_select 0, %s15, %s13
  $region1: #{generator_forward.1} parent=0
    #allocation5 [shape = 'u8[2048]{0}', space=vmem, size = 0x800, scoped, tag = 'input window, operand 0, single buffered']
    #allocation6 [shape = 's32[1]{0}', space=sflag, size = 0x4, scoped, tag = 'scoped memory for generator_forward.1']
    #allocation7 [shape = 'u8[262144]{0}', space=vmem, size = 0x40000, scoped, tag = 'input window, operand 1, single buffered']
    #allocation8 [shape = 's32[1]{0}', space=sflag, size = 0x4, scoped, tag = 'scoped memory for generator_forward.1']
    #allocation9 [shape = 'u8[8192]{0}', space=vmem, size = 0x2000, scoped, tag = 'input window, operand 2, single buffered']
    #allocation10 [shape = 'u8[8192]{0}', space=vmem, size = 0x2000, scoped, tag = 'input window, operand 3, single buffered']
    #allocation11 [shape = 's32[1]{0}', space=sflag, size = 0x4, scoped, tag = 'scoped memory for generator_forward.1']
    #allocation12 [shape = 'u8[2097152]{0}', space=vmem, size = 0x200000, scoped, tag = 'input window, operand 4, single buffered']
    #allocation13 [shape = 'u8[2048]{0}', space=vmem, size = 0x800, scoped, tag = 'input window, operand 5, single buffered']
    #allocation14 [shape = 's32[1]{0}', space=sflag, size = 0x4, scoped, tag = 'scoped memory for generator_forward.1']
    #allocation15 [shape = 'u8[2048]{0}', space=vmem, size = 0x800, scoped, tag = 'input window, operand 6, single buffered']
    #allocation16 [shape = 'u8[2097152]{0}', space=vmem, size = 0x200000, scoped, tag = 'input window, operand 7, single buffered']
    #allocation17 [shape = 's32[1]{0}', space=sflag, size = 0x4, scoped, tag = 'scoped memory for generator_forward.1']
    #allocation18 [shape = 'u8[2048]{0}', space=vmem, size = 0x800, scoped, tag = 'input window, operand 8, single buffered']
    #allocation19 [shape = 'u8[2048]{0}', space=vmem, size = 0x800, scoped, tag = 'input window, operand 9, single buffered']
    #allocation20 [shape = 's32[1]{0}', space=sflag, size = 0x4, scoped, tag = 'scoped memory for generator_forward.1']
    #allocation21 [shape = 'u8[524288]{0}', space=vmem, size = 0x80000, scoped, tag = 'input window, operand 10, single buffered']
    #allocation22 [shape = 'u8[512]{0}', space=vmem, size = 0x400, scoped, tag = 'input window, operand 11, single buffered']
    #allocation23 [shape = 's32[1]{0}', space=sflag, size = 0x4, scoped, tag = 'scoped memory for generator_forward.1']
    %17 = vsyncpa [#allocation6], 0
    %18 = vsyncpa [#allocation8], 0
    %19 = vsyncpa [#allocation11], 0
    %20 = vsyncpa [#allocation14], 0
    %21 = vsyncpa [#allocation17], 0
    %22 = vsyncpa [#allocation20], 0
    %23 = vsyncpa [#allocation23], 0
    // Predicated region
    $region2: #{generator_forward.1} parent=1 // pred_check
      _
    $region3: #{generator_forward.1} parent=1 // pred_check_branch
      %25 = sbr.rel (0) target = $region5
    $region4: #{generator_forward.1} parent=1 // pred_region
      %s27 = ssub.s32 64, 64
      %28 = vsyncadd [#allocation6], %s27
      %s30 = sshll.u32 [#allocation5], 4
      %s31 = int_to_ptr.vmem [resolvable:$true] %s30
      %33 = dma.hbm_to_vmem [thread:$0]  %s0, 64, %s31, [#allocation6]
    $region5: #{generator_forward.1} parent=1 // pred_fallthru
      _
    // Predicated region
    $region6: #{generator_forward.1} parent=1 // pred_check
      _
    $region7: #{generator_forward.1} parent=1 // pred_check_branch
      %35 = sbr.rel (0) target = $region9
    $region8: #{generator_forward.1} parent=1 // pred_region
      %s37 = ssub.s32 8192, 8192
      %38 = vsyncadd [#allocation8], %s37
      %s39 = sshll.u32 [#allocation7], 4
      %s40 = int_to_ptr.vmem [resolvable:$true] %s39
      %45 = dma.hbm_to_vmem [thread:$0]  %s1, 8192, %s40, [#allocation8], 2048, 2048, 128
    $region9: #{generator_forward.1} parent=1 // pred_fallthru
      _
    // Predicated region
    $region10: #{generator_forward.1} parent=1 // pred_check
      _
    $region11: #{generator_forward.1} parent=1 // pred_check_branch
      %47 = sbr.rel (0) target = $region13
    $region12: #{generator_forward.1} parent=1 // pred_region
      %s49 = ssub.s32 256, 256
      %50 = vsyncadd [#allocation8], %s49
      %s52 = sshll.u32 [#allocation9], 4
      %s53 = int_to_ptr.vmem [resolvable:$true] %s52
      %55 = dma.hbm_to_vmem [thread:$0]  %s2, 256, %s53, [#allocation8]
    $region13: #{generator_forward.1} parent=1 // pred_fallthru
      _
    // Predicated region
    $region14: #{generator_forward.1} parent=1 // pred_check
      _
    $region15: #{generator_forward.1} parent=1 // pred_check_branch
      %57 = sbr.rel (0) target = $region17
    $region16: #{generator_forward.1} parent=1 // pred_region
      %s59 = ssub.s32 256, 256
      %60 = vsyncadd [#allocation11], %s59
      %s62 = sshll.u32 [#allocation10], 4
      %s63 = int_to_ptr.vmem [resolvable:$true] %s62
      %65 = dma.hbm_to_vmem [thread:$0]  %s3, 256, %s63, [#allocation11]
    $region17: #{generator_forward.1} parent=1 // pred_fallthru
      _
    // Predicated region
    $region18: #{generator_forward.1} parent=1 // pred_check
      _
    $region19: #{generator_forward.1} parent=1 // pred_check_branch
      %67 = sbr.rel (0) target = $region21
    $region20: #{generator_forward.1} parent=1 // pred_region
      %s69 = ssub.s32 65536, 65536
      %70 = vsyncadd [#allocation11], %s69
      %s71 = sshll.u32 [#allocation12], 4
      %s72 = int_to_ptr.vmem [resolvable:$true] %s71
      %77 = dma.hbm_to_vmem [thread:$0]  %s4, 65536, %s72, [#allocation11], 512, 512, 32
    $region21: #{generator_forward.1} parent=1 // pred_fallthru
      _
    // Predicated region
    $region22: #{generator_forward.1} parent=1 // pred_check
      _
    $region23: #{generator_forward.1} parent=1 // pred_check_branch
      %79 = sbr.rel (0) target = $region25
    $region24: #{generator_forward.1} parent=1 // pred_region
      %s81 = ssub.s32 64, 64
      %82 = vsyncadd [#allocation14], %s81
      %s84 = sshll.u32 [#allocation13], 4
      %s85 = int_to_ptr.vmem [resolvable:$true] %s84
      %87 = dma.hbm_to_vmem [thread:$0]  %s5, 64, %s85, [#allocation14]
    $region25: #{generator_forward.1} parent=1 // pred_fallthru
      _
    // Predicated region
    $region26: #{generator_forward.1} parent=1 // pred_check
      _
    $region27: #{generator_forward.1} parent=1 // pred_check_branch
      %89 = sbr.rel (0) target = $region29
    $region28: #{generator_forward.1} parent=1 // pred_region
      %s91 = ssub.s32 64, 64
      %92 = vsyncadd [#allocation14], %s91
      %s94 = sshll.u32 [#allocation15], 4
      %s95 = int_to_ptr.vmem [resolvable:$true] %s94
      %97 = dma.hbm_to_vmem [thread:$0]  %s6, 64, %s95, [#allocation14]
    $region29: #{generator_forward.1} parent=1 // pred_fallthru
      _
    // Predicated region
    $region30: #{generator_forward.1} parent=1 // pred_check
      _
    $region31: #{generator_forward.1} parent=1 // pred_check_branch
      %99 = sbr.rel (0) target = $region33
    $region32: #{generator_forward.1} parent=1 // pred_region
      %s101 = ssub.s32 65536, 65536
      %102 = vsyncadd [#allocation17], %s101
      %s103 = sshll.u32 [#allocation16], 4
      %s104 = int_to_ptr.vmem [resolvable:$true] %s103
      %109 = dma.hbm_to_vmem [thread:$0]  %s7, 65536, %s104, [#allocation17], 512, 512, 32
    $region33: #{generator_forward.1} parent=1 // pred_fallthru
      _
    // Predicated region
    $region34: #{generator_forward.1} parent=1 // pred_check
      _
    $region35: #{generator_forward.1} parent=1 // pred_check_branch
      %111 = sbr.rel (0) target = $region37
    $region36: #{generator_forward.1} parent=1 // pred_region
      %s113 = ssub.s32 64, 64
      %114 = vsyncadd [#allocation17], %s113
      %s116 = sshll.u32 [#allocation18], 4
      %s117 = int_to_ptr.vmem [resolvable:$true] %s116
      %119 = dma.hbm_to_vmem [thread:$0]  %s8, 64, %s117, [#allocation17]
    $region37: #{generator_forward.1} parent=1 // pred_fallthru
      _
    // Predicated region
    $region38: #{generator_forward.1} parent=1 // pred_check
      _
    $region39: #{generator_forward.1} parent=1 // pred_check_branch
      %121 = sbr.rel (0) target = $region41
    $region40: #{generator_forward.1} parent=1 // pred_region
      %s123 = ssub.s32 64, 64
      %124 = vsyncadd [#allocation20], %s123
      %s126 = sshll.u32 [#allocation19], 4
      %s127 = int_to_ptr.vmem [resolvable:$true] %s126
      %129 = dma.hbm_to_vmem [thread:$0]  %s9, 64, %s127, [#allocation20]
    $region41: #{generator_forward.1} parent=1 // pred_fallthru
      _
    // Predicated region
    $region42: #{generator_forward.1} parent=1 // pred_check
      _
    $region43: #{generator_forward.1} parent=1 // pred_check_branch
      %131 = sbr.rel (0) target = $region45
    $region44: #{generator_forward.1} parent=1 // pred_region
      %s133 = ssub.s32 16384, 16384
      %134 = vsyncadd [#allocation20], %s133
      %s135 = sshll.u32 [#allocation21], 4
      %s136 = int_to_ptr.vmem [resolvable:$true] %s135
      %141 = dma.hbm_to_vmem [thread:$0]  %s10, 16384, %s136, [#allocation20], 128, 128, 8
    $region45: #{generator_forward.1} parent=1 // pred_fallthru
      _
    // Predicated region
    $region46: #{generator_forward.1} parent=1 // pred_check
      _
    $region47: #{generator_forward.1} parent=1 // pred_check_branch
      %143 = sbr.rel (0) target = $region49
    $region48: #{generator_forward.1} parent=1 // pred_region
      %s145 = ssub.s32 16, 16
      %146 = vsyncadd [#allocation23], %s145
      %s148 = sshll.u32 [#allocation22], 4
      %s149 = int_to_ptr.vmem [resolvable:$true] %s148
      %151 = dma.hbm_to_vmem [thread:$0]  %s11, 16, %s149, [#allocation23]
    $region49: #{generator_forward.1} parent=1 // pred_fallthru
      _
    // Predicated region
    $region50: #{generator_forward.1} parent=1 // pred_check
      _
    $region51: #{generator_forward.1} parent=1 // pred_check_branch
      %153 = sbr.rel (0) target = $region53
    $region52: #{generator_forward.1} parent=1 // pred_region
      %154 = dma.done [#allocation6], 64
    $region53: #{generator_forward.1} parent=1 // pred_fallthru
      _
    // Predicated region
    $region54: #{generator_forward.1} parent=1 // pred_check
      _
    $region55: #{generator_forward.1} parent=1 // pred_check_branch
      %156 = sbr.rel (0) target = $region57
    $region56: #{generator_forward.1} parent=1 // pred_region
      %157 = dma.done [#allocation8], 8192
    $region57: #{generator_forward.1} parent=1 // pred_fallthru
      _
    // Predicated region
    $region58: #{generator_forward.1} parent=1 // pred_check
      _
    $region59: #{generator_forward.1} parent=1 // pred_check_branch
      %159 = sbr.rel (0) target = $region61
    $region60: #{generator_forward.1} parent=1 // pred_region
      %160 = dma.done [#allocation8], 256
    $region61: #{generator_forward.1} parent=1 // pred_fallthru
      _
    // Predicated region
    $region62: #{generator_forward.1} parent=1 // pred_check
      _
    $region63: #{generator_forward.1} parent=1 // pred_check_branch
      %162 = sbr.rel (0) target = $region65
    $region64: #{generator_forward.1} parent=1 // pred_region
      %163 = dma.done [#allocation11], 256
    $region65: #{generator_forward.1} parent=1 // pred_fallthru
      _
    // Predicated region
    $region66: #{generator_forward.1} parent=1 // pred_check
      _
    $region67: #{generator_forward.1} parent=1 // pred_check_branch
      %165 = sbr.rel (0) target = $region69
    $region68: #{generator_forward.1} parent=1 // pred_region
      %166 = dma.done [#allocation11], 65536
    $region69: #{generator_forward.1} parent=1 // pred_fallthru
      _
    // Predicated region
    $region70: #{generator_forward.1} parent=1 // pred_check
      _
    $region71: #{generator_forward.1} parent=1 // pred_check_branch
      %168 = sbr.rel (0) target = $region73
    $region72: #{generator_forward.1} parent=1 // pred_region
      %169 = dma.done [#allocation14], 64
    $region73: #{generator_forward.1} parent=1 // pred_fallthru
      _
    // Predicated region
    $region74: #{generator_forward.1} parent=1 // pred_check
      _
    $region75: #{generator_forward.1} parent=1 // pred_check_branch
      %171 = sbr.rel (0) target = $region77
    $region76: #{generator_forward.1} parent=1 // pred_region
      %172 = dma.done [#allocation14], 64
    $region77: #{generator_forward.1} parent=1 // pred_fallthru
      _
    // Predicated region
    $region78: #{generator_forward.1} parent=1 // pred_check
      _
    $region79: #{generator_forward.1} parent=1 // pred_check_branch
      %174 = sbr.rel (0) target = $region81
    $region80: #{generator_forward.1} parent=1 // pred_region
      %175 = dma.done [#allocation17], 65536
    $region81: #{generator_forward.1} parent=1 // pred_fallthru
      _
    // Predicated region
    $region82: #{generator_forward.1} parent=1 // pred_check
      _
    $region83: #{generator_forward.1} parent=1 // pred_check_branch
      %177 = sbr.rel (0) target = $region85
    $region84: #{generator_forward.1} parent=1 // pred_region
      %178 = dma.done [#allocation17], 64
    $region85: #{generator_forward.1} parent=1 // pred_fallthru
      _
    // Predicated region
    $region86: #{generator_forward.1} parent=1 // pred_check
      _
    $region87: #{generator_forward.1} parent=1 // pred_check_branch
      %180 = sbr.rel (0) target = $region89
    $region88: #{generator_forward.1} parent=1 // pred_region
      %181 = dma.done [#allocation20], 64
    $region89: #{generator_forward.1} parent=1 // pred_fallthru
      _
    // Predicated region
    $region90: #{generator_forward.1} parent=1 // pred_check
      _
    $region91: #{generator_forward.1} parent=1 // pred_check_branch
      %183 = sbr.rel (0) target = $region93
    $region92: #{generator_forward.1} parent=1 // pred_region
      %184 = dma.done [#allocation20], 16384
    $region93: #{generator_forward.1} parent=1 // pred_fallthru
      _
    // Predicated region
    $region94: #{generator_forward.1} parent=1 // pred_check
      _
    $region95: #{generator_forward.1} parent=1 // pred_check_branch
      %186 = sbr.rel (0) target = $region97
    $region96: #{generator_forward.1} parent=1 // pred_region
      %187 = dma.done [#allocation23], 16
    $region97: #{generator_forward.1} parent=1 // pred_fallthru
      _
    %v188 = vld [vmem:[#allocation5] sm:$0xf]
    %v189 = vld [vmem:[#allocation7] sm:$0xff]
    %v190 = vld [vmem:[#allocation7 + $0x8] sm:$0xff]
    %v191 = vld [vmem:[#allocation7 + $0x10] sm:$0xff]
    %v192 = vld [vmem:[#allocation7 + $0x18] sm:$0xff]
    %v193 = vld [vmem:[#allocation7 + $0x20] sm:$0xff]
    %v194 = vld [vmem:[#allocation7 + $0x28] sm:$0xff]
    %v195 = vld [vmem:[#allocation7 + $0x30] sm:$0xff]
    %v196 = vld [vmem:[#allocation7 + $0x38] sm:$0xff]
    %v197 = vld [vmem:[#allocation7 + $0x40] sm:$0xff]
    %v198 = vld [vmem:[#allocation7 + $0x48] sm:$0xff]
    %v199 = vld [vmem:[#allocation7 + $0x50] sm:$0xff]
    %v200 = vld [vmem:[#allocation7 + $0x58] sm:$0xff]
    %v201 = vld [vmem:[#allocation7 + $0x60] sm:$0xff]
    %v202 = vld [vmem:[#allocation7 + $0x68] sm:$0xff]
    %v203 = vld [vmem:[#allocation7 + $0x70] sm:$0xff]
    %v204 = vld [vmem:[#allocation7 + $0x78] sm:$0xff]
    %v205 = vld [vmem:[#allocation7 + $0x80] sm:$0xff]
    %v206 = vld [vmem:[#allocation7 + $0x88] sm:$0xff]
    %v207 = vld [vmem:[#allocation7 + $0x90] sm:$0xff]
    %v208 = vld [vmem:[#allocation7 + $0x98] sm:$0xff]
    %v209 = vld [vmem:[#allocation7 + $0xa0] sm:$0xff]
    %v210 = vld [vmem:[#allocation7 + $0xa8] sm:$0xff]
    %v211 = vld [vmem:[#allocation7 + $0xb0] sm:$0xff]
    %v212 = vld [vmem:[#allocation7 + $0xb8] sm:$0xff]
    %v213 = vld [vmem:[#allocation7 + $0xc0] sm:$0xff]
    %v214 = vld [vmem:[#allocation7 + $0xc8] sm:$0xff]
    %v215 = vld [vmem:[#allocation7 + $0xd0] sm:$0xff]
    %v216 = vld [vmem:[#allocation7 + $0xd8] sm:$0xff]
    %v217 = vld [vmem:[#allocation7 + $0xe0] sm:$0xff]
    %v218 = vld [vmem:[#allocation7 + $0xe8] sm:$0xff]
    %v219 = vld [vmem:[#allocation7 + $0xf0] sm:$0xff]
    %v220 = vld [vmem:[#allocation7 + $0xf8] sm:$0xff]
    %v221 = vld [vmem:[#allocation7 + $0x100] sm:$0xff]
    %v222 = vld [vmem:[#allocation7 + $0x108] sm:$0xff]
    %v223 = vld [vmem:[#allocation7 + $0x110] sm:$0xff]
    %v224 = vld [vmem:[#allocation7 + $0x118] sm:$0xff]
    %v225 = vld [vmem:[#allocation7 + $0x120] sm:$0xff]
    %v226 = vld [vmem:[#allocation7 + $0x128] sm:$0xff]
    %v227 = vld [vmem:[#allocation7 + $0x130] sm:$0xff]
    %v228 = vld [vmem:[#allocation7 + $0x138] sm:$0xff]
    %v229 = vld [vmem:[#allocation7 + $0x140] sm:$0xff]
    %v230 = vld [vmem:[#allocation7 + $0x148] sm:$0xff]
    %v231 = vld [vmem:[#allocation7 + $0x150] sm:$0xff]
    %v232 = vld [vmem:[#allocation7 + $0x158] sm:$0xff]
    %v233 = vld [vmem:[#allocation7 + $0x160] sm:$0xff]
    %v234 = vld [vmem:[#allocation7 + $0x168] sm:$0xff]
    %v235 = vld [vmem:[#allocation7 + $0x170] sm:$0xff]
    %v236 = vld [vmem:[#allocation7 + $0x178] sm:$0xff]
    %v237 = vld [vmem:[#allocation7 + $0x180] sm:$0xff]
    %v238 = vld [vmem:[#allocation7 + $0x188] sm:$0xff]
    %v239 = vld [vmem:[#allocation7 + $0x190] sm:$0xff]
    %v240 = vld [vmem:[#allocation7 + $0x198] sm:$0xff]
    %v241 = vld [vmem:[#allocation7 + $0x1a0] sm:$0xff]
    %v242 = vld [vmem:[#allocation7 + $0x1a8] sm:$0xff]
    %v243 = vld [vmem:[#allocation7 + $0x1b0] sm:$0xff]
    %v244 = vld [vmem:[#allocation7 + $0x1b8] sm:$0xff]
    %v245 = vld [vmem:[#allocation7 + $0x1c0] sm:$0xff]
    %v246 = vld [vmem:[#allocation7 + $0x1c8] sm:$0xff]
    %v247 = vld [vmem:[#allocation7 + $0x1d0] sm:$0xff]
    %v248 = vld [vmem:[#allocation7 + $0x1d8] sm:$0xff]
    %v249 = vld [vmem:[#allocation7 + $0x1e0] sm:$0xff]
    %v250 = vld [vmem:[#allocation7 + $0x1e8] sm:$0xff]
    %v251 = vld [vmem:[#allocation7 + $0x1f0] sm:$0xff]
    %v252 = vld [vmem:[#allocation7 + $0x1f8] sm:$0xff]
    %vm253 = vcmask 261120
    %v255 = vsel %vm253, %v188, 0
    %257 = vmatprep.subr.mxu0 0.0
    %258 = vmatpush1.msra.mxu0 0.0
    %259 = vmatprep.subr.mxu0 0.0
    %260 = vmatpush1.msra.mxu0 0.0
    %261 = vmatprep.subr.mxu0 0.0
    %262 = vmatpush1.msra.mxu0 0.0
    %263 = vmatprep.subr.mxu0 0.0
    %264 = vmatpush1.msra.mxu0 0.0
    %265 = vmatprep.subr.mxu0 0.0
    %266 = vmatpush1.msra.mxu0 0.0
    %267 = vmatprep.subr.mxu0 0.0
    %268 = vmatpush1.msra.mxu0 0.0
    %269 = vmatprep.subr.mxu0 0.0
    %270 = vmatpush1.msra.mxu0 0.0
    %271 = vmatprep.subr.mxu0 0.0
    %272 = vmatpush1.msra.mxu0 0.0
    %273 = vmatprep.subr.mxu0 0.0
    %274 = vmatpush1.msra.mxu0 0.0
    %275 = vmatprep.subr.mxu0 0.0
    %276 = vmatpush1.msra.mxu0 0.0
    %277 = vmatprep.subr.mxu0 0.0
    %278 = vmatpush1.msra.mxu0 0.0
    %279 = vmatprep.subr.mxu0 0.0
    %280 = vmatpush1.msra.mxu0 0.0
    %281 = vmatprep.subr.mxu0 %v238
    %282 = vmatpush1.msra.mxu0 %v237
    %283 = vmatprep.subr.mxu0 %v222
    %284 = vmatpush1.msra.mxu0 %v221
    %285 = vmatprep.subr.mxu0 %v206
    %286 = vmatpush1.msra.mxu0 %v205
    %287 = vmatprep.subr.mxu0 %v190
    %288 = vmatpush1.msra.mxu0 %v189
    %289 = vmatprep.subr.mxu0 0.0
    %290 = vmatpush2.msra.mxu0 0.0
    %291 = vmatprep.subr.mxu0 0.0
    %292 = vmatpush2.msra.mxu0 0.0
    %293 = vmatprep.subr.mxu0 0.0
    %294 = vmatpush2.msra.mxu0 0.0
    %295 = vmatprep.subr.mxu0 0.0
    %296 = vmatpush2.msra.mxu0 0.0
    %297 = vmatprep.subr.mxu0 0.0
    %298 = vmatpush2.msra.mxu0 0.0
    %299 = vmatprep.subr.mxu0 0.0
    %300 = vmatpush2.msra.mxu0 0.0
    %301 = vmatprep.subr.mxu0 0.0
    %302 = vmatpush2.msra.mxu0 0.0
    %303 = vmatprep.subr.mxu0 0.0
    %304 = vmatpush2.msra.mxu0 0.0
    %305 = vmatprep.subr.mxu0 0.0
    %306 = vmatpush2.msra.mxu0 0.0
    %307 = vmatprep.subr.mxu0 0.0
    %308 = vmatpush2.msra.mxu0 0.0
    %309 = vmatprep.subr.mxu0 0.0
    %310 = vmatpush2.msra.mxu0 0.0
    %311 = vmatprep.subr.mxu0 0.0
    %312 = vmatpush2.msra.mxu0 0.0
    %313 = vmatprep.subr.mxu0 0.0
    %314 = vmatpush2.msra.mxu0 0.0
    %315 = vmatprep.subr.mxu0 0.0
    %316 = vmatpush2.msra.mxu0 0.0
    %317 = vmatprep.subr.mxu0 0.0
    %318 = vmatpush2.msra.mxu0 0.0
    %319 = vmatprep.subr.mxu0 0.0
    %320 = vmatpush2.msra.mxu0 0.0
    %321 = vmatprep.mubr.f32.mxu0 0.0
    %322 = vmatmul.mubr.f32.gmra.mxu0 %v255
    %v323 = vpop.f32.mrf.mxu0
    %v324 = vadd.f32 0.0, %v323
    %v325 = vpop.f32.mrf.mxu0
    %v326 = vadd.f32 0.0, %v325
    %327 = vdwg.mxu0
    %328 = vmatprep.subr.mxu0 0.0
    %329 = vmatpush1.msra.mxu0 0.0
    %330 = vmatprep.subr.mxu0 0.0
    %331 = vmatpush1.msra.mxu0 0.0
    %332 = vmatprep.subr.mxu0 0.0
    %333 = vmatpush1.msra.mxu0 0.0
    %334 = vmatprep.subr.mxu0 0.0
    %335 = vmatpush1.msra.mxu0 0.0
    %336 = vmatprep.subr.mxu0 0.0
    %337 = vmatpush1.msra.mxu0 0.0
    %338 = vmatprep.subr.mxu0 0.0
    %339 = vmatpush1.msra.mxu0 0.0
    %340 = vmatprep.subr.mxu0 0.0
    %341 = vmatpush1.msra.mxu0 0.0
    %342 = vmatprep.subr.mxu0 0.0
    %343 = vmatpush1.msra.mxu0 0.0
    %344 = vmatprep.subr.mxu0 0.0
    %345 = vmatpush1.msra.mxu0 0.0
    %346 = vmatprep.subr.mxu0 0.0
    %347 = vmatpush1.msra.mxu0 0.0
    %348 = vmatprep.subr.mxu0 0.0
    %349 = vmatpush1.msra.mxu0 0.0
    %350 = vmatprep.subr.mxu0 0.0
    %351 = vmatpush1.msra.mxu0 0.0
    %352 = vmatprep.subr.mxu0 %v240
    %353 = vmatpush1.msra.mxu0 %v239
    %354 = vmatprep.subr.mxu0 %v224
    %355 = vmatpush1.msra.mxu0 %v223
    %356 = vmatprep.subr.mxu0 %v208
    %357 = vmatpush1.msra.mxu0 %v207
    %358 = vmatprep.subr.mxu0 %v192
    %359 = vmatpush1.msra.mxu0 %v191
    %360 = vmatprep.subr.mxu0 0.0
    %361 = vmatpush2.msra.mxu0 0.0
    %362 = vmatprep.subr.mxu0 0.0
    %363 = vmatpush2.msra.mxu0 0.0
    %364 = vmatprep.subr.mxu0 0.0
    %365 = vmatpush2.msra.mxu0 0.0
    %366 = vmatprep.subr.mxu0 0.0
    %367 = vmatpush2.msra.mxu0 0.0
    %368 = vmatprep.subr.mxu0 0.0
    %369 = vmatpush2.msra.mxu0 0.0
    %370 = vmatprep.subr.mxu0 0.0
    %371 = vmatpush2.msra.mxu0 0.0
    %372 = vmatprep.subr.mxu0 0.0
    %373 = vmatpush2.msra.mxu0 0.0
    %374 = vmatprep.subr.mxu0 0.0
    %375 = vmatpush2.msra.mxu0 0.0
    %376 = vmatprep.subr.mxu0 0.0
    %377 = vmatpush2.msra.mxu0 0.0
    %378 = vmatprep.subr.mxu0 0.0
    %379 = vmatpush2.msra.mxu0 0.0
    %380 = vmatprep.subr.mxu0 0.0
    %381 = vmatpush2.msra.mxu0 0.0
    %382 = vmatprep.subr.mxu0 0.0
    %383 = vmatpush2.msra.mxu0 0.0
    %384 = vmatprep.subr.mxu0 0.0
    %385 = vmatpush2.msra.mxu0 0.0
    %386 = vmatprep.subr.mxu0 0.0
    %387 = vmatpush2.msra.mxu0 0.0
    %388 = vmatprep.subr.mxu0 0.0
    %389 = vmatpush2.msra.mxu0 0.0
    %390 = vmatprep.subr.mxu0 0.0
    %391 = vmatpush2.msra.mxu0 0.0
    %392 = vmatprep.mubr.f32.mxu0 0.0
    %393 = vmatmul.mubr.f32.gmra.mxu0 %v255
    %v394 = vpop.f32.mrf.mxu0
    %v395 = vadd.f32 0.0, %v394
    %v396 = vpop.f32.mrf.mxu0
    %v397 = vadd.f32 0.0, %v396
    %398 = vdwg.mxu0
    %399 = vmatprep.subr.mxu0 0.0
    %400 = vmatpush1.msra.mxu0 0.0
    %401 = vmatprep.subr.mxu0 0.0
    %402 = vmatpush1.msra.mxu0 0.0
    %403 = vmatprep.subr.mxu0 0.0
    %404 = vmatpush1.msra.mxu0 0.0
    %405 = vmatprep.subr.mxu0 0.0
    %406 = vmatpush1.msra.mxu0 0.0
    %407 = vmatprep.subr.mxu0 0.0
    %408 = vmatpush1.msra.mxu0 0.0
    %409 = vmatprep.subr.mxu0 0.0
    %410 = vmatpush1.msra.mxu0 0.0
    %411 = vmatprep.subr.mxu0 0.0
    %412 = vmatpush1.msra.mxu0 0.0
    %413 = vmatprep.subr.mxu0 0.0
    %414 = vmatpush1.msra.mxu0 0.0
    %415 = vmatprep.subr.mxu0 0.0
    %416 = vmatpush1.msra.mxu0 0.0
    %417 = vmatprep.subr.mxu0 0.0
    %418 = vmatpush1.msra.mxu0 0.0
    %419 = vmatprep.subr.mxu0 0.0
    %420 = vmatpush1.msra.mxu0 0.0
    %421 = vmatprep.subr.mxu0 0.0
    %422 = vmatpush1.msra.mxu0 0.0
    %423 = vmatprep.subr.mxu0 %v242
    %424 = vmatpush1.msra.mxu0 %v241
    %425 = vmatprep.subr.mxu0 %v226
    %426 = vmatpush1.msra.mxu0 %v225
    %427 = vmatprep.subr.mxu0 %v210
    %428 = vmatpush1.msra.mxu0 %v209
    %429 = vmatprep.subr.mxu0 %v194
    %430 = vmatpush1.msra.mxu0 %v193
    %431 = vmatprep.subr.mxu0 0.0
    %432 = vmatpush2.msra.mxu0 0.0
    %433 = vmatprep.subr.mxu0 0.0
    %434 = vmatpush2.msra.mxu0 0.0
    %435 = vmatprep.subr.mxu0 0.0
    %436 = vmatpush2.msra.mxu0 0.0
    %437 = vmatprep.subr.mxu0 0.0
    %438 = vmatpush2.msra.mxu0 0.0
    %439 = vmatprep.subr.mxu0 0.0
    %440 = vmatpush2.msra.mxu0 0.0
    %441 = vmatprep.subr.mxu0 0.0
    %442 = vmatpush2.msra.mxu0 0.0
    %443 = vmatprep.subr.mxu0 0.0
    %444 = vmatpush2.msra.mxu0 0.0
    %445 = vmatprep.subr.mxu0 0.0
    %446 = vmatpush2.msra.mxu0 0.0
    %447 = vmatprep.subr.mxu0 0.0
    %448 = vmatpush2.msra.mxu0 0.0
    %449 = vmatprep.subr.mxu0 0.0
    %450 = vmatpush2.msra.mxu0 0.0
    %451 = vmatprep.subr.mxu0 0.0
    %452 = vmatpush2.msra.mxu0 0.0
    %453 = vmatprep.subr.mxu0 0.0
    %454 = vmatpush2.msra.mxu0 0.0
    %455 = vmatprep.subr.mxu0 0.0
    %456 = vmatpush2.msra.mxu0 0.0
    %457 = vmatprep.subr.mxu0 0.0
    %458 = vmatpush2.msra.mxu0 0.0
    %459 = vmatprep.subr.mxu0 0.0
    %460 = vmatpush2.msra.mxu0 0.0
    %461 = vmatprep.subr.mxu0 0.0
    %462 = vmatpush2.msra.mxu0 0.0
    %463 = vmatprep.mubr.f32.mxu0 0.0
    %464 = vmatmul.mubr.f32.gmra.mxu0 %v255
    %v465 = vpop.f32.mrf.mxu0
    %v466 = vadd.f32 0.0, %v465
    %v467 = vpop.f32.mrf.mxu0
    %v468 = vadd.f32 0.0, %v467
    %469 = vdwg.mxu0
    %470 = vmatprep.subr.mxu0 0.0
    %471 = vmatpush1.msra.mxu0 0.0
    %472 = vmatprep.subr.mxu0 0.0
    %473 = vmatpush1.msra.mxu0 0.0
    %474 = vmatprep.subr.mxu0 0.0
    %475 = vmatpush1.msra.mxu0 0.0
    %476 = vmatprep.subr.mxu0 0.0
    %477 = vmatpush1.msra.mxu0 0.0
    %478 = vmatprep.subr.mxu0 0.0
    %479 = vmatpush1.msra.mxu0 0.0
    %480 = vmatprep.subr.mxu0 0.0
    %481 = vmatpush1.msra.mxu0 0.0
    %482 = vmatprep.subr.mxu0 0.0
    %483 = vmatpush1.msra.mxu0 0.0
    %484 = vmatprep.subr.mxu0 0.0
    %485 = vmatpush1.msra.mxu0 0.0
    %486 = vmatprep.subr.mxu0 0.0
    %487 = vmatpush1.msra.mxu0 0.0
    %488 = vmatprep.subr.mxu0 0.0
    %489 = vmatpush1.msra.mxu0 0.0
    %490 = vmatprep.subr.mxu0 0.0
    %491 = vmatpush1.msra.mxu0 0.0
    %492 = vmatprep.subr.mxu0 0.0
    %493 = vmatpush1.msra.mxu0 0.0
    %494 = vmatprep.subr.mxu0 %v244
    %495 = vmatpush1.msra.mxu0 %v243
    %496 = vmatprep.subr.mxu0 %v228
    %497 = vmatpush1.msra.mxu0 %v227
    %498 = vmatprep.subr.mxu0 %v212
    %499 = vmatpush1.msra.mxu0 %v211
    %500 = vmatprep.subr.mxu0 %v196
    %501 = vmatpush1.msra.mxu0 %v195
    %502 = vmatprep.subr.mxu0 0.0
    %503 = vmatpush2.msra.mxu0 0.0
    %504 = vmatprep.subr.mxu0 0.0
    %505 = vmatpush2.msra.mxu0 0.0
    %506 = vmatprep.subr.mxu0 0.0
    %507 = vmatpush2.msra.mxu0 0.0
    %508 = vmatprep.subr.mxu0 0.0
    %509 = vmatpush2.msra.mxu0 0.0
    %510 = vmatprep.subr.mxu0 0.0
    %511 = vmatpush2.msra.mxu0 0.0
    %512 = vmatprep.subr.mxu0 0.0
    %513 = vmatpush2.msra.mxu0 0.0
    %514 = vmatprep.subr.mxu0 0.0
    %515 = vmatpush2.msra.mxu0 0.0
    %516 = vmatprep.subr.mxu0 0.0
    %517 = vmatpush2.msra.mxu0 0.0
    %518 = vmatprep.subr.mxu0 0.0
    %519 = vmatpush2.msra.mxu0 0.0
    %520 = vmatprep.subr.mxu0 0.0
    %521 = vmatpush2.msra.mxu0 0.0
    %522 = vmatprep.subr.mxu0 0.0
    %523 = vmatpush2.msra.mxu0 0.0
    %524 = vmatprep.subr.mxu0 0.0
    %525 = vmatpush2.msra.mxu0 0.0
    %526 = vmatprep.subr.mxu0 0.0
    %527 = vmatpush2.msra.mxu0 0.0
    %528 = vmatprep.subr.mxu0 0.0
    %529 = vmatpush2.msra.mxu0 0.0
    %530 = vmatprep.subr.mxu0 0.0
    %531 = vmatpush2.msra.mxu0 0.0
    %532 = vmatprep.subr.mxu0 0.0
    %533 = vmatpush2.msra.mxu0 0.0
    %534 = vmatprep.mubr.f32.mxu0 0.0
    %535 = vmatmul.mubr.f32.gmra.mxu0 %v255
    %v536 = vpop.f32.mrf.mxu0
    %v537 = vadd.f32 0.0, %v536
    %v538 = vpop.f32.mrf.mxu0
    %v539 = vadd.f32 0.0, %v538
    %540 = vdwg.mxu0
    %541 = vmatprep.subr.mxu0 0.0
    %542 = vmatpush1.msra.mxu0 0.0
    %543 = vmatprep.subr.mxu0 0.0
    %544 = vmatpush1.msra.mxu0 0.0
    %545 = vmatprep.subr.mxu0 0.0
    %546 = vmatpush1.msra.mxu0 0.0
    %547 = vmatprep.subr.mxu0 0.0
    %548 = vmatpush1.msra.mxu0 0.0
    %549 = vmatprep.subr.mxu0 0.0
    %550 = vmatpush1.msra.mxu0 0.0
    %551 = vmatprep.subr.mxu0 0.0
    %552 = vmatpush1.msra.mxu0 0.0
    %553 = vmatprep.subr.mxu0 0.0
    %554 = vmatpush1.msra.mxu0 0.0
    %555 = vmatprep.subr.mxu0 0.0
    %556 = vmatpush1.msra.mxu0 0.0
    %557 = vmatprep.subr.mxu0 0.0
    %558 = vmatpush1.msra.mxu0 0.0
    %559 = vmatprep.subr.mxu0 0.0
    %560 = vmatpush1.msra.mxu0 0.0
    %561 = vmatprep.subr.mxu0 0.0
    %562 = vmatpush1.msra.mxu0 0.0
    %563 = vmatprep.subr.mxu0 0.0
    %564 = vmatpush1.msra.mxu0 0.0
    %565 = vmatprep.subr.mxu0 %v246
    %566 = vmatpush1.msra.mxu0 %v245
    %567 = vmatprep.subr.mxu0 %v230
    %568 = vmatpush1.msra.mxu0 %v229
    %569 = vmatprep.subr.mxu0 %v214
    %570 = vmatpush1.msra.mxu0 %v213
    %571 = vmatprep.subr.mxu0 %v198
    %572 = vmatpush1.msra.mxu0 %v197
    %573 = vmatprep.subr.mxu0 0.0
    %574 = vmatpush2.msra.mxu0 0.0
    %575 = vmatprep.subr.mxu0 0.0
    %576 = vmatpush2.msra.mxu0 0.0
    %577 = vmatprep.subr.mxu0 0.0
    %578 = vmatpush2.msra.mxu0 0.0
    %579 = vmatprep.subr.mxu0 0.0
    %580 = vmatpush2.msra.mxu0 0.0
    %581 = vmatprep.subr.mxu0 0.0
    %582 = vmatpush2.msra.mxu0 0.0
    %583 = vmatprep.subr.mxu0 0.0
    %584 = vmatpush2.msra.mxu0 0.0
    %585 = vmatprep.subr.mxu0 0.0
    %586 = vmatpush2.msra.mxu0 0.0
    %587 = vmatprep.subr.mxu0 0.0
    %588 = vmatpush2.msra.mxu0 0.0
    %589 = vmatprep.subr.mxu0 0.0
    %590 = vmatpush2.msra.mxu0 0.0
    %591 = vmatprep.subr.mxu0 0.0
    %592 = vmatpush2.msra.mxu0 0.0
    %593 = vmatprep.subr.mxu0 0.0
    %594 = vmatpush2.msra.mxu0 0.0
    %595 = vmatprep.subr.mxu0 0.0
    %596 = vmatpush2.msra.mxu0 0.0
    %597 = vmatprep.subr.mxu0 0.0
    %598 = vmatpush2.msra.mxu0 0.0
    %599 = vmatprep.subr.mxu0 0.0
    %600 = vmatpush2.msra.mxu0 0.0
    %601 = vmatprep.subr.mxu0 0.0
    %602 = vmatpush2.msra.mxu0 0.0
    %603 = vmatprep.subr.mxu0 0.0
    %604 = vmatpush2.msra.mxu0 0.0
    %605 = vmatprep.mubr.f32.mxu0 0.0
    %606 = vmatmul.mubr.f32.gmra.mxu0 %v255
    %v607 = vpop.f32.mrf.mxu0
    %v608 = vadd.f32 0.0, %v607
    %v609 = vpop.f32.mrf.mxu0
    %v610 = vadd.f32 0.0, %v609
    %611 = vdwg.mxu0
    %612 = vmatprep.subr.mxu0 0.0
    %613 = vmatpush1.msra.mxu0 0.0
    %614 = vmatprep.subr.mxu0 0.0
    %615 = vmatpush1.msra.mxu0 0.0
    %616 = vmatprep.subr.mxu0 0.0
    %617 = vmatpush1.msra.mxu0 0.0
    %618 = vmatprep.subr.mxu0 0.0
    %619 = vmatpush1.msra.mxu0 0.0
    %620 = vmatprep.subr.mxu0 0.0
    %621 = vmatpush1.msra.mxu0 0.0
    %622 = vmatprep.subr.mxu0 0.0
    %623 = vmatpush1.msra.mxu0 0.0
    %624 = vmatprep.subr.mxu0 0.0
    %625 = vmatpush1.msra.mxu0 0.0
    %626 = vmatprep.subr.mxu0 0.0
    %627 = vmatpush1.msra.mxu0 0.0
    %628 = vmatprep.subr.mxu0 0.0
    %629 = vmatpush1.msra.mxu0 0.0
    %630 = vmatprep.subr.mxu0 0.0
    %631 = vmatpush1.msra.mxu0 0.0
    %632 = vmatprep.subr.mxu0 0.0
    %633 = vmatpush1.msra.mxu0 0.0
    %634 = vmatprep.subr.mxu0 0.0
    %635 = vmatpush1.msra.mxu0 0.0
    %636 = vmatprep.subr.mxu0 %v248
    %637 = vmatpush1.msra.mxu0 %v247
    %638 = vmatprep.subr.mxu0 %v232
    %639 = vmatpush1.msra.mxu0 %v231
    %640 = vmatprep.subr.mxu0 %v216
    %641 = vmatpush1.msra.mxu0 %v215
    %642 = vmatprep.subr.mxu0 %v200
    %643 = vmatpush1.msra.mxu0 %v199
    %644 = vmatprep.subr.mxu0 0.0
    %645 = vmatpush2.msra.mxu0 0.0
    %646 = vmatprep.subr.mxu0 0.0
    %647 = vmatpush2.msra.mxu0 0.0
    %648 = vmatprep.subr.mxu0 0.0
    %649 = vmatpush2.msra.mxu0 0.0
    %650 = vmatprep.subr.mxu0 0.0
    %651 = vmatpush2.msra.mxu0 0.0
    %652 = vmatprep.subr.mxu0 0.0
    %653 = vmatpush2.msra.mxu0 0.0
    %654 = vmatprep.subr.mxu0 0.0
    %655 = vmatpush2.msra.mxu0 0.0
    %656 = vmatprep.subr.mxu0 0.0
    %657 = vmatpush2.msra.mxu0 0.0
    %658 = vmatprep.subr.mxu0 0.0
    %659 = vmatpush2.msra.mxu0 0.0
    %660 = vmatprep.subr.mxu0 0.0
    %661 = vmatpush2.msra.mxu0 0.0
    %662 = vmatprep.subr.mxu0 0.0
    %663 = vmatpush2.msra.mxu0 0.0
    %664 = vmatprep.subr.mxu0 0.0
    %665 = vmatpush2.msra.mxu0 0.0
    %666 = vmatprep.subr.mxu0 0.0
    %667 = vmatpush2.msra.mxu0 0.0
    %668 = vmatprep.subr.mxu0 0.0
    %669 = vmatpush2.msra.mxu0 0.0
    %670 = vmatprep.subr.mxu0 0.0
    %671 = vmatpush2.msra.mxu0 0.0
    %672 = vmatprep.subr.mxu0 0.0
    %673 = vmatpush2.msra.mxu0 0.0
    %674 = vmatprep.subr.mxu0 0.0
    %675 = vmatpush2.msra.mxu0 0.0
    %676 = vmatprep.mubr.f32.mxu0 0.0
    %677 = vmatmul.mubr.f32.gmra.mxu0 %v255
    %v678 = vpop.f32.mrf.mxu0
    %v679 = vadd.f32 0.0, %v678
    %v680 = vpop.f32.mrf.mxu0
    %v681 = vadd.f32 0.0, %v680
    %682 = vdwg.mxu0
    %683 = vmatprep.subr.mxu0 0.0
    %684 = vmatpush1.msra.mxu0 0.0
    %685 = vmatprep.subr.mxu0 0.0
    %686 = vmatpush1.msra.mxu0 0.0
    %687 = vmatprep.subr.mxu0 0.0
    %688 = vmatpush1.msra.mxu0 0.0
    %689 = vmatprep.subr.mxu0 0.0
    %690 = vmatpush1.msra.mxu0 0.0
    %691 = vmatprep.subr.mxu0 0.0
    %692 = vmatpush1.msra.mxu0 0.0
    %693 = vmatprep.subr.mxu0 0.0
    %694 = vmatpush1.msra.mxu0 0.0
    %695 = vmatprep.subr.mxu0 0.0
    %696 = vmatpush1.msra.mxu0 0.0
    %697 = vmatprep.subr.mxu0 0.0
    %698 = vmatpush1.msra.mxu0 0.0
    %699 = vmatprep.subr.mxu0 0.0
    %700 = vmatpush1.msra.mxu0 0.0
    %701 = vmatprep.subr.mxu0 0.0
    %702 = vmatpush1.msra.mxu0 0.0
    %703 = vmatprep.subr.mxu0 0.0
    %704 = vmatpush1.msra.mxu0 0.0
    %705 = vmatprep.subr.mxu0 0.0
    %706 = vmatpush1.msra.mxu0 0.0
    %707 = vmatprep.subr.mxu0 %v250
    %708 = vmatpush1.msra.mxu0 %v249
    %709 = vmatprep.subr.mxu0 %v234
    %710 = vmatpush1.msra.mxu0 %v233
    %711 = vmatprep.subr.mxu0 %v218
    %712 = vmatpush1.msra.mxu0 %v217
    %713 = vmatprep.subr.mxu0 %v202
    %714 = vmatpush1.msra.mxu0 %v201
    %715 = vmatprep.subr.mxu0 0.0
    %716 = vmatpush2.msra.mxu0 0.0
    %717 = vmatprep.subr.mxu0 0.0
    %718 = vmatpush2.msra.mxu0 0.0
    %719 = vmatprep.subr.mxu0 0.0
    %720 = vmatpush2.msra.mxu0 0.0
    %721 = vmatprep.subr.mxu0 0.0
    %722 = vmatpush2.msra.mxu0 0.0
    %723 = vmatprep.subr.mxu0 0.0
    %724 = vmatpush2.msra.mxu0 0.0
    %725 = vmatprep.subr.mxu0 0.0
    %726 = vmatpush2.msra.mxu0 0.0
    %727 = vmatprep.subr.mxu0 0.0
    %728 = vmatpush2.msra.mxu0 0.0
    %729 = vmatprep.subr.mxu0 0.0
    %730 = vmatpush2.msra.mxu0 0.0
    %731 = vmatprep.subr.mxu0 0.0
    %732 = vmatpush2.msra.mxu0 0.0
    %733 = vmatprep.subr.mxu0 0.0
    %734 = vmatpush2.msra.mxu0 0.0
    %735 = vmatprep.subr.mxu0 0.0
    %736 = vmatpush2.msra.mxu0 0.0
    %737 = vmatprep.subr.mxu0 0.0
    %738 = vmatpush2.msra.mxu0 0.0
    %739 = vmatprep.subr.mxu0 0.0
    %740 = vmatpush2.msra.mxu0 0.0
    %741 = vmatprep.subr.mxu0 0.0
    %742 = vmatpush2.msra.mxu0 0.0
    %743 = vmatprep.subr.mxu0 0.0
    %744 = vmatpush2.msra.mxu0 0.0
    %745 = vmatprep.subr.mxu0 0.0
    %746 = vmatpush2.msra.mxu0 0.0
    %747 = vmatprep.mubr.f32.mxu0 0.0
    %748 = vmatmul.mubr.f32.gmra.mxu0 %v255
    %v749 = vpop.f32.mrf.mxu0
    %v750 = vadd.f32 0.0, %v749
    %v751 = vpop.f32.mrf.mxu0
    %v752 = vadd.f32 0.0, %v751
    %753 = vdwg.mxu0
    %754 = vmatprep.subr.mxu0 0.0
    %755 = vmatpush1.msra.mxu0 0.0
    %756 = vmatprep.subr.mxu0 0.0
    %757 = vmatpush1.msra.mxu0 0.0
    %758 = vmatprep.subr.mxu0 0.0
    %759 = vmatpush1.msra.mxu0 0.0
    %760 = vmatprep.subr.mxu0 0.0
    %761 = vmatpush1.msra.mxu0 0.0
    %762 = vmatprep.subr.mxu0 0.0
    %763 = vmatpush1.msra.mxu0 0.0
    %764 = vmatprep.subr.mxu0 0.0
    %765 = vmatpush1.msra.mxu0 0.0
    %766 = vmatprep.subr.mxu0 0.0
    %767 = vmatpush1.msra.mxu0 0.0
    %768 = vmatprep.subr.mxu0 0.0
    %769 = vmatpush1.msra.mxu0 0.0
    %770 = vmatprep.subr.mxu0 0.0
    %771 = vmatpush1.msra.mxu0 0.0
    %772 = vmatprep.subr.mxu0 0.0
    %773 = vmatpush1.msra.mxu0 0.0
    %774 = vmatprep.subr.mxu0 0.0
    %775 = vmatpush1.msra.mxu0 0.0
    %776 = vmatprep.subr.mxu0 0.0
    %777 = vmatpush1.msra.mxu0 0.0
    %778 = vmatprep.subr.mxu0 %v252
    %779 = vmatpush1.msra.mxu0 %v251
    %780 = vmatprep.subr.mxu0 %v236
    %781 = vmatpush1.msra.mxu0 %v235
    %782 = vmatprep.subr.mxu0 %v220
    %783 = vmatpush1.msra.mxu0 %v219
    %784 = vmatprep.subr.mxu0 %v204
    %785 = vmatpush1.msra.mxu0 %v203
    %786 = vmatprep.subr.mxu0 0.0
    %787 = vmatpush2.msra.mxu0 0.0
    %788 = vmatprep.subr.mxu0 0.0
    %789 = vmatpush2.msra.mxu0 0.0
    %790 = vmatprep.subr.mxu0 0.0
    %791 = vmatpush2.msra.mxu0 0.0
    %792 = vmatprep.subr.mxu0 0.0
    %793 = vmatpush2.msra.mxu0 0.0
    %794 = vmatprep.subr.mxu0 0.0
    %795 = vmatpush2.msra.mxu0 0.0
    %796 = vmatprep.subr.mxu0 0.0
    %797 = vmatpush2.msra.mxu0 0.0
    %798 = vmatprep.subr.mxu0 0.0
    %799 = vmatpush2.msra.mxu0 0.0
    %800 = vmatprep.subr.mxu0 0.0
    %801 = vmatpush2.msra.mxu0 0.0
    %802 = vmatprep.subr.mxu0 0.0
    %803 = vmatpush2.msra.mxu0 0.0
    %804 = vmatprep.subr.mxu0 0.0
    %805 = vmatpush2.msra.mxu0 0.0
    %806 = vmatprep.subr.mxu0 0.0
    %807 = vmatpush2.msra.mxu0 0.0
    %808 = vmatprep.subr.mxu0 0.0
    %809 = vmatpush2.msra.mxu0 0.0
    %810 = vmatprep.subr.mxu0 0.0
    %811 = vmatpush2.msra.mxu0 0.0
    %812 = vmatprep.subr.mxu0 0.0
    %813 = vmatpush2.msra.mxu0 0.0
    %814 = vmatprep.subr.mxu0 0.0
    %815 = vmatpush2.msra.mxu0 0.0
    %816 = vmatprep.subr.mxu0 0.0
    %817 = vmatpush2.msra.mxu0 0.0
    %818 = vmatprep.mubr.f32.mxu0 0.0
    %819 = vmatmul.mubr.f32.gmra.mxu0 %v255
    %v820 = vpop.f32.mrf.mxu0
    %v821 = vadd.f32 0.0, %v820
    %v822 = vpop.f32.mrf.mxu0
    %v823 = vadd.f32 0.0, %v822
    %824 = vdwg.mxu0
    %vm825 = vcmask 1043456
    %v826 = vsel %vm825, %v324, 0.0
    %v827 = vrot.slane %v826, 4
    %v828 = vadd.f32 %v826, %v827
    %v829 = vrot.slane %v828, 2
    %v830 = vadd.f32 %v828, %v829
    %v831 = vrot.slane %v830, 1
    %v832 = vadd.f32 %v830, %v831
    %v833 = vsel %vm825, %v326, 0.0
    %v834 = vrot.slane %v833, 4
    %v835 = vadd.f32 %v833, %v834
    %v836 = vrot.slane %v835, 2
    %v837 = vadd.f32 %v835, %v836
    %v838 = vrot.slane %v837, 1
    %v839 = vadd.f32 %v837, %v838
    %v840 = vsel %vm825, %v395, 0.0
    %v841 = vrot.slane %v840, 4
    %v842 = vadd.f32 %v840, %v841
    %v843 = vrot.slane %v842, 2
    %v844 = vadd.f32 %v842, %v843
    %v845 = vrot.slane %v844, 1
    %v846 = vadd.f32 %v844, %v845
    %v847 = vsel %vm825, %v397, 0.0
    %v848 = vrot.slane %v847, 4
    %v849 = vadd.f32 %v847, %v848
    %v850 = vrot.slane %v849, 2
    %v851 = vadd.f32 %v849, %v850
    %v852 = vrot.slane %v851, 1
    %v853 = vadd.f32 %v851, %v852
    %v854 = vsel %vm825, %v466, 0.0
    %v855 = vrot.slane %v854, 4
    %v856 = vadd.f32 %v854, %v855
    %v857 = vrot.slane %v856, 2
    %v858 = vadd.f32 %v856, %v857
    %v859 = vrot.slane %v858, 1
    %v860 = vadd.f32 %v858, %v859
    %v861 = vsel %vm825, %v468, 0.0
    %v862 = vrot.slane %v861, 4
    %v863 = vadd.f32 %v861, %v862
    %v864 = vrot.slane %v863, 2
    %v865 = vadd.f32 %v863, %v864
    %v866 = vrot.slane %v865, 1
    %v867 = vadd.f32 %v865, %v866
    %v868 = vsel %vm825, %v537, 0.0
    %v869 = vrot.slane %v868, 4
    %v870 = vadd.f32 %v868, %v869
    %v871 = vrot.slane %v870, 2
    %v872 = vadd.f32 %v870, %v871
    %v873 = vrot.slane %v872, 1
    %v874 = vadd.f32 %v872, %v873
    %v875 = vsel %vm825, %v539, 0.0
    %v876 = vrot.slane %v875, 4
    %v877 = vadd.f32 %v875, %v876
    %v878 = vrot.slane %v877, 2
    %v879 = vadd.f32 %v877, %v878
    %v880 = vrot.slane %v879, 1
    %v881 = vadd.f32 %v879, %v880
    %v882 = vsel %vm825, %v608, 0.0
    %v883 = vrot.slane %v882, 4
    %v884 = vadd.f32 %v882, %v883
    %v885 = vrot.slane %v884, 2
    %v886 = vadd.f32 %v884, %v885
    %v887 = vrot.slane %v886, 1
    %v888 = vadd.f32 %v886, %v887
    %v889 = vsel %vm825, %v610, 0.0
    %v890 = vrot.slane %v889, 4
    %v891 = vadd.f32 %v889, %v890
    %v892 = vrot.slane %v891, 2
    %v893 = vadd.f32 %v891, %v892
    %v894 = vrot.slane %v893, 1
    %v895 = vadd.f32 %v893, %v894
    %v896 = vsel %vm825, %v679, 0.0
    %v897 = vrot.slane %v896, 4
    %v898 = vadd.f32 %v896, %v897
    %v899 = vrot.slane %v898, 2
    %v900 = vadd.f32 %v898, %v899
    %v901 = vrot.slane %v900, 1
    %v902 = vadd.f32 %v900, %v901
    %v903 = vsel %vm825, %v681, 0.0
    %v904 = vrot.slane %v903, 4
    %v905 = vadd.f32 %v903, %v904
    %v906 = vrot.slane %v905, 2
    %v907 = vadd.f32 %v905, %v906
    %v908 = vrot.slane %v907, 1
    %v909 = vadd.f32 %v907, %v908
    %v910 = vsel %vm825, %v750, 0.0
    %v911 = vrot.slane %v910, 4
    %v912 = vadd.f32 %v910, %v911
    %v913 = vrot.slane %v912, 2
    %v914 = vadd.f32 %v912, %v913
    %v915 = vrot.slane %v914, 1
    %v916 = vadd.f32 %v914, %v915
    %v917 = vsel %vm825, %v752, 0.0
    %v918 = vrot.slane %v917, 4
    %v919 = vadd.f32 %v917, %v918
    %v920 = vrot.slane %v919, 2
    %v921 = vadd.f32 %v919, %v920
    %v922 = vrot.slane %v921, 1
    %v923 = vadd.f32 %v921, %v922
    %v924 = vsel %vm825, %v821, 0.0
    %v925 = vrot.slane %v924, 4
    %v926 = vadd.f32 %v924, %v925
    %v927 = vrot.slane %v926, 2
    %v928 = vadd.f32 %v926, %v927
    %v929 = vrot.slane %v928, 1
    %v930 = vadd.f32 %v928, %v929
    %v931 = vsel %vm825, %v823, 0.0
    %v932 = vrot.slane %v931, 4
    %v933 = vadd.f32 %v931, %v932
    %v934 = vrot.slane %v933, 2
    %v935 = vadd.f32 %v933, %v934
    %v936 = vrot.slane %v935, 1
    %v937 = vadd.f32 %v935, %v936
    %v938 = vrcp.pop 4.0
    %v939 = vmul.f32 %v832, %v938
    %v940 = vmul.f32 %v839, %v938
    %v941 = vmul.f32 %v846, %v938
    %v942 = vmul.f32 %v853, %v938
    %v943 = vmul.f32 %v860, %v938
    %v944 = vmul.f32 %v867, %v938
    %v945 = vmul.f32 %v874, %v938
    %v946 = vmul.f32 %v881, %v938
    %v947 = vmul.f32 %v888, %v938
    %v948 = vmul.f32 %v895, %v938
    %v949 = vmul.f32 %v902, %v938
    %v950 = vmul.f32 %v909, %v938
    %v951 = vmul.f32 %v916, %v938
    %v952 = vmul.f32 %v923, %v938
    %v953 = vmul.f32 %v930, %v938
    %v954 = vmul.f32 %v937, %v938
    %v955 = vmul.f32 %v324, %v324
    %v956 = vmul.f32 %v326, %v326
    %v957 = vmul.f32 %v395, %v395
    %v958 = vmul.f32 %v397, %v397
    %v959 = vmul.f32 %v466, %v466
    %v960 = vmul.f32 %v468, %v468
    %v961 = vmul.f32 %v537, %v537
    %v962 = vmul.f32 %v539, %v539
    %v963 = vmul.f32 %v608, %v608
    %v964 = vmul.f32 %v610, %v610
    %v965 = vmul.f32 %v679, %v679
    %v966 = vmul.f32 %v681, %v681
    %v967 = vmul.f32 %v750, %v750
    %v968 = vmul.f32 %v752, %v752
    %v969 = vmul.f32 %v821, %v821
    %v970 = vmul.f32 %v823, %v823
    %v971 = vsel %vm825, %v955, 0.0
    %v972 = vrot.slane %v971, 4
    %v973 = vadd.f32 %v971, %v972
    %v974 = vrot.slane %v973, 2
    %v975 = vadd.f32 %v973, %v974
    %v976 = vrot.slane %v975, 1
    %v977 = vadd.f32 %v975, %v976
    %v978 = vsel %vm825, %v956, 0.0
    %v979 = vrot.slane %v978, 4
    %v980 = vadd.f32 %v978, %v979
    %v981 = vrot.slane %v980, 2
    %v982 = vadd.f32 %v980, %v981
    %v983 = vrot.slane %v982, 1
    %v984 = vadd.f32 %v982, %v983
    %v985 = vsel %vm825, %v957, 0.0
    %v986 = vrot.slane %v985, 4
    %v987 = vadd.f32 %v985, %v986
    %v988 = vrot.slane %v987, 2
    %v989 = vadd.f32 %v987, %v988
    %v990 = vrot.slane %v989, 1
    %v991 = vadd.f32 %v989, %v990
    %v992 = vsel %vm825, %v958, 0.0
    %v993 = vrot.slane %v992, 4
    %v994 = vadd.f32 %v992, %v993
    %v995 = vrot.slane %v994, 2
    %v996 = vadd.f32 %v994, %v995
    %v997 = vrot.slane %v996, 1
    %v998 = vadd.f32 %v996, %v997
    %v999 = vsel %vm825, %v959, 0.0
    %v1000 = vrot.slane %v999, 4
    %v1001 = vadd.f32 %v999, %v1000
    %v1002 = vrot.slane %v1001, 2
    %v1003 = vadd.f32 %v1001, %v1002
    %v1004 = vrot.slane %v1003, 1
    %v1005 = vadd.f32 %v1003, %v1004
    %v1006 = vsel %vm825, %v960, 0.0
    %v1007 = vrot.slane %v1006, 4
    %v1008 = vadd.f32 %v1006, %v1007
    %v1009 = vrot.slane %v1008, 2
    %v1010 = vadd.f32 %v1008, %v1009
    %v1011 = vrot.slane %v1010, 1
    %v1012 = vadd.f32 %v1010, %v1011
    %v1013 = vsel %vm825, %v961, 0.0
    %v1014 = vrot.slane %v1013, 4
    %v1015 = vadd.f32 %v1013, %v1014
    %v1016 = vrot.slane %v1015, 2
    %v1017 = vadd.f32 %v1015, %v1016
    %v1018 = vrot.slane %v1017, 1
    %v1019 = vadd.f32 %v1017, %v1018
    %v1020 = vsel %vm825, %v962, 0.0
    %v1021 = vrot.slane %v1020, 4
    %v1022 = vadd.f32 %v1020, %v1021
    %v1023 = vrot.slane %v1022, 2
    %v1024 = vadd.f32 %v1022, %v1023
    %v1025 = vrot.slane %v1024, 1
    %v1026 = vadd.f32 %v1024, %v1025
    %v1027 = vsel %vm825, %v963, 0.0
    %v1028 = vrot.slane %v1027, 4
    %v1029 = vadd.f32 %v1027, %v1028
    %v1030 = vrot.slane %v1029, 2
    %v1031 = vadd.f32 %v1029, %v1030
    %v1032 = vrot.slane %v1031, 1
    %v1033 = vadd.f32 %v1031, %v1032
    %v1034 = vsel %vm825, %v964, 0.0
    %v1035 = vrot.slane %v1034, 4
    %v1036 = vadd.f32 %v1034, %v1035
    %v1037 = vrot.slane %v1036, 2
    %v1038 = vadd.f32 %v1036, %v1037
    %v1039 = vrot.slane %v1038, 1
    %v1040 = vadd.f32 %v1038, %v1039
    %v1041 = vsel %vm825, %v965, 0.0
    %v1042 = vrot.slane %v1041, 4
    %v1043 = vadd.f32 %v1041, %v1042
    %v1044 = vrot.slane %v1043, 2
    %v1045 = vadd.f32 %v1043, %v1044
    %v1046 = vrot.slane %v1045, 1
    %v1047 = vadd.f32 %v1045, %v1046
    %v1048 = vsel %vm825, %v966, 0.0
    %v1049 = vrot.slane %v1048, 4
    %v1050 = vadd.f32 %v1048, %v1049
    %v1051 = vrot.slane %v1050, 2
    %v1052 = vadd.f32 %v1050, %v1051
    %v1053 = vrot.slane %v1052, 1
    %v1054 = vadd.f32 %v1052, %v1053
    %v1055 = vsel %vm825, %v967, 0.0
    %v1056 = vrot.slane %v1055, 4
    %v1057 = vadd.f32 %v1055, %v1056
    %v1058 = vrot.slane %v1057, 2
    %v1059 = vadd.f32 %v1057, %v1058
    %v1060 = vrot.slane %v1059, 1
    %v1061 = vadd.f32 %v1059, %v1060
    %v1062 = vsel %vm825, %v968, 0.0
    %v1063 = vrot.slane %v1062, 4
    %v1064 = vadd.f32 %v1062, %v1063
    %v1065 = vrot.slane %v1064, 2
    %v1066 = vadd.f32 %v1064, %v1065
    %v1067 = vrot.slane %v1066, 1
    %v1068 = vadd.f32 %v1066, %v1067
    %v1069 = vsel %vm825, %v969, 0.0
    %v1070 = vrot.slane %v1069, 4
    %v1071 = vadd.f32 %v1069, %v1070
    %v1072 = vrot.slane %v1071, 2
    %v1073 = vadd.f32 %v1071, %v1072
    %v1074 = vrot.slane %v1073, 1
    %v1075 = vadd.f32 %v1073, %v1074
    %v1076 = vsel %vm825, %v970, 0.0
    %v1077 = vrot.slane %v1076, 4
    %v1078 = vadd.f32 %v1076, %v1077
    %v1079 = vrot.slane %v1078, 2
    %v1080 = vadd.f32 %v1078, %v1079
    %v1081 = vrot.slane %v1080, 1
    %v1082 = vadd.f32 %v1080, %v1081
    %v1083 = vmul.f32 %v977, %v938
    %v1084 = vmul.f32 %v984, %v938
    %v1085 = vmul.f32 %v991, %v938
    %v1086 = vmul.f32 %v998, %v938
    %v1087 = vmul.f32 %v1005, %v938
    %v1088 = vmul.f32 %v1012, %v938
    %v1089 = vmul.f32 %v1019, %v938
    %v1090 = vmul.f32 %v1026, %v938
    %v1091 = vmul.f32 %v1033, %v938
    %v1092 = vmul.f32 %v1040, %v938
    %v1093 = vmul.f32 %v1047, %v938
    %v1094 = vmul.f32 %v1054, %v938
    %v1095 = vmul.f32 %v1061, %v938
    %v1096 = vmul.f32 %v1068, %v938
    %v1097 = vmul.f32 %v1075, %v938
    %v1098 = vmul.f32 %v1082, %v938
    %v1099 = vmul.f32 %v939, %v939
    %v1100 = vmul.f32 %v940, %v940
    %v1101 = vmul.f32 %v941, %v941
    %v1102 = vmul.f32 %v942, %v942
    %v1103 = vmul.f32 %v943, %v943
    %v1104 = vmul.f32 %v944, %v944
    %v1105 = vmul.f32 %v945, %v945
    %v1106 = vmul.f32 %v946, %v946
    %v1107 = vmul.f32 %v947, %v947
    %v1108 = vmul.f32 %v948, %v948
    %v1109 = vmul.f32 %v949, %v949
    %v1110 = vmul.f32 %v950, %v950
    %v1111 = vmul.f32 %v951, %v951
    %v1112 = vmul.f32 %v952, %v952
    %v1113 = vmul.f32 %v953, %v953
    %v1114 = vmul.f32 %v954, %v954
    %v1115 = vsub.f32 %v1083, %v1099
    %v1116 = vsub.f32 %v1084, %v1100
    %v1117 = vsub.f32 %v1085, %v1101
    %v1118 = vsub.f32 %v1086, %v1102
    %v1119 = vsub.f32 %v1087, %v1103
    %v1120 = vsub.f32 %v1088, %v1104
    %v1121 = vsub.f32 %v1089, %v1105
    %v1122 = vsub.f32 %v1090, %v1106
    %v1123 = vsub.f32 %v1091, %v1107
    %v1124 = vsub.f32 %v1092, %v1108
    %v1125 = vsub.f32 %v1093, %v1109
    %v1126 = vsub.f32 %v1094, %v1110
    %v1127 = vsub.f32 %v1095, %v1111
    %v1128 = vsub.f32 %v1096, %v1112
    %v1129 = vsub.f32 %v1097, %v1113
    %v1130 = vsub.f32 %v1098, %v1114
    %v1131 = vmax.f32 %v1115, 0.0
    %v1132 = vmax.f32 %v1116, 0.0
    %v1133 = vmax.f32 %v1117, 0.0
    %v1134 = vmax.f32 %v1118, 0.0
    %v1135 = vmax.f32 %v1119, 0.0
    %v1136 = vmax.f32 %v1120, 0.0
    %v1137 = vmax.f32 %v1121, 0.0
    %v1138 = vmax.f32 %v1122, 0.0
    %v1139 = vmax.f32 %v1123, 0.0
    %v1140 = vmax.f32 %v1124, 0.0
    %v1141 = vmax.f32 %v1125, 0.0
    %v1142 = vmax.f32 %v1126, 0.0
    %v1143 = vmax.f32 %v1127, 0.0
    %v1144 = vmax.f32 %v1128, 0.0
    %v1145 = vmax.f32 %v1129, 0.0
    %v1146 = vmax.f32 %v1130, 0.0
    %v1147 = vsub.f32 %v324, %v939
    %v1148 = vsub.f32 %v326, %v940
    %v1149 = vsub.f32 %v395, %v941
    %v1150 = vsub.f32 %v397, %v942
    %v1151 = vsub.f32 %v466, %v943
    %v1152 = vsub.f32 %v468, %v944
    %v1153 = vsub.f32 %v537, %v945
    %v1154 = vsub.f32 %v539, %v946
    %v1155 = vsub.f32 %v608, %v947
    %v1156 = vsub.f32 %v610, %v948
    %v1157 = vsub.f32 %v679, %v949
    %v1158 = vsub.f32 %v681, %v950
    %v1159 = vsub.f32 %v750, %v951
    %v1160 = vsub.f32 %v752, %v952
    %v1161 = vsub.f32 %v821, %v953
    %v1162 = vsub.f32 %v823, %v954
    %v1163 = vadd.f32 %v1131, 1e-05
    %v1164 = vadd.f32 %v1132, 1e-05
    %v1165 = vadd.f32 %v1133, 1e-05
    %v1166 = vadd.f32 %v1134, 1e-05
    %v1167 = vadd.f32 %v1135, 1e-05
    %v1168 = vadd.f32 %v1136, 1e-05
    %v1169 = vadd.f32 %v1137, 1e-05
    %v1170 = vadd.f32 %v1138, 1e-05
    %v1171 = vadd.f32 %v1139, 1e-05
    %v1172 = vadd.f32 %v1140, 1e-05
    %v1173 = vadd.f32 %v1141, 1e-05
    %v1174 = vadd.f32 %v1142, 1e-05
    %v1175 = vadd.f32 %v1143, 1e-05
    %v1176 = vadd.f32 %v1144, 1e-05
    %v1177 = vadd.f32 %v1145, 1e-05
    %v1178 = vadd.f32 %v1146, 1e-05
    %v1179 = vrsqrt.pop %v1163
    %v1180 = vrsqrt.pop %v1164
    %v1181 = vrsqrt.pop %v1165
    %v1182 = vrsqrt.pop %v1166
    %v1183 = vrsqrt.pop %v1167
    %v1184 = vrsqrt.pop %v1168
    %v1185 = vrsqrt.pop %v1169
    %v1186 = vrsqrt.pop %v1170
    %v1187 = vrsqrt.pop %v1171
    %v1188 = vrsqrt.pop %v1172
    %v1189 = vrsqrt.pop %v1173
    %v1190 = vrsqrt.pop %v1174
    %v1191 = vrsqrt.pop %v1175
    %v1192 = vrsqrt.pop %v1176
    %v1193 = vrsqrt.pop %v1177
    %v1194 = vrsqrt.pop %v1178
    %v1195 = vmul.f32 %v1147, %v1179
    %v1196 = vmul.f32 %v1148, %v1180
    %v1197 = vmul.f32 %v1149, %v1181
    %v1198 = vmul.f32 %v1150, %v1182
    %v1199 = vmul.f32 %v1151, %v1183
    %v1200 = vmul.f32 %v1152, %v1184
    %v1201 = vmul.f32 %v1153, %v1185
    %v1202 = vmul.f32 %v1154, %v1186
    %v1203 = vmul.f32 %v1155, %v1187
    %v1204 = vmul.f32 %v1156, %v1188
    %v1205 = vmul.f32 %v1157, %v1189
    %v1206 = vmul.f32 %v1158, %v1190
    %v1207 = vmul.f32 %v1159, %v1191
    %v1208 = vmul.f32 %v1160, %v1192
    %v1209 = vmul.f32 %v1161, %v1193
    %v1210 = vmul.f32 %v1162, %v1194
    %v1211 = vld [vmem:[#allocation9] sm:$0xff]
    %v1212 = vld [vmem:[#allocation9 + $0x8] sm:$0xff]
    %v1215 = vlaneseq
    %v1216 = vshrl.u32 %v1215, 7
    %v1217 = vsub.s32 0, %v1216
    %v1218 = vrot.slane %v1211, %v1217
    %v1219 = vlaneseq
    %v1220 = vshrl.u32 %v1219, 7
    %v1221 = vsub.s32 1, %v1220
    %v1222 = vrot.slane %v1211, %v1221
    %v1223 = vlaneseq
    %v1224 = vshrl.u32 %v1223, 7
    %v1225 = vsub.s32 2, %v1224
    %v1226 = vrot.slane %v1211, %v1225
    %v1227 = vlaneseq
    %v1228 = vshrl.u32 %v1227, 7
    %v1229 = vsub.s32 3, %v1228
    %v1230 = vrot.slane %v1211, %v1229
    %v1231 = vlaneseq
    %v1232 = vshrl.u32 %v1231, 7
    %v1233 = vsub.s32 4, %v1232
    %v1234 = vrot.slane %v1211, %v1233
    %v1235 = vlaneseq
    %v1236 = vshrl.u32 %v1235, 7
    %v1237 = vsub.s32 5, %v1236
    %v1238 = vrot.slane %v1211, %v1237
    %v1239 = vlaneseq
    %v1240 = vshrl.u32 %v1239, 7
    %v1241 = vsub.s32 6, %v1240
    %v1242 = vrot.slane %v1211, %v1241
    %v1243 = vlaneseq
    %v1244 = vshrl.u32 %v1243, 7
    %v1245 = vsub.s32 7, %v1244
    %v1246 = vrot.slane %v1211, %v1245
    %v1247 = vlaneseq
    %v1248 = vshrl.u32 %v1247, 7
    %v1249 = vsub.s32 0, %v1248
    %v1250 = vrot.slane %v1212, %v1249
    %v1251 = vlaneseq
    %v1252 = vshrl.u32 %v1251, 7
    %v1253 = vsub.s32 1, %v1252
    %v1254 = vrot.slane %v1212, %v1253
    %v1255 = vlaneseq
    %v1256 = vshrl.u32 %v1255, 7
    %v1257 = vsub.s32 2, %v1256
    %v1258 = vrot.slane %v1212, %v1257
    %v1259 = vlaneseq
    %v1260 = vshrl.u32 %v1259, 7
    %v1261 = vsub.s32 3, %v1260
    %v1262 = vrot.slane %v1212, %v1261
    %v1263 = vlaneseq
    %v1264 = vshrl.u32 %v1263, 7
    %v1265 = vsub.s32 4, %v1264
    %v1266 = vrot.slane %v1212, %v1265
    %v1267 = vlaneseq
    %v1268 = vshrl.u32 %v1267, 7
    %v1269 = vsub.s32 5, %v1268
    %v1270 = vrot.slane %v1212, %v1269
    %v1271 = vlaneseq
    %v1272 = vshrl.u32 %v1271, 7
    %v1273 = vsub.s32 6, %v1272
    %v1274 = vrot.slane %v1212, %v1273
    %v1275 = vlaneseq
    %v1276 = vshrl.u32 %v1275, 7
    %v1277 = vsub.s32 7, %v1276
    %v1278 = vrot.slane %v1212, %v1277
    %v1295 = vmul.f32 %v1195, %v1218
    %v1296 = vmul.f32 %v1196, %v1222
    %v1297 = vmul.f32 %v1197, %v1226
    %v1298 = vmul.f32 %v1198, %v1230
    %v1299 = vmul.f32 %v1199, %v1234
    %v1300 = vmul.f32 %v1200, %v1238
    %v1301 = vmul.f32 %v1201, %v1242
    %v1302 = vmul.f32 %v1202, %v1246
    %v1303 = vmul.f32 %v1203, %v1250
    %v1304 = vmul.f32 %v1204, %v1254
    %v1305 = vmul.f32 %v1205, %v1258
    %v1306 = vmul.f32 %v1206, %v1262
    %v1307 = vmul.f32 %v1207, %v1266
    %v1308 = vmul.f32 %v1208, %v1270
    %v1309 = vmul.f32 %v1209, %v1274
    %v1310 = vmul.f32 %v1210, %v1278
    %v1311 = vld [vmem:[#allocation10] sm:$0xff]
    %v1312 = vld [vmem:[#allocation10 + $0x8] sm:$0xff]
    %v1315 = vlaneseq
    %v1316 = vshrl.u32 %v1315, 7
    %v1317 = vsub.s32 0, %v1316
    %v1318 = vrot.slane %v1311, %v1317
    %v1319 = vlaneseq
    %v1320 = vshrl.u32 %v1319, 7
    %v1321 = vsub.s32 1, %v1320
    %v1322 = vrot.slane %v1311, %v1321
    %v1323 = vlaneseq
    %v1324 = vshrl.u32 %v1323, 7
    %v1325 = vsub.s32 2, %v1324
    %v1326 = vrot.slane %v1311, %v1325
    %v1327 = vlaneseq
    %v1328 = vshrl.u32 %v1327, 7
    %v1329 = vsub.s32 3, %v1328
    %v1330 = vrot.slane %v1311, %v1329
    %v1331 = vlaneseq
    %v1332 = vshrl.u32 %v1331, 7
    %v1333 = vsub.s32 4, %v1332
    %v1334 = vrot.slane %v1311, %v1333
    %v1335 = vlaneseq
    %v1336 = vshrl.u32 %v1335, 7
    %v1337 = vsub.s32 5, %v1336
    %v1338 = vrot.slane %v1311, %v1337
    %v1339 = vlaneseq
    %v1340 = vshrl.u32 %v1339, 7
    %v1341 = vsub.s32 6, %v1340
    %v1342 = vrot.slane %v1311, %v1341
    %v1343 = vlaneseq
    %v1344 = vshrl.u32 %v1343, 7
    %v1345 = vsub.s32 7, %v1344
    %v1346 = vrot.slane %v1311, %v1345
    %v1347 = vlaneseq
    %v1348 = vshrl.u32 %v1347, 7
    %v1349 = vsub.s32 0, %v1348
    %v1350 = vrot.slane %v1312, %v1349
    %v1351 = vlaneseq
    %v1352 = vshrl.u32 %v1351, 7
    %v1353 = vsub.s32 1, %v1352
    %v1354 = vrot.slane %v1312, %v1353
    %v1355 = vlaneseq
    %v1356 = vshrl.u32 %v1355, 7
    %v1357 = vsub.s32 2, %v1356
    %v1358 = vrot.slane %v1312, %v1357
    %v1359 = vlaneseq
    %v1360 = vshrl.u32 %v1359, 7
    %v1361 = vsub.s32 3, %v1360
    %v1362 = vrot.slane %v1312, %v1361
    %v1363 = vlaneseq
    %v1364 = vshrl.u32 %v1363, 7
    %v1365 = vsub.s32 4, %v1364
    %v1366 = vrot.slane %v1312, %v1365
    %v1367 = vlaneseq
    %v1368 = vshrl.u32 %v1367, 7
    %v1369 = vsub.s32 5, %v1368
    %v1370 = vrot.slane %v1312, %v1369
    %v1371 = vlaneseq
    %v1372 = vshrl.u32 %v1371, 7
    %v1373 = vsub.s32 6, %v1372
    %v1374 = vrot.slane %v1312, %v1373
    %v1375 = vlaneseq
    %v1376 = vshrl.u32 %v1375, 7
    %v1377 = vsub.s32 7, %v1376
    %v1378 = vrot.slane %v1312, %v1377
    %v1395 = vadd.f32 %v1295, %v1318
    %v1396 = vadd.f32 %v1296, %v1322
    %v1397 = vadd.f32 %v1297, %v1326
    %v1398 = vadd.f32 %v1298, %v1330
    %v1399 = vadd.f32 %v1299, %v1334
    %v1400 = vadd.f32 %v1300, %v1338
    %v1401 = vadd.f32 %v1301, %v1342
    %v1402 = vadd.f32 %v1302, %v1346
    %v1403 = vadd.f32 %v1303, %v1350
    %v1404 = vadd.f32 %v1304, %v1354
    %v1405 = vadd.f32 %v1305, %v1358
    %v1406 = vadd.f32 %v1306, %v1362
    %v1407 = vadd.f32 %v1307, %v1366
    %v1408 = vadd.f32 %v1308, %v1370
    %v1409 = vadd.f32 %v1309, %v1374
    %v1410 = vadd.f32 %v1310, %v1378
    %vm1411 = vcmp.ge.f32.partialorder %v1395, 0.0
    %vm1412 = vcmp.ge.f32.partialorder %v1396, 0.0
    %vm1413 = vcmp.ge.f32.partialorder %v1397, 0.0
    %vm1414 = vcmp.ge.f32.partialorder %v1398, 0.0
    %vm1415 = vcmp.ge.f32.partialorder %v1399, 0.0
    %vm1416 = vcmp.ge.f32.partialorder %v1400, 0.0
    %vm1417 = vcmp.ge.f32.partialorder %v1401, 0.0
    %vm1418 = vcmp.ge.f32.partialorder %v1402, 0.0
    %vm1419 = vcmp.ge.f32.partialorder %v1403, 0.0
    %vm1420 = vcmp.ge.f32.partialorder %v1404, 0.0
    %vm1421 = vcmp.ge.f32.partialorder %v1405, 0.0
    %vm1422 = vcmp.ge.f32.partialorder %v1406, 0.0
    %vm1423 = vcmp.ge.f32.partialorder %v1407, 0.0
    %vm1424 = vcmp.ge.f32.partialorder %v1408, 0.0
    %vm1425 = vcmp.ge.f32.partialorder %v1409, 0.0
    %vm1426 = vcmp.ge.f32.partialorder %v1410, 0.0
    %v1427 = vmul.f32 %v1395, 0.2
    %v1428 = vmul.f32 %v1396, 0.2
    %v1429 = vmul.f32 %v1397, 0.2
    %v1430 = vmul.f32 %v1398, 0.2
    %v1431 = vmul.f32 %v1399, 0.2
    %v1432 = vmul.f32 %v1400, 0.2
    %v1433 = vmul.f32 %v1401, 0.2
    %v1434 = vmul.f32 %v1402, 0.2
    %v1435 = vmul.f32 %v1403, 0.2
    %v1436 = vmul.f32 %v1404, 0.2
    %v1437 = vmul.f32 %v1405, 0.2
    %v1438 = vmul.f32 %v1406, 0.2
    %v1439 = vmul.f32 %v1407, 0.2
    %v1440 = vmul.f32 %v1408, 0.2
    %v1441 = vmul.f32 %v1409, 0.2
    %v1442 = vmul.f32 %v1410, 0.2
    %v1443 = vsel %vm1411, %v1395, %v1427
    %v1444 = vsel %vm1412, %v1396, %v1428
    %v1445 = vsel %vm1413, %v1397, %v1429
    %v1446 = vsel %vm1414, %v1398, %v1430
    %v1447 = vsel %vm1415, %v1399, %v1431
    %v1448 = vsel %vm1416, %v1400, %v1432
    %v1449 = vsel %vm1417, %v1401, %v1433
    %v1450 = vsel %vm1418, %v1402, %v1434
    %v1451 = vsel %vm1419, %v1403, %v1435
    %v1452 = vsel %vm1420, %v1404, %v1436
    %v1453 = vsel %vm1421, %v1405, %v1437
    %v1454 = vsel %vm1422, %v1406, %v1438
    %v1455 = vsel %vm1423, %v1407, %v1439
    %v1456 = vsel %vm1424, %v1408, %v1440
    %v1457 = vsel %vm1425, %v1409, %v1441
    %v1458 = vsel %vm1426, %v1410, %v1442
    %1459 = vst [vmem:[#allocation2] sm:$0xf] %v1443
    %1460 = vst [vmem:[#allocation2 + $0x8] sm:$0xf] %v1444
    %1461 = vst [vmem:[#allocation2 + $0x10] sm:$0xf] %v1445
    %1462 = vst [vmem:[#allocation2 + $0x18] sm:$0xf] %v1446
    %v1467 = vrot.slane %v1447, 4
    %v1468 = vrot.slane %v1448, 4
    %v1469 = vrot.slane %v1449, 4
    %v1470 = vrot.slane %v1450, 4
    %1475 = vst [vmem:[#allocation2] sm:$0xf0] %v1467
    %1476 = vst [vmem:[#allocation2 + $0x8] sm:$0xf0] %v1468
    %1477 = vst [vmem:[#allocation2 + $0x10] sm:$0xf0] %v1469
    %1478 = vst [vmem:[#allocation2 + $0x18] sm:$0xf0] %v1470
    %1479 = vst [vmem:[#allocation2 + $0x20] sm:$0xf] %v1451
    %1480 = vst [vmem:[#allocation2 + $0x28] sm:$0xf] %v1452
    %1481 = vst [vmem:[#allocation2 + $0x30] sm:$0xf] %v1453
    %1482 = vst [vmem:[#allocation2 + $0x38] sm:$0xf] %v1454
    %v1487 = vrot.slane %v1455, 4
    %v1488 = vrot.slane %v1456, 4
    %v1489 = vrot.slane %v1457, 4
    %v1490 = vrot.slane %v1458, 4
    %1495 = vst [vmem:[#allocation2 + $0x20] sm:$0xf0] %v1487
    %1496 = vst [vmem:[#allocation2 + $0x28] sm:$0xf0] %v1488
    %1497 = vst [vmem:[#allocation2 + $0x30] sm:$0xf0] %v1489
    %1498 = vst [vmem:[#allocation2 + $0x38] sm:$0xf0] %v1490
    %v1499 = vld [vmem:[#allocation2] sm:$0xff]
    %v1500 = vld [vmem:[#allocation2 + $0x8] sm:$0xff]
    %v1501 = vld [vmem:[#allocation2 + $0x10] sm:$0xff]
    %v1502 = vld [vmem:[#allocation2 + $0x18] sm:$0xff]
    %v1503 = vld [vmem:[#allocation2 + $0x20] sm:$0xff]
    %v1504 = vld [vmem:[#allocation2 + $0x28] sm:$0xff]
    %v1505 = vld [vmem:[#allocation2 + $0x30] sm:$0xff]
    %v1506 = vld [vmem:[#allocation2 + $0x38] sm:$0xff]
    %v1507 = vld [vmem:[#allocation12] sm:$0xff]
    %v1508 = vld [vmem:[#allocation12 + $0x8] sm:$0xff]
    %v1509 = vld [vmem:[#allocation12 + $0x10] sm:$0xff]
    %v1510 = vld [vmem:[#allocation12 + $0x18] sm:$0xff]
    %v1511 = vld [vmem:[#allocation12 + $0x20] sm:$0xff]
    %v1512 = vld [vmem:[#allocation12 + $0x28] sm:$0xff]
    %v1513 = vld [vmem:[#allocation12 + $0x30] sm:$0xff]
    %v1514 = vld [vmem:[#allocation12 + $0x38] sm:$0xff]
    %v1515 = vld [vmem:[#allocation12 + $0x40] sm:$0xff]
    %v1516 = vld [vmem:[#allocation12 + $0x48] sm:$0xff]
    %v1517 = vld [vmem:[#allocation12 + $0x50] sm:$0xff]
    %v1518 = vld [vmem:[#allocation12 + $0x58] sm:$0xff]
    %v1519 = vld [vmem:[#allocation12 + $0x60] sm:$0xff]
    %v1520 = vld [vmem:[#allocation12 + $0x68] sm:$0xff]
    %v1521 = vld [vmem:[#allocation12 + $0x70] sm:$0xff]
    %v1522 = vld [vmem:[#allocation12 + $0x78] sm:$0xff]
    %v1523 = vld [vmem:[#allocation12 + $0x80] sm:$0xff]
    %v1524 = vld [vmem:[#allocation12 + $0x88] sm:$0xff]
    %v1525 = vld [vmem:[#allocation12 + $0x90] sm:$0xff]
    %v1526 = vld [vmem:[#allocation12 + $0x98] sm:$0xff]
    %v1527 = vld [vmem:[#allocation12 + $0xa0] sm:$0xff]
    %v1528 = vld [vmem:[#allocation12 + $0xa8] sm:$0xff]
    %v1529 = vld [vmem:[#allocation12 + $0xb0] sm:$0xff]
    %v1530 = vld [vmem:[#allocation12 + $0xb8] sm:$0xff]
    %v1531 = vld [vmem:[#allocation12 + $0xc0] sm:$0xff]
    %v1532 = vld [vmem:[#allocation12 + $0xc8] sm:$0xff]
    %v1533 = vld [vmem:[#allocation12 + $0xd0] sm:$0xff]
    %v1534 = vld [vmem:[#allocation12 + $0xd8] sm:$0xff]
    %v1535 = vld [vmem:[#allocation12 + $0xe0] sm:$0xff]
    %v1536 = vld [vmem:[#allocation12 + $0xe8] sm:$0xff]
    %v1537 = vld [vmem:[#allocation12 + $0xf0] sm:$0xff]
    %v1538 = vld [vmem:[#allocation12 + $0xf8] sm:$0xff]
    %v1539 = vld [vmem:[#allocation12 + $0x100] sm:$0xff]
    %v1540 = vld [vmem:[#allocation12 + $0x108] sm:$0xff]
    %v1541 = vld [vmem:[#allocation12 + $0x110] sm:$0xff]
    %v1542 = vld [vmem:[#allocation12 + $0x118] sm:$0xff]
    %v1543 = vld [vmem:[#allocation12 + $0x120] sm:$0xff]
    %v1544 = vld [vmem:[#allocation12 + $0x128] sm:$0xff]
    %v1545 = vld [vmem:[#allocation12 + $0x130] sm:$0xff]
    %v1546 = vld [vmem:[#allocation12 + $0x138] sm:$0xff]
    %v1547 = vld [vmem:[#allocation12 + $0x140] sm:$0xff]
    %v1548 = vld [vmem:[#allocation12 + $0x148] sm:$0xff]
    %v1549 = vld [vmem:[#allocation12 + $0x150] sm:$0xff]
    %v1550 = vld [vmem:[#allocation12 + $0x158] sm:$0xff]
    %v1551 = vld [vmem:[#allocation12 + $0x160] sm:$0xff]
    %v1552 = vld [vmem:[#allocation12 + $0x168] sm:$0xff]
    %v1553 = vld [vmem:[#allocation12 + $0x170] sm:$0xff]
    %v1554 = vld [vmem:[#allocation12 + $0x178] sm:$0xff]
    %v1555 = vld [vmem:[#allocation12 + $0x180] sm:$0xff]
    %v1556 = vld [vmem:[#allocation12 + $0x188] sm:$0xff]
    %v1557 = vld [vmem:[#allocation12 + $0x190] sm:$0xff]
    %v1558 = vld [vmem:[#allocation12 + $0x198] sm:$0xff]
    %v1559 = vld [vmem:[#allocation12 + $0x1a0] sm:$0xff]
    %v1560 = vld [vmem:[#allocation12 + $0x1a8] sm:$0xff]
    %v1561 = vld [vmem:[#allocation12 + $0x1b0] sm:$0xff]
    %v1562 = vld [vmem:[#allocation12 + $0x1b8] sm:$0xff]
    %v1563 = vld [vmem:[#allocation12 + $0x1c0] sm:$0xff]
    %v1564 = vld [vmem:[#allocation12 + $0x1c8] sm:$0xff]
    %v1565 = vld [vmem:[#allocation12 + $0x1d0] sm:$0xff]
    %v1566 = vld [vmem:[#allocation12 + $0x1d8] sm:$0xff]
    %v1567 = vld [vmem:[#allocation12 + $0x1e0] sm:$0xff]
    %v1568 = vld [vmem:[#allocation12 + $0x1e8] sm:$0xff]
    %v1569 = vld [vmem:[#allocation12 + $0x1f0] sm:$0xff]
    %v1570 = vld [vmem:[#allocation12 + $0x1f8] sm:$0xff]
    %v1571 = vld [vmem:[#allocation12 + $0x200] sm:$0xff]
    %v1572 = vld [vmem:[#allocation12 + $0x208] sm:$0xff]
    %v1573 = vld [vmem:[#allocation12 + $0x210] sm:$0xff]
    %v1574 = vld [vmem:[#allocation12 + $0x218] sm:$0xff]
    %v1575 = vld [vmem:[#allocation12 + $0x220] sm:$0xff]
    %v1576 = vld [vmem:[#allocation12 + $0x228] sm:$0xff]
    %v1577 = vld [vmem:[#allocation12 + $0x230] sm:$0xff]
    %v1578 = vld [vmem:[#allocation12 + $0x238] sm:$0xff]
    %v1579 = vld [vmem:[#allocation12 + $0x240] sm:$0xff]
    %v1580 = vld [vmem:[#allocation12 + $0x248] sm:$0xff]
    %v1581 = vld [vmem:[#allocation12 + $0x250] sm:$0xff]
    %v1582 = vld [vmem:[#allocation12 + $0x258] sm:$0xff]
    %v1583 = vld [vmem:[#allocation12 + $0x260] sm:$0xff]
    %v1584 = vld [vmem:[#allocation12 + $0x268] sm:$0xff]
    %v1585 = vld [vmem:[#allocation12 + $0x270] sm:$0xff]
    %v1586 = vld [vmem:[#allocation12 + $0x278] sm:$0xff]
    %v1587 = vld [vmem:[#allocation12 + $0x280] sm:$0xff]
    %v1588 = vld [vmem:[#allocation12 + $0x288] sm:$0xff]
    %v1589 = vld [vmem:[#allocation12 + $0x290] sm:$0xff]
    %v1590 = vld [vmem:[#allocation12 + $0x298] sm:$0xff]
    %v1591 = vld [vmem:[#allocation12 + $0x2a0] sm:$0xff]
    %v1592 = vld [vmem:[#allocation12 + $0x2a8] sm:$0xff]
    %v1593 = vld [vmem:[#allocation12 + $0x2b0] sm:$0xff]
    %v1594 = vld [vmem:[#allocation12 + $0x2b8] sm:$0xff]
    %v1595 = vld [vmem:[#allocation12 + $0x2c0] sm:$0xff]
    %v1596 = vld [vmem:[#allocation12 + $0x2c8] sm:$0xff]
    %v1597 = vld [vmem:[#allocation12 + $0x2d0] sm:$0xff]
    %v1598 = vld [vmem:[#allocation12 + $0x2d8] sm:$0xff]
    %v1599 = vld [vmem:[#allocation12 + $0x2e0] sm:$0xff]
    %v1600 = vld [vmem:[#allocation12 + $0x2e8] sm:$0xff]
    %v1601 = vld [vmem:[#allocation12 + $0x2f0] sm:$0xff]
    %v1602 = vld [vmem:[#allocation12 + $0x2f8] sm:$0xff]
    %v1603 = vld [vmem:[#allocation12 + $0x300] sm:$0xff]
    %v1604 = vld [vmem:[#allocation12 + $0x308] sm:$0xff]
    %v1605 = vld [vmem:[#allocation12 + $0x310] sm:$0xff]
    %v1606 = vld [vmem:[#allocation12 + $0x318] sm:$0xff]
    %v1607 = vld [vmem:[#allocation12 + $0x320] sm:$0xff]
    %v1608 = vld [vmem:[#allocation12 + $0x328] sm:$0xff]
    %v1609 = vld [vmem:[#allocation12 + $0x330] sm:$0xff]
    %v1610 = vld [vmem:[#allocation12 + $0x338] sm:$0xff]
    %v1611 = vld [vmem:[#allocation12 + $0x340] sm:$0xff]
    %v1612 = vld [vmem:[#allocation12 + $0x348] sm:$0xff]
    %v1613 = vld [vmem:[#allocation12 + $0x350] sm:$0xff]
    %v1614 = vld [vmem:[#allocation12 + $0x358] sm:$0xff]
    %v1615 = vld [vmem:[#allocation12 + $0x360] sm:$0xff]
    %v1616 = vld [vmem:[#allocation12 + $0x368] sm:$0xff]
    %v1617 = vld [vmem:[#allocation12 + $0x370] sm:$0xff]
    %v1618 = vld [vmem:[#allocation12 + $0x378] sm:$0xff]
    %v1619 = vld [vmem:[#allocation12 + $0x380] sm:$0xff]
    %v1620 = vld [vmem:[#allocation12 + $0x388] sm:$0xff]
    %v1621 = vld [vmem:[#allocation12 + $0x390] sm:$0xff]
    %v1622 = vld [vmem:[#allocation12 + $0x398] sm:$0xff]
    %v1623 = vld [vmem:[#allocation12 + $0x3a0] sm:$0xff]
    %v1624 = vld [vmem:[#allocation12 + $0x3a8] sm:$0xff]
    %v1625 = vld [vmem:[#allocation12 + $0x3b0] sm:$0xff]
    %v1626 = vld [vmem:[#allocation12 + $0x3b8] sm:$0xff]
    %v1627 = vld [vmem:[#allocation12 + $0x3c0] sm:$0xff]
    %v1628 = vld [vmem:[#allocation12 + $0x3c8] sm:$0xff]
    %v1629 = vld [vmem:[#allocation12 + $0x3d0] sm:$0xff]
    %v1630 = vld [vmem:[#allocation12 + $0x3d8] sm:$0xff]
    %v1631 = vld [vmem:[#allocation12 + $0x3e0] sm:$0xff]
    %v1632 = vld [vmem:[#allocation12 + $0x3e8] sm:$0xff]
    %v1633 = vld [vmem:[#allocation12 + $0x3f0] sm:$0xff]
    %v1634 = vld [vmem:[#allocation12 + $0x3f8] sm:$0xff]
    %v1635 = vld [vmem:[#allocation12 + $0x400] sm:$0xff]
    %v1636 = vld [vmem:[#allocation12 + $0x408] sm:$0xff]
    %v1637 = vld [vmem:[#allocation12 + $0x410] sm:$0xff]
    %v1638 = vld [vmem:[#allocation12 + $0x418] sm:$0xff]
    %v1639 = vld [vmem:[#allocation12 + $0x420] sm:$0xff]
    %v1640 = vld [vmem:[#allocation12 + $0x428] sm:$0xff]
    %v1641 = vld [vmem:[#allocation12 + $0x430] sm:$0xff]
    %v1642 = vld [vmem:[#allocation12 + $0x438] sm:$0xff]
    %v1643 = vld [vmem:[#allocation12 + $0x440] sm:$0xff]
    %v1644 = vld [vmem:[#allocation12 + $0x448] sm:$0xff]
    %v1645 = vld [vmem:[#allocation12 + $0x450] sm:$0xff]
    %v1646 = vld [vmem:[#allocation12 + $0x458] sm:$0xff]
    %v1647 = vld [vmem:[#allocation12 + $0x460] sm:$0xff]
    %v1648 = vld [vmem:[#allocation12 + $0x468] sm:$0xff]
    %v1649 = vld [vmem:[#allocation12 + $0x470] sm:$0xff]
    %v1650 = vld [vmem:[#allocation12 + $0x478] sm:$0xff]
    %v1651 = vld [vmem:[#allocation12 + $0x480] sm:$0xff]
    %v1652 = vld [vmem:[#allocation12 + $0x488] sm:$0xff]
    %v1653 = vld [vmem:[#allocation12 + $0x490] sm:$0xff]
    %v1654 = vld [vmem:[#allocation12 + $0x498] sm:$0xff]
    %v1655 = vld [vmem:[#allocation12 + $0x4a0] sm:$0xff]
    %v1656 = vld [vmem:[#allocation12 + $0x4a8] sm:$0xff]
    %v1657 = vld [vmem:[#allocation12 + $0x4b0] sm:$0xff]
    %v1658 = vld [vmem:[#allocation12 + $0x4b8] sm:$0xff]
    %v1659 = vld [vmem:[#allocation12 + $0x4c0] sm:$0xff]
    %v1660 = vld [vmem:[#allocation12 + $0x4c8] sm:$0xff]
    %v1661 = vld [vmem:[#allocation12 + $0x4d0] sm:$0xff]
    %v1662 = vld [vmem:[#allocation12 + $0x4d8] sm:$0xff]
    %v1663 = vld [vmem:[#allocation12 + $0x4e0] sm:$0xff]
    %v1664 = vld [vmem:[#allocation12 + $0x4e8] sm:$0xff]
    %v1665 = vld [vmem:[#allocation12 + $0x4f0] sm:$0xff]
    %v1666 = vld [vmem:[#allocation12 + $0x4f8] sm:$0xff]
    %v1667 = vld [vmem:[#allocation12 + $0x500] sm:$0xff]
    %v1668 = vld [vmem:[#allocation12 + $0x508] sm:$0xff]
    %v1669 = vld [vmem:[#allocation12 + $0x510] sm:$0xff]
    %v1670 = vld [vmem:[#allocation12 + $0x518] sm:$0xff]
    %v1671 = vld [vmem:[#allocation12 + $0x520] sm:$0xff]
    %v1672 = vld [vmem:[#allocation12 + $0x528] sm:$0xff]
    %v1673 = vld [vmem:[#allocation12 + $0x530] sm:$0xff]
    %v1674 = vld [vmem:[#allocation12 + $0x538] sm:$0xff]
    %v1675 = vld [vmem:[#allocation12 + $0x540] sm:$0xff]
    %v1676 = vld [vmem:[#allocation12 + $0x548] sm:$0xff]
    %v1677 = vld [vmem:[#allocation12 + $0x550] sm:$0xff]
    %v1678 = vld [vmem:[#allocation12 + $0x558] sm:$0xff]
    %v1679 = vld [vmem:[#allocation12 + $0x560] sm:$0xff]
    %v1680 = vld [vmem:[#allocation12 + $0x568] sm:$0xff]
    %v1681 = vld [vmem:[#allocation12 + $0x570] sm:$0xff]
    %v1682 = vld [vmem:[#allocation12 + $0x578] sm:$0xff]
    %v1683 = vld [vmem:[#allocation12 + $0x580] sm:$0xff]
    %v1684 = vld [vmem:[#allocation12 + $0x588] sm:$0xff]
    %v1685 = vld [vmem:[#allocation12 + $0x590] sm:$0xff]
    %v1686 = vld [vmem:[#allocation12 + $0x598] sm:$0xff]
    %v1687 = vld [vmem:[#allocation12 + $0x5a0] sm:$0xff]
    %v1688 = vld [vmem:[#allocation12 + $0x5a8] sm:$0xff]
    %v1689 = vld [vmem:[#allocation12 + $0x5b0] sm:$0xff]
    %v1690 = vld [vmem:[#allocation12 + $0x5b8] sm:$0xff]
    %v1691 = vld [vmem:[#allocation12 + $0x5c0] sm:$0xff]
    %v1692 = vld [vmem:[#allocation12 + $0x5c8] sm:$0xff]
    %v1693 = vld [vmem:[#allocation12 + $0x5d0] sm:$0xff]
    %v1694 = vld [vmem:[#allocation12 + $0x5d8] sm:$0xff]
    %v1695 = vld [vmem:[#allocation12 + $0x5e0] sm:$0xff]
    %v1696 = vld [vmem:[#allocation12 + $0x5e8] sm:$0xff]
    %v1697 = vld [vmem:[#allocation12 + $0x5f0] sm:$0xff]
    %v1698 = vld [vmem:[#allocation12 + $0x5f8] sm:$0xff]
    %v1699 = vld [vmem:[#allocation12 + $0x600] sm:$0xff]
    %v1700 = vld [vmem:[#allocation12 + $0x608] sm:$0xff]
    %v1701 = vld [vmem:[#allocation12 + $0x610] sm:$0xff]
    %v1702 = vld [vmem:[#allocation12 + $0x618] sm:$0xff]
    %v1703 = vld [vmem:[#allocation12 + $0x620] sm:$0xff]
    %v1704 = vld [vmem:[#allocation12 + $0x628] sm:$0xff]
    %v1705 = vld [vmem:[#allocation12 + $0x630] sm:$0xff]
    %v1706 = vld [vmem:[#allocation12 + $0x638] sm:$0xff]
    %v1707 = vld [vmem:[#allocation12 + $0x640] sm:$0xff]
    %v1708 = vld [vmem:[#allocation12 + $0x648] sm:$0xff]
    %v1709 = vld [vmem:[#allocation12 + $0x650] sm:$0xff]
    %v1710 = vld [vmem:[#allocation12 + $0x658] sm:$0xff]
    %v1711 = vld [vmem:[#allocation12 + $0x660] sm:$0xff]
    %v1712 = vld [vmem:[#allocation12 + $0x668] sm:$0xff]
    %v1713 = vld [vmem:[#allocation12 + $0x670] sm:$0xff]
    %v1714 = vld [vmem:[#allocation12 + $0x678] sm:$0xff]
    %v1715 = vld [vmem:[#allocation12 + $0x680] sm:$0xff]
    %v1716 = vld [vmem:[#allocation12 + $0x688] sm:$0xff]
    %v1717 = vld [vmem:[#allocation12 + $0x690] sm:$0xff]
    %v1718 = vld [vmem:[#allocation12 + $0x698] sm:$0xff]
    %v1719 = vld [vmem:[#allocation12 + $0x6a0] sm:$0xff]
    %v1720 = vld [vmem:[#allocation12 + $0x6a8] sm:$0xff]
    %v1721 = vld [vmem:[#allocation12 + $0x6b0] sm:$0xff]
    %v1722 = vld [vmem:[#allocation12 + $0x6b8] sm:$0xff]
    %v1723 = vld [vmem:[#allocation12 + $0x6c0] sm:$0xff]
    %v1724 = vld [vmem:[#allocation12 + $0x6c8] sm:$0xff]
    %v1725 = vld [vmem:[#allocation12 + $0x6d0] sm:$0xff]
    %v1726 = vld [vmem:[#allocation12 + $0x6d8] sm:$0xff]
    %v1727 = vld [vmem:[#allocation12 + $0x6e0] sm:$0xff]
    %v1728 = vld [vmem:[#allocation12 + $0x6e8] sm:$0xff]
    %v1729 = vld [vmem:[#allocation12 + $0x6f0] sm:$0xff]
    %v1730 = vld [vmem:[#allocation12 + $0x6f8] sm:$0xff]
    %v1731 = vld [vmem:[#allocation12 + $0x700] sm:$0xff]
    %v1732 = vld [vmem:[#allocation12 + $0x708] sm:$0xff]
    %v1733 = vld [vmem:[#allocation12 + $0x710] sm:$0xff]
    %v1734 = vld [vmem:[#allocation12 + $0x718] sm:$0xff]
    %v1735 = vld [vmem:[#allocation12 + $0x720] sm:$0xff]
    %v1736 = vld [vmem:[#allocation12 + $0x728] sm:$0xff]
    %v1737 = vld [vmem:[#allocation12 + $0x730] sm:$0xff]
    %v1738 = vld [vmem:[#allocation12 + $0x738] sm:$0xff]
    %v1739 = vld [vmem:[#allocation12 + $0x740] sm:$0xff]
    %v1740 = vld [vmem:[#allocation12 + $0x748] sm:$0xff]
    %v1741 = vld [vmem:[#allocation12 + $0x750] sm:$0xff]
    %v1742 = vld [vmem:[#allocation12 + $0x758] sm:$0xff]
    %v1743 = vld [vmem:[#allocation12 + $0x760] sm:$0xff]
    %v1744 = vld [vmem:[#allocation12 + $0x768] sm:$0xff]
    %v1745 = vld [vmem:[#allocation12 + $0x770] sm:$0xff]
    %v1746 = vld [vmem:[#allocation12 + $0x778] sm:$0xff]
    %v1747 = vld [vmem:[#allocation12 + $0x780] sm:$0xff]
    %v1748 = vld [vmem:[#allocation12 + $0x788] sm:$0xff]
    %v1749 = vld [vmem:[#allocation12 + $0x790] sm:$0xff]
    %v1750 = vld [vmem:[#allocation12 + $0x798] sm:$0xff]
    %v1751 = vld [vmem:[#allocation12 + $0x7a0] sm:$0xff]
    %v1752 = vld [vmem:[#allocation12 + $0x7a8] sm:$0xff]
    %v1753 = vld [vmem:[#allocation12 + $0x7b0] sm:$0xff]
    %v1754 = vld [vmem:[#allocation12 + $0x7b8] sm:$0xff]
    %v1755 = vld [vmem:[#allocation12 + $0x7c0] sm:$0xff]
    %v1756 = vld [vmem:[#allocation12 + $0x7c8] sm:$0xff]
    %v1757 = vld [vmem:[#allocation12 + $0x7d0] sm:$0xff]
    %v1758 = vld [vmem:[#allocation12 + $0x7d8] sm:$0xff]
    %v1759 = vld [vmem:[#allocation12 + $0x7e0] sm:$0xff]
    %v1760 = vld [vmem:[#allocation12 + $0x7e8] sm:$0xff]
    %v1761 = vld [vmem:[#allocation12 + $0x7f0] sm:$0xff]
    %v1762 = vld [vmem:[#allocation12 + $0x7f8] sm:$0xff]
    %1763 = vmatprep.subr.mxu0 %v1568
    %1764 = vmatpush1.msra.mxu0 %v1567
    %1765 = vmatprep.subr.mxu0 %v1564
    %1766 = vmatpush1.msra.mxu0 %v1563
    %1767 = vmatprep.subr.mxu0 %v1560
    %1768 = vmatpush1.msra.mxu0 %v1559
    %1769 = vmatprep.subr.mxu0 %v1556
    %1770 = vmatpush1.msra.mxu0 %v1555
    %1771 = vmatprep.subr.mxu0 %v1552
    %1772 = vmatpush1.msra.mxu0 %v1551
    %1773 = vmatprep.subr.mxu0 %v1548
    %1774 = vmatpush1.msra.mxu0 %v1547
    %1775 = vmatprep.subr.mxu0 %v1544
    %1776 = vmatpush1.msra.mxu0 %v1543
    %1777 = vmatprep.subr.mxu0 %v1540
    %1778 = vmatpush1.msra.mxu0 %v1539
    %1779 = vmatprep.subr.mxu0 %v1536
    %1780 = vmatpush1.msra.mxu0 %v1535
    %1781 = vmatprep.subr.mxu0 %v1532
    %1782 = vmatpush1.msra.mxu0 %v1531
    %1783 = vmatprep.subr.mxu0 %v1528
    %1784 = vmatpush1.msra.mxu0 %v1527
    %1785 = vmatprep.subr.mxu0 %v1524
    %1786 = vmatpush1.msra.mxu0 %v1523
    %1787 = vmatprep.subr.mxu0 %v1520
    %1788 = vmatpush1.msra.mxu0 %v1519
    %1789 = vmatprep.subr.mxu0 %v1516
    %1790 = vmatpush1.msra.mxu0 %v1515
    %1791 = vmatprep.subr.mxu0 %v1512
    %1792 = vmatpush1.msra.mxu0 %v1511
    %1793 = vmatprep.subr.mxu0 %v1508
    %1794 = vmatpush1.msra.mxu0 %v1507
    %1795 = vmatprep.subr.mxu0 %v1632
    %1796 = vmatpush2.msra.mxu0 %v1631
    %1797 = vmatprep.subr.mxu0 %v1628
    %1798 = vmatpush2.msra.mxu0 %v1627
    %1799 = vmatprep.subr.mxu0 %v1624
    %1800 = vmatpush2.msra.mxu0 %v1623
    %1801 = vmatprep.subr.mxu0 %v1620
    %1802 = vmatpush2.msra.mxu0 %v1619
    %1803 = vmatprep.subr.mxu0 %v1616
    %1804 = vmatpush2.msra.mxu0 %v1615
    %1805 = vmatprep.subr.mxu0 %v1612
    %1806 = vmatpush2.msra.mxu0 %v1611
    %1807 = vmatprep.subr.mxu0 %v1608
    %1808 = vmatpush2.msra.mxu0 %v1607
    %1809 = vmatprep.subr.mxu0 %v1604
    %1810 = vmatpush2.msra.mxu0 %v1603
    %1811 = vmatprep.subr.mxu0 %v1600
    %1812 = vmatpush2.msra.mxu0 %v1599
    %1813 = vmatprep.subr.mxu0 %v1596
    %1814 = vmatpush2.msra.mxu0 %v1595
    %1815 = vmatprep.subr.mxu0 %v1592
    %1816 = vmatpush2.msra.mxu0 %v1591
    %1817 = vmatprep.subr.mxu0 %v1588
    %1818 = vmatpush2.msra.mxu0 %v1587
    %1819 = vmatprep.subr.mxu0 %v1584
    %1820 = vmatpush2.msra.mxu0 %v1583
    %1821 = vmatprep.subr.mxu0 %v1580
    %1822 = vmatpush2.msra.mxu0 %v1579
    %1823 = vmatprep.subr.mxu0 %v1576
    %1824 = vmatpush2.msra.mxu0 %v1575
    %1825 = vmatprep.subr.mxu0 %v1572
    %1826 = vmatpush2.msra.mxu0 %v1571
    %1827 = vmatprep.mubr.f32.mxu0 %v1500
    %1828 = vmatmul.mubr.f32.gmra.mxu0 %v1499
    %v1829 = vpop.f32.mrf.mxu0
    %v1830 = vadd.f32 0.0, %v1829
    %v1831 = vpop.f32.mrf.mxu0
    %v1832 = vadd.f32 0.0, %v1831
    %1833 = vmatprep.mubr.f32.mxu0 %v1504
    %1834 = vmatmul.mubr.f32.gmra.mxu0 %v1503
    %v1835 = vpop.f32.mrf.mxu0
    %v1836 = vadd.f32 0.0, %v1835
    %v1837 = vpop.f32.mrf.mxu0
    %v1838 = vadd.f32 0.0, %v1837
    %1839 = vdwg.mxu0
    %1840 = vmatprep.subr.mxu0 %v1696
    %1841 = vmatpush1.msra.mxu0 %v1695
    %1842 = vmatprep.subr.mxu0 %v1692
    %1843 = vmatpush1.msra.mxu0 %v1691
    %1844 = vmatprep.subr.mxu0 %v1688
    %1845 = vmatpush1.msra.mxu0 %v1687
    %1846 = vmatprep.subr.mxu0 %v1684
    %1847 = vmatpush1.msra.mxu0 %v1683
    %1848 = vmatprep.subr.mxu0 %v1680
    %1849 = vmatpush1.msra.mxu0 %v1679
    %1850 = vmatprep.subr.mxu0 %v1676
    %1851 = vmatpush1.msra.mxu0 %v1675
    %1852 = vmatprep.subr.mxu0 %v1672
    %1853 = vmatpush1.msra.mxu0 %v1671
    %1854 = vmatprep.subr.mxu0 %v1668
    %1855 = vmatpush1.msra.mxu0 %v1667
    %1856 = vmatprep.subr.mxu0 %v1664
    %1857 = vmatpush1.msra.mxu0 %v1663
    %1858 = vmatprep.subr.mxu0 %v1660
    %1859 = vmatpush1.msra.mxu0 %v1659
    %1860 = vmatprep.subr.mxu0 %v1656
    %1861 = vmatpush1.msra.mxu0 %v1655
    %1862 = vmatprep.subr.mxu0 %v1652
    %1863 = vmatpush1.msra.mxu0 %v1651
    %1864 = vmatprep.subr.mxu0 %v1648
    %1865 = vmatpush1.msra.mxu0 %v1647
    %1866 = vmatprep.subr.mxu0 %v1644
    %1867 = vmatpush1.msra.mxu0 %v1643
    %1868 = vmatprep.subr.mxu0 %v1640
    %1869 = vmatpush1.msra.mxu0 %v1639
    %1870 = vmatprep.subr.mxu0 %v1636
    %1871 = vmatpush1.msra.mxu0 %v1635
    %1872 = vmatprep.subr.mxu0 %v1760
    %1873 = vmatpush2.msra.mxu0 %v1759
    %1874 = vmatprep.subr.mxu0 %v1756
    %1875 = vmatpush2.msra.mxu0 %v1755
    %1876 = vmatprep.subr.mxu0 %v1752
    %1877 = vmatpush2.msra.mxu0 %v1751
    %1878 = vmatprep.subr.mxu0 %v1748
    %1879 = vmatpush2.msra.mxu0 %v1747
    %1880 = vmatprep.subr.mxu0 %v1744
    %1881 = vmatpush2.msra.mxu0 %v1743
    %1882 = vmatprep.subr.mxu0 %v1740
    %1883 = vmatpush2.msra.mxu0 %v1739
    %1884 = vmatprep.subr.mxu0 %v1736
    %1885 = vmatpush2.msra.mxu0 %v1735
    %1886 = vmatprep.subr.mxu0 %v1732
    %1887 = vmatpush2.msra.mxu0 %v1731
    %1888 = vmatprep.subr.mxu0 %v1728
    %1889 = vmatpush2.msra.mxu0 %v1727
    %1890 = vmatprep.subr.mxu0 %v1724
    %1891 = vmatpush2.msra.mxu0 %v1723
    %1892 = vmatprep.subr.mxu0 %v1720
    %1893 = vmatpush2.msra.mxu0 %v1719
    %1894 = vmatprep.subr.mxu0 %v1716
    %1895 = vmatpush2.msra.mxu0 %v1715
    %1896 = vmatprep.subr.mxu0 %v1712
    %1897 = vmatpush2.msra.mxu0 %v1711
    %1898 = vmatprep.subr.mxu0 %v1708
    %1899 = vmatpush2.msra.mxu0 %v1707
    %1900 = vmatprep.subr.mxu0 %v1704
    %1901 = vmatpush2.msra.mxu0 %v1703
    %1902 = vmatprep.subr.mxu0 %v1700
    %1903 = vmatpush2.msra.mxu0 %v1699
    %1904 = vmatprep.mubr.f32.mxu0 %v1502
    %1905 = vmatmul.mubr.f32.gmra.mxu0 %v1501
    %v1906 = vpop.f32.mrf.mxu0
    %v1907 = vadd.f32 %v1830, %v1906
    %v1908 = vpop.f32.mrf.mxu0
    %v1909 = vadd.f32 %v1832, %v1908
    %1910 = vmatprep.mubr.f32.mxu0 %v1506
    %1911 = vmatmul.mubr.f32.gmra.mxu0 %v1505
    %v1912 = vpop.f32.mrf.mxu0
    %v1913 = vadd.f32 %v1836, %v1912
    %v1914 = vpop.f32.mrf.mxu0
    %v1915 = vadd.f32 %v1838, %v1914
    %1916 = vdwg.mxu0
    %1917 = vmatprep.subr.mxu0 %v1570
    %1918 = vmatpush1.msra.mxu0 %v1569
    %1919 = vmatprep.subr.mxu0 %v1566
    %1920 = vmatpush1.msra.mxu0 %v1565
    %1921 = vmatprep.subr.mxu0 %v1562
    %1922 = vmatpush1.msra.mxu0 %v1561
    %1923 = vmatprep.subr.mxu0 %v1558
    %1924 = vmatpush1.msra.mxu0 %v1557
    %1925 = vmatprep.subr.mxu0 %v1554
    %1926 = vmatpush1.msra.mxu0 %v1553
    %1927 = vmatprep.subr.mxu0 %v1550
    %1928 = vmatpush1.msra.mxu0 %v1549
    %1929 = vmatprep.subr.mxu0 %v1546
    %1930 = vmatpush1.msra.mxu0 %v1545
    %1931 = vmatprep.subr.mxu0 %v1542
    %1932 = vmatpush1.msra.mxu0 %v1541
    %1933 = vmatprep.subr.mxu0 %v1538
    %1934 = vmatpush1.msra.mxu0 %v1537
    %1935 = vmatprep.subr.mxu0 %v1534
    %1936 = vmatpush1.msra.mxu0 %v1533
    %1937 = vmatprep.subr.mxu0 %v1530
    %1938 = vmatpush1.msra.mxu0 %v1529
    %1939 = vmatprep.subr.mxu0 %v1526
    %1940 = vmatpush1.msra.mxu0 %v1525
    %1941 = vmatprep.subr.mxu0 %v1522
    %1942 = vmatpush1.msra.mxu0 %v1521
    %1943 = vmatprep.subr.mxu0 %v1518
    %1944 = vmatpush1.msra.mxu0 %v1517
    %1945 = vmatprep.subr.mxu0 %v1514
    %1946 = vmatpush1.msra.mxu0 %v1513
    %1947 = vmatprep.subr.mxu0 %v1510
    %1948 = vmatpush1.msra.mxu0 %v1509
    %1949 = vmatprep.subr.mxu0 %v1634
    %1950 = vmatpush2.msra.mxu0 %v1633
    %1951 = vmatprep.subr.mxu0 %v1630
    %1952 = vmatpush2.msra.mxu0 %v1629
    %1953 = vmatprep.subr.mxu0 %v1626
    %1954 = vmatpush2.msra.mxu0 %v1625
    %1955 = vmatprep.subr.mxu0 %v1622
    %1956 = vmatpush2.msra.mxu0 %v1621
    %1957 = vmatprep.subr.mxu0 %v1618
    %1958 = vmatpush2.msra.mxu0 %v1617
    %1959 = vmatprep.subr.mxu0 %v1614
    %1960 = vmatpush2.msra.mxu0 %v1613
    %1961 = vmatprep.subr.mxu0 %v1610
    %1962 = vmatpush2.msra.mxu0 %v1609
    %1963 = vmatprep.subr.mxu0 %v1606
    %1964 = vmatpush2.msra.mxu0 %v1605
    %1965 = vmatprep.subr.mxu0 %v1602
    %1966 = vmatpush2.msra.mxu0 %v1601
    %1967 = vmatprep.subr.mxu0 %v1598
    %1968 = vmatpush2.msra.mxu0 %v1597
    %1969 = vmatprep.subr.mxu0 %v1594
    %1970 = vmatpush2.msra.mxu0 %v1593
    %1971 = vmatprep.subr.mxu0 %v1590
    %1972 = vmatpush2.msra.mxu0 %v1589
    %1973 = vmatprep.subr.mxu0 %v1586
    %1974 = vmatpush2.msra.mxu0 %v1585
    %1975 = vmatprep.subr.mxu0 %v1582
    %1976 = vmatpush2.msra.mxu0 %v1581
    %1977 = vmatprep.subr.mxu0 %v1578
    %1978 = vmatpush2.msra.mxu0 %v1577
    %1979 = vmatprep.subr.mxu0 %v1574
    %1980 = vmatpush2.msra.mxu0 %v1573
    %1981 = vmatprep.mubr.f32.mxu0 %v1500
    %1982 = vmatmul.mubr.f32.gmra.mxu0 %v1499
    %v1983 = vpop.f32.mrf.mxu0
    %v1984 = vadd.f32 0.0, %v1983
    %v1985 = vpop.f32.mrf.mxu0
    %v1986 = vadd.f32 0.0, %v1985
    %1987 = vmatprep.mubr.f32.mxu0 %v1504
    %1988 = vmatmul.mubr.f32.gmra.mxu0 %v1503
    %v1989 = vpop.f32.mrf.mxu0
    %v1990 = vadd.f32 0.0, %v1989
    %v1991 = vpop.f32.mrf.mxu0
    %v1992 = vadd.f32 0.0, %v1991
    %1993 = vdwg.mxu0
    %1994 = vmatprep.subr.mxu0 %v1698
    %1995 = vmatpush1.msra.mxu0 %v1697
    %1996 = vmatprep.subr.mxu0 %v1694
    %1997 = vmatpush1.msra.mxu0 %v1693
    %1998 = vmatprep.subr.mxu0 %v1690
    %1999 = vmatpush1.msra.mxu0 %v1689
    %2000 = vmatprep.subr.mxu0 %v1686
    %2001 = vmatpush1.msra.mxu0 %v1685
    %2002 = vmatprep.subr.mxu0 %v1682
    %2003 = vmatpush1.msra.mxu0 %v1681
    %2004 = vmatprep.subr.mxu0 %v1678
    %2005 = vmatpush1.msra.mxu0 %v1677
    %2006 = vmatprep.subr.mxu0 %v1674
    %2007 = vmatpush1.msra.mxu0 %v1673
    %2008 = vmatprep.subr.mxu0 %v1670
    %2009 = vmatpush1.msra.mxu0 %v1669
    %2010 = vmatprep.subr.mxu0 %v1666
    %2011 = vmatpush1.msra.mxu0 %v1665
    %2012 = vmatprep.subr.mxu0 %v1662
    %2013 = vmatpush1.msra.mxu0 %v1661
    %2014 = vmatprep.subr.mxu0 %v1658
    %2015 = vmatpush1.msra.mxu0 %v1657
    %2016 = vmatprep.subr.mxu0 %v1654
    %2017 = vmatpush1.msra.mxu0 %v1653
    %2018 = vmatprep.subr.mxu0 %v1650
    %2019 = vmatpush1.msra.mxu0 %v1649
    %2020 = vmatprep.subr.mxu0 %v1646
    %2021 = vmatpush1.msra.mxu0 %v1645
    %2022 = vmatprep.subr.mxu0 %v1642
    %2023 = vmatpush1.msra.mxu0 %v1641
    %2024 = vmatprep.subr.mxu0 %v1638
    %2025 = vmatpush1.msra.mxu0 %v1637
    %2026 = vmatprep.subr.mxu0 %v1762
    %2027 = vmatpush2.msra.mxu0 %v1761
    %2028 = vmatprep.subr.mxu0 %v1758
    %2029 = vmatpush2.msra.mxu0 %v1757
    %2030 = vmatprep.subr.mxu0 %v1754
    %2031 = vmatpush2.msra.mxu0 %v1753
    %2032 = vmatprep.subr.mxu0 %v1750
    %2033 = vmatpush2.msra.mxu0 %v1749
    %2034 = vmatprep.subr.mxu0 %v1746
    %2035 = vmatpush2.msra.mxu0 %v1745
    %2036 = vmatprep.subr.mxu0 %v1742
    %2037 = vmatpush2.msra.mxu0 %v1741
    %2038 = vmatprep.subr.mxu0 %v1738
    %2039 = vmatpush2.msra.mxu0 %v1737
    %2040 = vmatprep.subr.mxu0 %v1734
    %2041 = vmatpush2.msra.mxu0 %v1733
    %2042 = vmatprep.subr.mxu0 %v1730
    %2043 = vmatpush2.msra.mxu0 %v1729
    %2044 = vmatprep.subr.mxu0 %v1726
    %2045 = vmatpush2.msra.mxu0 %v1725
    %2046 = vmatprep.subr.mxu0 %v1722
    %2047 = vmatpush2.msra.mxu0 %v1721
    %2048 = vmatprep.subr.mxu0 %v1718
    %2049 = vmatpush2.msra.mxu0 %v1717
    %2050 = vmatprep.subr.mxu0 %v1714
    %2051 = vmatpush2.msra.mxu0 %v1713
    %2052 = vmatprep.subr.mxu0 %v1710
    %2053 = vmatpush2.msra.mxu0 %v1709
    %2054 = vmatprep.subr.mxu0 %v1706
    %2055 = vmatpush2.msra.mxu0 %v1705
    %2056 = vmatprep.subr.mxu0 %v1702
    %2057 = vmatpush2.msra.mxu0 %v1701
    %2058 = vmatprep.mubr.f32.mxu0 %v1502
    %2059 = vmatmul.mubr.f32.gmra.mxu0 %v1501
    %v2060 = vpop.f32.mrf.mxu0
    %v2061 = vadd.f32 %v1984, %v2060
    %v2062 = vpop.f32.mrf.mxu0
    %v2063 = vadd.f32 %v1986, %v2062
    %2064 = vmatprep.mubr.f32.mxu0 %v1506
    %2065 = vmatmul.mubr.f32.gmra.mxu0 %v1505
    %v2066 = vpop.f32.mrf.mxu0
    %v2067 = vadd.f32 %v1990, %v2066
    %v2068 = vpop.f32.mrf.mxu0
    %v2069 = vadd.f32 %v1992, %v2068
    %2070 = vdwg.mxu0
    %2071 = vst [vmem:[#allocation3] sm:$0xff] %v1907
    %2072 = vst [vmem:[#allocation3 + $0x8] sm:$0xff] %v1909
    %2073 = vst [vmem:[#allocation3 + $0x10] sm:$0xff] %v2061
    %2074 = vst [vmem:[#allocation3 + $0x18] sm:$0xff] %v2063
    %2075 = vst [vmem:[#allocation3 + $0x20] sm:$0xff] %v1913
    %2076 = vst [vmem:[#allocation3 + $0x28] sm:$0xff] %v1915
    %2077 = vst [vmem:[#allocation3 + $0x30] sm:$0xff] %v2067
    %2078 = vst [vmem:[#allocation3 + $0x38] sm:$0xff] %v2069
    %s2079 = scalar_lea.vmem [#allocation12], 2048
    %v2080 = vld [vmem:[%s2079] sm:$0xff]
    %v2081 = vld [vmem:[%s2079 + $0x8] sm:$0xff]
    %v2082 = vld [vmem:[%s2079 + $0x10] sm:$0xff]
    %v2083 = vld [vmem:[%s2079 + $0x18] sm:$0xff]
    %v2084 = vld [vmem:[%s2079 + $0x20] sm:$0xff]
    %v2085 = vld [vmem:[%s2079 + $0x28] sm:$0xff]
    %v2086 = vld [vmem:[%s2079 + $0x30] sm:$0xff]
    %v2087 = vld [vmem:[%s2079 + $0x38] sm:$0xff]
    %v2088 = vld [vmem:[%s2079 + $0x40] sm:$0xff]
    %v2089 = vld [vmem:[%s2079 + $0x48] sm:$0xff]
    %v2090 = vld [vmem:[%s2079 + $0x50] sm:$0xff]
    %v2091 = vld [vmem:[%s2079 + $0x58] sm:$0xff]
    %v2092 = vld [vmem:[%s2079 + $0x60] sm:$0xff]
    %v2093 = vld [vmem:[%s2079 + $0x68] sm:$0xff]
    %v2094 = vld [vmem:[%s2079 + $0x70] sm:$0xff]
    %v2095 = vld [vmem:[%s2079 + $0x78] sm:$0xff]
    %v2096 = vld [vmem:[%s2079 + $0x80] sm:$0xff]
    %v2097 = vld [vmem:[%s2079 + $0x88] sm:$0xff]
    %v2098 = vld [vmem:[%s2079 + $0x90] sm:$0xff]
    %v2099 = vld [vmem:[%s2079 + $0x98] sm:$0xff]
    %v2100 = vld [vmem:[%s2079 + $0xa0] sm:$0xff]
    %v2101 = vld [vmem:[%s2079 + $0xa8] sm:$0xff]
    %v2102 = vld [vmem:[%s2079 + $0xb0] sm:$0xff]
    %v2103 = vld [vmem:[%s2079 + $0xb8] sm:$0xff]
    %v2104 = vld [vmem:[%s2079 + $0xc0] sm:$0xff]
    %v2105 = vld [vmem:[%s2079 + $0xc8] sm:$0xff]
    %v2106 = vld [vmem:[%s2079 + $0xd0] sm:$0xff]
    %v2107 = vld [vmem:[%s2079 + $0xd8] sm:$0xff]
    %v2108 = vld [vmem:[%s2079 + $0xe0] sm:$0xff]
    %v2109 = vld [vmem:[%s2079 + $0xe8] sm:$0xff]
    %v2110 = vld [vmem:[%s2079 + $0xf0] sm:$0xff]
    %v2111 = vld [vmem:[%s2079 + $0xf8] sm:$0xff]
    %v2112 = vld [vmem:[%s2079 + $0x100] sm:$0xff]
    %v2113 = vld [vmem:[%s2079 + $0x108] sm:$0xff]
    %v2114 = vld [vmem:[%s2079 + $0x110] sm:$0xff]
    %v2115 = vld [vmem:[%s2079 + $0x118] sm:$0xff]
    %v2116 = vld [vmem:[%s2079 + $0x120] sm:$0xff]
    %v2117 = vld [vmem:[%s2079 + $0x128] sm:$0xff]
    %v2118 = vld [vmem:[%s2079 + $0x130] sm:$0xff]
    %v2119 = vld [vmem:[%s2079 + $0x138] sm:$0xff]
    %v2120 = vld [vmem:[%s2079 + $0x140] sm:$0xff]
    %v2121 = vld [vmem:[%s2079 + $0x148] sm:$0xff]
    %v2122 = vld [vmem:[%s2079 + $0x150] sm:$0xff]
    %v2123 = vld [vmem:[%s2079 + $0x158] sm:$0xff]
    %v2124 = vld [vmem:[%s2079 + $0x160] sm:$0xff]
    %v2125 = vld [vmem:[%s2079 + $0x168] sm:$0xff]
    %v2126 = vld [vmem:[%s2079 + $0x170] sm:$0xff]
    %v2127 = vld [vmem:[%s2079 + $0x178] sm:$0xff]
    %v2128 = vld [vmem:[%s2079 + $0x180] sm:$0xff]
    %v2129 = vld [vmem:[%s2079 + $0x188] sm:$0xff]
    %v2130 = vld [vmem:[%s2079 + $0x190] sm:$0xff]
    %v2131 = vld [vmem:[%s2079 + $0x198] sm:$0xff]
    %v2132 = vld [vmem:[%s2079 + $0x1a0] sm:$0xff]
    %v2133 = vld [vmem:[%s2079 + $0x1a8] sm:$0xff]
    %v2134 = vld [vmem:[%s2079 + $0x1b0] sm:$0xff]
    %v2135 = vld [vmem:[%s2079 + $0x1b8] sm:$0xff]
    %v2136 = vld [vmem:[%s2079 + $0x1c0] sm:$0xff]
    %v2137 = vld [vmem:[%s2079 + $0x1c8] sm:$0xff]
    %v2138 = vld [vmem:[%s2079 + $0x1d0] sm:$0xff]
    %v2139 = vld [vmem:[%s2079 + $0x1d8] sm:$0xff]
    %v2140 = vld [vmem:[%s2079 + $0x1e0] sm:$0xff]
    %v2141 = vld [vmem:[%s2079 + $0x1e8] sm:$0xff]
    %v2142 = vld [vmem:[%s2079 + $0x1f0] sm:$0xff]
    %v2143 = vld [vmem:[%s2079 + $0x1f8] sm:$0xff]
    %v2144 = vld [vmem:[%s2079 + $0x200] sm:$0xff]
    %v2145 = vld [vmem:[%s2079 + $0x208] sm:$0xff]
    %v2146 = vld [vmem:[%s2079 + $0x210] sm:$0xff]
    %v2147 = vld [vmem:[%s2079 + $0x218] sm:$0xff]
    %v2148 = vld [vmem:[%s2079 + $0x220] sm:$0xff]
    %v2149 = vld [vmem:[%s2079 + $0x228] sm:$0xff]
    %v2150 = vld [vmem:[%s2079 + $0x230] sm:$0xff]
    %v2151 = vld [vmem:[%s2079 + $0x238] sm:$0xff]
    %v2152 = vld [vmem:[%s2079 + $0x240] sm:$0xff]
    %v2153 = vld [vmem:[%s2079 + $0x248] sm:$0xff]
    %v2154 = vld [vmem:[%s2079 + $0x250] sm:$0xff]
    %v2155 = vld [vmem:[%s2079 + $0x258] sm:$0xff]
    %v2156 = vld [vmem:[%s2079 + $0x260] sm:$0xff]
    %v2157 = vld [vmem:[%s2079 + $0x268] sm:$0xff]
    %v2158 = vld [vmem:[%s2079 + $0x270] sm:$0xff]
    %v2159 = vld [vmem:[%s2079 + $0x278] sm:$0xff]
    %v2160 = vld [vmem:[%s2079 + $0x280] sm:$0xff]
    %v2161 = vld [vmem:[%s2079 + $0x288] sm:$0xff]
    %v2162 = vld [vmem:[%s2079 + $0x290] sm:$0xff]
    %v2163 = vld [vmem:[%s2079 + $0x298] sm:$0xff]
    %v2164 = vld [vmem:[%s2079 + $0x2a0] sm:$0xff]
    %v2165 = vld [vmem:[%s2079 + $0x2a8] sm:$0xff]
    %v2166 = vld [vmem:[%s2079 + $0x2b0] sm:$0xff]
    %v2167 = vld [vmem:[%s2079 + $0x2b8] sm:$0xff]
    %v2168 = vld [vmem:[%s2079 + $0x2c0] sm:$0xff]
    %v2169 = vld [vmem:[%s2079 + $0x2c8] sm:$0xff]
    %v2170 = vld [vmem:[%s2079 + $0x2d0] sm:$0xff]
    %v2171 = vld [vmem:[%s2079 + $0x2d8] sm:$0xff]
    %v2172 = vld [vmem:[%s2079 + $0x2e0] sm:$0xff]
    %v2173 = vld [vmem:[%s2079 + $0x2e8] sm:$0xff]
    %v2174 = vld [vmem:[%s2079 + $0x2f0] sm:$0xff]
    %v2175 = vld [vmem:[%s2079 + $0x2f8] sm:$0xff]
    %v2176 = vld [vmem:[%s2079 + $0x300] sm:$0xff]
    %v2177 = vld [vmem:[%s2079 + $0x308] sm:$0xff]
    %v2178 = vld [vmem:[%s2079 + $0x310] sm:$0xff]
    %v2179 = vld [vmem:[%s2079 + $0x318] sm:$0xff]
    %v2180 = vld [vmem:[%s2079 + $0x320] sm:$0xff]
    %v2181 = vld [vmem:[%s2079 + $0x328] sm:$0xff]
    %v2182 = vld [vmem:[%s2079 + $0x330] sm:$0xff]
    %v2183 = vld [vmem:[%s2079 + $0x338] sm:$0xff]
    %v2184 = vld [vmem:[%s2079 + $0x340] sm:$0xff]
    %v2185 = vld [vmem:[%s2079 + $0x348] sm:$0xff]
    %v2186 = vld [vmem:[%s2079 + $0x350] sm:$0xff]
    %v2187 = vld [vmem:[%s2079 + $0x358] sm:$0xff]
    %v2188 = vld [vmem:[%s2079 + $0x360] sm:$0xff]
    %v2189 = vld [vmem:[%s2079 + $0x368] sm:$0xff]
    %v2190 = vld [vmem:[%s2079 + $0x370] sm:$0xff]
    %v2191 = vld [vmem:[%s2079 + $0x378] sm:$0xff]
    %v2192 = vld [vmem:[%s2079 + $0x380] sm:$0xff]
    %v2193 = vld [vmem:[%s2079 + $0x388] sm:$0xff]
    %v2194 = vld [vmem:[%s2079 + $0x390] sm:$0xff]
    %v2195 = vld [vmem:[%s2079 + $0x398] sm:$0xff]
    %v2196 = vld [vmem:[%s2079 + $0x3a0] sm:$0xff]
    %v2197 = vld [vmem:[%s2079 + $0x3a8] sm:$0xff]
    %v2198 = vld [vmem:[%s2079 + $0x3b0] sm:$0xff]
    %v2199 = vld [vmem:[%s2079 + $0x3b8] sm:$0xff]
    %v2200 = vld [vmem:[%s2079 + $0x3c0] sm:$0xff]
    %v2201 = vld [vmem:[%s2079 + $0x3c8] sm:$0xff]
    %v2202 = vld [vmem:[%s2079 + $0x3d0] sm:$0xff]
    %v2203 = vld [vmem:[%s2079 + $0x3d8] sm:$0xff]
    %v2204 = vld [vmem:[%s2079 + $0x3e0] sm:$0xff]
    %v2205 = vld [vmem:[%s2079 + $0x3e8] sm:$0xff]
    %v2206 = vld [vmem:[%s2079 + $0x3f0] sm:$0xff]
    %v2207 = vld [vmem:[%s2079 + $0x3f8] sm:$0xff]
    %v2208 = vld [vmem:[%s2079 + $0x400] sm:$0xff]
    %v2209 = vld [vmem:[%s2079 + $0x408] sm:$0xff]
    %v2210 = vld [vmem:[%s2079 + $0x410] sm:$0xff]
    %v2211 = vld [vmem:[%s2079 + $0x418] sm:$0xff]
    %v2212 = vld [vmem:[%s2079 + $0x420] sm:$0xff]
    %v2213 = vld [vmem:[%s2079 + $0x428] sm:$0xff]
    %v2214 = vld [vmem:[%s2079 + $0x430] sm:$0xff]
    %v2215 = vld [vmem:[%s2079 + $0x438] sm:$0xff]
    %v2216 = vld [vmem:[%s2079 + $0x440] sm:$0xff]
    %v2217 = vld [vmem:[%s2079 + $0x448] sm:$0xff]
    %v2218 = vld [vmem:[%s2079 + $0x450] sm:$0xff]
    %v2219 = vld [vmem:[%s2079 + $0x458] sm:$0xff]
    %v2220 = vld [vmem:[%s2079 + $0x460] sm:$0xff]
    %v2221 = vld [vmem:[%s2079 + $0x468] sm:$0xff]
    %v2222 = vld [vmem:[%s2079 + $0x470] sm:$0xff]
    %v2223 = vld [vmem:[%s2079 + $0x478] sm:$0xff]
    %v2224 = vld [vmem:[%s2079 + $0x480] sm:$0xff]
    %v2225 = vld [vmem:[%s2079 + $0x488] sm:$0xff]
    %v2226 = vld [vmem:[%s2079 + $0x490] sm:$0xff]
    %v2227 = vld [vmem:[%s2079 + $0x498] sm:$0xff]
    %v2228 = vld [vmem:[%s2079 + $0x4a0] sm:$0xff]
    %v2229 = vld [vmem:[%s2079 + $0x4a8] sm:$0xff]
    %v2230 = vld [vmem:[%s2079 + $0x4b0] sm:$0xff]
    %v2231 = vld [vmem:[%s2079 + $0x4b8] sm:$0xff]
    %v2232 = vld [vmem:[%s2079 + $0x4c0] sm:$0xff]
    %v2233 = vld [vmem:[%s2079 + $0x4c8] sm:$0xff]
    %v2234 = vld [vmem:[%s2079 + $0x4d0] sm:$0xff]
    %v2235 = vld [vmem:[%s2079 + $0x4d8] sm:$0xff]
    %v2236 = vld [vmem:[%s2079 + $0x4e0] sm:$0xff]
    %v2237 = vld [vmem:[%s2079 + $0x4e8] sm:$0xff]
    %v2238 = vld [vmem:[%s2079 + $0x4f0] sm:$0xff]
    %v2239 = vld [vmem:[%s2079 + $0x4f8] sm:$0xff]
    %v2240 = vld [vmem:[%s2079 + $0x500] sm:$0xff]
    %v2241 = vld [vmem:[%s2079 + $0x508] sm:$0xff]
    %v2242 = vld [vmem:[%s2079 + $0x510] sm:$0xff]
    %v2243 = vld [vmem:[%s2079 + $0x518] sm:$0xff]
    %v2244 = vld [vmem:[%s2079 + $0x520] sm:$0xff]
    %v2245 = vld [vmem:[%s2079 + $0x528] sm:$0xff]
    %v2246 = vld [vmem:[%s2079 + $0x530] sm:$0xff]
    %v2247 = vld [vmem:[%s2079 + $0x538] sm:$0xff]
    %v2248 = vld [vmem:[%s2079 + $0x540] sm:$0xff]
    %v2249 = vld [vmem:[%s2079 + $0x548] sm:$0xff]
    %v2250 = vld [vmem:[%s2079 + $0x550] sm:$0xff]
    %v2251 = vld [vmem:[%s2079 + $0x558] sm:$0xff]
    %v2252 = vld [vmem:[%s2079 + $0x560] sm:$0xff]
    %v2253 = vld [vmem:[%s2079 + $0x568] sm:$0xff]
    %v2254 = vld [vmem:[%s2079 + $0x570] sm:$0xff]
    %v2255 = vld [vmem:[%s2079 + $0x578] sm:$0xff]
    %v2256 = vld [vmem:[%s2079 + $0x580] sm:$0xff]
    %v2257 = vld [vmem:[%s2079 + $0x588] sm:$0xff]
    %v2258 = vld [vmem:[%s2079 + $0x590] sm:$0xff]
    %v2259 = vld [vmem:[%s2079 + $0x598] sm:$0xff]
    %v2260 = vld [vmem:[%s2079 + $0x5a0] sm:$0xff]
    %v2261 = vld [vmem:[%s2079 + $0x5a8] sm:$0xff]
    %v2262 = vld [vmem:[%s2079 + $0x5b0] sm:$0xff]
    %v2263 = vld [vmem:[%s2079 + $0x5b8] sm:$0xff]
    %v2264 = vld [vmem:[%s2079 + $0x5c0] sm:$0xff]
    %v2265 = vld [vmem:[%s2079 + $0x5c8] sm:$0xff]
    %v2266 = vld [vmem:[%s2079 + $0x5d0] sm:$0xff]
    %v2267 = vld [vmem:[%s2079 + $0x5d8] sm:$0xff]
    %v2268 = vld [vmem:[%s2079 + $0x5e0] sm:$0xff]
    %v2269 = vld [vmem:[%s2079 + $0x5e8] sm:$0xff]
    %v2270 = vld [vmem:[%s2079 + $0x5f0] sm:$0xff]
    %v2271 = vld [vmem:[%s2079 + $0x5f8] sm:$0xff]
    %v2272 = vld [vmem:[%s2079 + $0x600] sm:$0xff]
    %v2273 = vld [vmem:[%s2079 + $0x608] sm:$0xff]
    %v2274 = vld [vmem:[%s2079 + $0x610] sm:$0xff]
    %v2275 = vld [vmem:[%s2079 + $0x618] sm:$0xff]
    %v2276 = vld [vmem:[%s2079 + $0x620] sm:$0xff]
    %v2277 = vld [vmem:[%s2079 + $0x628] sm:$0xff]
    %v2278 = vld [vmem:[%s2079 + $0x630] sm:$0xff]
    %v2279 = vld [vmem:[%s2079 + $0x638] sm:$0xff]
    %v2280 = vld [vmem:[%s2079 + $0x640] sm:$0xff]
    %v2281 = vld [vmem:[%s2079 + $0x648] sm:$0xff]
    %v2282 = vld [vmem:[%s2079 + $0x650] sm:$0xff]
    %v2283 = vld [vmem:[%s2079 + $0x658] sm:$0xff]
    %v2284 = vld [vmem:[%s2079 + $0x660] sm:$0xff]
    %v2285 = vld [vmem:[%s2079 + $0x668] sm:$0xff]
    %v2286 = vld [vmem:[%s2079 + $0x670] sm:$0xff]
    %v2287 = vld [vmem:[%s2079 + $0x678] sm:$0xff]
    %v2288 = vld [vmem:[%s2079 + $0x680] sm:$0xff]
    %v2289 = vld [vmem:[%s2079 + $0x688] sm:$0xff]
    %v2290 = vld [vmem:[%s2079 + $0x690] sm:$0xff]
    %v2291 = vld [vmem:[%s2079 + $0x698] sm:$0xff]
    %v2292 = vld [vmem:[%s2079 + $0x6a0] sm:$0xff]
    %v2293 = vld [vmem:[%s2079 + $0x6a8] sm:$0xff]
    %v2294 = vld [vmem:[%s2079 + $0x6b0] sm:$0xff]
    %v2295 = vld [vmem:[%s2079 + $0x6b8] sm:$0xff]
    %v2296 = vld [vmem:[%s2079 + $0x6c0] sm:$0xff]
    %v2297 = vld [vmem:[%s2079 + $0x6c8] sm:$0xff]
    %v2298 = vld [vmem:[%s2079 + $0x6d0] sm:$0xff]
    %v2299 = vld [vmem:[%s2079 + $0x6d8] sm:$0xff]
    %v2300 = vld [vmem:[%s2079 + $0x6e0] sm:$0xff]
    %v2301 = vld [vmem:[%s2079 + $0x6e8] sm:$0xff]
    %v2302 = vld [vmem:[%s2079 + $0x6f0] sm:$0xff]
    %v2303 = vld [vmem:[%s2079 + $0x6f8] sm:$0xff]
    %v2304 = vld [vmem:[%s2079 + $0x700] sm:$0xff]
    %v2305 = vld [vmem:[%s2079 + $0x708] sm:$0xff]
    %v2306 = vld [vmem:[%s2079 + $0x710] sm:$0xff]
    %v2307 = vld [vmem:[%s2079 + $0x718] sm:$0xff]
    %v2308 = vld [vmem:[%s2079 + $0x720] sm:$0xff]
    %v2309 = vld [vmem:[%s2079 + $0x728] sm:$0xff]
    %v2310 = vld [vmem:[%s2079 + $0x730] sm:$0xff]
    %v2311 = vld [vmem:[%s2079 + $0x738] sm:$0xff]
    %v2312 = vld [vmem:[%s2079 + $0x740] sm:$0xff]
    %v2313 = vld [vmem:[%s2079 + $0x748] sm:$0xff]
    %v2314 = vld [vmem:[%s2079 + $0x750] sm:$0xff]
    %v2315 = vld [vmem:[%s2079 + $0x758] sm:$0xff]
    %v2316 = vld [vmem:[%s2079 + $0x760] sm:$0xff]
    %v2317 = vld [vmem:[%s2079 + $0x768] sm:$0xff]
    %v2318 = vld [vmem:[%s2079 + $0x770] sm:$0xff]
    %v2319 = vld [vmem:[%s2079 + $0x778] sm:$0xff]
    %v2320 = vld [vmem:[%s2079 + $0x780] sm:$0xff]
    %v2321 = vld [vmem:[%s2079 + $0x788] sm:$0xff]
    %v2322 = vld [vmem:[%s2079 + $0x790] sm:$0xff]
    %v2323 = vld [vmem:[%s2079 + $0x798] sm:$0xff]
    %v2324 = vld [vmem:[%s2079 + $0x7a0] sm:$0xff]
    %v2325 = vld [vmem:[%s2079 + $0x7a8] sm:$0xff]
    %v2326 = vld [vmem:[%s2079 + $0x7b0] sm:$0xff]
    %v2327 = vld [vmem:[%s2079 + $0x7b8] sm:$0xff]
    %v2328 = vld [vmem:[%s2079 + $0x7c0] sm:$0xff]
    %v2329 = vld [vmem:[%s2079 + $0x7c8] sm:$0xff]
    %v2330 = vld [vmem:[%s2079 + $0x7d0] sm:$0xff]
    %v2331 = vld [vmem:[%s2079 + $0x7d8] sm:$0xff]
    %v2332 = vld [vmem:[%s2079 + $0x7e0] sm:$0xff]
    %v2333 = vld [vmem:[%s2079 + $0x7e8] sm:$0xff]
    %v2334 = vld [vmem:[%s2079 + $0x7f0] sm:$0xff]
    %v2335 = vld [vmem:[%s2079 + $0x7f8] sm:$0xff]
    %2336 = vmatprep.subr.mxu0 %v2141
    %2337 = vmatpush1.msra.mxu0 %v2140
    %2338 = vmatprep.subr.mxu0 %v2137
    %2339 = vmatpush1.msra.mxu0 %v2136
    %2340 = vmatprep.subr.mxu0 %v2133
    %2341 = vmatpush1.msra.mxu0 %v2132
    %2342 = vmatprep.subr.mxu0 %v2129
    %2343 = vmatpush1.msra.mxu0 %v2128
    %2344 = vmatprep.subr.mxu0 %v2125
    %2345 = vmatpush1.msra.mxu0 %v2124
    %2346 = vmatprep.subr.mxu0 %v2121
    %2347 = vmatpush1.msra.mxu0 %v2120
    %2348 = vmatprep.subr.mxu0 %v2117
    %2349 = vmatpush1.msra.mxu0 %v2116
    %2350 = vmatprep.subr.mxu0 %v2113
    %2351 = vmatpush1.msra.mxu0 %v2112
    %2352 = vmatprep.subr.mxu0 %v2109
    %2353 = vmatpush1.msra.mxu0 %v2108
    %2354 = vmatprep.subr.mxu0 %v2105
    %2355 = vmatpush1.msra.mxu0 %v2104
    %2356 = vmatprep.subr.mxu0 %v2101
    %2357 = vmatpush1.msra.mxu0 %v2100
    %2358 = vmatprep.subr.mxu0 %v2097
    %2359 = vmatpush1.msra.mxu0 %v2096
    %2360 = vmatprep.subr.mxu0 %v2093
    %2361 = vmatpush1.msra.mxu0 %v2092
    %2362 = vmatprep.subr.mxu0 %v2089
    %2363 = vmatpush1.msra.mxu0 %v2088
    %2364 = vmatprep.subr.mxu0 %v2085
    %2365 = vmatpush1.msra.mxu0 %v2084
    %2366 = vmatprep.subr.mxu0 %v2081
    %2367 = vmatpush1.msra.mxu0 %v2080
    %2368 = vmatprep.subr.mxu0 %v2205
    %2369 = vmatpush2.msra.mxu0 %v2204
    %2370 = vmatprep.subr.mxu0 %v2201
    %2371 = vmatpush2.msra.mxu0 %v2200
    %2372 = vmatprep.subr.mxu0 %v2197
    %2373 = vmatpush2.msra.mxu0 %v2196
    %2374 = vmatprep.subr.mxu0 %v2193
    %2375 = vmatpush2.msra.mxu0 %v2192
    %2376 = vmatprep.subr.mxu0 %v2189
    %2377 = vmatpush2.msra.mxu0 %v2188
    %2378 = vmatprep.subr.mxu0 %v2185
    %2379 = vmatpush2.msra.mxu0 %v2184
    %2380 = vmatprep.subr.mxu0 %v2181
    %2381 = vmatpush2.msra.mxu0 %v2180
    %2382 = vmatprep.subr.mxu0 %v2177
    %2383 = vmatpush2.msra.mxu0 %v2176
    %2384 = vmatprep.subr.mxu0 %v2173
    %2385 = vmatpush2.msra.mxu0 %v2172
    %2386 = vmatprep.subr.mxu0 %v2169
    %2387 = vmatpush2.msra.mxu0 %v2168
    %2388 = vmatprep.subr.mxu0 %v2165
    %2389 = vmatpush2.msra.mxu0 %v2164
    %2390 = vmatprep.subr.mxu0 %v2161
    %2391 = vmatpush2.msra.mxu0 %v2160
    %2392 = vmatprep.subr.mxu0 %v2157
    %2393 = vmatpush2.msra.mxu0 %v2156
    %2394 = vmatprep.subr.mxu0 %v2153
    %2395 = vmatpush2.msra.mxu0 %v2152
    %2396 = vmatprep.subr.mxu0 %v2149
    %2397 = vmatpush2.msra.mxu0 %v2148
    %2398 = vmatprep.subr.mxu0 %v2145
    %2399 = vmatpush2.msra.mxu0 %v2144
    %2400 = vmatprep.mubr.f32.mxu0 %v1500
    %2401 = vmatmul.mubr.f32.gmra.mxu0 %v1499
    %v2402 = vpop.f32.mrf.mxu0
    %v2403 = vadd.f32 0.0, %v2402
    %v2404 = vpop.f32.mrf.mxu0
    %v2405 = vadd.f32 0.0, %v2404
    %2406 = vmatprep.mubr.f32.mxu0 %v1504
    %2407 = vmatmul.mubr.f32.gmra.mxu0 %v1503
    %v2408 = vpop.f32.mrf.mxu0
    %v2409 = vadd.f32 0.0, %v2408
    %v2410 = vpop.f32.mrf.mxu0
    %v2411 = vadd.f32 0.0, %v2410
    %2412 = vdwg.mxu0
    %2413 = vmatprep.subr.mxu0 %v2269
    %2414 = vmatpush1.msra.mxu0 %v2268
    %2415 = vmatprep.subr.mxu0 %v2265
    %2416 = vmatpush1.msra.mxu0 %v2264
    %2417 = vmatprep.subr.mxu0 %v2261
    %2418 = vmatpush1.msra.mxu0 %v2260
    %2419 = vmatprep.subr.mxu0 %v2257
    %2420 = vmatpush1.msra.mxu0 %v2256
    %2421 = vmatprep.subr.mxu0 %v2253
    %2422 = vmatpush1.msra.mxu0 %v2252
    %2423 = vmatprep.subr.mxu0 %v2249
    %2424 = vmatpush1.msra.mxu0 %v2248
    %2425 = vmatprep.subr.mxu0 %v2245
    %2426 = vmatpush1.msra.mxu0 %v2244
    %2427 = vmatprep.subr.mxu0 %v2241
    %2428 = vmatpush1.msra.mxu0 %v2240
    %2429 = vmatprep.subr.mxu0 %v2237
    %2430 = vmatpush1.msra.mxu0 %v2236
    %2431 = vmatprep.subr.mxu0 %v2233
    %2432 = vmatpush1.msra.mxu0 %v2232
    %2433 = vmatprep.subr.mxu0 %v2229
    %2434 = vmatpush1.msra.mxu0 %v2228
    %2435 = vmatprep.subr.mxu0 %v2225
    %2436 = vmatpush1.msra.mxu0 %v2224
    %2437 = vmatprep.subr.mxu0 %v2221
    %2438 = vmatpush1.msra.mxu0 %v2220
    %2439 = vmatprep.subr.mxu0 %v2217
    %2440 = vmatpush1.msra.mxu0 %v2216
    %2441 = vmatprep.subr.mxu0 %v2213
    %2442 = vmatpush1.msra.mxu0 %v2212
    %2443 = vmatprep.subr.mxu0 %v2209
    %2444 = vmatpush1.msra.mxu0 %v2208
    %2445 = vmatprep.subr.mxu0 %v2333
    %2446 = vmatpush2.msra.mxu0 %v2332
    %2447 = vmatprep.subr.mxu0 %v2329
    %2448 = vmatpush2.msra.mxu0 %v2328
    %2449 = vmatprep.subr.mxu0 %v2325
    %2450 = vmatpush2.msra.mxu0 %v2324
    %2451 = vmatprep.subr.mxu0 %v2321
    %2452 = vmatpush2.msra.mxu0 %v2320
    %2453 = vmatprep.subr.mxu0 %v2317
    %2454 = vmatpush2.msra.mxu0 %v2316
    %2455 = vmatprep.subr.mxu0 %v2313
    %2456 = vmatpush2.msra.mxu0 %v2312
    %2457 = vmatprep.subr.mxu0 %v2309
    %2458 = vmatpush2.msra.mxu0 %v2308
    %2459 = vmatprep.subr.mxu0 %v2305
    %2460 = vmatpush2.msra.mxu0 %v2304
    %2461 = vmatprep.subr.mxu0 %v2301
    %2462 = vmatpush2.msra.mxu0 %v2300
    %2463 = vmatprep.subr.mxu0 %v2297
    %2464 = vmatpush2.msra.mxu0 %v2296
    %2465 = vmatprep.subr.mxu0 %v2293
    %2466 = vmatpush2.msra.mxu0 %v2292
    %2467 = vmatprep.subr.mxu0 %v2289
    %2468 = vmatpush2.msra.mxu0 %v2288
    %2469 = vmatprep.subr.mxu0 %v2285
    %2470 = vmatpush2.msra.mxu0 %v2284
    %2471 = vmatprep.subr.mxu0 %v2281
    %2472 = vmatpush2.msra.mxu0 %v2280
    %2473 = vmatprep.subr.mxu0 %v2277
    %2474 = vmatpush2.msra.mxu0 %v2276
    %2475 = vmatprep.subr.mxu0 %v2273
    %2476 = vmatpush2.msra.mxu0 %v2272
    %2477 = vmatprep.mubr.f32.mxu0 %v1502
    %2478 = vmatmul.mubr.f32.gmra.mxu0 %v1501
    %v2479 = vpop.f32.mrf.mxu0
    %v2480 = vadd.f32 %v2403, %v2479
    %v2481 = vpop.f32.mrf.mxu0
    %v2482 = vadd.f32 %v2405, %v2481
    %2483 = vmatprep.mubr.f32.mxu0 %v1506
    %2484 = vmatmul.mubr.f32.gmra.mxu0 %v1505
    %v2485 = vpop.f32.mrf.mxu0
    %v2486 = vadd.f32 %v2409, %v2485
    %v2487 = vpop.f32.mrf.mxu0
    %v2488 = vadd.f32 %v2411, %v2487
    %2489 = vdwg.mxu0
    %2490 = vmatprep.subr.mxu0 %v2143
    %2491 = vmatpush1.msra.mxu0 %v2142
    %2492 = vmatprep.subr.mxu0 %v2139
    %2493 = vmatpush1.msra.mxu0 %v2138
    %2494 = vmatprep.subr.mxu0 %v2135
    %2495 = vmatpush1.msra.mxu0 %v2134
    %2496 = vmatprep.subr.mxu0 %v2131
    %2497 = vmatpush1.msra.mxu0 %v2130
    %2498 = vmatprep.subr.mxu0 %v2127
    %2499 = vmatpush1.msra.mxu0 %v2126
    %2500 = vmatprep.subr.mxu0 %v2123
    %2501 = vmatpush1.msra.mxu0 %v2122
    %2502 = vmatprep.subr.mxu0 %v2119
    %2503 = vmatpush1.msra.mxu0 %v2118
    %2504 = vmatprep.subr.mxu0 %v2115
    %2505 = vmatpush1.msra.mxu0 %v2114
    %2506 = vmatprep.subr.mxu0 %v2111
    %2507 = vmatpush1.msra.mxu0 %v2110
    %2508 = vmatprep.subr.mxu0 %v2107
    %2509 = vmatpush1.msra.mxu0 %v2106
    %2510 = vmatprep.subr.mxu0 %v2103
    %2511 = vmatpush1.msra.mxu0 %v2102
    %2512 = vmatprep.subr.mxu0 %v2099
    %2513 = vmatpush1.msra.mxu0 %v2098
    %2514 = vmatprep.subr.mxu0 %v2095
    %2515 = vmatpush1.msra.mxu0 %v2094
    %2516 = vmatprep.subr.mxu0 %v2091
    %2517 = vmatpush1.msra.mxu0 %v2090
    %2518 = vmatprep.subr.mxu0 %v2087
    %2519 = vmatpush1.msra.mxu0 %v2086
    %2520 = vmatprep.subr.mxu0 %v2083
    %2521 = vmatpush1.msra.mxu0 %v2082
    %2522 = vmatprep.subr.mxu0 %v2207
    %2523 = vmatpush2.msra.mxu0 %v2206
    %2524 = vmatprep.subr.mxu0 %v2203
    %2525 = vmatpush2.msra.mxu0 %v2202
    %2526 = vmatprep.subr.mxu0 %v2199
    %2527 = vmatpush2.msra.mxu0 %v2198
    %2528 = vmatprep.subr.mxu0 %v2195
    %2529 = vmatpush2.msra.mxu0 %v2194
    %2530 = vmatprep.subr.mxu0 %v2191
    %2531 = vmatpush2.msra.mxu0 %v2190
    %2532 = vmatprep.subr.mxu0 %v2187
    %2533 = vmatpush2.msra.mxu0 %v2186
    %2534 = vmatprep.subr.mxu0 %v2183
    %2535 = vmatpush2.msra.mxu0 %v2182
    %2536 = vmatprep.subr.mxu0 %v2179
    %2537 = vmatpush2.msra.mxu0 %v2178
    %2538 = vmatprep.subr.mxu0 %v2175
    %2539 = vmatpush2.msra.mxu0 %v2174
    %2540 = vmatprep.subr.mxu0 %v2171
    %2541 = vmatpush2.msra.mxu0 %v2170
    %2542 = vmatprep.subr.mxu0 %v2167
    %2543 = vmatpush2.msra.mxu0 %v2166
    %2544 = vmatprep.subr.mxu0 %v2163
    %2545 = vmatpush2.msra.mxu0 %v2162
    %2546 = vmatprep.subr.mxu0 %v2159
    %2547 = vmatpush2.msra.mxu0 %v2158
    %2548 = vmatprep.subr.mxu0 %v2155
    %2549 = vmatpush2.msra.mxu0 %v2154
    %2550 = vmatprep.subr.mxu0 %v2151
    %2551 = vmatpush2.msra.mxu0 %v2150
    %2552 = vmatprep.subr.mxu0 %v2147
    %2553 = vmatpush2.msra.mxu0 %v2146
    %2554 = vmatprep.mubr.f32.mxu0 %v1500
    %2555 = vmatmul.mubr.f32.gmra.mxu0 %v1499
    %v2556 = vpop.f32.mrf.mxu0
    %v2557 = vadd.f32 0.0, %v2556
    %v2558 = vpop.f32.mrf.mxu0
    %v2559 = vadd.f32 0.0, %v2558
    %2560 = vmatprep.mubr.f32.mxu0 %v1504
    %2561 = vmatmul.mubr.f32.gmra.mxu0 %v1503
    %v2562 = vpop.f32.mrf.mxu0
    %v2563 = vadd.f32 0.0, %v2562
    %v2564 = vpop.f32.mrf.mxu0
    %v2565 = vadd.f32 0.0, %v2564
    %2566 = vdwg.mxu0
    %2567 = vmatprep.subr.mxu0 %v2271
    %2568 = vmatpush1.msra.mxu0 %v2270
    %2569 = vmatprep.subr.mxu0 %v2267
    %2570 = vmatpush1.msra.mxu0 %v2266
    %2571 = vmatprep.subr.mxu0 %v2263
    %2572 = vmatpush1.msra.mxu0 %v2262
    %2573 = vmatprep.subr.mxu0 %v2259
    %2574 = vmatpush1.msra.mxu0 %v2258
    %2575 = vmatprep.subr.mxu0 %v2255
    %2576 = vmatpush1.msra.mxu0 %v2254
    %2577 = vmatprep.subr.mxu0 %v2251
    %2578 = vmatpush1.msra.mxu0 %v2250
    %2579 = vmatprep.subr.mxu0 %v2247
    %2580 = vmatpush1.msra.mxu0 %v2246
    %2581 = vmatprep.subr.mxu0 %v2243
    %2582 = vmatpush1.msra.mxu0 %v2242
    %2583 = vmatprep.subr.mxu0 %v2239
    %2584 = vmatpush1.msra.mxu0 %v2238
    %2585 = vmatprep.subr.mxu0 %v2235
    %2586 = vmatpush1.msra.mxu0 %v2234
    %2587 = vmatprep.subr.mxu0 %v2231
    %2588 = vmatpush1.msra.mxu0 %v2230
    %2589 = vmatprep.subr.mxu0 %v2227
    %2590 = vmatpush1.msra.mxu0 %v2226
    %2591 = vmatprep.subr.mxu0 %v2223
    %2592 = vmatpush1.msra.mxu0 %v2222
    %2593 = vmatprep.subr.mxu0 %v2219
    %2594 = vmatpush1.msra.mxu0 %v2218
    %2595 = vmatprep.subr.mxu0 %v2215
    %2596 = vmatpush1.msra.mxu0 %v2214
    %2597 = vmatprep.subr.mxu0 %v2211
    %2598 = vmatpush1.msra.mxu0 %v2210
    %2599 = vmatprep.subr.mxu0 %v2335
    %2600 = vmatpush2.msra.mxu0 %v2334
    %2601 = vmatprep.subr.mxu0 %v2331
    %2602 = vmatpush2.msra.mxu0 %v2330
    %2603 = vmatprep.subr.mxu0 %v2327
    %2604 = vmatpush2.msra.mxu0 %v2326
    %2605 = vmatprep.subr.mxu0 %v2323
    %2606 = vmatpush2.msra.mxu0 %v2322
    %2607 = vmatprep.subr.mxu0 %v2319
    %2608 = vmatpush2.msra.mxu0 %v2318
    %2609 = vmatprep.subr.mxu0 %v2315
    %2610 = vmatpush2.msra.mxu0 %v2314
    %2611 = vmatprep.subr.mxu0 %v2311
    %2612 = vmatpush2.msra.mxu0 %v2310
    %2613 = vmatprep.subr.mxu0 %v2307
    %2614 = vmatpush2.msra.mxu0 %v2306
    %2615 = vmatprep.subr.mxu0 %v2303
    %2616 = vmatpush2.msra.mxu0 %v2302
    %2617 = vmatprep.subr.mxu0 %v2299
    %2618 = vmatpush2.msra.mxu0 %v2298
    %2619 = vmatprep.subr.mxu0 %v2295
    %2620 = vmatpush2.msra.mxu0 %v2294
    %2621 = vmatprep.subr.mxu0 %v2291
    %2622 = vmatpush2.msra.mxu0 %v2290
    %2623 = vmatprep.subr.mxu0 %v2287
    %2624 = vmatpush2.msra.mxu0 %v2286
    %2625 = vmatprep.subr.mxu0 %v2283
    %2626 = vmatpush2.msra.mxu0 %v2282
    %2627 = vmatprep.subr.mxu0 %v2279
    %2628 = vmatpush2.msra.mxu0 %v2278
    %2629 = vmatprep.subr.mxu0 %v2275
    %2630 = vmatpush2.msra.mxu0 %v2274
    %2631 = vmatprep.mubr.f32.mxu0 %v1502
    %2632 = vmatmul.mubr.f32.gmra.mxu0 %v1501
    %v2633 = vpop.f32.mrf.mxu0
    %v2634 = vadd.f32 %v2557, %v2633
    %v2635 = vpop.f32.mrf.mxu0
    %v2636 = vadd.f32 %v2559, %v2635
    %2637 = vmatprep.mubr.f32.mxu0 %v1506
    %2638 = vmatmul.mubr.f32.gmra.mxu0 %v1505
    %v2639 = vpop.f32.mrf.mxu0
    %v2640 = vadd.f32 %v2563, %v2639
    %v2641 = vpop.f32.mrf.mxu0
    %v2642 = vadd.f32 %v2565, %v2641
    %2643 = vdwg.mxu0
    %2644 = vst [vmem:[#allocation3 + $0x40] sm:$0xff] %v2480
    %2645 = vst [vmem:[#allocation3 + $0x48] sm:$0xff] %v2482
    %2646 = vst [vmem:[#allocation3 + $0x50] sm:$0xff] %v2634
    %2647 = vst [vmem:[#allocation3 + $0x58] sm:$0xff] %v2636
    %2648 = vst [vmem:[#allocation3 + $0x60] sm:$0xff] %v2486
    %2649 = vst [vmem:[#allocation3 + $0x68] sm:$0xff] %v2488
    %2650 = vst [vmem:[#allocation3 + $0x70] sm:$0xff] %v2640
    %2651 = vst [vmem:[#allocation3 + $0x78] sm:$0xff] %v2642
    %v2652 = vld [vmem:[#allocation13] sm:$0xf]
    %v2653 = vld [vmem:[#allocation15] sm:$0xf]
    %v2654 = vld [vmem:[#allocation3] sm:$0xff]
    %v2655 = vld [vmem:[#allocation3 + $0x8] sm:$0xff]
    %v2656 = vld [vmem:[#allocation3 + $0x10] sm:$0xff]
    %v2657 = vld [vmem:[#allocation3 + $0x18] sm:$0xff]
    %v2658 = vld [vmem:[#allocation3 + $0x20] sm:$0xff]
    %v2659 = vld [vmem:[#allocation3 + $0x28] sm:$0xff]
    %v2660 = vld [vmem:[#allocation3 + $0x30] sm:$0xff]
    %v2661 = vld [vmem:[#allocation3 + $0x38] sm:$0xff]
    %v2662 = vld [vmem:[#allocation3 + $0x40] sm:$0xff]
    %v2663 = vld [vmem:[#allocation3 + $0x48] sm:$0xff]
    %v2664 = vld [vmem:[#allocation3 + $0x50] sm:$0xff]
    %v2665 = vld [vmem:[#allocation3 + $0x58] sm:$0xff]
    %v2666 = vld [vmem:[#allocation3 + $0x60] sm:$0xff]
    %v2667 = vld [vmem:[#allocation3 + $0x68] sm:$0xff]
    %v2668 = vld [vmem:[#allocation3 + $0x70] sm:$0xff]
    %v2669 = vld [vmem:[#allocation3 + $0x78] sm:$0xff]
    %v2670 = vadd.f32 %v2654, %v2658
    %v2671 = vadd.f32 %v2670, %v2662
    %v2672 = vadd.f32 %v2671, %v2666
    %v2673 = vrot.slane %v2672, 4
    %v2674 = vadd.f32 %v2672, %v2673
    %v2675 = vrot.slane %v2674, 2
    %v2676 = vadd.f32 %v2674, %v2675
    %v2677 = vrot.slane %v2676, 1
    %v2678 = vadd.f32 %v2676, %v2677
    %v2679 = vadd.f32 %v2655, %v2659
    %v2680 = vadd.f32 %v2679, %v2663
    %v2681 = vadd.f32 %v2680, %v2667
    %v2682 = vrot.slane %v2681, 4
    %v2683 = vadd.f32 %v2681, %v2682
    %v2684 = vrot.slane %v2683, 2
    %v2685 = vadd.f32 %v2683, %v2684
    %v2686 = vrot.slane %v2685, 1
    %v2687 = vadd.f32 %v2685, %v2686
    %v2688 = vadd.f32 %v2656, %v2660
    %v2689 = vadd.f32 %v2688, %v2664
    %v2690 = vadd.f32 %v2689, %v2668
    %v2691 = vrot.slane %v2690, 4
    %v2692 = vadd.f32 %v2690, %v2691
    %v2693 = vrot.slane %v2692, 2
    %v2694 = vadd.f32 %v2692, %v2693
    %v2695 = vrot.slane %v2694, 1
    %v2696 = vadd.f32 %v2694, %v2695
    %v2697 = vadd.f32 %v2657, %v2661
    %v2698 = vadd.f32 %v2697, %v2665
    %v2699 = vadd.f32 %v2698, %v2669
    %v2700 = vrot.slane %v2699, 4
    %v2701 = vadd.f32 %v2699, %v2700
    %v2702 = vrot.slane %v2701, 2
    %v2703 = vadd.f32 %v2701, %v2702
    %v2704 = vrot.slane %v2703, 1
    %v2705 = vadd.f32 %v2703, %v2704
    %v2706 = vadd.f32 %v2678, 0.0
    %v2707 = vadd.f32 %v2687, 0.0
    %v2708 = vadd.f32 %v2696, 0.0
    %v2709 = vadd.f32 %v2705, 0.0
    %v2710 = vmul.f32 %v2654, %v2654
    %v2711 = vmul.f32 %v2655, %v2655
    %v2712 = vmul.f32 %v2656, %v2656
    %v2713 = vmul.f32 %v2657, %v2657
    %v2714 = vmul.f32 %v2658, %v2658
    %v2715 = vmul.f32 %v2659, %v2659
    %v2716 = vmul.f32 %v2660, %v2660
    %v2717 = vmul.f32 %v2661, %v2661
    %v2718 = vmul.f32 %v2662, %v2662
    %v2719 = vmul.f32 %v2663, %v2663
    %v2720 = vmul.f32 %v2664, %v2664
    %v2721 = vmul.f32 %v2665, %v2665
    %v2722 = vmul.f32 %v2666, %v2666
    %v2723 = vmul.f32 %v2667, %v2667
    %v2724 = vmul.f32 %v2668, %v2668
    %v2725 = vmul.f32 %v2669, %v2669
    %v2726 = vadd.f32 %v2710, %v2714
    %v2727 = vadd.f32 %v2726, %v2718
    %v2728 = vadd.f32 %v2727, %v2722
    %v2729 = vrot.slane %v2728, 4
    %v2730 = vadd.f32 %v2728, %v2729
    %v2731 = vrot.slane %v2730, 2
    %v2732 = vadd.f32 %v2730, %v2731
    %v2733 = vrot.slane %v2732, 1
    %v2734 = vadd.f32 %v2732, %v2733
    %v2735 = vadd.f32 %v2711, %v2715
    %v2736 = vadd.f32 %v2735, %v2719
    %v2737 = vadd.f32 %v2736, %v2723
    %v2738 = vrot.slane %v2737, 4
    %v2739 = vadd.f32 %v2737, %v2738
    %v2740 = vrot.slane %v2739, 2
    %v2741 = vadd.f32 %v2739, %v2740
    %v2742 = vrot.slane %v2741, 1
    %v2743 = vadd.f32 %v2741, %v2742
    %v2744 = vadd.f32 %v2712, %v2716
    %v2745 = vadd.f32 %v2744, %v2720
    %v2746 = vadd.f32 %v2745, %v2724
    %v2747 = vrot.slane %v2746, 4
    %v2748 = vadd.f32 %v2746, %v2747
    %v2749 = vrot.slane %v2748, 2
    %v2750 = vadd.f32 %v2748, %v2749
    %v2751 = vrot.slane %v2750, 1
    %v2752 = vadd.f32 %v2750, %v2751
    %v2753 = vadd.f32 %v2713, %v2717
    %v2754 = vadd.f32 %v2753, %v2721
    %v2755 = vadd.f32 %v2754, %v2725
    %v2756 = vrot.slane %v2755, 4
    %v2757 = vadd.f32 %v2755, %v2756
    %v2758 = vrot.slane %v2757, 2
    %v2759 = vadd.f32 %v2757, %v2758
    %v2760 = vrot.slane %v2759, 1
    %v2761 = vadd.f32 %v2759, %v2760
    %v2762 = vadd.f32 %v2734, 0.0
    %v2763 = vadd.f32 %v2743, 0.0
    %v2764 = vadd.f32 %v2752, 0.0
    %v2765 = vadd.f32 %v2761, 0.0
    %v2766 = vadd.f32 %v2706, %v2708
    %v2767 = vadd.f32 %v2707, %v2709
    %v2768 = vadd.f32 %v2766, %v2767
    %2769 = vrot.lane.b32.xlu0 %v2768, 64
    %v2770 = vpop.permute.xlu0 %2769
    %v2771 = vlaneseq
    %v2772 = vand.u32 %v2771, 127
    %v2773 = vadd.f32 %v2768, %v2770
    %v2774 = vadd.f32 %v2762, %v2764
    %v2775 = vadd.f32 %v2763, %v2765
    %v2776 = vadd.f32 %v2774, %v2775
    %2777 = vrot.lane.b32.xlu0 %v2776, 64
    %v2778 = vpop.permute.xlu0 %2777
    %v2779 = vadd.f32 %v2776, %v2778
    %v2780 = vrcp.pop 256.0
    %v2781 = vmul.f32 %v2773, %v2780
    %v2782 = vmul.f32 %v2779, %v2780
    %v2783 = vmul.f32 %v2781, %v2781
    %v2784 = vsub.f32 %v2782, %v2783
    %v2785 = vmax.f32 %v2784, 0.0
    %v2786 = vadd.f32 %v2785, 1e-05
    %v2787 = vrsqrt.pop %v2786
    %v2789 = vlaneseq
    %v2790 = vshrl.u32 %v2789, 7
    %v2791 = vsub.s32 0, %v2790
    %v2792 = vrot.slane %v2652, %v2791
    %v2793 = vlaneseq
    %v2794 = vshrl.u32 %v2793, 7
    %v2795 = vsub.s32 1, %v2794
    %v2796 = vrot.slane %v2652, %v2795
    %v2797 = vlaneseq
    %v2798 = vshrl.u32 %v2797, 7
    %v2799 = vsub.s32 2, %v2798
    %v2800 = vrot.slane %v2652, %v2799
    %v2801 = vlaneseq
    %v2802 = vshrl.u32 %v2801, 7
    %v2803 = vsub.s32 3, %v2802
    %v2804 = vrot.slane %v2652, %v2803
    %v2809 = vmul.f32 %v2787, %v2792
    %v2810 = vmul.f32 %v2787, %v2796
    %v2811 = vmul.f32 %v2787, %v2800
    %v2812 = vmul.f32 %v2787, %v2804
    %v2813 = vmul.f32 %v2781, %v2809
    %v2814 = vmul.f32 %v2781, %v2810
    %v2815 = vmul.f32 %v2781, %v2811
    %v2816 = vmul.f32 %v2781, %v2812
    %v2821 = vcombine.low %v2813, %v2814
    %v2822 = vcombine.low %v2815, %v2816
    %v2824 = vunpack.c.l.s4 1966171168
    %v2825 = vunpack.c.0.s8 %v2824
    %v2826 = vlaneseq
    %v2827 = vshrl.u32 %v2826, 7
    %v2828 = vsub.s32 %v2825, %v2827
    %v2829 = vrot.slane %v2821, %v2828
    %v2831 = vunpack.c.l.s4 1966171168
    %v2832 = vunpack.c.0.s8 %v2831
    %v2833 = vlaneseq
    %v2834 = vshrl.u32 %v2833, 7
    %v2835 = vsub.s32 %v2832, %v2834
    %v2836 = vrot.slane %v2822, %v2835
    %v2837 = vcombine.low %v2829, %v2836
    %v2839 = vunpack.c.l.s4 1966171168
    %v2840 = vunpack.c.0.s8 %v2839
    %v2841 = vlaneseq
    %v2842 = vshrl.u32 %v2841, 7
    %v2843 = vsub.s32 %v2840, %v2842
    %v2844 = vrot.slane %v2837, %v2843
    %v2846 = vsub.f32 %v2653, %v2844
    %v2847 = vlaneseq
    %v2848 = vshrl.u32 %v2847, 7
    %v2849 = vsub.s32 0, %v2848
    %v2850 = vrot.slane %v2809, %v2849
    %v2851 = vlaneseq
    %v2852 = vshrl.u32 %v2851, 7
    %v2853 = vsub.s32 0, %v2852
    %v2854 = vrot.slane %v2810, %v2853
    %v2855 = vlaneseq
    %v2856 = vshrl.u32 %v2855, 7
    %v2857 = vsub.s32 0, %v2856
    %v2858 = vrot.slane %v2811, %v2857
    %v2859 = vlaneseq
    %v2860 = vshrl.u32 %v2859, 7
    %v2861 = vsub.s32 0, %v2860
    %v2862 = vrot.slane %v2812, %v2861
    %v2863 = vmul.f32 %v2654, %v2850
    %v2864 = vmul.f32 %v2655, %v2854
    %v2865 = vmul.f32 %v2656, %v2858
    %v2866 = vmul.f32 %v2657, %v2862
    %v2867 = vmul.f32 %v2658, %v2850
    %v2868 = vmul.f32 %v2659, %v2854
    %v2869 = vmul.f32 %v2660, %v2858
    %v2870 = vmul.f32 %v2661, %v2862
    %v2871 = vmul.f32 %v2662, %v2850
    %v2872 = vmul.f32 %v2663, %v2854
    %v2873 = vmul.f32 %v2664, %v2858
    %v2874 = vmul.f32 %v2665, %v2862
    %v2875 = vmul.f32 %v2666, %v2850
    %v2876 = vmul.f32 %v2667, %v2854
    %v2877 = vmul.f32 %v2668, %v2858
    %v2878 = vmul.f32 %v2669, %v2862
    %v2880 = vlaneseq
    %v2881 = vshrl.u32 %v2880, 7
    %v2882 = vsub.s32 0, %v2881
    %v2883 = vrot.slane %v2846, %v2882
    %v2884 = vlaneseq
    %v2885 = vshrl.u32 %v2884, 7
    %v2886 = vsub.s32 1, %v2885
    %v2887 = vrot.slane %v2846, %v2886
    %v2888 = vlaneseq
    %v2889 = vshrl.u32 %v2888, 7
    %v2890 = vsub.s32 2, %v2889
    %v2891 = vrot.slane %v2846, %v2890
    %v2892 = vlaneseq
    %v2893 = vshrl.u32 %v2892, 7
    %v2894 = vsub.s32 3, %v2893
    %v2895 = vrot.slane %v2846, %v2894
    %v2900 = vadd.f32 %v2863, %v2883
    %v2901 = vadd.f32 %v2864, %v2887
    %v2902 = vadd.f32 %v2865, %v2891
    %v2903 = vadd.f32 %v2866, %v2895
    %v2904 = vadd.f32 %v2867, %v2883
    %v2905 = vadd.f32 %v2868, %v2887
    %v2906 = vadd.f32 %v2869, %v2891
    %v2907 = vadd.f32 %v2870, %v2895
    %v2908 = vadd.f32 %v2871, %v2883
    %v2909 = vadd.f32 %v2872, %v2887
    %v2910 = vadd.f32 %v2873, %v2891
    %v2911 = vadd.f32 %v2874, %v2895
    %v2912 = vadd.f32 %v2875, %v2883
    %v2913 = vadd.f32 %v2876, %v2887
    %v2914 = vadd.f32 %v2877, %v2891
    %v2915 = vadd.f32 %v2878, %v2895
    %vm2916 = vcmp.ge.f32.partialorder %v2900, 0.0
    %vm2917 = vcmp.ge.f32.partialorder %v2901, 0.0
    %vm2918 = vcmp.ge.f32.partialorder %v2902, 0.0
    %vm2919 = vcmp.ge.f32.partialorder %v2903, 0.0
    %vm2920 = vcmp.ge.f32.partialorder %v2904, 0.0
    %vm2921 = vcmp.ge.f32.partialorder %v2905, 0.0
    %vm2922 = vcmp.ge.f32.partialorder %v2906, 0.0
    %vm2923 = vcmp.ge.f32.partialorder %v2907, 0.0
    %vm2924 = vcmp.ge.f32.partialorder %v2908, 0.0
    %vm2925 = vcmp.ge.f32.partialorder %v2909, 0.0
    %vm2926 = vcmp.ge.f32.partialorder %v2910, 0.0
    %vm2927 = vcmp.ge.f32.partialorder %v2911, 0.0
    %vm2928 = vcmp.ge.f32.partialorder %v2912, 0.0
    %vm2929 = vcmp.ge.f32.partialorder %v2913, 0.0
    %vm2930 = vcmp.ge.f32.partialorder %v2914, 0.0
    %vm2931 = vcmp.ge.f32.partialorder %v2915, 0.0
    %v2932 = vmul.f32 %v2900, 0.2
    %v2933 = vmul.f32 %v2901, 0.2
    %v2934 = vmul.f32 %v2902, 0.2
    %v2935 = vmul.f32 %v2903, 0.2
    %v2936 = vmul.f32 %v2904, 0.2
    %v2937 = vmul.f32 %v2905, 0.2
    %v2938 = vmul.f32 %v2906, 0.2
    %v2939 = vmul.f32 %v2907, 0.2
    %v2940 = vmul.f32 %v2908, 0.2
    %v2941 = vmul.f32 %v2909, 0.2
    %v2942 = vmul.f32 %v2910, 0.2
    %v2943 = vmul.f32 %v2911, 0.2
    %v2944 = vmul.f32 %v2912, 0.2
    %v2945 = vmul.f32 %v2913, 0.2
    %v2946 = vmul.f32 %v2914, 0.2
    %v2947 = vmul.f32 %v2915, 0.2
    %v2948 = vsel %vm2916, %v2900, %v2932
    %v2949 = vsel %vm2917, %v2901, %v2933
    %v2950 = vsel %vm2918, %v2902, %v2934
    %v2951 = vsel %vm2919, %v2903, %v2935
    %v2952 = vsel %vm2920, %v2904, %v2936
    %v2953 = vsel %vm2921, %v2905, %v2937
    %v2954 = vsel %vm2922, %v2906, %v2938
    %v2955 = vsel %vm2923, %v2907, %v2939
    %v2956 = vsel %vm2924, %v2908, %v2940
    %v2957 = vsel %vm2925, %v2909, %v2941
    %v2958 = vsel %vm2926, %v2910, %v2942
    %v2959 = vsel %vm2927, %v2911, %v2943
    %v2960 = vsel %vm2928, %v2912, %v2944
    %v2961 = vsel %vm2929, %v2913, %v2945
    %v2962 = vsel %vm2930, %v2914, %v2946
    %v2963 = vsel %vm2931, %v2915, %v2947
    %v2964 = vld [vmem:[#allocation16] sm:$0xff]
    %v2965 = vld [vmem:[#allocation16 + $0x8] sm:$0xff]
    %v2966 = vld [vmem:[#allocation16 + $0x10] sm:$0xff]
    %v2967 = vld [vmem:[#allocation16 + $0x18] sm:$0xff]
    %v2968 = vld [vmem:[#allocation16 + $0x20] sm:$0xff]
    %v2969 = vld [vmem:[#allocation16 + $0x28] sm:$0xff]
    %v2970 = vld [vmem:[#allocation16 + $0x30] sm:$0xff]
    %v2971 = vld [vmem:[#allocation16 + $0x38] sm:$0xff]
    %v2972 = vld [vmem:[#allocation16 + $0x40] sm:$0xff]
    %v2973 = vld [vmem:[#allocation16 + $0x48] sm:$0xff]
    %v2974 = vld [vmem:[#allocation16 + $0x50] sm:$0xff]
    %v2975 = vld [vmem:[#allocation16 + $0x58] sm:$0xff]
    %v2976 = vld [vmem:[#allocation16 + $0x60] sm:$0xff]
    %v2977 = vld [vmem:[#allocation16 + $0x68] sm:$0xff]
    %v2978 = vld [vmem:[#allocation16 + $0x70] sm:$0xff]
    %v2979 = vld [vmem:[#allocation16 + $0x78] sm:$0xff]
    %v2980 = vld [vmem:[#allocation16 + $0x80] sm:$0xff]
    %v2981 = vld [vmem:[#allocation16 + $0x88] sm:$0xff]
    %v2982 = vld [vmem:[#allocation16 + $0x90] sm:$0xff]
    %v2983 = vld [vmem:[#allocation16 + $0x98] sm:$0xff]
    %v2984 = vld [vmem:[#allocation16 + $0xa0] sm:$0xff]
    %v2985 = vld [vmem:[#allocation16 + $0xa8] sm:$0xff]
    %v2986 = vld [vmem:[#allocation16 + $0xb0] sm:$0xff]
    %v2987 = vld [vmem:[#allocation16 + $0xb8] sm:$0xff]
    %v2988 = vld [vmem:[#allocation16 + $0xc0] sm:$0xff]
    %v2989 = vld [vmem:[#allocation16 + $0xc8] sm:$0xff]
    %v2990 = vld [vmem:[#allocation16 + $0xd0] sm:$0xff]
    %v2991 = vld [vmem:[#allocation16 + $0xd8] sm:$0xff]
    %v2992 = vld [vmem:[#allocation16 + $0xe0] sm:$0xff]
    %v2993 = vld [vmem:[#allocation16 + $0xe8] sm:$0xff]
    %v2994 = vld [vmem:[#allocation16 + $0xf0] sm:$0xff]
    %v2995 = vld [vmem:[#allocation16 + $0xf8] sm:$0xff]
    %v2996 = vld [vmem:[#allocation16 + $0x100] sm:$0xff]
    %v2997 = vld [vmem:[#allocation16 + $0x108] sm:$0xff]
    %v2998 = vld [vmem:[#allocation16 + $0x110] sm:$0xff]
    %v2999 = vld [vmem:[#allocation16 + $0x118] sm:$0xff]
    %v3000 = vld [vmem:[#allocation16 + $0x120] sm:$0xff]
    %v3001 = vld [vmem:[#allocation16 + $0x128] sm:$0xff]
    %v3002 = vld [vmem:[#allocation16 + $0x130] sm:$0xff]
    %v3003 = vld [vmem:[#allocation16 + $0x138] sm:$0xff]
    %v3004 = vld [vmem:[#allocation16 + $0x140] sm:$0xff]
    %v3005 = vld [vmem:[#allocation16 + $0x148] sm:$0xff]
    %v3006 = vld [vmem:[#allocation16 + $0x150] sm:$0xff]
    %v3007 = vld [vmem:[#allocation16 + $0x158] sm:$0xff]
    %v3008 = vld [vmem:[#allocation16 + $0x160] sm:$0xff]
    %v3009 = vld [vmem:[#allocation16 + $0x168] sm:$0xff]
    %v3010 = vld [vmem:[#allocation16 + $0x170] sm:$0xff]
    %v3011 = vld [vmem:[#allocation16 + $0x178] sm:$0xff]
    %v3012 = vld [vmem:[#allocation16 + $0x180] sm:$0xff]
    %v3013 = vld [vmem:[#allocation16 + $0x188] sm:$0xff]
    %v3014 = vld [vmem:[#allocation16 + $0x190] sm:$0xff]
    %v3015 = vld [vmem:[#allocation16 + $0x198] sm:$0xff]
    %v3016 = vld [vmem:[#allocation16 + $0x1a0] sm:$0xff]
    %v3017 = vld [vmem:[#allocation16 + $0x1a8] sm:$0xff]
    %v3018 = vld [vmem:[#allocation16 + $0x1b0] sm:$0xff]
    %v3019 = vld [vmem:[#allocation16 + $0x1b8] sm:$0xff]
    %v3020 = vld [vmem:[#allocation16 + $0x1c0] sm:$0xff]
    %v3021 = vld [vmem:[#allocation16 + $0x1c8] sm:$0xff]
    %v3022 = vld [vmem:[#allocation16 + $0x1d0] sm:$0xff]
    %v3023 = vld [vmem:[#allocation16 + $0x1d8] sm:$0xff]
    %v3024 = vld [vmem:[#allocation16 + $0x1e0] sm:$0xff]
    %v3025 = vld [vmem:[#allocation16 + $0x1e8] sm:$0xff]
    %v3026 = vld [vmem:[#allocation16 + $0x1f0] sm:$0xff]
    %v3027 = vld [vmem:[#allocation16 + $0x1f8] sm:$0xff]
    %v3028 = vld [vmem:[#allocation16 + $0x200] sm:$0xff]
    %v3029 = vld [vmem:[#allocation16 + $0x208] sm:$0xff]
    %v3030 = vld [vmem:[#allocation16 + $0x210] sm:$0xff]
    %v3031 = vld [vmem:[#allocation16 + $0x218] sm:$0xff]
    %v3032 = vld [vmem:[#allocation16 + $0x220] sm:$0xff]
    %v3033 = vld [vmem:[#allocation16 + $0x228] sm:$0xff]
    %v3034 = vld [vmem:[#allocation16 + $0x230] sm:$0xff]
    %v3035 = vld [vmem:[#allocation16 + $0x238] sm:$0xff]
    %v3036 = vld [vmem:[#allocation16 + $0x240] sm:$0xff]
    %v3037 = vld [vmem:[#allocation16 + $0x248] sm:$0xff]
    %v3038 = vld [vmem:[#allocation16 + $0x250] sm:$0xff]
    %v3039 = vld [vmem:[#allocation16 + $0x258] sm:$0xff]
    %v3040 = vld [vmem:[#allocation16 + $0x260] sm:$0xff]
    %v3041 = vld [vmem:[#allocation16 + $0x268] sm:$0xff]
    %v3042 = vld [vmem:[#allocation16 + $0x270] sm:$0xff]
    %v3043 = vld [vmem:[#allocation16 + $0x278] sm:$0xff]
    %v3044 = vld [vmem:[#allocation16 + $0x280] sm:$0xff]
    %v3045 = vld [vmem:[#allocation16 + $0x288] sm:$0xff]
    %v3046 = vld [vmem:[#allocation16 + $0x290] sm:$0xff]
    %v3047 = vld [vmem:[#allocation16 + $0x298] sm:$0xff]
    %v3048 = vld [vmem:[#allocation16 + $0x2a0] sm:$0xff]
    %v3049 = vld [vmem:[#allocation16 + $0x2a8] sm:$0xff]
    %v3050 = vld [vmem:[#allocation16 + $0x2b0] sm:$0xff]
    %v3051 = vld [vmem:[#allocation16 + $0x2b8] sm:$0xff]
    %v3052 = vld [vmem:[#allocation16 + $0x2c0] sm:$0xff]
    %v3053 = vld [vmem:[#allocation16 + $0x2c8] sm:$0xff]
    %v3054 = vld [vmem:[#allocation16 + $0x2d0] sm:$0xff]
    %v3055 = vld [vmem:[#allocation16 + $0x2d8] sm:$0xff]
    %v3056 = vld [vmem:[#allocation16 + $0x2e0] sm:$0xff]
    %v3057 = vld [vmem:[#allocation16 + $0x2e8] sm:$0xff]
    %v3058 = vld [vmem:[#allocation16 + $0x2f0] sm:$0xff]
    %v3059 = vld [vmem:[#allocation16 + $0x2f8] sm:$0xff]
    %v3060 = vld [vmem:[#allocation16 + $0x300] sm:$0xff]
    %v3061 = vld [vmem:[#allocation16 + $0x308] sm:$0xff]
    %v3062 = vld [vmem:[#allocation16 + $0x310] sm:$0xff]
    %v3063 = vld [vmem:[#allocation16 + $0x318] sm:$0xff]
    %v3064 = vld [vmem:[#allocation16 + $0x320] sm:$0xff]
    %v3065 = vld [vmem:[#allocation16 + $0x328] sm:$0xff]
    %v3066 = vld [vmem:[#allocation16 + $0x330] sm:$0xff]
    %v3067 = vld [vmem:[#allocation16 + $0x338] sm:$0xff]
    %v3068 = vld [vmem:[#allocation16 + $0x340] sm:$0xff]
    %v3069 = vld [vmem:[#allocation16 + $0x348] sm:$0xff]
    %v3070 = vld [vmem:[#allocation16 + $0x350] sm:$0xff]
    %v3071 = vld [vmem:[#allocation16 + $0x358] sm:$0xff]
    %v3072 = vld [vmem:[#allocation16 + $0x360] sm:$0xff]
    %v3073 = vld [vmem:[#allocation16 + $0x368] sm:$0xff]
    %v3074 = vld [vmem:[#allocation16 + $0x370] sm:$0xff]
    %v3075 = vld [vmem:[#allocation16 + $0x378] sm:$0xff]
    %v3076 = vld [vmem:[#allocation16 + $0x380] sm:$0xff]
    %v3077 = vld [vmem:[#allocation16 + $0x388] sm:$0xff]
    %v3078 = vld [vmem:[#allocation16 + $0x390] sm:$0xff]
    %v3079 = vld [vmem:[#allocation16 + $0x398] sm:$0xff]
    %v3080 = vld [vmem:[#allocation16 + $0x3a0] sm:$0xff]
    %v3081 = vld [vmem:[#allocation16 + $0x3a8] sm:$0xff]
    %v3082 = vld [vmem:[#allocation16 + $0x3b0] sm:$0xff]
    %v3083 = vld [vmem:[#allocation16 + $0x3b8] sm:$0xff]
    %v3084 = vld [vmem:[#allocation16 + $0x3c0] sm:$0xff]
    %v3085 = vld [vmem:[#allocation16 + $0x3c8] sm:$0xff]
    %v3086 = vld [vmem:[#allocation16 + $0x3d0] sm:$0xff]
    %v3087 = vld [vmem:[#allocation16 + $0x3d8] sm:$0xff]
    %v3088 = vld [vmem:[#allocation16 + $0x3e0] sm:$0xff]
    %v3089 = vld [vmem:[#allocation16 + $0x3e8] sm:$0xff]
    %v3090 = vld [vmem:[#allocation16 + $0x3f0] sm:$0xff]
    %v3091 = vld [vmem:[#allocation16 + $0x3f8] sm:$0xff]
    %v3092 = vld [vmem:[#allocation16 + $0x400] sm:$0xff]
    %v3093 = vld [vmem:[#allocation16 + $0x408] sm:$0xff]
    %v3094 = vld [vmem:[#allocation16 + $0x410] sm:$0xff]
    %v3095 = vld [vmem:[#allocation16 + $0x418] sm:$0xff]
    %v3096 = vld [vmem:[#allocation16 + $0x420] sm:$0xff]
    %v3097 = vld [vmem:[#allocation16 + $0x428] sm:$0xff]
    %v3098 = vld [vmem:[#allocation16 + $0x430] sm:$0xff]
    %v3099 = vld [vmem:[#allocation16 + $0x438] sm:$0xff]
    %v3100 = vld [vmem:[#allocation16 + $0x440] sm:$0xff]
    %v3101 = vld [vmem:[#allocation16 + $0x448] sm:$0xff]
    %v3102 = vld [vmem:[#allocation16 + $0x450] sm:$0xff]
    %v3103 = vld [vmem:[#allocation16 + $0x458] sm:$0xff]
    %v3104 = vld [vmem:[#allocation16 + $0x460] sm:$0xff]
    %v3105 = vld [vmem:[#allocation16 + $0x468] sm:$0xff]
    %v3106 = vld [vmem:[#allocation16 + $0x470] sm:$0xff]
    %v3107 = vld [vmem:[#allocation16 + $0x478] sm:$0xff]
    %v3108 = vld [vmem:[#allocation16 + $0x480] sm:$0xff]
    %v3109 = vld [vmem:[#allocation16 + $0x488] sm:$0xff]
    %v3110 = vld [vmem:[#allocation16 + $0x490] sm:$0xff]
    %v3111 = vld [vmem:[#allocation16 + $0x498] sm:$0xff]
    %v3112 = vld [vmem:[#allocation16 + $0x4a0] sm:$0xff]
    %v3113 = vld [vmem:[#allocation16 + $0x4a8] sm:$0xff]
    %v3114 = vld [vmem:[#allocation16 + $0x4b0] sm:$0xff]
    %v3115 = vld [vmem:[#allocation16 + $0x4b8] sm:$0xff]
    %v3116 = vld [vmem:[#allocation16 + $0x4c0] sm:$0xff]
    %v3117 = vld [vmem:[#allocation16 + $0x4c8] sm:$0xff]
    %v3118 = vld [vmem:[#allocation16 + $0x4d0] sm:$0xff]
    %v3119 = vld [vmem:[#allocation16 + $0x4d8] sm:$0xff]
    %v3120 = vld [vmem:[#allocation16 + $0x4e0] sm:$0xff]
    %v3121 = vld [vmem:[#allocation16 + $0x4e8] sm:$0xff]
    %v3122 = vld [vmem:[#allocation16 + $0x4f0] sm:$0xff]
    %v3123 = vld [vmem:[#allocation16 + $0x4f8] sm:$0xff]
    %v3124 = vld [vmem:[#allocation16 + $0x500] sm:$0xff]
    %v3125 = vld [vmem:[#allocation16 + $0x508] sm:$0xff]
    %v3126 = vld [vmem:[#allocation16 + $0x510] sm:$0xff]
    %v3127 = vld [vmem:[#allocation16 + $0x518] sm:$0xff]
    %v3128 = vld [vmem:[#allocation16 + $0x520] sm:$0xff]
    %v3129 = vld [vmem:[#allocation16 + $0x528] sm:$0xff]
    %v3130 = vld [vmem:[#allocation16 + $0x530] sm:$0xff]
    %v3131 = vld [vmem:[#allocation16 + $0x538] sm:$0xff]
    %v3132 = vld [vmem:[#allocation16 + $0x540] sm:$0xff]
    %v3133 = vld [vmem:[#allocation16 + $0x548] sm:$0xff]
    %v3134 = vld [vmem:[#allocation16 + $0x550] sm:$0xff]
    %v3135 = vld [vmem:[#allocation16 + $0x558] sm:$0xff]
    %v3136 = vld [vmem:[#allocation16 + $0x560] sm:$0xff]
    %v3137 = vld [vmem:[#allocation16 + $0x568] sm:$0xff]
    %v3138 = vld [vmem:[#allocation16 + $0x570] sm:$0xff]
    %v3139 = vld [vmem:[#allocation16 + $0x578] sm:$0xff]
    %v3140 = vld [vmem:[#allocation16 + $0x580] sm:$0xff]
    %v3141 = vld [vmem:[#allocation16 + $0x588] sm:$0xff]
    %v3142 = vld [vmem:[#allocation16 + $0x590] sm:$0xff]
    %v3143 = vld [vmem:[#allocation16 + $0x598] sm:$0xff]
    %v3144 = vld [vmem:[#allocation16 + $0x5a0] sm:$0xff]
    %v3145 = vld [vmem:[#allocation16 + $0x5a8] sm:$0xff]
    %v3146 = vld [vmem:[#allocation16 + $0x5b0] sm:$0xff]
    %v3147 = vld [vmem:[#allocation16 + $0x5b8] sm:$0xff]
    %v3148 = vld [vmem:[#allocation16 + $0x5c0] sm:$0xff]
    %v3149 = vld [vmem:[#allocation16 + $0x5c8] sm:$0xff]
    %v3150 = vld [vmem:[#allocation16 + $0x5d0] sm:$0xff]
    %v3151 = vld [vmem:[#allocation16 + $0x5d8] sm:$0xff]
    %v3152 = vld [vmem:[#allocation16 + $0x5e0] sm:$0xff]
    %v3153 = vld [vmem:[#allocation16 + $0x5e8] sm:$0xff]
    %v3154 = vld [vmem:[#allocation16 + $0x5f0] sm:$0xff]
    %v3155 = vld [vmem:[#allocation16 + $0x5f8] sm:$0xff]
    %v3156 = vld [vmem:[#allocation16 + $0x600] sm:$0xff]
    %v3157 = vld [vmem:[#allocation16 + $0x608] sm:$0xff]
    %v3158 = vld [vmem:[#allocation16 + $0x610] sm:$0xff]
    %v3159 = vld [vmem:[#allocation16 + $0x618] sm:$0xff]
    %v3160 = vld [vmem:[#allocation16 + $0x620] sm:$0xff]
    %v3161 = vld [vmem:[#allocation16 + $0x628] sm:$0xff]
    %v3162 = vld [vmem:[#allocation16 + $0x630] sm:$0xff]
    %v3163 = vld [vmem:[#allocation16 + $0x638] sm:$0xff]
    %v3164 = vld [vmem:[#allocation16 + $0x640] sm:$0xff]
    %v3165 = vld [vmem:[#allocation16 + $0x648] sm:$0xff]
    %v3166 = vld [vmem:[#allocation16 + $0x650] sm:$0xff]
    %v3167 = vld [vmem:[#allocation16 + $0x658] sm:$0xff]
    %v3168 = vld [vmem:[#allocation16 + $0x660] sm:$0xff]
    %v3169 = vld [vmem:[#allocation16 + $0x668] sm:$0xff]
    %v3170 = vld [vmem:[#allocation16 + $0x670] sm:$0xff]
    %v3171 = vld [vmem:[#allocation16 + $0x678] sm:$0xff]
    %v3172 = vld [vmem:[#allocation16 + $0x680] sm:$0xff]
    %v3173 = vld [vmem:[#allocation16 + $0x688] sm:$0xff]
    %v3174 = vld [vmem:[#allocation16 + $0x690] sm:$0xff]
    %v3175 = vld [vmem:[#allocation16 + $0x698] sm:$0xff]
    %v3176 = vld [vmem:[#allocation16 + $0x6a0] sm:$0xff]
    %v3177 = vld [vmem:[#allocation16 + $0x6a8] sm:$0xff]
    %v3178 = vld [vmem:[#allocation16 + $0x6b0] sm:$0xff]
    %v3179 = vld [vmem:[#allocation16 + $0x6b8] sm:$0xff]
    %v3180 = vld [vmem:[#allocation16 + $0x6c0] sm:$0xff]
    %v3181 = vld [vmem:[#allocation16 + $0x6c8] sm:$0xff]
    %v3182 = vld [vmem:[#allocation16 + $0x6d0] sm:$0xff]
    %v3183 = vld [vmem:[#allocation16 + $0x6d8] sm:$0xff]
    %v3184 = vld [vmem:[#allocation16 + $0x6e0] sm:$0xff]
    %v3185 = vld [vmem:[#allocation16 + $0x6e8] sm:$0xff]
    %v3186 = vld [vmem:[#allocation16 + $0x6f0] sm:$0xff]
    %v3187 = vld [vmem:[#allocation16 + $0x6f8] sm:$0xff]
    %v3188 = vld [vmem:[#allocation16 + $0x700] sm:$0xff]
    %v3189 = vld [vmem:[#allocation16 + $0x708] sm:$0xff]
    %v3190 = vld [vmem:[#allocation16 + $0x710] sm:$0xff]
    %v3191 = vld [vmem:[#allocation16 + $0x718] sm:$0xff]
    %v3192 = vld [vmem:[#allocation16 + $0x720] sm:$0xff]
    %v3193 = vld [vmem:[#allocation16 + $0x728] sm:$0xff]
    %v3194 = vld [vmem:[#allocation16 + $0x730] sm:$0xff]
    %v3195 = vld [vmem:[#allocation16 + $0x738] sm:$0xff]
    %v3196 = vld [vmem:[#allocation16 + $0x740] sm:$0xff]
    %v3197 = vld [vmem:[#allocation16 + $0x748] sm:$0xff]
    %v3198 = vld [vmem:[#allocation16 + $0x750] sm:$0xff]
    %v3199 = vld [vmem:[#allocation16 + $0x758] sm:$0xff]
    %v3200 = vld [vmem:[#allocation16 + $0x760] sm:$0xff]
    %v3201 = vld [vmem:[#allocation16 + $0x768] sm:$0xff]
    %v3202 = vld [vmem:[#allocation16 + $0x770] sm:$0xff]
    %v3203 = vld [vmem:[#allocation16 + $0x778] sm:$0xff]
    %v3204 = vld [vmem:[#allocation16 + $0x780] sm:$0xff]
    %v3205 = vld [vmem:[#allocation16 + $0x788] sm:$0xff]
    %v3206 = vld [vmem:[#allocation16 + $0x790] sm:$0xff]
    %v3207 = vld [vmem:[#allocation16 + $0x798] sm:$0xff]
    %v3208 = vld [vmem:[#allocation16 + $0x7a0] sm:$0xff]
    %v3209 = vld [vmem:[#allocation16 + $0x7a8] sm:$0xff]
    %v3210 = vld [vmem:[#allocation16 + $0x7b0] sm:$0xff]
    %v3211 = vld [vmem:[#allocation16 + $0x7b8] sm:$0xff]
    %v3212 = vld [vmem:[#allocation16 + $0x7c0] sm:$0xff]
    %v3213 = vld [vmem:[#allocation16 + $0x7c8] sm:$0xff]
    %v3214 = vld [vmem:[#allocation16 + $0x7d0] sm:$0xff]
    %v3215 = vld [vmem:[#allocation16 + $0x7d8] sm:$0xff]
    %v3216 = vld [vmem:[#allocation16 + $0x7e0] sm:$0xff]
    %v3217 = vld [vmem:[#allocation16 + $0x7e8] sm:$0xff]
    %v3218 = vld [vmem:[#allocation16 + $0x7f0] sm:$0xff]
    %v3219 = vld [vmem:[#allocation16 + $0x7f8] sm:$0xff]
    %3220 = vmatprep.subr.mxu0 %v3025
    %3221 = vmatpush1.msra.mxu0 %v3024
    %3222 = vmatprep.subr.mxu0 %v3021
    %3223 = vmatpush1.msra.mxu0 %v3020
    %3224 = vmatprep.subr.mxu0 %v3017
    %3225 = vmatpush1.msra.mxu0 %v3016
    %3226 = vmatprep.subr.mxu0 %v3013
    %3227 = vmatpush1.msra.mxu0 %v3012
    %3228 = vmatprep.subr.mxu0 %v3009
    %3229 = vmatpush1.msra.mxu0 %v3008
    %3230 = vmatprep.subr.mxu0 %v3005
    %3231 = vmatpush1.msra.mxu0 %v3004
    %3232 = vmatprep.subr.mxu0 %v3001
    %3233 = vmatpush1.msra.mxu0 %v3000
    %3234 = vmatprep.subr.mxu0 %v2997
    %3235 = vmatpush1.msra.mxu0 %v2996
    %3236 = vmatprep.subr.mxu0 %v2993
    %3237 = vmatpush1.msra.mxu0 %v2992
    %3238 = vmatprep.subr.mxu0 %v2989
    %3239 = vmatpush1.msra.mxu0 %v2988
    %3240 = vmatprep.subr.mxu0 %v2985
    %3241 = vmatpush1.msra.mxu0 %v2984
    %3242 = vmatprep.subr.mxu0 %v2981
    %3243 = vmatpush1.msra.mxu0 %v2980
    %3244 = vmatprep.subr.mxu0 %v2977
    %3245 = vmatpush1.msra.mxu0 %v2976
    %3246 = vmatprep.subr.mxu0 %v2973
    %3247 = vmatpush1.msra.mxu0 %v2972
    %3248 = vmatprep.subr.mxu0 %v2969
    %3249 = vmatpush1.msra.mxu0 %v2968
    %3250 = vmatprep.subr.mxu0 %v2965
    %3251 = vmatpush1.msra.mxu0 %v2964
    %3252 = vmatprep.subr.mxu0 %v3089
    %3253 = vmatpush2.msra.mxu0 %v3088
    %3254 = vmatprep.subr.mxu0 %v3085
    %3255 = vmatpush2.msra.mxu0 %v3084
    %3256 = vmatprep.subr.mxu0 %v3081
    %3257 = vmatpush2.msra.mxu0 %v3080
    %3258 = vmatprep.subr.mxu0 %v3077
    %3259 = vmatpush2.msra.mxu0 %v3076
    %3260 = vmatprep.subr.mxu0 %v3073
    %3261 = vmatpush2.msra.mxu0 %v3072
    %3262 = vmatprep.subr.mxu0 %v3069
    %3263 = vmatpush2.msra.mxu0 %v3068
    %3264 = vmatprep.subr.mxu0 %v3065
    %3265 = vmatpush2.msra.mxu0 %v3064
    %3266 = vmatprep.subr.mxu0 %v3061
    %3267 = vmatpush2.msra.mxu0 %v3060
    %3268 = vmatprep.subr.mxu0 %v3057
    %3269 = vmatpush2.msra.mxu0 %v3056
    %3270 = vmatprep.subr.mxu0 %v3053
    %3271 = vmatpush2.msra.mxu0 %v3052
    %3272 = vmatprep.subr.mxu0 %v3049
    %3273 = vmatpush2.msra.mxu0 %v3048
    %3274 = vmatprep.subr.mxu0 %v3045
    %3275 = vmatpush2.msra.mxu0 %v3044
    %3276 = vmatprep.subr.mxu0 %v3041
    %3277 = vmatpush2.msra.mxu0 %v3040
    %3278 = vmatprep.subr.mxu0 %v3037
    %3279 = vmatpush2.msra.mxu0 %v3036
    %3280 = vmatprep.subr.mxu0 %v3033
    %3281 = vmatpush2.msra.mxu0 %v3032
    %3282 = vmatprep.subr.mxu0 %v3029
    %3283 = vmatpush2.msra.mxu0 %v3028
    %3284 = vmatprep.mubr.f32.mxu0 %v2949
    %3285 = vmatmul.mubr.f32.gmra.mxu0 %v2948
    %v3286 = vpop.f32.mrf.mxu0
    %v3287 = vadd.f32 0.0, %v3286
    %v3288 = vpop.f32.mrf.mxu0
    %v3289 = vadd.f32 0.0, %v3288
    %3290 = vmatprep.mubr.f32.mxu0 %v2953
    %3291 = vmatmul.mubr.f32.gmra.mxu0 %v2952
    %v3292 = vpop.f32.mrf.mxu0
    %v3293 = vadd.f32 0.0, %v3292
    %v3294 = vpop.f32.mrf.mxu0
    %v3295 = vadd.f32 0.0, %v3294
    %3296 = vmatprep.mubr.f32.mxu0 %v2957
    %3297 = vmatmul.mubr.f32.gmra.mxu0 %v2956
    %v3298 = vpop.f32.mrf.mxu0
    %v3299 = vadd.f32 0.0, %v3298
    %v3300 = vpop.f32.mrf.mxu0
    %v3301 = vadd.f32 0.0, %v3300
    %3302 = vmatprep.mubr.f32.mxu0 %v2961
    %3303 = vmatmul.mubr.f32.gmra.mxu0 %v2960
    %v3304 = vpop.f32.mrf.mxu0
    %v3305 = vadd.f32 0.0, %v3304
    %v3306 = vpop.f32.mrf.mxu0
    %v3307 = vadd.f32 0.0, %v3306
    %3308 = vdwg.mxu0
    %3309 = vmatprep.subr.mxu0 %v3153
    %3310 = vmatpush1.msra.mxu0 %v3152
    %3311 = vmatprep.subr.mxu0 %v3149
    %3312 = vmatpush1.msra.mxu0 %v3148
    %3313 = vmatprep.subr.mxu0 %v3145
    %3314 = vmatpush1.msra.mxu0 %v3144
    %3315 = vmatprep.subr.mxu0 %v3141
    %3316 = vmatpush1.msra.mxu0 %v3140
    %3317 = vmatprep.subr.mxu0 %v3137
    %3318 = vmatpush1.msra.mxu0 %v3136
    %3319 = vmatprep.subr.mxu0 %v3133
    %3320 = vmatpush1.msra.mxu0 %v3132
    %3321 = vmatprep.subr.mxu0 %v3129
    %3322 = vmatpush1.msra.mxu0 %v3128
    %3323 = vmatprep.subr.mxu0 %v3125
    %3324 = vmatpush1.msra.mxu0 %v3124
    %3325 = vmatprep.subr.mxu0 %v3121
    %3326 = vmatpush1.msra.mxu0 %v3120
    %3327 = vmatprep.subr.mxu0 %v3117
    %3328 = vmatpush1.msra.mxu0 %v3116
    %3329 = vmatprep.subr.mxu0 %v3113
    %3330 = vmatpush1.msra.mxu0 %v3112
    %3331 = vmatprep.subr.mxu0 %v3109
    %3332 = vmatpush1.msra.mxu0 %v3108
    %3333 = vmatprep.subr.mxu0 %v3105
    %3334 = vmatpush1.msra.mxu0 %v3104
    %3335 = vmatprep.subr.mxu0 %v3101
    %3336 = vmatpush1.msra.mxu0 %v3100
    %3337 = vmatprep.subr.mxu0 %v3097
    %3338 = vmatpush1.msra.mxu0 %v3096
    %3339 = vmatprep.subr.mxu0 %v3093
    %3340 = vmatpush1.msra.mxu0 %v3092
    %3341 = vmatprep.subr.mxu0 %v3217
    %3342 = vmatpush2.msra.mxu0 %v3216
    %3343 = vmatprep.subr.mxu0 %v3213
    %3344 = vmatpush2.msra.mxu0 %v3212
    %3345 = vmatprep.subr.mxu0 %v3209
    %3346 = vmatpush2.msra.mxu0 %v3208
    %3347 = vmatprep.subr.mxu0 %v3205
    %3348 = vmatpush2.msra.mxu0 %v3204
    %3349 = vmatprep.subr.mxu0 %v3201
    %3350 = vmatpush2.msra.mxu0 %v3200
    %3351 = vmatprep.subr.mxu0 %v3197
    %3352 = vmatpush2.msra.mxu0 %v3196
    %3353 = vmatprep.subr.mxu0 %v3193
    %3354 = vmatpush2.msra.mxu0 %v3192
    %3355 = vmatprep.subr.mxu0 %v3189
    %3356 = vmatpush2.msra.mxu0 %v3188
    %3357 = vmatprep.subr.mxu0 %v3185
    %3358 = vmatpush2.msra.mxu0 %v3184
    %3359 = vmatprep.subr.mxu0 %v3181
    %3360 = vmatpush2.msra.mxu0 %v3180
    %3361 = vmatprep.subr.mxu0 %v3177
    %3362 = vmatpush2.msra.mxu0 %v3176
    %3363 = vmatprep.subr.mxu0 %v3173
    %3364 = vmatpush2.msra.mxu0 %v3172
    %3365 = vmatprep.subr.mxu0 %v3169
    %3366 = vmatpush2.msra.mxu0 %v3168
    %3367 = vmatprep.subr.mxu0 %v3165
    %3368 = vmatpush2.msra.mxu0 %v3164
    %3369 = vmatprep.subr.mxu0 %v3161
    %3370 = vmatpush2.msra.mxu0 %v3160
    %3371 = vmatprep.subr.mxu0 %v3157
    %3372 = vmatpush2.msra.mxu0 %v3156
    %3373 = vmatprep.mubr.f32.mxu0 %v2951
    %3374 = vmatmul.mubr.f32.gmra.mxu0 %v2950
    %v3375 = vpop.f32.mrf.mxu0
    %v3376 = vadd.f32 %v3287, %v3375
    %v3377 = vpop.f32.mrf.mxu0
    %v3378 = vadd.f32 %v3289, %v3377
    %3379 = vmatprep.mubr.f32.mxu0 %v2955
    %3380 = vmatmul.mubr.f32.gmra.mxu0 %v2954
    %v3381 = vpop.f32.mrf.mxu0
    %v3382 = vadd.f32 %v3293, %v3381
    %v3383 = vpop.f32.mrf.mxu0
    %v3384 = vadd.f32 %v3295, %v3383
    %3385 = vmatprep.mubr.f32.mxu0 %v2959
    %3386 = vmatmul.mubr.f32.gmra.mxu0 %v2958
    %v3387 = vpop.f32.mrf.mxu0
    %v3388 = vadd.f32 %v3299, %v3387
    %v3389 = vpop.f32.mrf.mxu0
    %v3390 = vadd.f32 %v3301, %v3389
    %3391 = vmatprep.mubr.f32.mxu0 %v2963
    %3392 = vmatmul.mubr.f32.gmra.mxu0 %v2962
    %v3393 = vpop.f32.mrf.mxu0
    %v3394 = vadd.f32 %v3305, %v3393
    %v3395 = vpop.f32.mrf.mxu0
    %v3396 = vadd.f32 %v3307, %v3395
    %3397 = vdwg.mxu0
    %3398 = vmatprep.subr.mxu0 %v3027
    %3399 = vmatpush1.msra.mxu0 %v3026
    %3400 = vmatprep.subr.mxu0 %v3023
    %3401 = vmatpush1.msra.mxu0 %v3022
    %3402 = vmatprep.subr.mxu0 %v3019
    %3403 = vmatpush1.msra.mxu0 %v3018
    %3404 = vmatprep.subr.mxu0 %v3015
    %3405 = vmatpush1.msra.mxu0 %v3014
    %3406 = vmatprep.subr.mxu0 %v3011
    %3407 = vmatpush1.msra.mxu0 %v3010
    %3408 = vmatprep.subr.mxu0 %v3007
    %3409 = vmatpush1.msra.mxu0 %v3006
    %3410 = vmatprep.subr.mxu0 %v3003
    %3411 = vmatpush1.msra.mxu0 %v3002
    %3412 = vmatprep.subr.mxu0 %v2999
    %3413 = vmatpush1.msra.mxu0 %v2998
    %3414 = vmatprep.subr.mxu0 %v2995
    %3415 = vmatpush1.msra.mxu0 %v2994
    %3416 = vmatprep.subr.mxu0 %v2991
    %3417 = vmatpush1.msra.mxu0 %v2990
    %3418 = vmatprep.subr.mxu0 %v2987
    %3419 = vmatpush1.msra.mxu0 %v2986
    %3420 = vmatprep.subr.mxu0 %v2983
    %3421 = vmatpush1.msra.mxu0 %v2982
    %3422 = vmatprep.subr.mxu0 %v2979
    %3423 = vmatpush1.msra.mxu0 %v2978
    %3424 = vmatprep.subr.mxu0 %v2975
    %3425 = vmatpush1.msra.mxu0 %v2974
    %3426 = vmatprep.subr.mxu0 %v2971
    %3427 = vmatpush1.msra.mxu0 %v2970
    %3428 = vmatprep.subr.mxu0 %v2967
    %3429 = vmatpush1.msra.mxu0 %v2966
    %3430 = vmatprep.subr.mxu0 %v3091
    %3431 = vmatpush2.msra.mxu0 %v3090
    %3432 = vmatprep.subr.mxu0 %v3087
    %3433 = vmatpush2.msra.mxu0 %v3086
    %3434 = vmatprep.subr.mxu0 %v3083
    %3435 = vmatpush2.msra.mxu0 %v3082
    %3436 = vmatprep.subr.mxu0 %v3079
    %3437 = vmatpush2.msra.mxu0 %v3078
    %3438 = vmatprep.subr.mxu0 %v3075
    %3439 = vmatpush2.msra.mxu0 %v3074
    %3440 = vmatprep.subr.mxu0 %v3071
    %3441 = vmatpush2.msra.mxu0 %v3070
    %3442 = vmatprep.subr.mxu0 %v3067
    %3443 = vmatpush2.msra.mxu0 %v3066
    %3444 = vmatprep.subr.mxu0 %v3063
    %3445 = vmatpush2.msra.mxu0 %v3062
    %3446 = vmatprep.subr.mxu0 %v3059
    %3447 = vmatpush2.msra.mxu0 %v3058
    %3448 = vmatprep.subr.mxu0 %v3055
    %3449 = vmatpush2.msra.mxu0 %v3054
    %3450 = vmatprep.subr.mxu0 %v3051
    %3451 = vmatpush2.msra.mxu0 %v3050
    %3452 = vmatprep.subr.mxu0 %v3047
    %3453 = vmatpush2.msra.mxu0 %v3046
    %3454 = vmatprep.subr.mxu0 %v3043
    %3455 = vmatpush2.msra.mxu0 %v3042
    %3456 = vmatprep.subr.mxu0 %v3039
    %3457 = vmatpush2.msra.mxu0 %v3038
    %3458 = vmatprep.subr.mxu0 %v3035
    %3459 = vmatpush2.msra.mxu0 %v3034
    %3460 = vmatprep.subr.mxu0 %v3031
    %3461 = vmatpush2.msra.mxu0 %v3030
    %3462 = vmatprep.mubr.f32.mxu0 %v2949
    %3463 = vmatmul.mubr.f32.gmra.mxu0 %v2948
    %v3464 = vpop.f32.mrf.mxu0
    %v3465 = vadd.f32 0.0, %v3464
    %v3466 = vpop.f32.mrf.mxu0
    %v3467 = vadd.f32 0.0, %v3466
    %3468 = vmatprep.mubr.f32.mxu0 %v2953
    %3469 = vmatmul.mubr.f32.gmra.mxu0 %v2952
    %v3470 = vpop.f32.mrf.mxu0
    %v3471 = vadd.f32 0.0, %v3470
    %v3472 = vpop.f32.mrf.mxu0
    %v3473 = vadd.f32 0.0, %v3472
    %3474 = vmatprep.mubr.f32.mxu0 %v2957
    %3475 = vmatmul.mubr.f32.gmra.mxu0 %v2956
    %v3476 = vpop.f32.mrf.mxu0
    %v3477 = vadd.f32 0.0, %v3476
    %v3478 = vpop.f32.mrf.mxu0
    %v3479 = vadd.f32 0.0, %v3478
    %3480 = vmatprep.mubr.f32.mxu0 %v2961
    %3481 = vmatmul.mubr.f32.gmra.mxu0 %v2960
    %v3482 = vpop.f32.mrf.mxu0
    %v3483 = vadd.f32 0.0, %v3482
    %v3484 = vpop.f32.mrf.mxu0
    %v3485 = vadd.f32 0.0, %v3484
    %3486 = vdwg.mxu0
    %3487 = vmatprep.subr.mxu0 %v3155
    %3488 = vmatpush1.msra.mxu0 %v3154
    %3489 = vmatprep.subr.mxu0 %v3151
    %3490 = vmatpush1.msra.mxu0 %v3150
    %3491 = vmatprep.subr.mxu0 %v3147
    %3492 = vmatpush1.msra.mxu0 %v3146
    %3493 = vmatprep.subr.mxu0 %v3143
    %3494 = vmatpush1.msra.mxu0 %v3142
    %3495 = vmatprep.subr.mxu0 %v3139
    %3496 = vmatpush1.msra.mxu0 %v3138
    %3497 = vmatprep.subr.mxu0 %v3135
    %3498 = vmatpush1.msra.mxu0 %v3134
    %3499 = vmatprep.subr.mxu0 %v3131
    %3500 = vmatpush1.msra.mxu0 %v3130
    %3501 = vmatprep.subr.mxu0 %v3127
    %3502 = vmatpush1.msra.mxu0 %v3126
    %3503 = vmatprep.subr.mxu0 %v3123
    %3504 = vmatpush1.msra.mxu0 %v3122
    %3505 = vmatprep.subr.mxu0 %v3119
    %3506 = vmatpush1.msra.mxu0 %v3118
    %3507 = vmatprep.subr.mxu0 %v3115
    %3508 = vmatpush1.msra.mxu0 %v3114
    %3509 = vmatprep.subr.mxu0 %v3111
    %3510 = vmatpush1.msra.mxu0 %v3110
    %3511 = vmatprep.subr.mxu0 %v3107
    %3512 = vmatpush1.msra.mxu0 %v3106
    %3513 = vmatprep.subr.mxu0 %v3103
    %3514 = vmatpush1.msra.mxu0 %v3102
    %3515 = vmatprep.subr.mxu0 %v3099
    %3516 = vmatpush1.msra.mxu0 %v3098
    %3517 = vmatprep.subr.mxu0 %v3095
    %3518 = vmatpush1.msra.mxu0 %v3094
    %3519 = vmatprep.subr.mxu0 %v3219
    %3520 = vmatpush2.msra.mxu0 %v3218
    %3521 = vmatprep.subr.mxu0 %v3215
    %3522 = vmatpush2.msra.mxu0 %v3214
    %3523 = vmatprep.subr.mxu0 %v3211
    %3524 = vmatpush2.msra.mxu0 %v3210
    %3525 = vmatprep.subr.mxu0 %v3207
    %3526 = vmatpush2.msra.mxu0 %v3206
    %3527 = vmatprep.subr.mxu0 %v3203
    %3528 = vmatpush2.msra.mxu0 %v3202
    %3529 = vmatprep.subr.mxu0 %v3199
    %3530 = vmatpush2.msra.mxu0 %v3198
    %3531 = vmatprep.subr.mxu0 %v3195
    %3532 = vmatpush2.msra.mxu0 %v3194
    %3533 = vmatprep.subr.mxu0 %v3191
    %3534 = vmatpush2.msra.mxu0 %v3190
    %3535 = vmatprep.subr.mxu0 %v3187
    %3536 = vmatpush2.msra.mxu0 %v3186
    %3537 = vmatprep.subr.mxu0 %v3183
    %3538 = vmatpush2.msra.mxu0 %v3182
    %3539 = vmatprep.subr.mxu0 %v3179
    %3540 = vmatpush2.msra.mxu0 %v3178
    %3541 = vmatprep.subr.mxu0 %v3175
    %3542 = vmatpush2.msra.mxu0 %v3174
    %3543 = vmatprep.subr.mxu0 %v3171
    %3544 = vmatpush2.msra.mxu0 %v3170
    %3545 = vmatprep.subr.mxu0 %v3167
    %3546 = vmatpush2.msra.mxu0 %v3166
    %3547 = vmatprep.subr.mxu0 %v3163
    %3548 = vmatpush2.msra.mxu0 %v3162
    %3549 = vmatprep.subr.mxu0 %v3159
    %3550 = vmatpush2.msra.mxu0 %v3158
    %3551 = vmatprep.mubr.f32.mxu0 %v2951
    %3552 = vmatmul.mubr.f32.gmra.mxu0 %v2950
    %v3553 = vpop.f32.mrf.mxu0
    %v3554 = vadd.f32 %v3465, %v3553
    %v3555 = vpop.f32.mrf.mxu0
    %v3556 = vadd.f32 %v3467, %v3555
    %3557 = vmatprep.mubr.f32.mxu0 %v2955
    %3558 = vmatmul.mubr.f32.gmra.mxu0 %v2954
    %v3559 = vpop.f32.mrf.mxu0
    %v3560 = vadd.f32 %v3471, %v3559
    %v3561 = vpop.f32.mrf.mxu0
    %v3562 = vadd.f32 %v3473, %v3561
    %3563 = vmatprep.mubr.f32.mxu0 %v2959
    %3564 = vmatmul.mubr.f32.gmra.mxu0 %v2958
    %v3565 = vpop.f32.mrf.mxu0
    %v3566 = vadd.f32 %v3477, %v3565
    %v3567 = vpop.f32.mrf.mxu0
    %v3568 = vadd.f32 %v3479, %v3567
    %3569 = vmatprep.mubr.f32.mxu0 %v2963
    %3570 = vmatmul.mubr.f32.gmra.mxu0 %v2962
    %v3571 = vpop.f32.mrf.mxu0
    %v3572 = vadd.f32 %v3483, %v3571
    %v3573 = vpop.f32.mrf.mxu0
    %v3574 = vadd.f32 %v3485, %v3573
    %3575 = vdwg.mxu0
    %3576 = vst [vmem:[#allocation4] sm:$0xff] %v3376
    %3577 = vst [vmem:[#allocation4 + $0x8] sm:$0xff] %v3378
    %3578 = vst [vmem:[#allocation4 + $0x10] sm:$0xff] %v3554
    %3579 = vst [vmem:[#allocation4 + $0x18] sm:$0xff] %v3556
    %3580 = vst [vmem:[#allocation4 + $0x20] sm:$0xff] %v3382
    %3581 = vst [vmem:[#allocation4 + $0x28] sm:$0xff] %v3384
    %3582 = vst [vmem:[#allocation4 + $0x30] sm:$0xff] %v3560
    %3583 = vst [vmem:[#allocation4 + $0x38] sm:$0xff] %v3562
    %3584 = vst [vmem:[#allocation4 + $0x40] sm:$0xff] %v3388
    %3585 = vst [vmem:[#allocation4 + $0x48] sm:$0xff] %v3390
    %3586 = vst [vmem:[#allocation4 + $0x50] sm:$0xff] %v3566
    %3587 = vst [vmem:[#allocation4 + $0x58] sm:$0xff] %v3568
    %3588 = vst [vmem:[#allocation4 + $0x60] sm:$0xff] %v3394
    %3589 = vst [vmem:[#allocation4 + $0x68] sm:$0xff] %v3396
    %3590 = vst [vmem:[#allocation4 + $0x70] sm:$0xff] %v3572
    %3591 = vst [vmem:[#allocation4 + $0x78] sm:$0xff] %v3574
    %s3592 = scalar_lea.vmem [#allocation16], 2048
    %v3593 = vld [vmem:[%s3592] sm:$0xff]
    %v3594 = vld [vmem:[%s3592 + $0x8] sm:$0xff]
    %v3595 = vld [vmem:[%s3592 + $0x10] sm:$0xff]
    %v3596 = vld [vmem:[%s3592 + $0x18] sm:$0xff]
    %v3597 = vld [vmem:[%s3592 + $0x20] sm:$0xff]
    %v3598 = vld [vmem:[%s3592 + $0x28] sm:$0xff]
    %v3599 = vld [vmem:[%s3592 + $0x30] sm:$0xff]
    %v3600 = vld [vmem:[%s3592 + $0x38] sm:$0xff]
    %v3601 = vld [vmem:[%s3592 + $0x40] sm:$0xff]
    %v3602 = vld [vmem:[%s3592 + $0x48] sm:$0xff]
    %v3603 = vld [vmem:[%s3592 + $0x50] sm:$0xff]
    %v3604 = vld [vmem:[%s3592 + $0x58] sm:$0xff]
    %v3605 = vld [vmem:[%s3592 + $0x60] sm:$0xff]
    %v3606 = vld [vmem:[%s3592 + $0x68] sm:$0xff]
    %v3607 = vld [vmem:[%s3592 + $0x70] sm:$0xff]
    %v3608 = vld [vmem:[%s3592 + $0x78] sm:$0xff]
    %v3609 = vld [vmem:[%s3592 + $0x80] sm:$0xff]
    %v3610 = vld [vmem:[%s3592 + $0x88] sm:$0xff]
    %v3611 = vld [vmem:[%s3592 + $0x90] sm:$0xff]
    %v3612 = vld [vmem:[%s3592 + $0x98] sm:$0xff]
    %v3613 = vld [vmem:[%s3592 + $0xa0] sm:$0xff]
    %v3614 = vld [vmem:[%s3592 + $0xa8] sm:$0xff]
    %v3615 = vld [vmem:[%s3592 + $0xb0] sm:$0xff]
    %v3616 = vld [vmem:[%s3592 + $0xb8] sm:$0xff]
    %v3617 = vld [vmem:[%s3592 + $0xc0] sm:$0xff]
    %v3618 = vld [vmem:[%s3592 + $0xc8] sm:$0xff]
    %v3619 = vld [vmem:[%s3592 + $0xd0] sm:$0xff]
    %v3620 = vld [vmem:[%s3592 + $0xd8] sm:$0xff]
    %v3621 = vld [vmem:[%s3592 + $0xe0] sm:$0xff]
    %v3622 = vld [vmem:[%s3592 + $0xe8] sm:$0xff]
    %v3623 = vld [vmem:[%s3592 + $0xf0] sm:$0xff]
    %v3624 = vld [vmem:[%s3592 + $0xf8] sm:$0xff]
    %v3625 = vld [vmem:[%s3592 + $0x100] sm:$0xff]
    %v3626 = vld [vmem:[%s3592 + $0x108] sm:$0xff]
    %v3627 = vld [vmem:[%s3592 + $0x110] sm:$0xff]
    %v3628 = vld [vmem:[%s3592 + $0x118] sm:$0xff]
    %v3629 = vld [vmem:[%s3592 + $0x120] sm:$0xff]
    %v3630 = vld [vmem:[%s3592 + $0x128] sm:$0xff]
    %v3631 = vld [vmem:[%s3592 + $0x130] sm:$0xff]
    %v3632 = vld [vmem:[%s3592 + $0x138] sm:$0xff]
    %v3633 = vld [vmem:[%s3592 + $0x140] sm:$0xff]
    %v3634 = vld [vmem:[%s3592 + $0x148] sm:$0xff]
    %v3635 = vld [vmem:[%s3592 + $0x150] sm:$0xff]
    %v3636 = vld [vmem:[%s3592 + $0x158] sm:$0xff]
    %v3637 = vld [vmem:[%s3592 + $0x160] sm:$0xff]
    %v3638 = vld [vmem:[%s3592 + $0x168] sm:$0xff]
    %v3639 = vld [vmem:[%s3592 + $0x170] sm:$0xff]
    %v3640 = vld [vmem:[%s3592 + $0x178] sm:$0xff]
    %v3641 = vld [vmem:[%s3592 + $0x180] sm:$0xff]
    %v3642 = vld [vmem:[%s3592 + $0x188] sm:$0xff]
    %v3643 = vld [vmem:[%s3592 + $0x190] sm:$0xff]
    %v3644 = vld [vmem:[%s3592 + $0x198] sm:$0xff]
    %v3645 = vld [vmem:[%s3592 + $0x1a0] sm:$0xff]
    %v3646 = vld [vmem:[%s3592 + $0x1a8] sm:$0xff]
    %v3647 = vld [vmem:[%s3592 + $0x1b0] sm:$0xff]
    %v3648 = vld [vmem:[%s3592 + $0x1b8] sm:$0xff]
    %v3649 = vld [vmem:[%s3592 + $0x1c0] sm:$0xff]
    %v3650 = vld [vmem:[%s3592 + $0x1c8] sm:$0xff]
    %v3651 = vld [vmem:[%s3592 + $0x1d0] sm:$0xff]
    %v3652 = vld [vmem:[%s3592 + $0x1d8] sm:$0xff]
    %v3653 = vld [vmem:[%s3592 + $0x1e0] sm:$0xff]
    %v3654 = vld [vmem:[%s3592 + $0x1e8] sm:$0xff]
    %v3655 = vld [vmem:[%s3592 + $0x1f0] sm:$0xff]
    %v3656 = vld [vmem:[%s3592 + $0x1f8] sm:$0xff]
    %v3657 = vld [vmem:[%s3592 + $0x200] sm:$0xff]
    %v3658 = vld [vmem:[%s3592 + $0x208] sm:$0xff]
    %v3659 = vld [vmem:[%s3592 + $0x210] sm:$0xff]
    %v3660 = vld [vmem:[%s3592 + $0x218] sm:$0xff]
    %v3661 = vld [vmem:[%s3592 + $0x220] sm:$0xff]
    %v3662 = vld [vmem:[%s3592 + $0x228] sm:$0xff]
    %v3663 = vld [vmem:[%s3592 + $0x230] sm:$0xff]
    %v3664 = vld [vmem:[%s3592 + $0x238] sm:$0xff]
    %v3665 = vld [vmem:[%s3592 + $0x240] sm:$0xff]
    %v3666 = vld [vmem:[%s3592 + $0x248] sm:$0xff]
    %v3667 = vld [vmem:[%s3592 + $0x250] sm:$0xff]
    %v3668 = vld [vmem:[%s3592 + $0x258] sm:$0xff]
    %v3669 = vld [vmem:[%s3592 + $0x260] sm:$0xff]
    %v3670 = vld [vmem:[%s3592 + $0x268] sm:$0xff]
    %v3671 = vld [vmem:[%s3592 + $0x270] sm:$0xff]
    %v3672 = vld [vmem:[%s3592 + $0x278] sm:$0xff]
    %v3673 = vld [vmem:[%s3592 + $0x280] sm:$0xff]
    %v3674 = vld [vmem:[%s3592 + $0x288] sm:$0xff]
    %v3675 = vld [vmem:[%s3592 + $0x290] sm:$0xff]
    %v3676 = vld [vmem:[%s3592 + $0x298] sm:$0xff]
    %v3677 = vld [vmem:[%s3592 + $0x2a0] sm:$0xff]
    %v3678 = vld [vmem:[%s3592 + $0x2a8] sm:$0xff]
    %v3679 = vld [vmem:[%s3592 + $0x2b0] sm:$0xff]
    %v3680 = vld [vmem:[%s3592 + $0x2b8] sm:$0xff]
    %v3681 = vld [vmem:[%s3592 + $0x2c0] sm:$0xff]
    %v3682 = vld [vmem:[%s3592 + $0x2c8] sm:$0xff]
    %v3683 = vld [vmem:[%s3592 + $0x2d0] sm:$0xff]
    %v3684 = vld [vmem:[%s3592 + $0x2d8] sm:$0xff]
    %v3685 = vld [vmem:[%s3592 + $0x2e0] sm:$0xff]
    %v3686 = vld [vmem:[%s3592 + $0x2e8] sm:$0xff]
    %v3687 = vld [vmem:[%s3592 + $0x2f0] sm:$0xff]
    %v3688 = vld [vmem:[%s3592 + $0x2f8] sm:$0xff]
    %v3689 = vld [vmem:[%s3592 + $0x300] sm:$0xff]
    %v3690 = vld [vmem:[%s3592 + $0x308] sm:$0xff]
    %v3691 = vld [vmem:[%s3592 + $0x310] sm:$0xff]
    %v3692 = vld [vmem:[%s3592 + $0x318] sm:$0xff]
    %v3693 = vld [vmem:[%s3592 + $0x320] sm:$0xff]
    %v3694 = vld [vmem:[%s3592 + $0x328] sm:$0xff]
    %v3695 = vld [vmem:[%s3592 + $0x330] sm:$0xff]
    %v3696 = vld [vmem:[%s3592 + $0x338] sm:$0xff]
    %v3697 = vld [vmem:[%s3592 + $0x340] sm:$0xff]
    %v3698 = vld [vmem:[%s3592 + $0x348] sm:$0xff]
    %v3699 = vld [vmem:[%s3592 + $0x350] sm:$0xff]
    %v3700 = vld [vmem:[%s3592 + $0x358] sm:$0xff]
    %v3701 = vld [vmem:[%s3592 + $0x360] sm:$0xff]
    %v3702 = vld [vmem:[%s3592 + $0x368] sm:$0xff]
    %v3703 = vld [vmem:[%s3592 + $0x370] sm:$0xff]
    %v3704 = vld [vmem:[%s3592 + $0x378] sm:$0xff]
    %v3705 = vld [vmem:[%s3592 + $0x380] sm:$0xff]
    %v3706 = vld [vmem:[%s3592 + $0x388] sm:$0xff]
    %v3707 = vld [vmem:[%s3592 + $0x390] sm:$0xff]
    %v3708 = vld [vmem:[%s3592 + $0x398] sm:$0xff]
    %v3709 = vld [vmem:[%s3592 + $0x3a0] sm:$0xff]
    %v3710 = vld [vmem:[%s3592 + $0x3a8] sm:$0xff]
    %v3711 = vld [vmem:[%s3592 + $0x3b0] sm:$0xff]
    %v3712 = vld [vmem:[%s3592 + $0x3b8] sm:$0xff]
    %v3713 = vld [vmem:[%s3592 + $0x3c0] sm:$0xff]
    %v3714 = vld [vmem:[%s3592 + $0x3c8] sm:$0xff]
    %v3715 = vld [vmem:[%s3592 + $0x3d0] sm:$0xff]
    %v3716 = vld [vmem:[%s3592 + $0x3d8] sm:$0xff]
    %v3717 = vld [vmem:[%s3592 + $0x3e0] sm:$0xff]
    %v3718 = vld [vmem:[%s3592 + $0x3e8] sm:$0xff]
    %v3719 = vld [vmem:[%s3592 + $0x3f0] sm:$0xff]
    %v3720 = vld [vmem:[%s3592 + $0x3f8] sm:$0xff]
    %v3721 = vld [vmem:[%s3592 + $0x400] sm:$0xff]
    %v3722 = vld [vmem:[%s3592 + $0x408] sm:$0xff]
    %v3723 = vld [vmem:[%s3592 + $0x410] sm:$0xff]
    %v3724 = vld [vmem:[%s3592 + $0x418] sm:$0xff]
    %v3725 = vld [vmem:[%s3592 + $0x420] sm:$0xff]
    %v3726 = vld [vmem:[%s3592 + $0x428] sm:$0xff]
    %v3727 = vld [vmem:[%s3592 + $0x430] sm:$0xff]
    %v3728 = vld [vmem:[%s3592 + $0x438] sm:$0xff]
    %v3729 = vld [vmem:[%s3592 + $0x440] sm:$0xff]
    %v3730 = vld [vmem:[%s3592 + $0x448] sm:$0xff]
    %v3731 = vld [vmem:[%s3592 + $0x450] sm:$0xff]
    %v3732 = vld [vmem:[%s3592 + $0x458] sm:$0xff]
    %v3733 = vld [vmem:[%s3592 + $0x460] sm:$0xff]
    %v3734 = vld [vmem:[%s3592 + $0x468] sm:$0xff]
    %v3735 = vld [vmem:[%s3592 + $0x470] sm:$0xff]
    %v3736 = vld [vmem:[%s3592 + $0x478] sm:$0xff]
    %v3737 = vld [vmem:[%s3592 + $0x480] sm:$0xff]
    %v3738 = vld [vmem:[%s3592 + $0x488] sm:$0xff]
    %v3739 = vld [vmem:[%s3592 + $0x490] sm:$0xff]
    %v3740 = vld [vmem:[%s3592 + $0x498] sm:$0xff]
    %v3741 = vld [vmem:[%s3592 + $0x4a0] sm:$0xff]
    %v3742 = vld [vmem:[%s3592 + $0x4a8] sm:$0xff]
    %v3743 = vld [vmem:[%s3592 + $0x4b0] sm:$0xff]
    %v3744 = vld [vmem:[%s3592 + $0x4b8] sm:$0xff]
    %v3745 = vld [vmem:[%s3592 + $0x4c0] sm:$0xff]
    %v3746 = vld [vmem:[%s3592 + $0x4c8] sm:$0xff]
    %v3747 = vld [vmem:[%s3592 + $0x4d0] sm:$0xff]
    %v3748 = vld [vmem:[%s3592 + $0x4d8] sm:$0xff]
    %v3749 = vld [vmem:[%s3592 + $0x4e0] sm:$0xff]
    %v3750 = vld [vmem:[%s3592 + $0x4e8] sm:$0xff]
    %v3751 = vld [vmem:[%s3592 + $0x4f0] sm:$0xff]
    %v3752 = vld [vmem:[%s3592 + $0x4f8] sm:$0xff]
    %v3753 = vld [vmem:[%s3592 + $0x500] sm:$0xff]
    %v3754 = vld [vmem:[%s3592 + $0x508] sm:$0xff]
    %v3755 = vld [vmem:[%s3592 + $0x510] sm:$0xff]
    %v3756 = vld [vmem:[%s3592 + $0x518] sm:$0xff]
    %v3757 = vld [vmem:[%s3592 + $0x520] sm:$0xff]
    %v3758 = vld [vmem:[%s3592 + $0x528] sm:$0xff]
    %v3759 = vld [vmem:[%s3592 + $0x530] sm:$0xff]
    %v3760 = vld [vmem:[%s3592 + $0x538] sm:$0xff]
    %v3761 = vld [vmem:[%s3592 + $0x540] sm:$0xff]
    %v3762 = vld [vmem:[%s3592 + $0x548] sm:$0xff]
    %v3763 = vld [vmem:[%s3592 + $0x550] sm:$0xff]
    %v3764 = vld [vmem:[%s3592 + $0x558] sm:$0xff]
    %v3765 = vld [vmem:[%s3592 + $0x560] sm:$0xff]
    %v3766 = vld [vmem:[%s3592 + $0x568] sm:$0xff]
    %v3767 = vld [vmem:[%s3592 + $0x570] sm:$0xff]
    %v3768 = vld [vmem:[%s3592 + $0x578] sm:$0xff]
    %v3769 = vld [vmem:[%s3592 + $0x580] sm:$0xff]
    %v3770 = vld [vmem:[%s3592 + $0x588] sm:$0xff]
    %v3771 = vld [vmem:[%s3592 + $0x590] sm:$0xff]
    %v3772 = vld [vmem:[%s3592 + $0x598] sm:$0xff]
    %v3773 = vld [vmem:[%s3592 + $0x5a0] sm:$0xff]
    %v3774 = vld [vmem:[%s3592 + $0x5a8] sm:$0xff]
    %v3775 = vld [vmem:[%s3592 + $0x5b0] sm:$0xff]
    %v3776 = vld [vmem:[%s3592 + $0x5b8] sm:$0xff]
    %v3777 = vld [vmem:[%s3592 + $0x5c0] sm:$0xff]
    %v3778 = vld [vmem:[%s3592 + $0x5c8] sm:$0xff]
    %v3779 = vld [vmem:[%s3592 + $0x5d0] sm:$0xff]
    %v3780 = vld [vmem:[%s3592 + $0x5d8] sm:$0xff]
    %v3781 = vld [vmem:[%s3592 + $0x5e0] sm:$0xff]
    %v3782 = vld [vmem:[%s3592 + $0x5e8] sm:$0xff]
    %v3783 = vld [vmem:[%s3592 + $0x5f0] sm:$0xff]
    %v3784 = vld [vmem:[%s3592 + $0x5f8] sm:$0xff]
    %v3785 = vld [vmem:[%s3592 + $0x600] sm:$0xff]
    %v3786 = vld [vmem:[%s3592 + $0x608] sm:$0xff]
    %v3787 = vld [vmem:[%s3592 + $0x610] sm:$0xff]
    %v3788 = vld [vmem:[%s3592 + $0x618] sm:$0xff]
    %v3789 = vld [vmem:[%s3592 + $0x620] sm:$0xff]
    %v3790 = vld [vmem:[%s3592 + $0x628] sm:$0xff]
    %v3791 = vld [vmem:[%s3592 + $0x630] sm:$0xff]
    %v3792 = vld [vmem:[%s3592 + $0x638] sm:$0xff]
    %v3793 = vld [vmem:[%s3592 + $0x640] sm:$0xff]
    %v3794 = vld [vmem:[%s3592 + $0x648] sm:$0xff]
    %v3795 = vld [vmem:[%s3592 + $0x650] sm:$0xff]
    %v3796 = vld [vmem:[%s3592 + $0x658] sm:$0xff]
    %v3797 = vld [vmem:[%s3592 + $0x660] sm:$0xff]
    %v3798 = vld [vmem:[%s3592 + $0x668] sm:$0xff]
    %v3799 = vld [vmem:[%s3592 + $0x670] sm:$0xff]
    %v3800 = vld [vmem:[%s3592 + $0x678] sm:$0xff]
    %v3801 = vld [vmem:[%s3592 + $0x680] sm:$0xff]
    %v3802 = vld [vmem:[%s3592 + $0x688] sm:$0xff]
    %v3803 = vld [vmem:[%s3592 + $0x690] sm:$0xff]
    %v3804 = vld [vmem:[%s3592 + $0x698] sm:$0xff]
    %v3805 = vld [vmem:[%s3592 + $0x6a0] sm:$0xff]
    %v3806 = vld [vmem:[%s3592 + $0x6a8] sm:$0xff]
    %v3807 = vld [vmem:[%s3592 + $0x6b0] sm:$0xff]
    %v3808 = vld [vmem:[%s3592 + $0x6b8] sm:$0xff]
    %v3809 = vld [vmem:[%s3592 + $0x6c0] sm:$0xff]
    %v3810 = vld [vmem:[%s3592 + $0x6c8] sm:$0xff]
    %v3811 = vld [vmem:[%s3592 + $0x6d0] sm:$0xff]
    %v3812 = vld [vmem:[%s3592 + $0x6d8] sm:$0xff]
    %v3813 = vld [vmem:[%s3592 + $0x6e0] sm:$0xff]
    %v3814 = vld [vmem:[%s3592 + $0x6e8] sm:$0xff]
    %v3815 = vld [vmem:[%s3592 + $0x6f0] sm:$0xff]
    %v3816 = vld [vmem:[%s3592 + $0x6f8] sm:$0xff]
    %v3817 = vld [vmem:[%s3592 + $0x700] sm:$0xff]
    %v3818 = vld [vmem:[%s3592 + $0x708] sm:$0xff]
    %v3819 = vld [vmem:[%s3592 + $0x710] sm:$0xff]
    %v3820 = vld [vmem:[%s3592 + $0x718] sm:$0xff]
    %v3821 = vld [vmem:[%s3592 + $0x720] sm:$0xff]
    %v3822 = vld [vmem:[%s3592 + $0x728] sm:$0xff]
    %v3823 = vld [vmem:[%s3592 + $0x730] sm:$0xff]
    %v3824 = vld [vmem:[%s3592 + $0x738] sm:$0xff]
    %v3825 = vld [vmem:[%s3592 + $0x740] sm:$0xff]
    %v3826 = vld [vmem:[%s3592 + $0x748] sm:$0xff]
    %v3827 = vld [vmem:[%s3592 + $0x750] sm:$0xff]
    %v3828 = vld [vmem:[%s3592 + $0x758] sm:$0xff]
    %v3829 = vld [vmem:[%s3592 + $0x760] sm:$0xff]
    %v3830 = vld [vmem:[%s3592 + $0x768] sm:$0xff]
    %v3831 = vld [vmem:[%s3592 + $0x770] sm:$0xff]
    %v3832 = vld [vmem:[%s3592 + $0x778] sm:$0xff]
    %v3833 = vld [vmem:[%s3592 + $0x780] sm:$0xff]
    %v3834 = vld [vmem:[%s3592 + $0x788] sm:$0xff]
    %v3835 = vld [vmem:[%s3592 + $0x790] sm:$0xff]
    %v3836 = vld [vmem:[%s3592 + $0x798] sm:$0xff]
    %v3837 = vld [vmem:[%s3592 + $0x7a0] sm:$0xff]
    %v3838 = vld [vmem:[%s3592 + $0x7a8] sm:$0xff]
    %v3839 = vld [vmem:[%s3592 + $0x7b0] sm:$0xff]
    %v3840 = vld [vmem:[%s3592 + $0x7b8] sm:$0xff]
    %v3841 = vld [vmem:[%s3592 + $0x7c0] sm:$0xff]
    %v3842 = vld [vmem:[%s3592 + $0x7c8] sm:$0xff]
    %v3843 = vld [vmem:[%s3592 + $0x7d0] sm:$0xff]
    %v3844 = vld [vmem:[%s3592 + $0x7d8] sm:$0xff]
    %v3845 = vld [vmem:[%s3592 + $0x7e0] sm:$0xff]
    %v3846 = vld [vmem:[%s3592 + $0x7e8] sm:$0xff]
    %v3847 = vld [vmem:[%s3592 + $0x7f0] sm:$0xff]
    %v3848 = vld [vmem:[%s3592 + $0x7f8] sm:$0xff]
    %3849 = vmatprep.subr.mxu0 %v3654
    %3850 = vmatpush1.msra.mxu0 %v3653
    %3851 = vmatprep.subr.mxu0 %v3650
    %3852 = vmatpush1.msra.mxu0 %v3649
    %3853 = vmatprep.subr.mxu0 %v3646
    %3854 = vmatpush1.msra.mxu0 %v3645
    %3855 = vmatprep.subr.mxu0 %v3642
    %3856 = vmatpush1.msra.mxu0 %v3641
    %3857 = vmatprep.subr.mxu0 %v3638
    %3858 = vmatpush1.msra.mxu0 %v3637
    %3859 = vmatprep.subr.mxu0 %v3634
    %3860 = vmatpush1.msra.mxu0 %v3633
    %3861 = vmatprep.subr.mxu0 %v3630
    %3862 = vmatpush1.msra.mxu0 %v3629
    %3863 = vmatprep.subr.mxu0 %v3626
    %3864 = vmatpush1.msra.mxu0 %v3625
    %3865 = vmatprep.subr.mxu0 %v3622
    %3866 = vmatpush1.msra.mxu0 %v3621
    %3867 = vmatprep.subr.mxu0 %v3618
    %3868 = vmatpush1.msra.mxu0 %v3617
    %3869 = vmatprep.subr.mxu0 %v3614
    %3870 = vmatpush1.msra.mxu0 %v3613
    %3871 = vmatprep.subr.mxu0 %v3610
    %3872 = vmatpush1.msra.mxu0 %v3609
    %3873 = vmatprep.subr.mxu0 %v3606
    %3874 = vmatpush1.msra.mxu0 %v3605
    %3875 = vmatprep.subr.mxu0 %v3602
    %3876 = vmatpush1.msra.mxu0 %v3601
    %3877 = vmatprep.subr.mxu0 %v3598
    %3878 = vmatpush1.msra.mxu0 %v3597
    %3879 = vmatprep.subr.mxu0 %v3594
    %3880 = vmatpush1.msra.mxu0 %v3593
    %3881 = vmatprep.subr.mxu0 %v3718
    %3882 = vmatpush2.msra.mxu0 %v3717
    %3883 = vmatprep.subr.mxu0 %v3714
    %3884 = vmatpush2.msra.mxu0 %v3713
    %3885 = vmatprep.subr.mxu0 %v3710
    %3886 = vmatpush2.msra.mxu0 %v3709
    %3887 = vmatprep.subr.mxu0 %v3706
    %3888 = vmatpush2.msra.mxu0 %v3705
    %3889 = vmatprep.subr.mxu0 %v3702
    %3890 = vmatpush2.msra.mxu0 %v3701
    %3891 = vmatprep.subr.mxu0 %v3698
    %3892 = vmatpush2.msra.mxu0 %v3697
    %3893 = vmatprep.subr.mxu0 %v3694
    %3894 = vmatpush2.msra.mxu0 %v3693
    %3895 = vmatprep.subr.mxu0 %v3690
    %3896 = vmatpush2.msra.mxu0 %v3689
    %3897 = vmatprep.subr.mxu0 %v3686
    %3898 = vmatpush2.msra.mxu0 %v3685
    %3899 = vmatprep.subr.mxu0 %v3682
    %3900 = vmatpush2.msra.mxu0 %v3681
    %3901 = vmatprep.subr.mxu0 %v3678
    %3902 = vmatpush2.msra.mxu0 %v3677
    %3903 = vmatprep.subr.mxu0 %v3674
    %3904 = vmatpush2.msra.mxu0 %v3673
    %3905 = vmatprep.subr.mxu0 %v3670
    %3906 = vmatpush2.msra.mxu0 %v3669
    %3907 = vmatprep.subr.mxu0 %v3666
    %3908 = vmatpush2.msra.mxu0 %v3665
    %3909 = vmatprep.subr.mxu0 %v3662
    %3910 = vmatpush2.msra.mxu0 %v3661
    %3911 = vmatprep.subr.mxu0 %v3658
    %3912 = vmatpush2.msra.mxu0 %v3657
    %3913 = vmatprep.mubr.f32.mxu0 %v2949
    %3914 = vmatmul.mubr.f32.gmra.mxu0 %v2948
    %v3915 = vpop.f32.mrf.mxu0
    %v3916 = vadd.f32 0.0, %v3915
    %v3917 = vpop.f32.mrf.mxu0
    %v3918 = vadd.f32 0.0, %v3917
    %3919 = vmatprep.mubr.f32.mxu0 %v2953
    %3920 = vmatmul.mubr.f32.gmra.mxu0 %v2952
    %v3921 = vpop.f32.mrf.mxu0
    %v3922 = vadd.f32 0.0, %v3921
    %v3923 = vpop.f32.mrf.mxu0
    %v3924 = vadd.f32 0.0, %v3923
    %3925 = vmatprep.mubr.f32.mxu0 %v2957
    %3926 = vmatmul.mubr.f32.gmra.mxu0 %v2956
    %v3927 = vpop.f32.mrf.mxu0
    %v3928 = vadd.f32 0.0, %v3927
    %v3929 = vpop.f32.mrf.mxu0
    %v3930 = vadd.f32 0.0, %v3929
    %3931 = vmatprep.mubr.f32.mxu0 %v2961
    %3932 = vmatmul.mubr.f32.gmra.mxu0 %v2960
    %v3933 = vpop.f32.mrf.mxu0
    %v3934 = vadd.f32 0.0, %v3933
    %v3935 = vpop.f32.mrf.mxu0
    %v3936 = vadd.f32 0.0, %v3935
    %3937 = vdwg.mxu0
    %3938 = vmatprep.subr.mxu0 %v3782
    %3939 = vmatpush1.msra.mxu0 %v3781
    %3940 = vmatprep.subr.mxu0 %v3778
    %3941 = vmatpush1.msra.mxu0 %v3777
    %3942 = vmatprep.subr.mxu0 %v3774
    %3943 = vmatpush1.msra.mxu0 %v3773
    %3944 = vmatprep.subr.mxu0 %v3770
    %3945 = vmatpush1.msra.mxu0 %v3769
    %3946 = vmatprep.subr.mxu0 %v3766
    %3947 = vmatpush1.msra.mxu0 %v3765
    %3948 = vmatprep.subr.mxu0 %v3762
    %3949 = vmatpush1.msra.mxu0 %v3761
    %3950 = vmatprep.subr.mxu0 %v3758
    %3951 = vmatpush1.msra.mxu0 %v3757
    %3952 = vmatprep.subr.mxu0 %v3754
    %3953 = vmatpush1.msra.mxu0 %v3753
    %3954 = vmatprep.subr.mxu0 %v3750
    %3955 = vmatpush1.msra.mxu0 %v3749
    %3956 = vmatprep.subr.mxu0 %v3746
    %3957 = vmatpush1.msra.mxu0 %v3745
    %3958 = vmatprep.subr.mxu0 %v3742
    %3959 = vmatpush1.msra.mxu0 %v3741
    %3960 = vmatprep.subr.mxu0 %v3738
    %3961 = vmatpush1.msra.mxu0 %v3737
    %3962 = vmatprep.subr.mxu0 %v3734
    %3963 = vmatpush1.msra.mxu0 %v3733
    %3964 = vmatprep.subr.mxu0 %v3730
    %3965 = vmatpush1.msra.mxu0 %v3729
    %3966 = vmatprep.subr.mxu0 %v3726
    %3967 = vmatpush1.msra.mxu0 %v3725
    %3968 = vmatprep.subr.mxu0 %v3722
    %3969 = vmatpush1.msra.mxu0 %v3721
    %3970 = vmatprep.subr.mxu0 %v3846
    %3971 = vmatpush2.msra.mxu0 %v3845
    %3972 = vmatprep.subr.mxu0 %v3842
    %3973 = vmatpush2.msra.mxu0 %v3841
    %3974 = vmatprep.subr.mxu0 %v3838
    %3975 = vmatpush2.msra.mxu0 %v3837
    %3976 = vmatprep.subr.mxu0 %v3834
    %3977 = vmatpush2.msra.mxu0 %v3833
    %3978 = vmatprep.subr.mxu0 %v3830
    %3979 = vmatpush2.msra.mxu0 %v3829
    %3980 = vmatprep.subr.mxu0 %v3826
    %3981 = vmatpush2.msra.mxu0 %v3825
    %3982 = vmatprep.subr.mxu0 %v3822
    %3983 = vmatpush2.msra.mxu0 %v3821
    %3984 = vmatprep.subr.mxu0 %v3818
    %3985 = vmatpush2.msra.mxu0 %v3817
    %3986 = vmatprep.subr.mxu0 %v3814
    %3987 = vmatpush2.msra.mxu0 %v3813
    %3988 = vmatprep.subr.mxu0 %v3810
    %3989 = vmatpush2.msra.mxu0 %v3809
    %3990 = vmatprep.subr.mxu0 %v3806
    %3991 = vmatpush2.msra.mxu0 %v3805
    %3992 = vmatprep.subr.mxu0 %v3802
    %3993 = vmatpush2.msra.mxu0 %v3801
    %3994 = vmatprep.subr.mxu0 %v3798
    %3995 = vmatpush2.msra.mxu0 %v3797
    %3996 = vmatprep.subr.mxu0 %v3794
    %3997 = vmatpush2.msra.mxu0 %v3793
    %3998 = vmatprep.subr.mxu0 %v3790
    %3999 = vmatpush2.msra.mxu0 %v3789
    %4000 = vmatprep.subr.mxu0 %v3786
    %4001 = vmatpush2.msra.mxu0 %v3785
    %4002 = vmatprep.mubr.f32.mxu0 %v2951
    %4003 = vmatmul.mubr.f32.gmra.mxu0 %v2950
    %v4004 = vpop.f32.mrf.mxu0
    %v4005 = vadd.f32 %v3916, %v4004
    %v4006 = vpop.f32.mrf.mxu0
    %v4007 = vadd.f32 %v3918, %v4006
    %4008 = vmatprep.mubr.f32.mxu0 %v2955
    %4009 = vmatmul.mubr.f32.gmra.mxu0 %v2954
    %v4010 = vpop.f32.mrf.mxu0
    %v4011 = vadd.f32 %v3922, %v4010
    %v4012 = vpop.f32.mrf.mxu0
    %v4013 = vadd.f32 %v3924, %v4012
    %4014 = vmatprep.mubr.f32.mxu0 %v2959
    %4015 = vmatmul.mubr.f32.gmra.mxu0 %v2958
    %v4016 = vpop.f32.mrf.mxu0
    %v4017 = vadd.f32 %v3928, %v4016
    %v4018 = vpop.f32.mrf.mxu0
    %v4019 = vadd.f32 %v3930, %v4018
    %4020 = vmatprep.mubr.f32.mxu0 %v2963
    %4021 = vmatmul.mubr.f32.gmra.mxu0 %v2962
    %v4022 = vpop.f32.mrf.mxu0
    %v4023 = vadd.f32 %v3934, %v4022
    %v4024 = vpop.f32.mrf.mxu0
    %v4025 = vadd.f32 %v3936, %v4024
    %4026 = vdwg.mxu0
    %4027 = vmatprep.subr.mxu0 %v3656
    %4028 = vmatpush1.msra.mxu0 %v3655
    %4029 = vmatprep.subr.mxu0 %v3652
    %4030 = vmatpush1.msra.mxu0 %v3651
    %4031 = vmatprep.subr.mxu0 %v3648
    %4032 = vmatpush1.msra.mxu0 %v3647
    %4033 = vmatprep.subr.mxu0 %v3644
    %4034 = vmatpush1.msra.mxu0 %v3643
    %4035 = vmatprep.subr.mxu0 %v3640
    %4036 = vmatpush1.msra.mxu0 %v3639
    %4037 = vmatprep.subr.mxu0 %v3636
    %4038 = vmatpush1.msra.mxu0 %v3635
    %4039 = vmatprep.subr.mxu0 %v3632
    %4040 = vmatpush1.msra.mxu0 %v3631
    %4041 = vmatprep.subr.mxu0 %v3628
    %4042 = vmatpush1.msra.mxu0 %v3627
    %4043 = vmatprep.subr.mxu0 %v3624
    %4044 = vmatpush1.msra.mxu0 %v3623
    %4045 = vmatprep.subr.mxu0 %v3620
    %4046 = vmatpush1.msra.mxu0 %v3619
    %4047 = vmatprep.subr.mxu0 %v3616
    %4048 = vmatpush1.msra.mxu0 %v3615
    %4049 = vmatprep.subr.mxu0 %v3612
    %4050 = vmatpush1.msra.mxu0 %v3611
    %4051 = vmatprep.subr.mxu0 %v3608
    %4052 = vmatpush1.msra.mxu0 %v3607
    %4053 = vmatprep.subr.mxu0 %v3604
    %4054 = vmatpush1.msra.mxu0 %v3603
    %4055 = vmatprep.subr.mxu0 %v3600
    %4056 = vmatpush1.msra.mxu0 %v3599
    %4057 = vmatprep.subr.mxu0 %v3596
    %4058 = vmatpush1.msra.mxu0 %v3595
    %4059 = vmatprep.subr.mxu0 %v3720
    %4060 = vmatpush2.msra.mxu0 %v3719
    %4061 = vmatprep.subr.mxu0 %v3716
    %4062 = vmatpush2.msra.mxu0 %v3715
    %4063 = vmatprep.subr.mxu0 %v3712
    %4064 = vmatpush2.msra.mxu0 %v3711
    %4065 = vmatprep.subr.mxu0 %v3708
    %4066 = vmatpush2.msra.mxu0 %v3707
    %4067 = vmatprep.subr.mxu0 %v3704
    %4068 = vmatpush2.msra.mxu0 %v3703
    %4069 = vmatprep.subr.mxu0 %v3700
    %4070 = vmatpush2.msra.mxu0 %v3699
    %4071 = vmatprep.subr.mxu0 %v3696
    %4072 = vmatpush2.msra.mxu0 %v3695
    %4073 = vmatprep.subr.mxu0 %v3692
    %4074 = vmatpush2.msra.mxu0 %v3691
    %4075 = vmatprep.subr.mxu0 %v3688
    %4076 = vmatpush2.msra.mxu0 %v3687
    %4077 = vmatprep.subr.mxu0 %v3684
    %4078 = vmatpush2.msra.mxu0 %v3683
    %4079 = vmatprep.subr.mxu0 %v3680
    %4080 = vmatpush2.msra.mxu0 %v3679
    %4081 = vmatprep.subr.mxu0 %v3676
    %4082 = vmatpush2.msra.mxu0 %v3675
    %4083 = vmatprep.subr.mxu0 %v3672
    %4084 = vmatpush2.msra.mxu0 %v3671
    %4085 = vmatprep.subr.mxu0 %v3668
    %4086 = vmatpush2.msra.mxu0 %v3667
    %4087 = vmatprep.subr.mxu0 %v3664
    %4088 = vmatpush2.msra.mxu0 %v3663
    %4089 = vmatprep.subr.mxu0 %v3660
    %4090 = vmatpush2.msra.mxu0 %v3659
    %4091 = vmatprep.mubr.f32.mxu0 %v2949
    %4092 = vmatmul.mubr.f32.gmra.mxu0 %v2948
    %v4093 = vpop.f32.mrf.mxu0
    %v4094 = vadd.f32 0.0, %v4093
    %v4095 = vpop.f32.mrf.mxu0
    %v4096 = vadd.f32 0.0, %v4095
    %4097 = vmatprep.mubr.f32.mxu0 %v2953
    %4098 = vmatmul.mubr.f32.gmra.mxu0 %v2952
    %v4099 = vpop.f32.mrf.mxu0
    %v4100 = vadd.f32 0.0, %v4099
    %v4101 = vpop.f32.mrf.mxu0
    %v4102 = vadd.f32 0.0, %v4101
    %4103 = vmatprep.mubr.f32.mxu0 %v2957
    %4104 = vmatmul.mubr.f32.gmra.mxu0 %v2956
    %v4105 = vpop.f32.mrf.mxu0
    %v4106 = vadd.f32 0.0, %v4105
    %v4107 = vpop.f32.mrf.mxu0
    %v4108 = vadd.f32 0.0, %v4107
    %4109 = vmatprep.mubr.f32.mxu0 %v2961
    %4110 = vmatmul.mubr.f32.gmra.mxu0 %v2960
    %v4111 = vpop.f32.mrf.mxu0
    %v4112 = vadd.f32 0.0, %v4111
    %v4113 = vpop.f32.mrf.mxu0
    %v4114 = vadd.f32 0.0, %v4113
    %4115 = vdwg.mxu0
    %4116 = vmatprep.subr.mxu0 %v3784
    %4117 = vmatpush1.msra.mxu0 %v3783
    %4118 = vmatprep.subr.mxu0 %v3780
    %4119 = vmatpush1.msra.mxu0 %v3779
    %4120 = vmatprep.subr.mxu0 %v3776
    %4121 = vmatpush1.msra.mxu0 %v3775
    %4122 = vmatprep.subr.mxu0 %v3772
    %4123 = vmatpush1.msra.mxu0 %v3771
    %4124 = vmatprep.subr.mxu0 %v3768
    %4125 = vmatpush1.msra.mxu0 %v3767
    %4126 = vmatprep.subr.mxu0 %v3764
    %4127 = vmatpush1.msra.mxu0 %v3763
    %4128 = vmatprep.subr.mxu0 %v3760
    %4129 = vmatpush1.msra.mxu0 %v3759
    %4130 = vmatprep.subr.mxu0 %v3756
    %4131 = vmatpush1.msra.mxu0 %v3755
    %4132 = vmatprep.subr.mxu0 %v3752
    %4133 = vmatpush1.msra.mxu0 %v3751
    %4134 = vmatprep.subr.mxu0 %v3748
    %4135 = vmatpush1.msra.mxu0 %v3747
    %4136 = vmatprep.subr.mxu0 %v3744
    %4137 = vmatpush1.msra.mxu0 %v3743
    %4138 = vmatprep.subr.mxu0 %v3740
    %4139 = vmatpush1.msra.mxu0 %v3739
    %4140 = vmatprep.subr.mxu0 %v3736
    %4141 = vmatpush1.msra.mxu0 %v3735
    %4142 = vmatprep.subr.mxu0 %v3732
    %4143 = vmatpush1.msra.mxu0 %v3731
    %4144 = vmatprep.subr.mxu0 %v3728
    %4145 = vmatpush1.msra.mxu0 %v3727
    %4146 = vmatprep.subr.mxu0 %v3724
    %4147 = vmatpush1.msra.mxu0 %v3723
    %4148 = vmatprep.subr.mxu0 %v3848
    %4149 = vmatpush2.msra.mxu0 %v3847
    %4150 = vmatprep.subr.mxu0 %v3844
    %4151 = vmatpush2.msra.mxu0 %v3843
    %4152 = vmatprep.subr.mxu0 %v3840
    %4153 = vmatpush2.msra.mxu0 %v3839
    %4154 = vmatprep.subr.mxu0 %v3836
    %4155 = vmatpush2.msra.mxu0 %v3835
    %4156 = vmatprep.subr.mxu0 %v3832
    %4157 = vmatpush2.msra.mxu0 %v3831
    %4158 = vmatprep.subr.mxu0 %v3828
    %4159 = vmatpush2.msra.mxu0 %v3827
    %4160 = vmatprep.subr.mxu0 %v3824
    %4161 = vmatpush2.msra.mxu0 %v3823
    %4162 = vmatprep.subr.mxu0 %v3820
    %4163 = vmatpush2.msra.mxu0 %v3819
    %4164 = vmatprep.subr.mxu0 %v3816
    %4165 = vmatpush2.msra.mxu0 %v3815
    %4166 = vmatprep.subr.mxu0 %v3812
    %4167 = vmatpush2.msra.mxu0 %v3811
    %4168 = vmatprep.subr.mxu0 %v3808
    %4169 = vmatpush2.msra.mxu0 %v3807
    %4170 = vmatprep.subr.mxu0 %v3804
    %4171 = vmatpush2.msra.mxu0 %v3803
    %4172 = vmatprep.subr.mxu0 %v3800
    %4173 = vmatpush2.msra.mxu0 %v3799
    %4174 = vmatprep.subr.mxu0 %v3796
    %4175 = vmatpush2.msra.mxu0 %v3795
    %4176 = vmatprep.subr.mxu0 %v3792
    %4177 = vmatpush2.msra.mxu0 %v3791
    %4178 = vmatprep.subr.mxu0 %v3788
    %4179 = vmatpush2.msra.mxu0 %v3787
    %4180 = vmatprep.mubr.f32.mxu0 %v2951
    %4181 = vmatmul.mubr.f32.gmra.mxu0 %v2950
    %v4182 = vpop.f32.mrf.mxu0
    %v4183 = vadd.f32 %v4094, %v4182
    %v4184 = vpop.f32.mrf.mxu0
    %v4185 = vadd.f32 %v4096, %v4184
    %4186 = vmatprep.mubr.f32.mxu0 %v2955
    %4187 = vmatmul.mubr.f32.gmra.mxu0 %v2954
    %v4188 = vpop.f32.mrf.mxu0
    %v4189 = vadd.f32 %v4100, %v4188
    %v4190 = vpop.f32.mrf.mxu0
    %v4191 = vadd.f32 %v4102, %v4190
    %4192 = vmatprep.mubr.f32.mxu0 %v2959
    %4193 = vmatmul.mubr.f32.gmra.mxu0 %v2958
    %v4194 = vpop.f32.mrf.mxu0
    %v4195 = vadd.f32 %v4106, %v4194
    %v4196 = vpop.f32.mrf.mxu0
    %v4197 = vadd.f32 %v4108, %v4196
    %4198 = vmatprep.mubr.f32.mxu0 %v2963
    %4199 = vmatmul.mubr.f32.gmra.mxu0 %v2962
    %v4200 = vpop.f32.mrf.mxu0
    %v4201 = vadd.f32 %v4112, %v4200
    %v4202 = vpop.f32.mrf.mxu0
    %v4203 = vadd.f32 %v4114, %v4202
    %4204 = vdwg.mxu0
    %4205 = vst [vmem:[#allocation4 + $0x80] sm:$0xff] %v4005
    %4206 = vst [vmem:[#allocation4 + $0x88] sm:$0xff] %v4007
    %4207 = vst [vmem:[#allocation4 + $0x90] sm:$0xff] %v4183
    %4208 = vst [vmem:[#allocation4 + $0x98] sm:$0xff] %v4185
    %4209 = vst [vmem:[#allocation4 + $0xa0] sm:$0xff] %v4011
    %4210 = vst [vmem:[#allocation4 + $0xa8] sm:$0xff] %v4013
    %4211 = vst [vmem:[#allocation4 + $0xb0] sm:$0xff] %v4189
    %4212 = vst [vmem:[#allocation4 + $0xb8] sm:$0xff] %v4191
    %4213 = vst [vmem:[#allocation4 + $0xc0] sm:$0xff] %v4017
    %4214 = vst [vmem:[#allocation4 + $0xc8] sm:$0xff] %v4019
    %4215 = vst [vmem:[#allocation4 + $0xd0] sm:$0xff] %v4195
    %4216 = vst [vmem:[#allocation4 + $0xd8] sm:$0xff] %v4197
    %4217 = vst [vmem:[#allocation4 + $0xe0] sm:$0xff] %v4023
    %4218 = vst [vmem:[#allocation4 + $0xe8] sm:$0xff] %v4025
    %4219 = vst [vmem:[#allocation4 + $0xf0] sm:$0xff] %v4201
    %4220 = vst [vmem:[#allocation4 + $0xf8] sm:$0xff] %v4203
    %v4221 = vld [vmem:[#allocation18] sm:$0xf]
    %v4222 = vld [vmem:[#allocation19] sm:$0xf]
    %v4223 = vld [vmem:[#allocation22] sm:$0x1]
    %v4224 = vld [vmem:[#allocation4] sm:$0xff]
    %v4225 = vld [vmem:[#allocation4 + $0x8] sm:$0xff]
    %v4226 = vld [vmem:[#allocation4 + $0x10] sm:$0xff]
    %v4227 = vld [vmem:[#allocation4 + $0x18] sm:$0xff]
    %v4228 = vld [vmem:[#allocation4 + $0x20] sm:$0xff]
    %v4229 = vld [vmem:[#allocation4 + $0x28] sm:$0xff]
    %v4230 = vld [vmem:[#allocation4 + $0x30] sm:$0xff]
    %v4231 = vld [vmem:[#allocation4 + $0x38] sm:$0xff]
    %v4232 = vld [vmem:[#allocation4 + $0x40] sm:$0xff]
    %v4233 = vld [vmem:[#allocation4 + $0x48] sm:$0xff]
    %v4234 = vld [vmem:[#allocation4 + $0x50] sm:$0xff]
    %v4235 = vld [vmem:[#allocation4 + $0x58] sm:$0xff]
    %v4236 = vld [vmem:[#allocation4 + $0x60] sm:$0xff]
    %v4237 = vld [vmem:[#allocation4 + $0x68] sm:$0xff]
    %v4238 = vld [vmem:[#allocation4 + $0x70] sm:$0xff]
    %v4239 = vld [vmem:[#allocation4 + $0x78] sm:$0xff]
    %v4240 = vadd.f32 %v4224, %v4228
    %v4241 = vadd.f32 %v4240, %v4232
    %v4242 = vadd.f32 %v4241, %v4236
    %v4243 = vrot.slane %v4242, 4
    %v4244 = vadd.f32 %v4242, %v4243
    %v4245 = vrot.slane %v4244, 2
    %v4246 = vadd.f32 %v4244, %v4245
    %v4247 = vrot.slane %v4246, 1
    %v4248 = vadd.f32 %v4246, %v4247
    %v4249 = vadd.f32 %v4225, %v4229
    %v4250 = vadd.f32 %v4249, %v4233
    %v4251 = vadd.f32 %v4250, %v4237
    %v4252 = vrot.slane %v4251, 4
    %v4253 = vadd.f32 %v4251, %v4252
    %v4254 = vrot.slane %v4253, 2
    %v4255 = vadd.f32 %v4253, %v4254
    %v4256 = vrot.slane %v4255, 1
    %v4257 = vadd.f32 %v4255, %v4256
    %v4258 = vadd.f32 %v4226, %v4230
    %v4259 = vadd.f32 %v4258, %v4234
    %v4260 = vadd.f32 %v4259, %v4238
    %v4261 = vrot.slane %v4260, 4
    %v4262 = vadd.f32 %v4260, %v4261
    %v4263 = vrot.slane %v4262, 2
    %v4264 = vadd.f32 %v4262, %v4263
    %v4265 = vrot.slane %v4264, 1
    %v4266 = vadd.f32 %v4264, %v4265
    %v4267 = vadd.f32 %v4227, %v4231
    %v4268 = vadd.f32 %v4267, %v4235
    %v4269 = vadd.f32 %v4268, %v4239
    %v4270 = vrot.slane %v4269, 4
    %v4271 = vadd.f32 %v4269, %v4270
    %v4272 = vrot.slane %v4271, 2
    %v4273 = vadd.f32 %v4271, %v4272
    %v4274 = vrot.slane %v4273, 1
    %v4275 = vadd.f32 %v4273, %v4274
    %v4276 = vadd.f32 %v4248, 0.0
    %v4277 = vadd.f32 %v4257, 0.0
    %v4278 = vadd.f32 %v4266, 0.0
    %v4279 = vadd.f32 %v4275, 0.0
    %v4280 = vmul.f32 %v4224, %v4224
    %v4281 = vmul.f32 %v4225, %v4225
    %v4282 = vmul.f32 %v4226, %v4226
    %v4283 = vmul.f32 %v4227, %v4227
    %v4284 = vmul.f32 %v4228, %v4228
    %v4285 = vmul.f32 %v4229, %v4229
    %v4286 = vmul.f32 %v4230, %v4230
    %v4287 = vmul.f32 %v4231, %v4231
    %v4288 = vmul.f32 %v4232, %v4232
    %v4289 = vmul.f32 %v4233, %v4233
    %v4290 = vmul.f32 %v4234, %v4234
    %v4291 = vmul.f32 %v4235, %v4235
    %v4292 = vmul.f32 %v4236, %v4236
    %v4293 = vmul.f32 %v4237, %v4237
    %v4294 = vmul.f32 %v4238, %v4238
    %v4295 = vmul.f32 %v4239, %v4239
    %v4296 = vadd.f32 %v4280, %v4284
    %v4297 = vadd.f32 %v4296, %v4288
    %v4298 = vadd.f32 %v4297, %v4292
    %v4299 = vrot.slane %v4298, 4
    %v4300 = vadd.f32 %v4298, %v4299
    %v4301 = vrot.slane %v4300, 2
    %v4302 = vadd.f32 %v4300, %v4301
    %v4303 = vrot.slane %v4302, 1
    %v4304 = vadd.f32 %v4302, %v4303
    %v4305 = vadd.f32 %v4281, %v4285
    %v4306 = vadd.f32 %v4305, %v4289
    %v4307 = vadd.f32 %v4306, %v4293
    %v4308 = vrot.slane %v4307, 4
    %v4309 = vadd.f32 %v4307, %v4308
    %v4310 = vrot.slane %v4309, 2
    %v4311 = vadd.f32 %v4309, %v4310
    %v4312 = vrot.slane %v4311, 1
    %v4313 = vadd.f32 %v4311, %v4312
    %v4314 = vadd.f32 %v4282, %v4286
    %v4315 = vadd.f32 %v4314, %v4290
    %v4316 = vadd.f32 %v4315, %v4294
    %v4317 = vrot.slane %v4316, 4
    %v4318 = vadd.f32 %v4316, %v4317
    %v4319 = vrot.slane %v4318, 2
    %v4320 = vadd.f32 %v4318, %v4319
    %v4321 = vrot.slane %v4320, 1
    %v4322 = vadd.f32 %v4320, %v4321
    %v4323 = vadd.f32 %v4283, %v4287
    %v4324 = vadd.f32 %v4323, %v4291
    %v4325 = vadd.f32 %v4324, %v4295
    %v4326 = vrot.slane %v4325, 4
    %v4327 = vadd.f32 %v4325, %v4326
    %v4328 = vrot.slane %v4327, 2
    %v4329 = vadd.f32 %v4327, %v4328
    %v4330 = vrot.slane %v4329, 1
    %v4331 = vadd.f32 %v4329, %v4330
    %v4332 = vadd.f32 %v4304, 0.0
    %v4333 = vadd.f32 %v4313, 0.0
    %v4334 = vadd.f32 %v4322, 0.0
    %v4335 = vadd.f32 %v4331, 0.0
    %v4336 = vld [vmem:[#allocation4 + $0x80] sm:$0xff]
    %v4337 = vld [vmem:[#allocation4 + $0x88] sm:$0xff]
    %v4338 = vld [vmem:[#allocation4 + $0x90] sm:$0xff]
    %v4339 = vld [vmem:[#allocation4 + $0x98] sm:$0xff]
    %v4340 = vld [vmem:[#allocation4 + $0xa0] sm:$0xff]
    %v4341 = vld [vmem:[#allocation4 + $0xa8] sm:$0xff]
    %v4342 = vld [vmem:[#allocation4 + $0xb0] sm:$0xff]
    %v4343 = vld [vmem:[#allocation4 + $0xb8] sm:$0xff]
    %v4344 = vld [vmem:[#allocation4 + $0xc0] sm:$0xff]
    %v4345 = vld [vmem:[#allocation4 + $0xc8] sm:$0xff]
    %v4346 = vld [vmem:[#allocation4 + $0xd0] sm:$0xff]
    %v4347 = vld [vmem:[#allocation4 + $0xd8] sm:$0xff]
    %v4348 = vld [vmem:[#allocation4 + $0xe0] sm:$0xff]
    %v4349 = vld [vmem:[#allocation4 + $0xe8] sm:$0xff]
    %v4350 = vld [vmem:[#allocation4 + $0xf0] sm:$0xff]
    %v4351 = vld [vmem:[#allocation4 + $0xf8] sm:$0xff]
    %v4352 = vadd.f32 %v4336, %v4340
    %v4353 = vadd.f32 %v4352, %v4344
    %v4354 = vadd.f32 %v4353, %v4348
    %v4355 = vrot.slane %v4354, 4
    %v4356 = vadd.f32 %v4354, %v4355
    %v4357 = vrot.slane %v4356, 2
    %v4358 = vadd.f32 %v4356, %v4357
    %v4359 = vrot.slane %v4358, 1
    %v4360 = vadd.f32 %v4358, %v4359
    %v4361 = vadd.f32 %v4337, %v4341
    %v4362 = vadd.f32 %v4361, %v4345
    %v4363 = vadd.f32 %v4362, %v4349
    %v4364 = vrot.slane %v4363, 4
    %v4365 = vadd.f32 %v4363, %v4364
    %v4366 = vrot.slane %v4365, 2
    %v4367 = vadd.f32 %v4365, %v4366
    %v4368 = vrot.slane %v4367, 1
    %v4369 = vadd.f32 %v4367, %v4368
    %v4370 = vadd.f32 %v4338, %v4342
    %v4371 = vadd.f32 %v4370, %v4346
    %v4372 = vadd.f32 %v4371, %v4350
    %v4373 = vrot.slane %v4372, 4
    %v4374 = vadd.f32 %v4372, %v4373
    %v4375 = vrot.slane %v4374, 2
    %v4376 = vadd.f32 %v4374, %v4375
    %v4377 = vrot.slane %v4376, 1
    %v4378 = vadd.f32 %v4376, %v4377
    %v4379 = vadd.f32 %v4339, %v4343
    %v4380 = vadd.f32 %v4379, %v4347
    %v4381 = vadd.f32 %v4380, %v4351
    %v4382 = vrot.slane %v4381, 4
    %v4383 = vadd.f32 %v4381, %v4382
    %v4384 = vrot.slane %v4383, 2
    %v4385 = vadd.f32 %v4383, %v4384
    %v4386 = vrot.slane %v4385, 1
    %v4387 = vadd.f32 %v4385, %v4386
    %v4388 = vadd.f32 %v4276, %v4360
    %v4389 = vadd.f32 %v4277, %v4369
    %v4390 = vadd.f32 %v4278, %v4378
    %v4391 = vadd.f32 %v4279, %v4387
    %v4392 = vmul.f32 %v4336, %v4336
    %v4393 = vmul.f32 %v4337, %v4337
    %v4394 = vmul.f32 %v4338, %v4338
    %v4395 = vmul.f32 %v4339, %v4339
    %v4396 = vmul.f32 %v4340, %v4340
    %v4397 = vmul.f32 %v4341, %v4341
    %v4398 = vmul.f32 %v4342, %v4342
    %v4399 = vmul.f32 %v4343, %v4343
    %v4400 = vmul.f32 %v4344, %v4344
    %v4401 = vmul.f32 %v4345, %v4345
    %v4402 = vmul.f32 %v4346, %v4346
    %v4403 = vmul.f32 %v4347, %v4347
    %v4404 = vmul.f32 %v4348, %v4348
    %v4405 = vmul.f32 %v4349, %v4349
    %v4406 = vmul.f32 %v4350, %v4350
    %v4407 = vmul.f32 %v4351, %v4351
    %v4408 = vadd.f32 %v4392, %v4396
    %v4409 = vadd.f32 %v4408, %v4400
    %v4410 = vadd.f32 %v4409, %v4404
    %v4411 = vrot.slane %v4410, 4
    %v4412 = vadd.f32 %v4410, %v4411
    %v4413 = vrot.slane %v4412, 2
    %v4414 = vadd.f32 %v4412, %v4413
    %v4415 = vrot.slane %v4414, 1
    %v4416 = vadd.f32 %v4414, %v4415
    %v4417 = vadd.f32 %v4393, %v4397
    %v4418 = vadd.f32 %v4417, %v4401
    %v4419 = vadd.f32 %v4418, %v4405
    %v4420 = vrot.slane %v4419, 4
    %v4421 = vadd.f32 %v4419, %v4420
    %v4422 = vrot.slane %v4421, 2
    %v4423 = vadd.f32 %v4421, %v4422
    %v4424 = vrot.slane %v4423, 1
    %v4425 = vadd.f32 %v4423, %v4424
    %v4426 = vadd.f32 %v4394, %v4398
    %v4427 = vadd.f32 %v4426, %v4402
    %v4428 = vadd.f32 %v4427, %v4406
    %v4429 = vrot.slane %v4428, 4
    %v4430 = vadd.f32 %v4428, %v4429
    %v4431 = vrot.slane %v4430, 2
    %v4432 = vadd.f32 %v4430, %v4431
    %v4433 = vrot.slane %v4432, 1
    %v4434 = vadd.f32 %v4432, %v4433
    %v4435 = vadd.f32 %v4395, %v4399
    %v4436 = vadd.f32 %v4435, %v4403
    %v4437 = vadd.f32 %v4436, %v4407
    %v4438 = vrot.slane %v4437, 4
    %v4439 = vadd.f32 %v4437, %v4438
    %v4440 = vrot.slane %v4439, 2
    %v4441 = vadd.f32 %v4439, %v4440
    %v4442 = vrot.slane %v4441, 1
    %v4443 = vadd.f32 %v4441, %v4442
    %v4444 = vadd.f32 %v4332, %v4416
    %v4445 = vadd.f32 %v4333, %v4425
    %v4446 = vadd.f32 %v4334, %v4434
    %v4447 = vadd.f32 %v4335, %v4443
    %v4448 = vadd.f32 %v4388, %v4390
    %v4449 = vadd.f32 %v4389, %v4391
    %v4450 = vadd.f32 %v4448, %v4449
    %4451 = vrot.lane.b32.xlu0 %v4450, 64
    %v4452 = vpop.permute.xlu0 %4451
    %v4453 = vadd.f32 %v4450, %v4452
    %4454 = vrot.lane.b32.xlu0 %v4453, 32
    %v4455 = vpop.permute.xlu0 %4454
    %v4456 = vadd.f32 %v4453, %v4455
    %v4457 = vadd.f32 %v4444, %v4446
    %v4458 = vadd.f32 %v4445, %v4447
    %v4459 = vadd.f32 %v4457, %v4458
    %4460 = vrot.lane.b32.xlu0 %v4459, 64
    %v4461 = vpop.permute.xlu0 %4460
    %v4462 = vadd.f32 %v4459, %v4461
    %4463 = vrot.lane.b32.xlu0 %v4462, 32
    %v4464 = vpop.permute.xlu0 %4463
    %v4465 = vadd.f32 %v4462, %v4464
    %v4466 = vrcp.pop 1024.0
    %v4467 = vmul.f32 %v4456, %v4466
    %v4468 = vmul.f32 %v4465, %v4466
    %v4469 = vmul.f32 %v4467, %v4467
    %v4470 = vsub.f32 %v4468, %v4469
    %v4471 = vmax.f32 %v4470, 0.0
    %v4472 = vadd.f32 %v4471, 1e-05
    %v4473 = vrsqrt.pop %v4472
    %v4475 = vlaneseq
    %v4476 = vshrl.u32 %v4475, 7
    %v4477 = vsub.s32 0, %v4476
    %v4478 = vrot.slane %v4221, %v4477
    %v4479 = vlaneseq
    %v4480 = vshrl.u32 %v4479, 7
    %v4481 = vsub.s32 1, %v4480
    %v4482 = vrot.slane %v4221, %v4481
    %v4483 = vlaneseq
    %v4484 = vshrl.u32 %v4483, 7
    %v4485 = vsub.s32 2, %v4484
    %v4486 = vrot.slane %v4221, %v4485
    %v4487 = vlaneseq
    %v4488 = vshrl.u32 %v4487, 7
    %v4489 = vsub.s32 3, %v4488
    %v4490 = vrot.slane %v4221, %v4489
    %v4495 = vmul.f32 %v4473, %v4478
    %v4496 = vmul.f32 %v4473, %v4482
    %v4497 = vmul.f32 %v4473, %v4486
    %v4498 = vmul.f32 %v4473, %v4490
    %v4499 = vmul.f32 %v4467, %v4495
    %v4500 = vmul.f32 %v4467, %v4496
    %v4501 = vmul.f32 %v4467, %v4497
    %v4502 = vmul.f32 %v4467, %v4498
    %v4507 = vcombine.low %v4499, %v4500
    %v4508 = vcombine.low %v4501, %v4502
    %v4510 = vunpack.c.l.s4 1966171168
    %v4511 = vunpack.c.0.s8 %v4510
    %v4512 = vlaneseq
    %v4513 = vshrl.u32 %v4512, 7
    %v4514 = vsub.s32 %v4511, %v4513
    %v4515 = vrot.slane %v4507, %v4514
    %v4517 = vunpack.c.l.s4 1966171168
    %v4518 = vunpack.c.0.s8 %v4517
    %v4519 = vlaneseq
    %v4520 = vshrl.u32 %v4519, 7
    %v4521 = vsub.s32 %v4518, %v4520
    %v4522 = vrot.slane %v4508, %v4521
    %v4523 = vcombine.low %v4515, %v4522
    %v4525 = vunpack.c.l.s4 1966171168
    %v4526 = vunpack.c.0.s8 %v4525
    %v4527 = vlaneseq
    %v4528 = vshrl.u32 %v4527, 7
    %v4529 = vsub.s32 %v4526, %v4528
    %v4530 = vrot.slane %v4523, %v4529
    %v4532 = vsub.f32 %v4222, %v4530
    %v4533 = vlaneseq
    %v4534 = vshrl.u32 %v4533, 7
    %v4535 = vsub.s32 0, %v4534
    %v4536 = vrot.slane %v4495, %v4535
    %v4537 = vlaneseq
    %v4538 = vshrl.u32 %v4537, 7
    %v4539 = vsub.s32 0, %v4538
    %v4540 = vrot.slane %v4496, %v4539
    %v4541 = vlaneseq
    %v4542 = vshrl.u32 %v4541, 7
    %v4543 = vsub.s32 0, %v4542
    %v4544 = vrot.slane %v4497, %v4543
    %v4545 = vlaneseq
    %v4546 = vshrl.u32 %v4545, 7
    %v4547 = vsub.s32 0, %v4546
    %v4548 = vrot.slane %v4498, %v4547
    %v4549 = vmul.f32 %v4224, %v4536
    %v4550 = vmul.f32 %v4225, %v4540
    %v4551 = vmul.f32 %v4226, %v4544
    %v4552 = vmul.f32 %v4227, %v4548
    %v4553 = vmul.f32 %v4228, %v4536
    %v4554 = vmul.f32 %v4229, %v4540
    %v4555 = vmul.f32 %v4230, %v4544
    %v4556 = vmul.f32 %v4231, %v4548
    %v4557 = vmul.f32 %v4232, %v4536
    %v4558 = vmul.f32 %v4233, %v4540
    %v4559 = vmul.f32 %v4234, %v4544
    %v4560 = vmul.f32 %v4235, %v4548
    %v4561 = vmul.f32 %v4236, %v4536
    %v4562 = vmul.f32 %v4237, %v4540
    %v4563 = vmul.f32 %v4238, %v4544
    %v4564 = vmul.f32 %v4239, %v4548
    %v4566 = vlaneseq
    %v4567 = vshrl.u32 %v4566, 7
    %v4568 = vsub.s32 0, %v4567
    %v4569 = vrot.slane %v4532, %v4568
    %v4570 = vlaneseq
    %v4571 = vshrl.u32 %v4570, 7
    %v4572 = vsub.s32 1, %v4571
    %v4573 = vrot.slane %v4532, %v4572
    %v4574 = vlaneseq
    %v4575 = vshrl.u32 %v4574, 7
    %v4576 = vsub.s32 2, %v4575
    %v4577 = vrot.slane %v4532, %v4576
    %v4578 = vlaneseq
    %v4579 = vshrl.u32 %v4578, 7
    %v4580 = vsub.s32 3, %v4579
    %v4581 = vrot.slane %v4532, %v4580
    %v4586 = vadd.f32 %v4549, %v4569
    %v4587 = vadd.f32 %v4550, %v4573
    %v4588 = vadd.f32 %v4551, %v4577
    %v4589 = vadd.f32 %v4552, %v4581
    %v4590 = vadd.f32 %v4553, %v4569
    %v4591 = vadd.f32 %v4554, %v4573
    %v4592 = vadd.f32 %v4555, %v4577
    %v4593 = vadd.f32 %v4556, %v4581
    %v4594 = vadd.f32 %v4557, %v4569
    %v4595 = vadd.f32 %v4558, %v4573
    %v4596 = vadd.f32 %v4559, %v4577
    %v4597 = vadd.f32 %v4560, %v4581
    %v4598 = vadd.f32 %v4561, %v4569
    %v4599 = vadd.f32 %v4562, %v4573
    %v4600 = vadd.f32 %v4563, %v4577
    %v4601 = vadd.f32 %v4564, %v4581
    %vm4602 = vcmp.ge.f32.partialorder %v4586, 0.0
    %vm4603 = vcmp.ge.f32.partialorder %v4587, 0.0
    %vm4604 = vcmp.ge.f32.partialorder %v4588, 0.0
    %vm4605 = vcmp.ge.f32.partialorder %v4589, 0.0
    %vm4606 = vcmp.ge.f32.partialorder %v4590, 0.0
    %vm4607 = vcmp.ge.f32.partialorder %v4591, 0.0
    %vm4608 = vcmp.ge.f32.partialorder %v4592, 0.0
    %vm4609 = vcmp.ge.f32.partialorder %v4593, 0.0
    %vm4610 = vcmp.ge.f32.partialorder %v4594, 0.0
    %vm4611 = vcmp.ge.f32.partialorder %v4595, 0.0
    %vm4612 = vcmp.ge.f32.partialorder %v4596, 0.0
    %vm4613 = vcmp.ge.f32.partialorder %v4597, 0.0
    %vm4614 = vcmp.ge.f32.partialorder %v4598, 0.0
    %vm4615 = vcmp.ge.f32.partialorder %v4599, 0.0
    %vm4616 = vcmp.ge.f32.partialorder %v4600, 0.0
    %vm4617 = vcmp.ge.f32.partialorder %v4601, 0.0
    %v4618 = vmul.f32 %v4586, 0.2
    %v4619 = vmul.f32 %v4587, 0.2
    %v4620 = vmul.f32 %v4588, 0.2
    %v4621 = vmul.f32 %v4589, 0.2
    %v4622 = vmul.f32 %v4590, 0.2
    %v4623 = vmul.f32 %v4591, 0.2
    %v4624 = vmul.f32 %v4592, 0.2
    %v4625 = vmul.f32 %v4593, 0.2
    %v4626 = vmul.f32 %v4594, 0.2
    %v4627 = vmul.f32 %v4595, 0.2
    %v4628 = vmul.f32 %v4596, 0.2
    %v4629 = vmul.f32 %v4597, 0.2
    %v4630 = vmul.f32 %v4598, 0.2
    %v4631 = vmul.f32 %v4599, 0.2
    %v4632 = vmul.f32 %v4600, 0.2
    %v4633 = vmul.f32 %v4601, 0.2
    %v4634 = vsel %vm4602, %v4586, %v4618
    %v4635 = vsel %vm4603, %v4587, %v4619
    %v4636 = vsel %vm4604, %v4588, %v4620
    %v4637 = vsel %vm4605, %v4589, %v4621
    %v4638 = vsel %vm4606, %v4590, %v4622
    %v4639 = vsel %vm4607, %v4591, %v4623
    %v4640 = vsel %vm4608, %v4592, %v4624
    %v4641 = vsel %vm4609, %v4593, %v4625
    %v4642 = vsel %vm4610, %v4594, %v4626
    %v4643 = vsel %vm4611, %v4595, %v4627
    %v4644 = vsel %vm4612, %v4596, %v4628
    %v4645 = vsel %vm4613, %v4597, %v4629
    %v4646 = vsel %vm4614, %v4598, %v4630
    %v4647 = vsel %vm4615, %v4599, %v4631
    %v4648 = vsel %vm4616, %v4600, %v4632
    %v4649 = vsel %vm4617, %v4601, %v4633
    %v4650 = vld [vmem:[#allocation21] sm:$0xff]
    %v4651 = vld [vmem:[#allocation21 + $0x8] sm:$0xff]
    %v4652 = vld [vmem:[#allocation21 + $0x10] sm:$0xff]
    %v4653 = vld [vmem:[#allocation21 + $0x18] sm:$0xff]
    %v4654 = vld [vmem:[#allocation21 + $0x20] sm:$0xff]
    %v4655 = vld [vmem:[#allocation21 + $0x28] sm:$0xff]
    %v4656 = vld [vmem:[#allocation21 + $0x30] sm:$0xff]
    %v4657 = vld [vmem:[#allocation21 + $0x38] sm:$0xff]
    %v4658 = vld [vmem:[#allocation21 + $0x40] sm:$0xff]
    %v4659 = vld [vmem:[#allocation21 + $0x48] sm:$0xff]
    %v4660 = vld [vmem:[#allocation21 + $0x50] sm:$0xff]
    %v4661 = vld [vmem:[#allocation21 + $0x58] sm:$0xff]
    %v4662 = vld [vmem:[#allocation21 + $0x60] sm:$0xff]
    %v4663 = vld [vmem:[#allocation21 + $0x68] sm:$0xff]
    %v4664 = vld [vmem:[#allocation21 + $0x70] sm:$0xff]
    %v4665 = vld [vmem:[#allocation21 + $0x78] sm:$0xff]
    %v4666 = vld [vmem:[#allocation21 + $0x80] sm:$0xff]
    %v4667 = vld [vmem:[#allocation21 + $0x88] sm:$0xff]
    %v4668 = vld [vmem:[#allocation21 + $0x90] sm:$0xff]
    %v4669 = vld [vmem:[#allocation21 + $0x98] sm:$0xff]
    %v4670 = vld [vmem:[#allocation21 + $0xa0] sm:$0xff]
    %v4671 = vld [vmem:[#allocation21 + $0xa8] sm:$0xff]
    %v4672 = vld [vmem:[#allocation21 + $0xb0] sm:$0xff]
    %v4673 = vld [vmem:[#allocation21 + $0xb8] sm:$0xff]
    %v4674 = vld [vmem:[#allocation21 + $0xc0] sm:$0xff]
    %v4675 = vld [vmem:[#allocation21 + $0xc8] sm:$0xff]
    %v4676 = vld [vmem:[#allocation21 + $0xd0] sm:$0xff]
    %v4677 = vld [vmem:[#allocation21 + $0xd8] sm:$0xff]
    %v4678 = vld [vmem:[#allocation21 + $0xe0] sm:$0xff]
    %v4679 = vld [vmem:[#allocation21 + $0xe8] sm:$0xff]
    %v4680 = vld [vmem:[#allocation21 + $0xf0] sm:$0xff]
    %v4681 = vld [vmem:[#allocation21 + $0xf8] sm:$0xff]
    %v4682 = vld [vmem:[#allocation21 + $0x100] sm:$0xff]
    %v4683 = vld [vmem:[#allocation21 + $0x108] sm:$0xff]
    %v4684 = vld [vmem:[#allocation21 + $0x110] sm:$0xff]
    %v4685 = vld [vmem:[#allocation21 + $0x118] sm:$0xff]
    %v4686 = vld [vmem:[#allocation21 + $0x120] sm:$0xff]
    %v4687 = vld [vmem:[#allocation21 + $0x128] sm:$0xff]
    %v4688 = vld [vmem:[#allocation21 + $0x130] sm:$0xff]
    %v4689 = vld [vmem:[#allocation21 + $0x138] sm:$0xff]
    %v4690 = vld [vmem:[#allocation21 + $0x140] sm:$0xff]
    %v4691 = vld [vmem:[#allocation21 + $0x148] sm:$0xff]
    %v4692 = vld [vmem:[#allocation21 + $0x150] sm:$0xff]
    %v4693 = vld [vmem:[#allocation21 + $0x158] sm:$0xff]
    %v4694 = vld [vmem:[#allocation21 + $0x160] sm:$0xff]
    %v4695 = vld [vmem:[#allocation21 + $0x168] sm:$0xff]
    %v4696 = vld [vmem:[#allocation21 + $0x170] sm:$0xff]
    %v4697 = vld [vmem:[#allocation21 + $0x178] sm:$0xff]
    %v4698 = vld [vmem:[#allocation21 + $0x180] sm:$0xff]
    %v4699 = vld [vmem:[#allocation21 + $0x188] sm:$0xff]
    %v4700 = vld [vmem:[#allocation21 + $0x190] sm:$0xff]
    %v4701 = vld [vmem:[#allocation21 + $0x198] sm:$0xff]
    %v4702 = vld [vmem:[#allocation21 + $0x1a0] sm:$0xff]
    %v4703 = vld [vmem:[#allocation21 + $0x1a8] sm:$0xff]
    %v4704 = vld [vmem:[#allocation21 + $0x1b0] sm:$0xff]
    %v4705 = vld [vmem:[#allocation21 + $0x1b8] sm:$0xff]
    %v4706 = vld [vmem:[#allocation21 + $0x1c0] sm:$0xff]
    %v4707 = vld [vmem:[#allocation21 + $0x1c8] sm:$0xff]
    %v4708 = vld [vmem:[#allocation21 + $0x1d0] sm:$0xff]
    %v4709 = vld [vmem:[#allocation21 + $0x1d8] sm:$0xff]
    %v4710 = vld [vmem:[#allocation21 + $0x1e0] sm:$0xff]
    %v4711 = vld [vmem:[#allocation21 + $0x1e8] sm:$0xff]
    %v4712 = vld [vmem:[#allocation21 + $0x1f0] sm:$0xff]
    %v4713 = vld [vmem:[#allocation21 + $0x1f8] sm:$0xff]
    %v4715 = vlaneseq
    %v4716 = vshrl.u32 %v4715, 7
    %v4717 = vsub.s32 0, %v4716
    %v4718 = vrot.slane %v4223, %v4717
    %4720 = vmatprep.subr.mxu0 0.0
    %4721 = vmatpush1.msra.mxu0 %v4665
    %4722 = vmatprep.subr.mxu0 0.0
    %4723 = vmatpush1.msra.mxu0 %v4664
    %4724 = vmatprep.subr.mxu0 0.0
    %4725 = vmatpush1.msra.mxu0 %v4663
    %4726 = vmatprep.subr.mxu0 0.0
    %4727 = vmatpush1.msra.mxu0 %v4662
    %4728 = vmatprep.subr.mxu0 0.0
    %4729 = vmatpush1.msra.mxu0 %v4661
    %4730 = vmatprep.subr.mxu0 0.0
    %4731 = vmatpush1.msra.mxu0 %v4660
    %4732 = vmatprep.subr.mxu0 0.0
    %4733 = vmatpush1.msra.mxu0 %v4659
    %4734 = vmatprep.subr.mxu0 0.0
    %4735 = vmatpush1.msra.mxu0 %v4658
    %4736 = vmatprep.subr.mxu0 0.0
    %4737 = vmatpush1.msra.mxu0 %v4657
    %4738 = vmatprep.subr.mxu0 0.0
    %4739 = vmatpush1.msra.mxu0 %v4656
    %4740 = vmatprep.subr.mxu0 0.0
    %4741 = vmatpush1.msra.mxu0 %v4655
    %4742 = vmatprep.subr.mxu0 0.0
    %4743 = vmatpush1.msra.mxu0 %v4654
    %4744 = vmatprep.subr.mxu0 0.0
    %4745 = vmatpush1.msra.mxu0 %v4653
    %4746 = vmatprep.subr.mxu0 0.0
    %4747 = vmatpush1.msra.mxu0 %v4652
    %4748 = vmatprep.subr.mxu0 0.0
    %4749 = vmatpush1.msra.mxu0 %v4651
    %4750 = vmatprep.subr.mxu0 0.0
    %4751 = vmatpush1.msra.mxu0 %v4650
    %4752 = vmatprep.subr.mxu0 0.0
    %4753 = vmatpush2.msra.mxu0 %v4681
    %4754 = vmatprep.subr.mxu0 0.0
    %4755 = vmatpush2.msra.mxu0 %v4680
    %4756 = vmatprep.subr.mxu0 0.0
    %4757 = vmatpush2.msra.mxu0 %v4679
    %4758 = vmatprep.subr.mxu0 0.0
    %4759 = vmatpush2.msra.mxu0 %v4678
    %4760 = vmatprep.subr.mxu0 0.0
    %4761 = vmatpush2.msra.mxu0 %v4677
    %4762 = vmatprep.subr.mxu0 0.0
    %4763 = vmatpush2.msra.mxu0 %v4676
    %4764 = vmatprep.subr.mxu0 0.0
    %4765 = vmatpush2.msra.mxu0 %v4675
    %4766 = vmatprep.subr.mxu0 0.0
    %4767 = vmatpush2.msra.mxu0 %v4674
    %4768 = vmatprep.subr.mxu0 0.0
    %4769 = vmatpush2.msra.mxu0 %v4673
    %4770 = vmatprep.subr.mxu0 0.0
    %4771 = vmatpush2.msra.mxu0 %v4672
    %4772 = vmatprep.subr.mxu0 0.0
    %4773 = vmatpush2.msra.mxu0 %v4671
    %4774 = vmatprep.subr.mxu0 0.0
    %4775 = vmatpush2.msra.mxu0 %v4670
    %4776 = vmatprep.subr.mxu0 0.0
    %4777 = vmatpush2.msra.mxu0 %v4669
    %4778 = vmatprep.subr.mxu0 0.0
    %4779 = vmatpush2.msra.mxu0 %v4668
    %4780 = vmatprep.subr.mxu0 0.0
    %4781 = vmatpush2.msra.mxu0 %v4667
    %4782 = vmatprep.subr.mxu0 0.0
    %4783 = vmatpush2.msra.mxu0 %v4666
    %4784 = vmatprep.mubr.f32.mxu0 %v4635
    %4785 = vmatmul.mubr.f32.gmra.mxu0 %v4634
    %v4786 = vpop.f32.mrf.mxu0
    %v4787 = vadd.f32 %v4718, %v4786
    %v4788 = vpop.f32.mrf.mxu0
    %4789 = vmatprep.mubr.f32.mxu0 %v4639
    %4790 = vmatmul.mubr.f32.gmra.mxu0 %v4638
    %v4791 = vpop.f32.mrf.mxu0
    %v4792 = vadd.f32 %v4718, %v4791
    %v4793 = vpop.f32.mrf.mxu0
    %4794 = vmatprep.mubr.f32.mxu0 %v4643
    %4795 = vmatmul.mubr.f32.gmra.mxu0 %v4642
    %v4796 = vpop.f32.mrf.mxu0
    %v4797 = vadd.f32 %v4718, %v4796
    %v4798 = vpop.f32.mrf.mxu0
    %4799 = vmatprep.mubr.f32.mxu0 %v4647
    %4800 = vmatmul.mubr.f32.gmra.mxu0 %v4646
    %v4801 = vpop.f32.mrf.mxu0
    %v4802 = vadd.f32 %v4718, %v4801
    %v4803 = vpop.f32.mrf.mxu0
    %4804 = vdwg.mxu0
    %4805 = vmatprep.subr.mxu0 0.0
    %4806 = vmatpush1.msra.mxu0 %v4697
    %4807 = vmatprep.subr.mxu0 0.0
    %4808 = vmatpush1.msra.mxu0 %v4696
    %4809 = vmatprep.subr.mxu0 0.0
    %4810 = vmatpush1.msra.mxu0 %v4695
    %4811 = vmatprep.subr.mxu0 0.0
    %4812 = vmatpush1.msra.mxu0 %v4694
    %4813 = vmatprep.subr.mxu0 0.0
    %4814 = vmatpush1.msra.mxu0 %v4693
    %4815 = vmatprep.subr.mxu0 0.0
    %4816 = vmatpush1.msra.mxu0 %v4692
    %4817 = vmatprep.subr.mxu0 0.0
    %4818 = vmatpush1.msra.mxu0 %v4691
    %4819 = vmatprep.subr.mxu0 0.0
    %4820 = vmatpush1.msra.mxu0 %v4690
    %4821 = vmatprep.subr.mxu0 0.0
    %4822 = vmatpush1.msra.mxu0 %v4689
    %4823 = vmatprep.subr.mxu0 0.0
    %4824 = vmatpush1.msra.mxu0 %v4688
    %4825 = vmatprep.subr.mxu0 0.0
    %4826 = vmatpush1.msra.mxu0 %v4687
    %4827 = vmatprep.subr.mxu0 0.0
    %4828 = vmatpush1.msra.mxu0 %v4686
    %4829 = vmatprep.subr.mxu0 0.0
    %4830 = vmatpush1.msra.mxu0 %v4685
    %4831 = vmatprep.subr.mxu0 0.0
    %4832 = vmatpush1.msra.mxu0 %v4684
    %4833 = vmatprep.subr.mxu0 0.0
    %4834 = vmatpush1.msra.mxu0 %v4683
    %4835 = vmatprep.subr.mxu0 0.0
    %4836 = vmatpush1.msra.mxu0 %v4682
    %4837 = vmatprep.subr.mxu0 0.0
    %4838 = vmatpush2.msra.mxu0 %v4713
    %4839 = vmatprep.subr.mxu0 0.0
    %4840 = vmatpush2.msra.mxu0 %v4712
    %4841 = vmatprep.subr.mxu0 0.0
    %4842 = vmatpush2.msra.mxu0 %v4711
    %4843 = vmatprep.subr.mxu0 0.0
    %4844 = vmatpush2.msra.mxu0 %v4710
    %4845 = vmatprep.subr.mxu0 0.0
    %4846 = vmatpush2.msra.mxu0 %v4709
    %4847 = vmatprep.subr.mxu0 0.0
    %4848 = vmatpush2.msra.mxu0 %v4708
    %4849 = vmatprep.subr.mxu0 0.0
    %4850 = vmatpush2.msra.mxu0 %v4707
    %4851 = vmatprep.subr.mxu0 0.0
    %4852 = vmatpush2.msra.mxu0 %v4706
    %4853 = vmatprep.subr.mxu0 0.0
    %4854 = vmatpush2.msra.mxu0 %v4705
    %4855 = vmatprep.subr.mxu0 0.0
    %4856 = vmatpush2.msra.mxu0 %v4704
    %4857 = vmatprep.subr.mxu0 0.0
    %4858 = vmatpush2.msra.mxu0 %v4703
    %4859 = vmatprep.subr.mxu0 0.0
    %4860 = vmatpush2.msra.mxu0 %v4702
    %4861 = vmatprep.subr.mxu0 0.0
    %4862 = vmatpush2.msra.mxu0 %v4701
    %4863 = vmatprep.subr.mxu0 0.0
    %4864 = vmatpush2.msra.mxu0 %v4700
    %4865 = vmatprep.subr.mxu0 0.0
    %4866 = vmatpush2.msra.mxu0 %v4699
    %4867 = vmatprep.subr.mxu0 0.0
    %4868 = vmatpush2.msra.mxu0 %v4698
    %4869 = vmatprep.mubr.f32.mxu0 %v4637
    %4870 = vmatmul.mubr.f32.gmra.mxu0 %v4636
    %v4871 = vpop.f32.mrf.mxu0
    %v4872 = vadd.f32 %v4787, %v4871
    %v4873 = vpop.f32.mrf.mxu0
    %4874 = vmatprep.mubr.f32.mxu0 %v4641
    %4875 = vmatmul.mubr.f32.gmra.mxu0 %v4640
    %v4876 = vpop.f32.mrf.mxu0
    %v4877 = vadd.f32 %v4792, %v4876
    %v4878 = vpop.f32.mrf.mxu0
    %4879 = vmatprep.mubr.f32.mxu0 %v4645
    %4880 = vmatmul.mubr.f32.gmra.mxu0 %v4644
    %v4881 = vpop.f32.mrf.mxu0
    %v4882 = vadd.f32 %v4797, %v4881
    %v4883 = vpop.f32.mrf.mxu0
    %4884 = vmatprep.mubr.f32.mxu0 %v4649
    %4885 = vmatmul.mubr.f32.gmra.mxu0 %v4648
    %v4886 = vpop.f32.mrf.mxu0
    %v4887 = vadd.f32 %v4802, %v4886
    %v4888 = vpop.f32.mrf.mxu0
    %4889 = vdwg.mxu0
    %v4890 = vtanh.pop %v4872
    %v4891 = vtanh.pop %v4877
    %v4892 = vtanh.pop %v4882
    %v4893 = vtanh.pop %v4887
    %4894 = vst [vmem:[%s12] sm:$0xff] %v4890
    %4895 = vst [vmem:[%s12 + $0x8] sm:$0xff] %v4891
    %4896 = vst [vmem:[%s12 + $0x10] sm:$0xff] %v4892
    %4897 = vst [vmem:[%s12 + $0x18] sm:$0xff] %v4893
    %s4898 = scalar_lea.vmem [#allocation21], 512
    %v4899 = vld [vmem:[%s4898] sm:$0xff]
    %v4900 = vld [vmem:[%s4898 + $0x8] sm:$0xff]
    %v4901 = vld [vmem:[%s4898 + $0x10] sm:$0xff]
    %v4902 = vld [vmem:[%s4898 + $0x18] sm:$0xff]
    %v4903 = vld [vmem:[%s4898 + $0x20] sm:$0xff]
    %v4904 = vld [vmem:[%s4898 + $0x28] sm:$0xff]
    %v4905 = vld [vmem:[%s4898 + $0x30] sm:$0xff]
    %v4906 = vld [vmem:[%s4898 + $0x38] sm:$0xff]
    %v4907 = vld [vmem:[%s4898 + $0x40] sm:$0xff]
    %v4908 = vld [vmem:[%s4898 + $0x48] sm:$0xff]
    %v4909 = vld [vmem:[%s4898 + $0x50] sm:$0xff]
    %v4910 = vld [vmem:[%s4898 + $0x58] sm:$0xff]
    %v4911 = vld [vmem:[%s4898 + $0x60] sm:$0xff]
    %v4912 = vld [vmem:[%s4898 + $0x68] sm:$0xff]
    %v4913 = vld [vmem:[%s4898 + $0x70] sm:$0xff]
    %v4914 = vld [vmem:[%s4898 + $0x78] sm:$0xff]
    %v4915 = vld [vmem:[%s4898 + $0x80] sm:$0xff]
    %v4916 = vld [vmem:[%s4898 + $0x88] sm:$0xff]
    %v4917 = vld [vmem:[%s4898 + $0x90] sm:$0xff]
    %v4918 = vld [vmem:[%s4898 + $0x98] sm:$0xff]
    %v4919 = vld [vmem:[%s4898 + $0xa0] sm:$0xff]
    %v4920 = vld [vmem:[%s4898 + $0xa8] sm:$0xff]
    %v4921 = vld [vmem:[%s4898 + $0xb0] sm:$0xff]
    %v4922 = vld [vmem:[%s4898 + $0xb8] sm:$0xff]
    %v4923 = vld [vmem:[%s4898 + $0xc0] sm:$0xff]
    %v4924 = vld [vmem:[%s4898 + $0xc8] sm:$0xff]
    %v4925 = vld [vmem:[%s4898 + $0xd0] sm:$0xff]
    %v4926 = vld [vmem:[%s4898 + $0xd8] sm:$0xff]
    %v4927 = vld [vmem:[%s4898 + $0xe0] sm:$0xff]
    %v4928 = vld [vmem:[%s4898 + $0xe8] sm:$0xff]
    %v4929 = vld [vmem:[%s4898 + $0xf0] sm:$0xff]
    %v4930 = vld [vmem:[%s4898 + $0xf8] sm:$0xff]
    %v4931 = vld [vmem:[%s4898 + $0x100] sm:$0xff]
    %v4932 = vld [vmem:[%s4898 + $0x108] sm:$0xff]
    %v4933 = vld [vmem:[%s4898 + $0x110] sm:$0xff]
    %v4934 = vld [vmem:[%s4898 + $0x118] sm:$0xff]
    %v4935 = vld [vmem:[%s4898 + $0x120] sm:$0xff]
    %v4936 = vld [vmem:[%s4898 + $0x128] sm:$0xff]
    %v4937 = vld [vmem:[%s4898 + $0x130] sm:$0xff]
    %v4938 = vld [vmem:[%s4898 + $0x138] sm:$0xff]
    %v4939 = vld [vmem:[%s4898 + $0x140] sm:$0xff]
    %v4940 = vld [vmem:[%s4898 + $0x148] sm:$0xff]
    %v4941 = vld [vmem:[%s4898 + $0x150] sm:$0xff]
    %v4942 = vld [vmem:[%s4898 + $0x158] sm:$0xff]
    %v4943 = vld [vmem:[%s4898 + $0x160] sm:$0xff]
    %v4944 = vld [vmem:[%s4898 + $0x168] sm:$0xff]
    %v4945 = vld [vmem:[%s4898 + $0x170] sm:$0xff]
    %v4946 = vld [vmem:[%s4898 + $0x178] sm:$0xff]
    %v4947 = vld [vmem:[%s4898 + $0x180] sm:$0xff]
    %v4948 = vld [vmem:[%s4898 + $0x188] sm:$0xff]
    %v4949 = vld [vmem:[%s4898 + $0x190] sm:$0xff]
    %v4950 = vld [vmem:[%s4898 + $0x198] sm:$0xff]
    %v4951 = vld [vmem:[%s4898 + $0x1a0] sm:$0xff]
    %v4952 = vld [vmem:[%s4898 + $0x1a8] sm:$0xff]
    %v4953 = vld [vmem:[%s4898 + $0x1b0] sm:$0xff]
    %v4954 = vld [vmem:[%s4898 + $0x1b8] sm:$0xff]
    %v4955 = vld [vmem:[%s4898 + $0x1c0] sm:$0xff]
    %v4956 = vld [vmem:[%s4898 + $0x1c8] sm:$0xff]
    %v4957 = vld [vmem:[%s4898 + $0x1d0] sm:$0xff]
    %v4958 = vld [vmem:[%s4898 + $0x1d8] sm:$0xff]
    %v4959 = vld [vmem:[%s4898 + $0x1e0] sm:$0xff]
    %v4960 = vld [vmem:[%s4898 + $0x1e8] sm:$0xff]
    %v4961 = vld [vmem:[%s4898 + $0x1f0] sm:$0xff]
    %v4962 = vld [vmem:[%s4898 + $0x1f8] sm:$0xff]
    %4963 = vmatprep.subr.mxu0 0.0
    %4964 = vmatpush1.msra.mxu0 %v4914
    %4965 = vmatprep.subr.mxu0 0.0
    %4966 = vmatpush1.msra.mxu0 %v4913
    %4967 = vmatprep.subr.mxu0 0.0
    %4968 = vmatpush1.msra.mxu0 %v4912
    %4969 = vmatprep.subr.mxu0 0.0
    %4970 = vmatpush1.msra.mxu0 %v4911
    %4971 = vmatprep.subr.mxu0 0.0
    %4972 = vmatpush1.msra.mxu0 %v4910
    %4973 = vmatprep.subr.mxu0 0.0
    %4974 = vmatpush1.msra.mxu0 %v4909
    %4975 = vmatprep.subr.mxu0 0.0
    %4976 = vmatpush1.msra.mxu0 %v4908
    %4977 = vmatprep.subr.mxu0 0.0
    %4978 = vmatpush1.msra.mxu0 %v4907
    %4979 = vmatprep.subr.mxu0 0.0
    %4980 = vmatpush1.msra.mxu0 %v4906
    %4981 = vmatprep.subr.mxu0 0.0
    %4982 = vmatpush1.msra.mxu0 %v4905
    %4983 = vmatprep.subr.mxu0 0.0
    %4984 = vmatpush1.msra.mxu0 %v4904
    %4985 = vmatprep.subr.mxu0 0.0
    %4986 = vmatpush1.msra.mxu0 %v4903
    %4987 = vmatprep.subr.mxu0 0.0
    %4988 = vmatpush1.msra.mxu0 %v4902
    %4989 = vmatprep.subr.mxu0 0.0
    %4990 = vmatpush1.msra.mxu0 %v4901
    %4991 = vmatprep.subr.mxu0 0.0
    %4992 = vmatpush1.msra.mxu0 %v4900
    %4993 = vmatprep.subr.mxu0 0.0
    %4994 = vmatpush1.msra.mxu0 %v4899
    %4995 = vmatprep.subr.mxu0 0.0
    %4996 = vmatpush2.msra.mxu0 %v4930
    %4997 = vmatprep.subr.mxu0 0.0
    %4998 = vmatpush2.msra.mxu0 %v4929
    %4999 = vmatprep.subr.mxu0 0.0
    %5000 = vmatpush2.msra.mxu0 %v4928
    %5001 = vmatprep.subr.mxu0 0.0
    %5002 = vmatpush2.msra.mxu0 %v4927
    %5003 = vmatprep.subr.mxu0 0.0
    %5004 = vmatpush2.msra.mxu0 %v4926
    %5005 = vmatprep.subr.mxu0 0.0
    %5006 = vmatpush2.msra.mxu0 %v4925
    %5007 = vmatprep.subr.mxu0 0.0
    %5008 = vmatpush2.msra.mxu0 %v4924
    %5009 = vmatprep.subr.mxu0 0.0
    %5010 = vmatpush2.msra.mxu0 %v4923
    %5011 = vmatprep.subr.mxu0 0.0
    %5012 = vmatpush2.msra.mxu0 %v4922
    %5013 = vmatprep.subr.mxu0 0.0
    %5014 = vmatpush2.msra.mxu0 %v4921
    %5015 = vmatprep.subr.mxu0 0.0
    %5016 = vmatpush2.msra.mxu0 %v4920
    %5017 = vmatprep.subr.mxu0 0.0
    %5018 = vmatpush2.msra.mxu0 %v4919
    %5019 = vmatprep.subr.mxu0 0.0
    %5020 = vmatpush2.msra.mxu0 %v4918
    %5021 = vmatprep.subr.mxu0 0.0
    %5022 = vmatpush2.msra.mxu0 %v4917
    %5023 = vmatprep.subr.mxu0 0.0
    %5024 = vmatpush2.msra.mxu0 %v4916
    %5025 = vmatprep.subr.mxu0 0.0
    %5026 = vmatpush2.msra.mxu0 %v4915
    %5027 = vmatprep.mubr.f32.mxu0 %v4635
    %5028 = vmatmul.mubr.f32.gmra.mxu0 %v4634
    %v5029 = vpop.f32.mrf.mxu0
    %v5030 = vadd.f32 %v4718, %v5029
    %v5031 = vpop.f32.mrf.mxu0
    %5032 = vmatprep.mubr.f32.mxu0 %v4639
    %5033 = vmatmul.mubr.f32.gmra.mxu0 %v4638
    %v5034 = vpop.f32.mrf.mxu0
    %v5035 = vadd.f32 %v4718, %v5034
    %v5036 = vpop.f32.mrf.mxu0
    %5037 = vmatprep.mubr.f32.mxu0 %v4643
    %5038 = vmatmul.mubr.f32.gmra.mxu0 %v4642
    %v5039 = vpop.f32.mrf.mxu0
    %v5040 = vadd.f32 %v4718, %v5039
    %v5041 = vpop.f32.mrf.mxu0
    %5042 = vmatprep.mubr.f32.mxu0 %v4647
    %5043 = vmatmul.mubr.f32.gmra.mxu0 %v4646
    %v5044 = vpop.f32.mrf.mxu0
    %v5045 = vadd.f32 %v4718, %v5044
    %v5046 = vpop.f32.mrf.mxu0
    %5047 = vdwg.mxu0
    %5048 = vmatprep.subr.mxu0 0.0
    %5049 = vmatpush1.msra.mxu0 %v4946
    %5050 = vmatprep.subr.mxu0 0.0
    %5051 = vmatpush1.msra.mxu0 %v4945
    %5052 = vmatprep.subr.mxu0 0.0
    %5053 = vmatpush1.msra.mxu0 %v4944
    %5054 = vmatprep.subr.mxu0 0.0
    %5055 = vmatpush1.msra.mxu0 %v4943
    %5056 = vmatprep.subr.mxu0 0.0
    %5057 = vmatpush1.msra.mxu0 %v4942
    %5058 = vmatprep.subr.mxu0 0.0
    %5059 = vmatpush1.msra.mxu0 %v4941
    %5060 = vmatprep.subr.mxu0 0.0
    %5061 = vmatpush1.msra.mxu0 %v4940
    %5062 = vmatprep.subr.mxu0 0.0
    %5063 = vmatpush1.msra.mxu0 %v4939
    %5064 = vmatprep.subr.mxu0 0.0
    %5065 = vmatpush1.msra.mxu0 %v4938
    %5066 = vmatprep.subr.mxu0 0.0
    %5067 = vmatpush1.msra.mxu0 %v4937
    %5068 = vmatprep.subr.mxu0 0.0
    %5069 = vmatpush1.msra.mxu0 %v4936
    %5070 = vmatprep.subr.mxu0 0.0
    %5071 = vmatpush1.msra.mxu0 %v4935
    %5072 = vmatprep.subr.mxu0 0.0
    %5073 = vmatpush1.msra.mxu0 %v4934
    %5074 = vmatprep.subr.mxu0 0.0
    %5075 = vmatpush1.msra.mxu0 %v4933
    %5076 = vmatprep.subr.mxu0 0.0
    %5077 = vmatpush1.msra.mxu0 %v4932
    %5078 = vmatprep.subr.mxu0 0.0
    %5079 = vmatpush1.msra.mxu0 %v4931
    %5080 = vmatprep.subr.mxu0 0.0
    %5081 = vmatpush2.msra.mxu0 %v4962
    %5082 = vmatprep.subr.mxu0 0.0
    %5083 = vmatpush2.msra.mxu0 %v4961
    %5084 = vmatprep.subr.mxu0 0.0
    %5085 = vmatpush2.msra.mxu0 %v4960
    %5086 = vmatprep.subr.mxu0 0.0
    %5087 = vmatpush2.msra.mxu0 %v4959
    %5088 = vmatprep.subr.mxu0 0.0
    %5089 = vmatpush2.msra.mxu0 %v4958
    %5090 = vmatprep.subr.mxu0 0.0
    %5091 = vmatpush2.msra.mxu0 %v4957
    %5092 = vmatprep.subr.mxu0 0.0
    %5093 = vmatpush2.msra.mxu0 %v4956
    %5094 = vmatprep.subr.mxu0 0.0
    %5095 = vmatpush2.msra.mxu0 %v4955
    %5096 = vmatprep.subr.mxu0 0.0
    %5097 = vmatpush2.msra.mxu0 %v4954
    %5098 = vmatprep.subr.mxu0 0.0
    %5099 = vmatpush2.msra.mxu0 %v4953
    %5100 = vmatprep.subr.mxu0 0.0
    %5101 = vmatpush2.msra.mxu0 %v4952
    %5102 = vmatprep.subr.mxu0 0.0
    %5103 = vmatpush2.msra.mxu0 %v4951
    %5104 = vmatprep.subr.mxu0 0.0
    %5105 = vmatpush2.msra.mxu0 %v4950
    %5106 = vmatprep.subr.mxu0 0.0
    %5107 = vmatpush2.msra.mxu0 %v4949
    %5108 = vmatprep.subr.mxu0 0.0
    %5109 = vmatpush2.msra.mxu0 %v4948
    %5110 = vmatprep.subr.mxu0 0.0
    %5111 = vmatpush2.msra.mxu0 %v4947
    %5112 = vmatprep.mubr.f32.mxu0 %v4637
    %5113 = vmatmul.mubr.f32.gmra.mxu0 %v4636
    %v5114 = vpop.f32.mrf.mxu0
    %v5115 = vadd.f32 %v5030, %v5114
    %v5116 = vpop.f32.mrf.mxu0
    %5117 = vmatprep.mubr.f32.mxu0 %v4641
    %5118 = vmatmul.mubr.f32.gmra.mxu0 %v4640
    %v5119 = vpop.f32.mrf.mxu0
    %v5120 = vadd.f32 %v5035, %v5119
    %v5121 = vpop.f32.mrf.mxu0
    %5122 = vmatprep.mubr.f32.mxu0 %v4645
    %5123 = vmatmul.mubr.f32.gmra.mxu0 %v4644
    %v5124 = vpop.f32.mrf.mxu0
    %v5125 = vadd.f32 %v5040, %v5124
    %v5126 = vpop.f32.mrf.mxu0
    %5127 = vmatprep.mubr.f32.mxu0 %v4649
    %5128 = vmatmul.mubr.f32.gmra.mxu0 %v4648
    %v5129 = vpop.f32.mrf.mxu0
    %v5130 = vadd.f32 %v5045, %v5129
    %v5131 = vpop.f32.mrf.mxu0
    %5132 = vdwg.mxu0
    %v5133 = vtanh.pop %v5115
    %v5134 = vtanh.pop %v5120
    %v5135 = vtanh.pop %v5125
    %v5136 = vtanh.pop %v5130
    %5137 = vst [vmem:[%s12 + $0x40] sm:$0xff] %v5133
    %5138 = vst [vmem:[%s12 + $0x48] sm:$0xff] %v5134
    %5139 = vst [vmem:[%s12 + $0x50] sm:$0xff] %v5135
    %5140 = vst [vmem:[%s12 + $0x58] sm:$0xff] %v5136
    %v5141 = vld [vmem:[#allocation4 + $0x80] sm:$0xff]
    %v5142 = vld [vmem:[#allocation4 + $0x88] sm:$0xff]
    %v5143 = vld [vmem:[#allocation4 + $0x90] sm:$0xff]
    %v5144 = vld [vmem:[#allocation4 + $0x98] sm:$0xff]
    %v5145 = vld [vmem:[#allocation4 + $0xa0] sm:$0xff]
    %v5146 = vld [vmem:[#allocation4 + $0xa8] sm:$0xff]
    %v5147 = vld [vmem:[#allocation4 + $0xb0] sm:$0xff]
    %v5148 = vld [vmem:[#allocation4 + $0xb8] sm:$0xff]
    %v5149 = vld [vmem:[#allocation4 + $0xc0] sm:$0xff]
    %v5150 = vld [vmem:[#allocation4 + $0xc8] sm:$0xff]
    %v5151 = vld [vmem:[#allocation4 + $0xd0] sm:$0xff]
    %v5152 = vld [vmem:[#allocation4 + $0xd8] sm:$0xff]
    %v5153 = vld [vmem:[#allocation4 + $0xe0] sm:$0xff]
    %v5154 = vld [vmem:[#allocation4 + $0xe8] sm:$0xff]
    %v5155 = vld [vmem:[#allocation4 + $0xf0] sm:$0xff]
    %v5156 = vld [vmem:[#allocation4 + $0xf8] sm:$0xff]
    %v5157 = vmul.f32 %v5141, %v4536
    %v5158 = vmul.f32 %v5142, %v4540
    %v5159 = vmul.f32 %v5143, %v4544
    %v5160 = vmul.f32 %v5144, %v4548
    %v5161 = vmul.f32 %v5145, %v4536
    %v5162 = vmul.f32 %v5146, %v4540
    %v5163 = vmul.f32 %v5147, %v4544
    %v5164 = vmul.f32 %v5148, %v4548
    %v5165 = vmul.f32 %v5149, %v4536
    %v5166 = vmul.f32 %v5150, %v4540
    %v5167 = vmul.f32 %v5151, %v4544
    %v5168 = vmul.f32 %v5152, %v4548
    %v5169 = vmul.f32 %v5153, %v4536
    %v5170 = vmul.f32 %v5154, %v4540
    %v5171 = vmul.f32 %v5155, %v4544
    %v5172 = vmul.f32 %v5156, %v4548
    %v5173 = vadd.f32 %v5157, %v4569
    %v5174 = vadd.f32 %v5158, %v4573
    %v5175 = vadd.f32 %v5159, %v4577
    %v5176 = vadd.f32 %v5160, %v4581
    %v5177 = vadd.f32 %v5161, %v4569
    %v5178 = vadd.f32 %v5162, %v4573
    %v5179 = vadd.f32 %v5163, %v4577
    %v5180 = vadd.f32 %v5164, %v4581
    %v5181 = vadd.f32 %v5165, %v4569
    %v5182 = vadd.f32 %v5166, %v4573
    %v5183 = vadd.f32 %v5167, %v4577
    %v5184 = vadd.f32 %v5168, %v4581
    %v5185 = vadd.f32 %v5169, %v4569
    %v5186 = vadd.f32 %v5170, %v4573
    %v5187 = vadd.f32 %v5171, %v4577
    %v5188 = vadd.f32 %v5172, %v4581
    %vm5189 = vcmp.ge.f32.partialorder %v5173, 0.0
    %vm5190 = vcmp.ge.f32.partialorder %v5174, 0.0
    %vm5191 = vcmp.ge.f32.partialorder %v5175, 0.0
    %vm5192 = vcmp.ge.f32.partialorder %v5176, 0.0
    %vm5193 = vcmp.ge.f32.partialorder %v5177, 0.0
    %vm5194 = vcmp.ge.f32.partialorder %v5178, 0.0
    %vm5195 = vcmp.ge.f32.partialorder %v5179, 0.0
    %vm5196 = vcmp.ge.f32.partialorder %v5180, 0.0
    %vm5197 = vcmp.ge.f32.partialorder %v5181, 0.0
    %vm5198 = vcmp.ge.f32.partialorder %v5182, 0.0
    %vm5199 = vcmp.ge.f32.partialorder %v5183, 0.0
    %vm5200 = vcmp.ge.f32.partialorder %v5184, 0.0
    %vm5201 = vcmp.ge.f32.partialorder %v5185, 0.0
    %vm5202 = vcmp.ge.f32.partialorder %v5186, 0.0
    %vm5203 = vcmp.ge.f32.partialorder %v5187, 0.0
    %vm5204 = vcmp.ge.f32.partialorder %v5188, 0.0
    %v5205 = vmul.f32 %v5173, 0.2
    %v5206 = vmul.f32 %v5174, 0.2
    %v5207 = vmul.f32 %v5175, 0.2
    %v5208 = vmul.f32 %v5176, 0.2
    %v5209 = vmul.f32 %v5177, 0.2
    %v5210 = vmul.f32 %v5178, 0.2
    %v5211 = vmul.f32 %v5179, 0.2
    %v5212 = vmul.f32 %v5180, 0.2
    %v5213 = vmul.f32 %v5181, 0.2
    %v5214 = vmul.f32 %v5182, 0.2
    %v5215 = vmul.f32 %v5183, 0.2
    %v5216 = vmul.f32 %v5184, 0.2
    %v5217 = vmul.f32 %v5185, 0.2
    %v5218 = vmul.f32 %v5186, 0.2
    %v5219 = vmul.f32 %v5187, 0.2
    %v5220 = vmul.f32 %v5188, 0.2
    %v5221 = vsel %vm5189, %v5173, %v5205
    %v5222 = vsel %vm5190, %v5174, %v5206
    %v5223 = vsel %vm5191, %v5175, %v5207
    %v5224 = vsel %vm5192, %v5176, %v5208
    %v5225 = vsel %vm5193, %v5177, %v5209
    %v5226 = vsel %vm5194, %v5178, %v5210
    %v5227 = vsel %vm5195, %v5179, %v5211
    %v5228 = vsel %vm5196, %v5180, %v5212
    %v5229 = vsel %vm5197, %v5181, %v5213
    %v5230 = vsel %vm5198, %v5182, %v5214
    %v5231 = vsel %vm5199, %v5183, %v5215
    %v5232 = vsel %vm5200, %v5184, %v5216
    %v5233 = vsel %vm5201, %v5185, %v5217
    %v5234 = vsel %vm5202, %v5186, %v5218
    %v5235 = vsel %vm5203, %v5187, %v5219
    %v5236 = vsel %vm5204, %v5188, %v5220
    %v5237 = vld [vmem:[#allocation21] sm:$0xff]
    %v5238 = vld [vmem:[#allocation21 + $0x8] sm:$0xff]
    %v5239 = vld [vmem:[#allocation21 + $0x10] sm:$0xff]
    %v5240 = vld [vmem:[#allocation21 + $0x18] sm:$0xff]
    %v5241 = vld [vmem:[#allocation21 + $0x20] sm:$0xff]
    %v5242 = vld [vmem:[#allocation21 + $0x28] sm:$0xff]
    %v5243 = vld [vmem:[#allocation21 + $0x30] sm:$0xff]
    %v5244 = vld [vmem:[#allocation21 + $0x38] sm:$0xff]
    %v5245 = vld [vmem:[#allocation21 + $0x40] sm:$0xff]
    %v5246 = vld [vmem:[#allocation21 + $0x48] sm:$0xff]
    %v5247 = vld [vmem:[#allocation21 + $0x50] sm:$0xff]
    %v5248 = vld [vmem:[#allocation21 + $0x58] sm:$0xff]
    %v5249 = vld [vmem:[#allocation21 + $0x60] sm:$0xff]
    %v5250 = vld [vmem:[#allocation21 + $0x68] sm:$0xff]
    %v5251 = vld [vmem:[#allocation21 + $0x70] sm:$0xff]
    %v5252 = vld [vmem:[#allocation21 + $0x78] sm:$0xff]
    %v5253 = vld [vmem:[#allocation21 + $0x80] sm:$0xff]
    %v5254 = vld [vmem:[#allocation21 + $0x88] sm:$0xff]
    %v5255 = vld [vmem:[#allocation21 + $0x90] sm:$0xff]
    %v5256 = vld [vmem:[#allocation21 + $0x98] sm:$0xff]
    %v5257 = vld [vmem:[#allocation21 + $0xa0] sm:$0xff]
    %v5258 = vld [vmem:[#allocation21 + $0xa8] sm:$0xff]
    %v5259 = vld [vmem:[#allocation21 + $0xb0] sm:$0xff]
    %v5260 = vld [vmem:[#allocation21 + $0xb8] sm:$0xff]
    %v5261 = vld [vmem:[#allocation21 + $0xc0] sm:$0xff]
    %v5262 = vld [vmem:[#allocation21 + $0xc8] sm:$0xff]
    %v5263 = vld [vmem:[#allocation21 + $0xd0] sm:$0xff]
    %v5264 = vld [vmem:[#allocation21 + $0xd8] sm:$0xff]
    %v5265 = vld [vmem:[#allocation21 + $0xe0] sm:$0xff]
    %v5266 = vld [vmem:[#allocation21 + $0xe8] sm:$0xff]
    %v5267 = vld [vmem:[#allocation21 + $0xf0] sm:$0xff]
    %v5268 = vld [vmem:[#allocation21 + $0xf8] sm:$0xff]
    %v5269 = vld [vmem:[#allocation21 + $0x100] sm:$0xff]
    %v5270 = vld [vmem:[#allocation21 + $0x108] sm:$0xff]
    %v5271 = vld [vmem:[#allocation21 + $0x110] sm:$0xff]
    %v5272 = vld [vmem:[#allocation21 + $0x118] sm:$0xff]
    %v5273 = vld [vmem:[#allocation21 + $0x120] sm:$0xff]
    %v5274 = vld [vmem:[#allocation21 + $0x128] sm:$0xff]
    %v5275 = vld [vmem:[#allocation21 + $0x130] sm:$0xff]
    %v5276 = vld [vmem:[#allocation21 + $0x138] sm:$0xff]
    %v5277 = vld [vmem:[#allocation21 + $0x140] sm:$0xff]
    %v5278 = vld [vmem:[#allocation21 + $0x148] sm:$0xff]
    %v5279 = vld [vmem:[#allocation21 + $0x150] sm:$0xff]
    %v5280 = vld [vmem:[#allocation21 + $0x158] sm:$0xff]
    %v5281 = vld [vmem:[#allocation21 + $0x160] sm:$0xff]
    %v5282 = vld [vmem:[#allocation21 + $0x168] sm:$0xff]
    %v5283 = vld [vmem:[#allocation21 + $0x170] sm:$0xff]
    %v5284 = vld [vmem:[#allocation21 + $0x178] sm:$0xff]
    %v5285 = vld [vmem:[#allocation21 + $0x180] sm:$0xff]
    %v5286 = vld [vmem:[#allocation21 + $0x188] sm:$0xff]
    %v5287 = vld [vmem:[#allocation21 + $0x190] sm:$0xff]
    %v5288 = vld [vmem:[#allocation21 + $0x198] sm:$0xff]
    %v5289 = vld [vmem:[#allocation21 + $0x1a0] sm:$0xff]
    %v5290 = vld [vmem:[#allocation21 + $0x1a8] sm:$0xff]
    %v5291 = vld [vmem:[#allocation21 + $0x1b0] sm:$0xff]
    %v5292 = vld [vmem:[#allocation21 + $0x1b8] sm:$0xff]
    %v5293 = vld [vmem:[#allocation21 + $0x1c0] sm:$0xff]
    %v5294 = vld [vmem:[#allocation21 + $0x1c8] sm:$0xff]
    %v5295 = vld [vmem:[#allocation21 + $0x1d0] sm:$0xff]
    %v5296 = vld [vmem:[#allocation21 + $0x1d8] sm:$0xff]
    %v5297 = vld [vmem:[#allocation21 + $0x1e0] sm:$0xff]
    %v5298 = vld [vmem:[#allocation21 + $0x1e8] sm:$0xff]
    %v5299 = vld [vmem:[#allocation21 + $0x1f0] sm:$0xff]
    %v5300 = vld [vmem:[#allocation21 + $0x1f8] sm:$0xff]
    %5301 = vmatprep.subr.mxu0 0.0
    %5302 = vmatpush1.msra.mxu0 %v5252
    %5303 = vmatprep.subr.mxu0 0.0
    %5304 = vmatpush1.msra.mxu0 %v5251
    %5305 = vmatprep.subr.mxu0 0.0
    %5306 = vmatpush1.msra.mxu0 %v5250
    %5307 = vmatprep.subr.mxu0 0.0
    %5308 = vmatpush1.msra.mxu0 %v5249
    %5309 = vmatprep.subr.mxu0 0.0
    %5310 = vmatpush1.msra.mxu0 %v5248
    %5311 = vmatprep.subr.mxu0 0.0
    %5312 = vmatpush1.msra.mxu0 %v5247
    %5313 = vmatprep.subr.mxu0 0.0
    %5314 = vmatpush1.msra.mxu0 %v5246
    %5315 = vmatprep.subr.mxu0 0.0
    %5316 = vmatpush1.msra.mxu0 %v5245
    %5317 = vmatprep.subr.mxu0 0.0
    %5318 = vmatpush1.msra.mxu0 %v5244
    %5319 = vmatprep.subr.mxu0 0.0
    %5320 = vmatpush1.msra.mxu0 %v5243
    %5321 = vmatprep.subr.mxu0 0.0
    %5322 = vmatpush1.msra.mxu0 %v5242
    %5323 = vmatprep.subr.mxu0 0.0
    %5324 = vmatpush1.msra.mxu0 %v5241
    %5325 = vmatprep.subr.mxu0 0.0
    %5326 = vmatpush1.msra.mxu0 %v5240
    %5327 = vmatprep.subr.mxu0 0.0
    %5328 = vmatpush1.msra.mxu0 %v5239
    %5329 = vmatprep.subr.mxu0 0.0
    %5330 = vmatpush1.msra.mxu0 %v5238
    %5331 = vmatprep.subr.mxu0 0.0
    %5332 = vmatpush1.msra.mxu0 %v5237
    %5333 = vmatprep.subr.mxu0 0.0
    %5334 = vmatpush2.msra.mxu0 %v5268
    %5335 = vmatprep.subr.mxu0 0.0
    %5336 = vmatpush2.msra.mxu0 %v5267
    %5337 = vmatprep.subr.mxu0 0.0
    %5338 = vmatpush2.msra.mxu0 %v5266
    %5339 = vmatprep.subr.mxu0 0.0
    %5340 = vmatpush2.msra.mxu0 %v5265
    %5341 = vmatprep.subr.mxu0 0.0
    %5342 = vmatpush2.msra.mxu0 %v5264
    %5343 = vmatprep.subr.mxu0 0.0
    %5344 = vmatpush2.msra.mxu0 %v5263
    %5345 = vmatprep.subr.mxu0 0.0
    %5346 = vmatpush2.msra.mxu0 %v5262
    %5347 = vmatprep.subr.mxu0 0.0
    %5348 = vmatpush2.msra.mxu0 %v5261
    %5349 = vmatprep.subr.mxu0 0.0
    %5350 = vmatpush2.msra.mxu0 %v5260
    %5351 = vmatprep.subr.mxu0 0.0
    %5352 = vmatpush2.msra.mxu0 %v5259
    %5353 = vmatprep.subr.mxu0 0.0
    %5354 = vmatpush2.msra.mxu0 %v5258
    %5355 = vmatprep.subr.mxu0 0.0
    %5356 = vmatpush2.msra.mxu0 %v5257
    %5357 = vmatprep.subr.mxu0 0.0
    %5358 = vmatpush2.msra.mxu0 %v5256
    %5359 = vmatprep.subr.mxu0 0.0
    %5360 = vmatpush2.msra.mxu0 %v5255
    %5361 = vmatprep.subr.mxu0 0.0
    %5362 = vmatpush2.msra.mxu0 %v5254
    %5363 = vmatprep.subr.mxu0 0.0
    %5364 = vmatpush2.msra.mxu0 %v5253
    %5365 = vmatprep.mubr.f32.mxu0 %v5222
    %5366 = vmatmul.mubr.f32.gmra.mxu0 %v5221
    %v5367 = vpop.f32.mrf.mxu0
    %v5368 = vadd.f32 %v4718, %v5367
    %v5369 = vpop.f32.mrf.mxu0
    %5370 = vmatprep.mubr.f32.mxu0 %v5226
    %5371 = vmatmul.mubr.f32.gmra.mxu0 %v5225
    %v5372 = vpop.f32.mrf.mxu0
    %v5373 = vadd.f32 %v4718, %v5372
    %v5374 = vpop.f32.mrf.mxu0
    %5375 = vmatprep.mubr.f32.mxu0 %v5230
    %5376 = vmatmul.mubr.f32.gmra.mxu0 %v5229
    %v5377 = vpop.f32.mrf.mxu0
    %v5378 = vadd.f32 %v4718, %v5377
    %v5379 = vpop.f32.mrf.mxu0
    %5380 = vmatprep.mubr.f32.mxu0 %v5234
    %5381 = vmatmul.mubr.f32.gmra.mxu0 %v5233
    %v5382 = vpop.f32.mrf.mxu0
    %v5383 = vadd.f32 %v4718, %v5382
    %v5384 = vpop.f32.mrf.mxu0
    %5385 = vdwg.mxu0
    %5386 = vmatprep.subr.mxu0 0.0
    %5387 = vmatpush1.msra.mxu0 %v5284
    %5388 = vmatprep.subr.mxu0 0.0
    %5389 = vmatpush1.msra.mxu0 %v5283
    %5390 = vmatprep.subr.mxu0 0.0
    %5391 = vmatpush1.msra.mxu0 %v5282
    %5392 = vmatprep.subr.mxu0 0.0
    %5393 = vmatpush1.msra.mxu0 %v5281
    %5394 = vmatprep.subr.mxu0 0.0
    %5395 = vmatpush1.msra.mxu0 %v5280
    %5396 = vmatprep.subr.mxu0 0.0
    %5397 = vmatpush1.msra.mxu0 %v5279
    %5398 = vmatprep.subr.mxu0 0.0
    %5399 = vmatpush1.msra.mxu0 %v5278
    %5400 = vmatprep.subr.mxu0 0.0
    %5401 = vmatpush1.msra.mxu0 %v5277
    %5402 = vmatprep.subr.mxu0 0.0
    %5403 = vmatpush1.msra.mxu0 %v5276
    %5404 = vmatprep.subr.mxu0 0.0
    %5405 = vmatpush1.msra.mxu0 %v5275
    %5406 = vmatprep.subr.mxu0 0.0
    %5407 = vmatpush1.msra.mxu0 %v5274
    %5408 = vmatprep.subr.mxu0 0.0
    %5409 = vmatpush1.msra.mxu0 %v5273
    %5410 = vmatprep.subr.mxu0 0.0
    %5411 = vmatpush1.msra.mxu0 %v5272
    %5412 = vmatprep.subr.mxu0 0.0
    %5413 = vmatpush1.msra.mxu0 %v5271
    %5414 = vmatprep.subr.mxu0 0.0
    %5415 = vmatpush1.msra.mxu0 %v5270
    %5416 = vmatprep.subr.mxu0 0.0
    %5417 = vmatpush1.msra.mxu0 %v5269
    %5418 = vmatprep.subr.mxu0 0.0
    %5419 = vmatpush2.msra.mxu0 %v5300
    %5420 = vmatprep.subr.mxu0 0.0
    %5421 = vmatpush2.msra.mxu0 %v5299
    %5422 = vmatprep.subr.mxu0 0.0
    %5423 = vmatpush2.msra.mxu0 %v5298
    %5424 = vmatprep.subr.mxu0 0.0
    %5425 = vmatpush2.msra.mxu0 %v5297
    %5426 = vmatprep.subr.mxu0 0.0
    %5427 = vmatpush2.msra.mxu0 %v5296
    %5428 = vmatprep.subr.mxu0 0.0
    %5429 = vmatpush2.msra.mxu0 %v5295
    %5430 = vmatprep.subr.mxu0 0.0
    %5431 = vmatpush2.msra.mxu0 %v5294
    %5432 = vmatprep.subr.mxu0 0.0
    %5433 = vmatpush2.msra.mxu0 %v5293
    %5434 = vmatprep.subr.mxu0 0.0
    %5435 = vmatpush2.msra.mxu0 %v5292
    %5436 = vmatprep.subr.mxu0 0.0
    %5437 = vmatpush2.msra.mxu0 %v5291
    %5438 = vmatprep.subr.mxu0 0.0
    %5439 = vmatpush2.msra.mxu0 %v5290
    %5440 = vmatprep.subr.mxu0 0.0
    %5441 = vmatpush2.msra.mxu0 %v5289
    %5442 = vmatprep.subr.mxu0 0.0
    %5443 = vmatpush2.msra.mxu0 %v5288
    %5444 = vmatprep.subr.mxu0 0.0
    %5445 = vmatpush2.msra.mxu0 %v5287
    %5446 = vmatprep.subr.mxu0 0.0
    %5447 = vmatpush2.msra.mxu0 %v5286
    %5448 = vmatprep.subr.mxu0 0.0
    %5449 = vmatpush2.msra.mxu0 %v5285
    %5450 = vmatprep.mubr.f32.mxu0 %v5224
    %5451 = vmatmul.mubr.f32.gmra.mxu0 %v5223
    %v5452 = vpop.f32.mrf.mxu0
    %v5453 = vadd.f32 %v5368, %v5452
    %v5454 = vpop.f32.mrf.mxu0
    %5455 = vmatprep.mubr.f32.mxu0 %v5228
    %5456 = vmatmul.mubr.f32.gmra.mxu0 %v5227
    %v5457 = vpop.f32.mrf.mxu0
    %v5458 = vadd.f32 %v5373, %v5457
    %v5459 = vpop.f32.mrf.mxu0
    %5460 = vmatprep.mubr.f32.mxu0 %v5232
    %5461 = vmatmul.mubr.f32.gmra.mxu0 %v5231
    %v5462 = vpop.f32.mrf.mxu0
    %v5463 = vadd.f32 %v5378, %v5462
    %v5464 = vpop.f32.mrf.mxu0
    %5465 = vmatprep.mubr.f32.mxu0 %v5236
    %5466 = vmatmul.mubr.f32.gmra.mxu0 %v5235
    %v5467 = vpop.f32.mrf.mxu0
    %v5468 = vadd.f32 %v5383, %v5467
    %v5469 = vpop.f32.mrf.mxu0
    %5470 = vdwg.mxu0
    %v5471 = vtanh.pop %v5453
    %v5472 = vtanh.pop %v5458
    %v5473 = vtanh.pop %v5463
    %v5474 = vtanh.pop %v5468
    %5475 = vst [vmem:[%s12 + $0x20] sm:$0xff] %v5471
    %5476 = vst [vmem:[%s12 + $0x28] sm:$0xff] %v5472
    %5477 = vst [vmem:[%s12 + $0x30] sm:$0xff] %v5473
    %5478 = vst [vmem:[%s12 + $0x38] sm:$0xff] %v5474
    %v5479 = vld [vmem:[%s4898] sm:$0xff]
    %v5480 = vld [vmem:[%s4898 + $0x8] sm:$0xff]
    %v5481 = vld [vmem:[%s4898 + $0x10] sm:$0xff]
    %v5482 = vld [vmem:[%s4898 + $0x18] sm:$0xff]
    %v5483 = vld [vmem:[%s4898 + $0x20] sm:$0xff]
    %v5484 = vld [vmem:[%s4898 + $0x28] sm:$0xff]
    %v5485 = vld [vmem:[%s4898 + $0x30] sm:$0xff]
    %v5486 = vld [vmem:[%s4898 + $0x38] sm:$0xff]
    %v5487 = vld [vmem:[%s4898 + $0x40] sm:$0xff]
    %v5488 = vld [vmem:[%s4898 + $0x48] sm:$0xff]
    %v5489 = vld [vmem:[%s4898 + $0x50] sm:$0xff]
    %v5490 = vld [vmem:[%s4898 + $0x58] sm:$0xff]
    %v5491 = vld [vmem:[%s4898 + $0x60] sm:$0xff]
    %v5492 = vld [vmem:[%s4898 + $0x68] sm:$0xff]
    %v5493 = vld [vmem:[%s4898 + $0x70] sm:$0xff]
    %v5494 = vld [vmem:[%s4898 + $0x78] sm:$0xff]
    %v5495 = vld [vmem:[%s4898 + $0x80] sm:$0xff]
    %v5496 = vld [vmem:[%s4898 + $0x88] sm:$0xff]
    %v5497 = vld [vmem:[%s4898 + $0x90] sm:$0xff]
    %v5498 = vld [vmem:[%s4898 + $0x98] sm:$0xff]
    %v5499 = vld [vmem:[%s4898 + $0xa0] sm:$0xff]
    %v5500 = vld [vmem:[%s4898 + $0xa8] sm:$0xff]
    %v5501 = vld [vmem:[%s4898 + $0xb0] sm:$0xff]
    %v5502 = vld [vmem:[%s4898 + $0xb8] sm:$0xff]
    %v5503 = vld [vmem:[%s4898 + $0xc0] sm:$0xff]
    %v5504 = vld [vmem:[%s4898 + $0xc8] sm:$0xff]
    %v5505 = vld [vmem:[%s4898 + $0xd0] sm:$0xff]
    %v5506 = vld [vmem:[%s4898 + $0xd8] sm:$0xff]
    %v5507 = vld [vmem:[%s4898 + $0xe0] sm:$0xff]
    %v5508 = vld [vmem:[%s4898 + $0xe8] sm:$0xff]
    %v5509 = vld [vmem:[%s4898 + $0xf0] sm:$0xff]
    %v5510 = vld [vmem:[%s4898 + $0xf8] sm:$0xff]
    %v5511 = vld [vmem:[%s4898 + $0x100] sm:$0xff]
    %v5512 = vld [vmem:[%s4898 + $0x108] sm:$0xff]
    %v5513 = vld [vmem:[%s4898 + $0x110] sm:$0xff]
    %v5514 = vld [vmem:[%s4898 + $0x118] sm:$0xff]
    %v5515 = vld [vmem:[%s4898 + $0x120] sm:$0xff]
    %v5516 = vld [vmem:[%s4898 + $0x128] sm:$0xff]
    %v5517 = vld [vmem:[%s4898 + $0x130] sm:$0xff]
    %v5518 = vld [vmem:[%s4898 + $0x138] sm:$0xff]
    %v5519 = vld [vmem:[%s4898 + $0x140] sm:$0xff]
    %v5520 = vld [vmem:[%s4898 + $0x148] sm:$0xff]
    %v5521 = vld [vmem:[%s4898 + $0x150] sm:$0xff]
    %v5522 = vld [vmem:[%s4898 + $0x158] sm:$0xff]
    %v5523 = vld [vmem:[%s4898 + $0x160] sm:$0xff]
    %v5524 = vld [vmem:[%s4898 + $0x168] sm:$0xff]
    %v5525 = vld [vmem:[%s4898 + $0x170] sm:$0xff]
    %v5526 = vld [vmem:[%s4898 + $0x178] sm:$0xff]
    %v5527 = vld [vmem:[%s4898 + $0x180] sm:$0xff]
    %v5528 = vld [vmem:[%s4898 + $0x188] sm:$0xff]
    %v5529 = vld [vmem:[%s4898 + $0x190] sm:$0xff]
    %v5530 = vld [vmem:[%s4898 + $0x198] sm:$0xff]
    %v5531 = vld [vmem:[%s4898 + $0x1a0] sm:$0xff]
    %v5532 = vld [vmem:[%s4898 + $0x1a8] sm:$0xff]
    %v5533 = vld [vmem:[%s4898 + $0x1b0] sm:$0xff]
    %v5534 = vld [vmem:[%s4898 + $0x1b8] sm:$0xff]
    %v5535 = vld [vmem:[%s4898 + $0x1c0] sm:$0xff]
    %v5536 = vld [vmem:[%s4898 + $0x1c8] sm:$0xff]
    %v5537 = vld [vmem:[%s4898 + $0x1d0] sm:$0xff]
    %v5538 = vld [vmem:[%s4898 + $0x1d8] sm:$0xff]
    %v5539 = vld [vmem:[%s4898 + $0x1e0] sm:$0xff]
    %v5540 = vld [vmem:[%s4898 + $0x1e8] sm:$0xff]
    %v5541 = vld [vmem:[%s4898 + $0x1f0] sm:$0xff]
    %v5542 = vld [vmem:[%s4898 + $0x1f8] sm:$0xff]
    %5543 = vmatprep.subr.mxu0 0.0
    %5544 = vmatpush1.msra.mxu0 %v5494
    %5545 = vmatprep.subr.mxu0 0.0
    %5546 = vmatpush1.msra.mxu0 %v5493
    %5547 = vmatprep.subr.mxu0 0.0
    %5548 = vmatpush1.msra.mxu0 %v5492
    %5549 = vmatprep.subr.mxu0 0.0
    %5550 = vmatpush1.msra.mxu0 %v5491
    %5551 = vmatprep.subr.mxu0 0.0
    %5552 = vmatpush1.msra.mxu0 %v5490
    %5553 = vmatprep.subr.mxu0 0.0
    %5554 = vmatpush1.msra.mxu0 %v5489
    %5555 = vmatprep.subr.mxu0 0.0
    %5556 = vmatpush1.msra.mxu0 %v5488
    %5557 = vmatprep.subr.mxu0 0.0
    %5558 = vmatpush1.msra.mxu0 %v5487
    %5559 = vmatprep.subr.mxu0 0.0
    %5560 = vmatpush1.msra.mxu0 %v5486
    %5561 = vmatprep.subr.mxu0 0.0
    %5562 = vmatpush1.msra.mxu0 %v5485
    %5563 = vmatprep.subr.mxu0 0.0
    %5564 = vmatpush1.msra.mxu0 %v5484
    %5565 = vmatprep.subr.mxu0 0.0
    %5566 = vmatpush1.msra.mxu0 %v5483
    %5567 = vmatprep.subr.mxu0 0.0
    %5568 = vmatpush1.msra.mxu0 %v5482
    %5569 = vmatprep.subr.mxu0 0.0
    %5570 = vmatpush1.msra.mxu0 %v5481
    %5571 = vmatprep.subr.mxu0 0.0
    %5572 = vmatpush1.msra.mxu0 %v5480
    %5573 = vmatprep.subr.mxu0 0.0
    %5574 = vmatpush1.msra.mxu0 %v5479
    %5575 = vmatprep.subr.mxu0 0.0
    %5576 = vmatpush2.msra.mxu0 %v5510
    %5577 = vmatprep.subr.mxu0 0.0
    %5578 = vmatpush2.msra.mxu0 %v5509
    %5579 = vmatprep.subr.mxu0 0.0
    %5580 = vmatpush2.msra.mxu0 %v5508
    %5581 = vmatprep.subr.mxu0 0.0
    %5582 = vmatpush2.msra.mxu0 %v5507
    %5583 = vmatprep.subr.mxu0 0.0
    %5584 = vmatpush2.msra.mxu0 %v5506
    %5585 = vmatprep.subr.mxu0 0.0
    %5586 = vmatpush2.msra.mxu0 %v5505
    %5587 = vmatprep.subr.mxu0 0.0
    %5588 = vmatpush2.msra.mxu0 %v5504
    %5589 = vmatprep.subr.mxu0 0.0
    %5590 = vmatpush2.msra.mxu0 %v5503
    %5591 = vmatprep.subr.mxu0 0.0
    %5592 = vmatpush2.msra.mxu0 %v5502
    %5593 = vmatprep.subr.mxu0 0.0
    %5594 = vmatpush2.msra.mxu0 %v5501
    %5595 = vmatprep.subr.mxu0 0.0
    %5596 = vmatpush2.msra.mxu0 %v5500
    %5597 = vmatprep.subr.mxu0 0.0
    %5598 = vmatpush2.msra.mxu0 %v5499
    %5599 = vmatprep.subr.mxu0 0.0
    %5600 = vmatpush2.msra.mxu0 %v5498
    %5601 = vmatprep.subr.mxu0 0.0
    %5602 = vmatpush2.msra.mxu0 %v5497
    %5603 = vmatprep.subr.mxu0 0.0
    %5604 = vmatpush2.msra.mxu0 %v5496
    %5605 = vmatprep.subr.mxu0 0.0
    %5606 = vmatpush2.msra.mxu0 %v5495
    %5607 = vmatprep.mubr.f32.mxu0 %v5222
    %5608 = vmatmul.mubr.f32.gmra.mxu0 %v5221
    %v5609 = vpop.f32.mrf.mxu0
    %v5610 = vadd.f32 %v4718, %v5609
    %v5611 = vpop.f32.mrf.mxu0
    %5612 = vmatprep.mubr.f32.mxu0 %v5226
    %5613 = vmatmul.mubr.f32.gmra.mxu0 %v5225
    %v5614 = vpop.f32.mrf.mxu0
    %v5615 = vadd.f32 %v4718, %v5614
    %v5616 = vpop.f32.mrf.mxu0
    %5617 = vmatprep.mubr.f32.mxu0 %v5230
    %5618 = vmatmul.mubr.f32.gmra.mxu0 %v5229
    %v5619 = vpop.f32.mrf.mxu0
    %v5620 = vadd.f32 %v4718, %v5619
    %v5621 = vpop.f32.mrf.mxu0
    %5622 = vmatprep.mubr.f32.mxu0 %v5234
    %5623 = vmatmul.mubr.f32.gmra.mxu0 %v5233
    %v5624 = vpop.f32.mrf.mxu0
    %v5625 = vadd.f32 %v4718, %v5624
    %v5626 = vpop.f32.mrf.mxu0
    %5627 = vdwg.mxu0
    %5628 = vmatprep.subr.mxu0 0.0
    %5629 = vmatpush1.msra.mxu0 %v5526
    %5630 = vmatprep.subr.mxu0 0.0
    %5631 = vmatpush1.msra.mxu0 %v5525
    %5632 = vmatprep.subr.mxu0 0.0
    %5633 = vmatpush1.msra.mxu0 %v5524
    %5634 = vmatprep.subr.mxu0 0.0
    %5635 = vmatpush1.msra.mxu0 %v5523
    %5636 = vmatprep.subr.mxu0 0.0
    %5637 = vmatpush1.msra.mxu0 %v5522
    %5638 = vmatprep.subr.mxu0 0.0
    %5639 = vmatpush1.msra.mxu0 %v5521
    %5640 = vmatprep.subr.mxu0 0.0
    %5641 = vmatpush1.msra.mxu0 %v5520
    %5642 = vmatprep.subr.mxu0 0.0
    %5643 = vmatpush1.msra.mxu0 %v5519
    %5644 = vmatprep.subr.mxu0 0.0
    %5645 = vmatpush1.msra.mxu0 %v5518
    %5646 = vmatprep.subr.mxu0 0.0
    %5647 = vmatpush1.msra.mxu0 %v5517
    %5648 = vmatprep.subr.mxu0 0.0
    %5649 = vmatpush1.msra.mxu0 %v5516
    %5650 = vmatprep.subr.mxu0 0.0
    %5651 = vmatpush1.msra.mxu0 %v5515
    %5652 = vmatprep.subr.mxu0 0.0
    %5653 = vmatpush1.msra.mxu0 %v5514
    %5654 = vmatprep.subr.mxu0 0.0
    %5655 = vmatpush1.msra.mxu0 %v5513
    %5656 = vmatprep.subr.mxu0 0.0
    %5657 = vmatpush1.msra.mxu0 %v5512
    %5658 = vmatprep.subr.mxu0 0.0
    %5659 = vmatpush1.msra.mxu0 %v5511
    %5660 = vmatprep.subr.mxu0 0.0
    %5661 = vmatpush2.msra.mxu0 %v5542
    %5662 = vmatprep.subr.mxu0 0.0
    %5663 = vmatpush2.msra.mxu0 %v5541
    %5664 = vmatprep.subr.mxu0 0.0
    %5665 = vmatpush2.msra.mxu0 %v5540
    %5666 = vmatprep.subr.mxu0 0.0
    %5667 = vmatpush2.msra.mxu0 %v5539
    %5668 = vmatprep.subr.mxu0 0.0
    %5669 = vmatpush2.msra.mxu0 %v5538
    %5670 = vmatprep.subr.mxu0 0.0
    %5671 = vmatpush2.msra.mxu0 %v5537
    %5672 = vmatprep.subr.mxu0 0.0
    %5673 = vmatpush2.msra.mxu0 %v5536
    %5674 = vmatprep.subr.mxu0 0.0
    %5675 = vmatpush2.msra.mxu0 %v5535
    %5676 = vmatprep.subr.mxu0 0.0
    %5677 = vmatpush2.msra.mxu0 %v5534
    %5678 = vmatprep.subr.mxu0 0.0
    %5679 = vmatpush2.msra.mxu0 %v5533
    %5680 = vmatprep.subr.mxu0 0.0
    %5681 = vmatpush2.msra.mxu0 %v5532
    %5682 = vmatprep.subr.mxu0 0.0
    %5683 = vmatpush2.msra.mxu0 %v5531
    %5684 = vmatprep.subr.mxu0 0.0
    %5685 = vmatpush2.msra.mxu0 %v5530
    %5686 = vmatprep.subr.mxu0 0.0
    %5687 = vmatpush2.msra.mxu0 %v5529
    %5688 = vmatprep.subr.mxu0 0.0
    %5689 = vmatpush2.msra.mxu0 %v5528
    %5690 = vmatprep.subr.mxu0 0.0
    %5691 = vmatpush2.msra.mxu0 %v5527
    %5692 = vmatprep.mubr.f32.mxu0 %v5224
    %5693 = vmatmul.mubr.f32.gmra.mxu0 %v5223
    %v5694 = vpop.f32.mrf.mxu0
    %v5695 = vadd.f32 %v5610, %v5694
    %v5696 = vpop.f32.mrf.mxu0
    %5697 = vmatprep.mubr.f32.mxu0 %v5228
    %5698 = vmatmul.mubr.f32.gmra.mxu0 %v5227
    %v5699 = vpop.f32.mrf.mxu0
    %v5700 = vadd.f32 %v5615, %v5699
    %v5701 = vpop.f32.mrf.mxu0
    %5702 = vmatprep.mubr.f32.mxu0 %v5232
    %5703 = vmatmul.mubr.f32.gmra.mxu0 %v5231
    %v5704 = vpop.f32.mrf.mxu0
    %v5705 = vadd.f32 %v5620, %v5704
    %v5706 = vpop.f32.mrf.mxu0
    %5707 = vmatprep.mubr.f32.mxu0 %v5236
    %5708 = vmatmul.mubr.f32.gmra.mxu0 %v5235
    %v5709 = vpop.f32.mrf.mxu0
    %v5710 = vadd.f32 %v5625, %v5709
    %v5711 = vpop.f32.mrf.mxu0
    %5712 = vdwg.mxu0
    %v5713 = vtanh.pop %v5695
    %v5714 = vtanh.pop %v5700
    %v5715 = vtanh.pop %v5705
    %v5716 = vtanh.pop %v5710
    %5717 = vst [vmem:[%s12 + $0x60] sm:$0xff] %v5713
    %5718 = vst [vmem:[%s12 + $0x68] sm:$0xff] %v5714
    %5719 = vst [vmem:[%s12 + $0x70] sm:$0xff] %v5715
    %5720 = vst [vmem:[%s12 + $0x78] sm:$0xff] %v5716
    // Predicated region
    $region98: #{generator_forward.1} parent=1 // pred_check
      _
    $region99: #{generator_forward.1} parent=1 // pred_check_branch
      %5722 = sbr.rel (0) target = $region101
    $region100: #{generator_forward.1} parent=1 // pred_region
      _
    $region101: #{generator_forward.1} parent=1 // pred_fallthru
      _
    // Predicated region
    $region102: #{generator_forward.1} parent=1 // pred_check
      _
    $region103: #{generator_forward.1} parent=1 // pred_check_branch
      %5724 = sbr.rel (0) target = $region105
    $region104: #{generator_forward.1} parent=1 // pred_region
      _
    $region105: #{generator_forward.1} parent=1 // pred_fallthru
      _
    %5725 = vsyncpa [#allocation6], 1
    %5726 = vsyncpa [#allocation8], 1
    %5727 = vsyncpa [#allocation11], 1
    %5728 = vsyncpa [#allocation14], 1
    %5729 = vsyncpa [#allocation17], 1
    %5730 = vsyncpa [#allocation20], 1
    %5731 = vsyncpa [#allocation23], 1

</llo_original>
